<compile_context>
chip_gen: v7x
topology: tpu7x:2x2x1
jax: 0.10.0
libtpu: 0.0.40
codegen_flags: <defaults>
</compile_context>

<pallas_src>
import functools

import jax
import jax.numpy as jnp
from jax import lax
from jax.experimental import pallas as pl
from jax.experimental.pallas import tpu as pltpu

EPS = 1e-5
LANES = 128
SUBLANES = 8

# Center tap first so the fused 1x1 projection shortcut reads a prefix slice.
_TAP_ORDER = ((1, 1), (0, 0), (0, 1), (0, 2), (1, 0), (1, 2), (2, 0), (2, 1),
              (2, 2))


def _round_up(x, m):
    return (x + m - 1) // m * m


# ----------------------------- Pallas kernels ------------------------------

def _matmul_stats_kernel(x_ref, w_ref, y_ref, st_ref):
    """y_tile = x_tile @ w (f32 accumulate on MXU); also emit per-tile
    per-channel sum / sum-of-squares partials for BatchNorm."""
    y = jnp.dot(x_ref[...], w_ref[...], preferred_element_type=jnp.float32)
    y_ref[...] = y
    st_ref[0, 0:1, :] = jnp.sum(y, axis=0, keepdims=True)
    st_ref[0, 1:2, :] = jnp.sum(y * y, axis=0, keepdims=True)


def _matmul_shortcut_stats_kernel(cin, x_ref, w_ref, ws_ref,
                                  y_ref, s_ref, st1_ref, st3_ref):
    """Fused conv1 + projection-shortcut 1x1 conv.

    The leading `cin` columns of the tap-packed tile are the center tap,
    i.e. exactly the strided input of the 1x1 shortcut conv, so the shortcut
    matmul reuses the tile already in VMEM (no extra HBM slab)."""
    xv = x_ref[...]
    y = jnp.dot(xv, w_ref[...], preferred_element_type=jnp.float32)
    y_ref[...] = y
    st1_ref[0, 0:1, :] = jnp.sum(y, axis=0, keepdims=True)
    st1_ref[0, 1:2, :] = jnp.sum(y * y, axis=0, keepdims=True)

    s = jnp.dot(xv[:, :cin], ws_ref[...], preferred_element_type=jnp.float32)
    s_ref[...] = s
    st3_ref[0, 0:1, :] = jnp.sum(s, axis=0, keepdims=True)
    st3_ref[0, 1:2, :] = jnp.sum(s * s, axis=0, keepdims=True)


def _scale_shift_relu_kernel(y_ref, scale_ref, shift_ref, o_ref):
    """o = relu(y * scale + shift)  (BatchNorm folded to per-channel affine)."""
    o = jnp.maximum(y_ref[...] * scale_ref[...] + shift_ref[...], 0.0)
    o_ref[...] = o.astype(o_ref.dtype)


def _bn_residual_relu_kernel(y_ref, s_ref, sc2_ref, sh2_ref, sc3_ref, sh3_ref,
                             o_ref):
    """o = relu(bn2(y) + bn3(shortcut)); both BNs folded to scale/shift.
    Identity shortcut is expressed as scale=1, shift=0."""
    main = y_ref[...] * sc2_ref[...] + sh2_ref[...]
    short = s_ref[...] * sc3_ref[...] + sh3_ref[...]
    o_ref[...] = jnp.maximum(main + short, 0.0).astype(o_ref.dtype)


# ----------------------------- tiled wrappers ------------------------------

_CPARAMS = pltpu.CompilerParams(
    dimension_semantics=("parallel",),
    vmem_limit_bytes=32 * 1024 * 1024,
)


def _matmul_stats(x, w, tm):
    """Tiled (x @ w) with fused per-channel sum/sumsq.

    x: [Mp, K] bf16, w: [K, Cp] bf16;  Mp % tm == 0, Cp % 128 == 0.
    Returns y [Mp, Cp] f32 and stats [2, Cp] f32 (reduced over tiles)."""
    mp, k = x.shape
    cp = w.shape[1]
    nt = mp // tm
    bytes_accessed = int(x.size * x.dtype.itemsize + w.size * w.dtype.itemsize
                         + mp * cp * 4 + nt * 2 * cp * 4)
    y, st = pl.pallas_call(
        _matmul_stats_kernel,
        grid=(nt,),
        in_specs=[pl.BlockSpec((tm, k), lambda i: (i, 0)),
                  pl.BlockSpec((k, cp), lambda i: (0, 0))],
        out_specs=(pl.BlockSpec((tm, cp), lambda i: (i, 0)),
                   pl.BlockSpec((1, 2, cp), lambda i: (i, 0, 0))),
        out_shape=(jax.ShapeDtypeStruct((mp, cp), jnp.float32),
                   jax.ShapeDtypeStruct((nt, 2, cp), jnp.float32)),
        compiler_params=_CPARAMS,
        cost_estimate=pl.CostEstimate(flops=2 * mp * k * cp,
                                      transcendentals=0,
                                      bytes_accessed=bytes_accessed),
    )(x, w)
    return y, jnp.sum(st, axis=0)


def _matmul_proj_stats(x, w, ws, cin, tm):
    """Fused conv1 + projection-shortcut matmuls with BN partials for both."""
    mp, k = x.shape
    cp = w.shape[1]
    nt = mp // tm
    flops = 2 * mp * k * cp + 2 * mp * cin * cp
    bytes_accessed = int(x.size * x.dtype.itemsize + w.size * w.dtype.itemsize
                         + ws.size * ws.dtype.itemsize + 2 * mp * cp * 4
                         + nt * 4 * cp * 4)
    y, s, st1, st3 = pl.pallas_call(
        functools.partial(_matmul_shortcut_stats_kernel, cin),
        grid=(nt,),
        in_specs=[pl.BlockSpec((tm, k), lambda i: (i, 0)),
                  pl.BlockSpec((k, cp), lambda i: (0, 0)),
                  pl.BlockSpec((cin, cp), lambda i: (0, 0))],
        out_specs=(pl.BlockSpec((tm, cp), lambda i: (i, 0)),
                   pl.BlockSpec((tm, cp), lambda i: (i, 0)),
                   pl.BlockSpec((1, 2, cp), lambda i: (i, 0, 0)),
                   pl.BlockSpec((1, 2, cp), lambda i: (i, 0, 0))),
        out_shape=(jax.ShapeDtypeStruct((mp, cp), jnp.float32),
                   jax.ShapeDtypeStruct((mp, cp), jnp.float32),
                   jax.ShapeDtypeStruct((nt, 2, cp), jnp.float32),
                   jax.ShapeDtypeStruct((nt, 2, cp), jnp.float32)),
        compiler_params=_CPARAMS,
        cost_estimate=pl.CostEstimate(flops=flops, transcendentals=0,
                                      bytes_accessed=bytes_accessed),
    )(x, w, ws)
    return y, s, jnp.sum(st1, axis=0), jnp.sum(st3, axis=0)


def _scale_shift_relu(y, scale, shift, tm, out_dtype):
    mp, cp = y.shape
    nt = mp // tm
    bytes_accessed = int(y.size * y.dtype.itemsize + 2 * cp * 4
                         + mp * cp * jnp.dtype(out_dtype).itemsize)
    return pl.pallas_call(
        _scale_shift_relu_kernel,
        grid=(nt,),
        in_specs=[pl.BlockSpec((tm, cp), lambda i: (i, 0)),
                  pl.BlockSpec((1, cp), lambda i: (0, 0)),
                  pl.BlockSpec((1, cp), lambda i: (0, 0))],
        out_specs=pl.BlockSpec((tm, cp), lambda i: (i, 0)),
        out_shape=jax.ShapeDtypeStruct((mp, cp), out_dtype),
        compiler_params=_CPARAMS,
        cost_estimate=pl.CostEstimate(flops=2 * mp * cp, transcendentals=0,
                                      bytes_accessed=bytes_accessed),
    )(y, scale, shift)


def _bn_residual_relu(y, s, scale2, shift2, scale3, shift3, tm):
    mp, cp = y.shape
    nt = mp // tm
    bytes_accessed = int(y.size * y.dtype.itemsize + s.size * s.dtype.itemsize
                         + 4 * cp * 4 + mp * cp * 4)
    return pl.pallas_call(
        _bn_residual_relu_kernel,
        grid=(nt,),
        in_specs=[pl.BlockSpec((tm, cp), lambda i: (i, 0)),
                  pl.BlockSpec((tm, cp), lambda i: (i, 0)),
                  pl.BlockSpec((1, cp), lambda i: (0, 0)),
                  pl.BlockSpec((1, cp), lambda i: (0, 0)),
                  pl.BlockSpec((1, cp), lambda i: (0, 0)),
                  pl.BlockSpec((1, cp), lambda i: (0, 0))],
        out_specs=pl.BlockSpec((tm, cp), lambda i: (i, 0)),
        out_shape=jax.ShapeDtypeStruct((mp, cp), jnp.float32),
        compiler_params=_CPARAMS,
        cost_estimate=pl.CostEstimate(flops=5 * mp * cp, transcendentals=0,
                                      bytes_accessed=bytes_accessed),
    )(y, s, scale2, shift2, scale3, shift3)


# --------------------------------- glue ------------------------------------

def _im2col_3x3_packed(x_nhwc, stride, dtype):
    """Packed taps [N*Ho*Wo, 9*C] for a 3x3, padding=1 conv (center tap
    first, then the remaining taps in _TAP_ORDER)."""
    x_nhwc = x_nhwc.astype(dtype)
    n, h, w, c = x_nhwc.shape
    ho = (h - 1) // stride + 1
    wo = (w - 1) // stride + 1
    xp = jnp.pad(x_nhwc, ((0, 0), (1, 1), (1, 1), (0, 0)))
    taps = []
    for ky, kx in _TAP_ORDER:
        sl = xp[:, ky:ky + stride * (ho - 1) + 1:stride,
                   kx:kx + stride * (wo - 1) + 1:stride, :]
        taps.append(sl.reshape(n * ho * wo, c))
    return jnp.concatenate(taps, axis=1), (n, ho, wo)


def _pad_rows(a, mp):
    m = a.shape[0]
    return a if m == mp else jnp.pad(a, ((0, mp - m), (0, 0)))


def _pack_w3x3(w_oihw, cin_p, cout_p, dtype):
    """OIHW -> (ky,kx,cin,cout), zero-pad channels, pack rows in _TAP_ORDER
    to [9*cin_p, cout_p] (matches _im2col_3x3_packed column order)."""
    cout, cin = w_oihw.shape[0], w_oihw.shape[1]
    w = jnp.transpose(w_oihw, (2, 3, 1, 0))                     # (3,3,cin,cout)
    w = jnp.pad(w, ((0, 0), (0, 0), (0, cin_p - cin), (0, cout_p - cout)))
    return jnp.concatenate([w[ky, kx] for ky, kx in _TAP_ORDER],
                           axis=0).astype(dtype)                # [9*cin_p, cout_p]


def _bn_fold(stats, gamma_p, beta_p, count):
    """Fold batch stats + affine into per-channel scale/shift ([1, Cp] f32)."""
    mean = stats[0] / count
    var = jnp.maximum(stats[1] / count - mean * mean, 0.0)   # biased, like torch
    rstd = lax.rsqrt(var + EPS)
    scale = gamma_p * rstd
    shift = beta_p - mean * scale
    return scale.reshape(1, -1), shift.reshape(1, -1)


def _pick_tm(tm_req, m, k_max, cp):
    """Largest row tile that fits comfortably inside the VMEM budget."""
    tm = min(tm_req, _round_up(m, SUBLANES))
    budget = 24 * 1024 * 1024

    def vmem_bytes(t):
        # double-buffered tap block + weights + double-buffered f32 outputs x2
        return 2 * t * k_max * 2 + 2 * k_max * cp * 2 + 4 * t * cp * 4

    while tm > SUBLANES and tm % 2 == 0 and vmem_bytes(tm) > budget:
        tm //= 2
    return max(_round_up(tm, SUBLANES), SUBLANES)


# ------------------------------ forward pass --------------------------------

def basic_block_forward(x_nchw, params, stride=1, *, tm=512,
                        compute_dtype=jnp.bfloat16):
    """Pallas implementation of BasicBlock.forward; input/output are NCHW.
    (Callers that already hold NHWC activations can skip the two transposes.)"""
    x = jnp.transpose(x_nchw, (0, 2, 3, 1)).astype(jnp.float32)   # -> NHWC
    n, h, w, cin = x.shape
    cout = params['w1'].shape[0]
    has_proj = (stride != 1) or (cin != cout)
    cp = _round_up(cout, LANES)          # lane-dense internal channel dim

    # conv1 taps / packed weights
    xt, (_, ho, wo) = _im2col_3x3_packed(x, stride, compute_dtype)  # [m, 9*cin]
    m = n * ho * wo
    tm = _pick_tm(tm, m, 9 * cp, cp)     # sized for the largest K (conv2)
    mp = _round_up(m, tm)
    xt = _pad_rows(xt, mp)
    w1p = _pack_w3x3(params['w1'], cin, cp, compute_dtype)          # [9*cin, cp]

    g1 = jnp.pad(params['bn1_gamma'], (0, cp - cout))
    b1 = jnp.pad(params['bn1_beta'], (0, cp - cout))
    g2 = jnp.pad(params['bn2_gamma'], (0, cp - cout))
    b2 = jnp.pad(params['bn2_beta'], (0, cp - cout))

    # ---- stage 1: conv1 (+stats) fused with projection shortcut if present ----
    if has_proj:
        wsp = jnp.pad(params['ws'][:, :, 0, 0].T,
                      ((0, 0), (0, cp - cout))).astype(compute_dtype)  # [cin, cp]
        y1, s, st1, st3 = _matmul_proj_stats(xt, w1p, wsp, cin, tm)
        g3 = jnp.pad(params['bn3_gamma'], (0, cp - cout))
        b3 = jnp.pad(params['bn3_beta'], (0, cp - cout))
        sc3, sh3 = _bn_fold(st3, g3, b3, m)
    else:
        y1, st1 = _matmul_stats(xt, w1p, tm)
        s = _pad_rows(jnp.pad(x.reshape(m, cin), ((0, 0), (0, cp - cin))), mp)
        sc3 = jnp.ones((1, cp), jnp.float32)
        sh3 = jnp.zeros((1, cp), jnp.float32)

    # fold BN1, ReLU
    sc1, sh1 = _bn_fold(st1, g1, b1, m)
    h1 = _scale_shift_relu(y1, sc1, sh1, tm, compute_dtype)         # [mp, cp]

    # ---- stage 2: conv2 on h1 (+stats), fold BN2, residual add, ReLU ----
    h1_img = h1[:m].reshape(n, ho, wo, cp)
    ht, _ = _im2col_3x3_packed(h1_img, 1, compute_dtype)            # [m, 9*cp]
    ht = _pad_rows(ht, mp)
    w2p = _pack_w3x3(params['w2'], cp, cp, compute_dtype)           # [9*cp, cp]
    y2, st2 = _matmul_stats(ht, w2p, tm)
    sc2, sh2 = _bn_fold(st2, g2, b2, m)
    out = _bn_residual_relu(y2, s, sc2, sh2, sc3, sh3, tm)          # [mp, cp]

    out = out[:m, :cout].reshape(n, ho, wo, cout)
    return jnp.transpose(out, (0, 3, 1, 2))                         # -> NCHW


# ------------------------------ pure-JAX reference ---------------------------

def basic_block_reference(x_nchw, params, stride=1):
    """Pure-JAX reference (lax.conv) of the same forward pass, for verification."""
    x = jnp.transpose(x_nchw, (0, 2, 3, 1)).astype(jnp.float32)

    def conv(y, w_oihw, s, pad):
        w = jnp.transpose(w_oihw, (2, 3, 1, 0))  # HWIO
        return lax.conv_general_dilated(
            y, w, window_strides=(s, s), padding=pad,
            dimension_numbers=('NHWC', 'HWIO', 'NHWC'))

    def bn(y, g, b):
        mean = jnp.mean(y, axis=(0, 1, 2), keepdims=True)
        var = jnp.mean((y - mean) ** 2, axis=(0, 1, 2), keepdims=True)
        return (y - mean) * lax.rsqrt(var + EPS) * g + b

    cin = x.shape[-1]
    cout = params['w1'].shape[0]
    out = conv(x, params['w1'], stride, ((1, 1), (1, 1)))
    out = bn(out, params['bn1_gamma'], params['bn1_beta'])
    out = jnp.maximum(out, 0.0)
    out = conv(out, params['w2'], 1, ((1, 1), (1, 1)))
    out = bn(out, params['bn2_gamma'], params['bn2_beta'])
    if stride != 1 or cin != cout:
        s = conv(x, params['ws'], stride, ((0, 0), (0, 0)))
        s = bn(s, params['bn3_gamma'], params['bn3_beta'])
    else:
        s = x
    out = jnp.maximum(out + s, 0.0)
    return jnp.transpose(out, (0, 3, 1, 2))


# ----------------------------------- test ------------------------------------

if __name__ == "__main__":
    key = jax.random.PRNGKey(0)

    def make_params(k, cin, cout):
        ks = jax.random.split(k, 9)
        return {
            'w1': jax.random.normal(ks[0], (cout, cin, 3, 3), jnp.float32) * 0.1,
            'w2': jax.random.normal(ks[1], (cout, cout, 3, 3), jnp.float32) * 0.1,
            'ws': jax.random.normal(ks[2], (cout, cin, 1, 1), jnp.float32) * 0.1,
            'bn1_gamma': 1.0 + 0.1 * jax.random.normal(ks[3], (cout,), jnp.float32),
            'bn1_beta': 0.1 * jax.random.normal(ks[4], (cout,), jnp.float32),
            'bn2_gamma': 1.0 + 0.1 * jax.random.normal(ks[5], (cout,), jnp.float32),
            'bn2_beta': 0.1 * jax.random.normal(ks[6], (cout,), jnp.float32),
            'bn3_gamma': 1.0 + 0.1 * jax.random.normal(ks[7], (cout,), jnp.float32),
            'bn3_beta': 0.1 * jax.random.normal(ks[8], (cout,), jnp.float32),
        }

    cases = [
        # (N, Cin, H, W, Cout, stride)
        (2, 4, 16, 16, 8, 1),   # projection shortcut (1x1 conv + BN)
        (2, 8, 16, 16, 8, 1),   # identity shortcut
        (2, 4, 16, 16, 8, 2),   # strided projection shortcut
    ]
    for idx, (N, Cin, H, W, Cout, stride) in enumerate(cases):
        kp, kx, key = jax.random.split(key, 3)
        params = make_params(kp, Cin, Cout)
        x = jax.random.normal(kx, (N, Cin, H, W), jnp.float32)

        fwd = jax.jit(functools.partial(basic_block_forward, stride=stride))
        out = jax.block_until_ready(fwd(x, params))
        Ho = (H - 1) // stride + 1
        Wo = (W - 1) // stride + 1
        assert out.shape == (N, Cout, Ho, Wo), (idx, out.shape)

        ref = basic_block_reference(x, params, stride)
        max_err = float(jnp.max(jnp.abs(out - ref)))
        # bf16 MXU operands (f32 accumulation / BN math) -> slightly looser tol
        assert max_err < 5e-2, f"case {idx}: mismatch vs reference, max abs err = {max_err}"

    print("KERNEL_OK")
</pallas_src>

<mosaic_0001>
module attributes {stable_mosaic.version = 11 : i64} {
  func.func @_scale_shift_relu_kernel(%arg0: i32, %arg1: memref<512x128xf32, #tpu.memory_space<vmem>>, %arg2: memref<1x128xf32, #tpu.memory_space<vmem>>, %arg3: memref<1x128xf32, #tpu.memory_space<vmem>>, %arg4: memref<512x128xbf16, #tpu.memory_space<vmem>>) attributes {dimension_semantics = [#tpu.dimension_semantics<parallel>], iteration_bounds = array<i64: 1>, scalar_prefetch = 0 : i64, scratch_operands = 0 : i64, tpu.core_type = #tpu.core_type<tc>, window_params = [{transform_indices = @transform_0, window_bounds = array<i64: 512, 128>}, {pipeline_mode = #tpu.pipeline_mode<synchronous>, transform_indices = @transform_1, window_bounds = array<i64: 1, 128>}, {pipeline_mode = #tpu.pipeline_mode<synchronous>, transform_indices = @transform_2, window_bounds = array<i64: 1, 128>}, {transform_indices = @transform_3, window_bounds = array<i64: 512, 128>}]} {
    %c0 = arith.constant 0 : index
    %c0_0 = arith.constant 0 : index
    %0 = vector.load %arg1[%c0, %c0_0] : memref<512x128xf32, #tpu.memory_space<vmem>>, vector<512x128xf32>
    %c0_1 = arith.constant 0 : index
    %c0_2 = arith.constant 0 : index
    %1 = vector.load %arg2[%c0_1, %c0_2] : memref<1x128xf32, #tpu.memory_space<vmem>>, vector<1x128xf32>
    %2 = vector.broadcast %1 : vector<1x128xf32> to vector<512x128xf32>
    %3 = arith.mulf %0, %2 : vector<512x128xf32>
    %c0_3 = arith.constant 0 : index
    %c0_4 = arith.constant 0 : index
    %4 = vector.load %arg3[%c0_3, %c0_4] : memref<1x128xf32, #tpu.memory_space<vmem>>, vector<1x128xf32>
    %5 = vector.broadcast %4 : vector<1x128xf32> to vector<512x128xf32>
    %6 = arith.addf %3, %5 : vector<512x128xf32>
    %cst = arith.constant 0.000000e+00 : f32
    %7 = vector.broadcast %cst : f32 to vector<512x128xf32>
    %8 = arith.maximumf %6, %7 : vector<512x128xf32>
    %9 = arith.truncf %8 : vector<512x128xf32> to vector<512x128xbf16>
    %c0_5 = arith.constant 0 : index
    %c0_6 = arith.constant 0 : index
    %10 = vector.load %arg4[%c0_5, %c0_6] : memref<512x128xbf16, #tpu.memory_space<vmem>>, vector<512x128xbf16>
    tpu.vector_store %arg4[%c0_5, %c0_6], %9 {strides = array<i32>} : memref<512x128xbf16, #tpu.memory_space<vmem>>, vector<512x128xbf16>,
    return
  }
  func.func @transform_0(%arg0: i32) -> (i32, i32) {
    %c0_i32 = arith.constant 0 : i32
    %c0_i32_0 = arith.constant 0 : i32
    return %arg0, %c0_i32 : i32, i32
  }
  func.func @transform_1(%arg0: i32) -> (i32, i32) {
    %c0_i32 = arith.constant 0 : i32
    %c0_i32_0 = arith.constant 0 : i32
    %c0_i32_1 = arith.constant 0 : i32
    return %c0_i32, %c0_i32_0 : i32, i32
  }
  func.func @transform_2(%arg0: i32) -> (i32, i32) {
    %c0_i32 = arith.constant 0 : i32
    %c0_i32_0 = arith.constant 0 : i32
    %c0_i32_1 = arith.constant 0 : i32
    return %c0_i32, %c0_i32_0 : i32, i32
  }
  func.func @transform_3(%arg0: i32) -> (i32, i32) {
    %c0_i32 = arith.constant 0 : i32
    %c0_i32_0 = arith.constant 0 : i32
    return %arg0, %c0_i32 : i32, i32
  }
}

module attributes {stable_mosaic.version = 11 : i64} {
  func.func @_matmul_shortcut_stats_kernel(%arg0: i32, %arg1: memref<512x36xbf16, #tpu.memory_space<vmem>>, %arg2: memref<36x128xbf16, #tpu.memory_space<vmem>>, %arg3: memref<4x128xbf16, #tpu.memory_space<vmem>>, %arg4: memref<512x128xf32, #tpu.memory_space<vmem>>, %arg5: memref<512x128xf32, #tpu.memory_space<vmem>>, %arg6: memref<1x2x128xf32, #tpu.memory_space<vmem>>, %arg7: memref<1x2x128xf32, #tpu.memory_space<vmem>>) attributes {dimension_semantics = [#tpu.dimension_semantics<parallel>], iteration_bounds = array<i64: 1>, scalar_prefetch = 0 : i64, scratch_operands = 0 : i64, tpu.core_type = #tpu.core_type<tc>, window_params = [{transform_indices = @transform_0, window_bounds = array<i64: 512, 36>}, {pipeline_mode = #tpu.pipeline_mode<synchronous>, transform_indices = @transform_1, window_bounds = array<i64: 36, 128>}, {pipeline_mode = #tpu.pipeline_mode<synchronous>, transform_indices = @transform_2, window_bounds = array<i64: 4, 128>}, {transform_indices = @transform_3, window_bounds = array<i64: 512, 128>}, {transform_indices = @transform_4, window_bounds = array<i64: 512, 128>}, {transform_indices = @transform_5, window_bounds = array<i64: 1, 2, 128>}, {transform_indices = @transform_6, window_bounds = array<i64: 1, 2, 128>}]} {
    %c0 = arith.constant 0 : index
    %c0_0 = arith.constant 0 : index
    %0 = vector.load %arg1[%c0, %c0_0] : memref<512x36xbf16, #tpu.memory_space<vmem>>, vector<512x36xbf16>
    %c0_1 = arith.constant 0 : index
    %c0_2 = arith.constant 0 : index
    %1 = vector.load %arg2[%c0_1, %c0_2] : memref<36x128xbf16, #tpu.memory_space<vmem>>, vector<36x128xbf16>
    %cst = arith.constant dense<0.000000e+00> : vector<512x128xf32>
    %2 = tpu.matmul %0, %1, %cst {dimension_numbers = #tpu.dot_dimension_numbers<[1], [0], [0], [1], [0, 0, 1, 1], [], []>} : vector<512x36xbf16>, vector<36x128xbf16>, vector<512x128xf32> -> vector<512x128xf32>
    %c0_3 = arith.constant 0 : index
    %c0_4 = arith.constant 0 : index
    %3 = vector.load %arg4[%c0_3, %c0_4] : memref<512x128xf32, #tpu.memory_space<vmem>>, vector<512x128xf32>
    tpu.vector_store %arg4[%c0_3, %c0_4], %2 {strides = array<i32>} : memref<512x128xf32, #tpu.memory_space<vmem>>, vector<512x128xf32>,
    %cst_5 = arith.constant dense<0.000000e+00> : vector<128xf32>
    %4 = vector.multi_reduction <add>, %2, %cst_5 [0] : vector<512x128xf32> to vector<128xf32>
    %5 = vector.shape_cast %4 : vector<128xf32> to vector<1x128xf32>
    %c0_6 = arith.constant 0 : index
    %c0_7 = arith.constant 0 : index
    %c0_8 = arith.constant 0 : index
    %6 = vector.load %arg6[%c0_6, %c0_7, %c0_8] : memref<1x2x128xf32, #tpu.memory_space<vmem>>, vector<1x1x128xf32>
    %7 = vector.shape_cast %6 : vector<1x1x128xf32> to vector<1x128xf32>
    %8 = vector.shape_cast %5 : vector<1x128xf32> to vector<1x1x128xf32>
    tpu.vector_store %arg6[%c0_6, %c0_7, %c0_8], %8 {strides = array<i32>} : memref<1x2x128xf32, #tpu.memory_space<vmem>>, vector<1x1x128xf32>,
    %9 = arith.mulf %2, %2 : vector<512x128xf32>
    %cst_9 = arith.constant dense<0.000000e+00> : vector<128xf32>
    %10 = vector.multi_reduction <add>, %9, %cst_9 [0] : vector<512x128xf32> to vector<128xf32>
    %11 = vector.shape_cast %10 : vector<128xf32> to vector<1x128xf32>
    %c0_10 = arith.constant 0 : index
    %c1 = arith.constant 1 : index
    %c0_11 = arith.constant 0 : index
    %12 = vector.load %arg6[%c0_10, %c1, %c0_11] : memref<1x2x128xf32, #tpu.memory_space<vmem>>, vector<1x1x128xf32>
    %13 = vector.shape_cast %12 : vector<1x1x128xf32> to vector<1x128xf32>
    %14 = vector.shape_cast %11 : vector<1x128xf32> to vector<1x1x128xf32>
    tpu.vector_store %arg6[%c0_10, %c1, %c0_11], %14 {strides = array<i32>} : memref<1x2x128xf32, #tpu.memory_space<vmem>>, vector<1x1x128xf32>,
    %15 = vector.extract_strided_slice %0 {offsets = [0, 0], sizes = [512, 4], strides = [1, 1]} : vector<512x36xbf16> to vector<512x4xbf16>
    %c0_12 = arith.constant 0 : index
    %c0_13 = arith.constant 0 : index
    %16 = vector.load %arg3[%c0_12, %c0_13] : memref<4x128xbf16, #tpu.memory_space<vmem>>, vector<4x128xbf16>
    %cst_14 = arith.constant dense<0.000000e+00> : vector<512x128xf32>
    %17 = tpu.matmul %15, %16, %cst_14 {dimension_numbers = #tpu.dot_dimension_numbers<[1], [0], [0], [1], [0, 0, 1, 1], [], []>} : vector<512x4xbf16>, vector<4x128xbf16>, vector<512x128xf32> -> vector<512x128xf32>
    %c0_15 = arith.constant 0 : index
    %c0_16 = arith.constant 0 : index
    %18 = vector.load %arg5[%c0_15, %c0_16] : memref<512x128xf32, #tpu.memory_space<vmem>>, vector<512x128xf32>
    tpu.vector_store %arg5[%c0_15, %c0_16], %17 {strides = array<i32>} : memref<512x128xf32, #tpu.memory_space<vmem>>, vector<512x128xf32>,
    %cst_17 = arith.constant dense<0.000000e+00> : vector<128xf32>
    %19 = vector.multi_reduction <add>, %17, %cst_17 [0] : vector<512x128xf32> to vector<128xf32>
    %20 = vector.shape_cast %19 : vector<128xf32> to vector<1x128xf32>
    %c0_18 = arith.constant 0 : index
    %c0_19 = arith.constant 0 : index
    %c0_20 = arith.constant 0 : index
    %21 = vector.load %arg7[%c0_18, %c0_19, %c0_20] : memref<1x2x128xf32, #tpu.memory_space<vmem>>, vector<1x1x128xf32>
    %22 = vector.shape_cast %21 : vector<1x1x128xf32> to vector<1x128xf32>
    %23 = vector.shape_cast %20 : vector<1x128xf32> to vector<1x1x128xf32>
    tpu.vector_store %arg7[%c0_18, %c0_19, %c0_20], %23 {strides = array<i32>} : memref<1x2x128xf32, #tpu.memory_space<vmem>>, vector<1x1x128xf32>,
    %24 = arith.mulf %17, %17 : vector<512x128xf32>
    %cst_21 = arith.constant dense<0.000000e+00> : vector<128xf32>
    %25 = vector.multi_reduction <add>, %24, %cst_21 [0] : vector<512x128xf32> to vector<128xf32>
    %26 = vector.shape_cast %25 : vector<128xf32> to vector<1x128xf32>
    %c0_22 = arith.constant 0 : index
    %c1_23 = arith.constant 1 : index
    %c0_24 = arith.constant 0 : index
    %27 = vector.load %arg7[%c0_22, %c1_23, %c0_24] : memref<1x2x128xf32, #tpu.memory_space<vmem>>, vector<1x1x128xf32>
    %28 = vector.shape_cast %27 : vector<1x1x128xf32> to vector<1x128xf32>
    %29 = vector.shape_cast %26 : vector<1x128xf32> to vector<1x1x128xf32>
    tpu.vector_store %arg7[%c0_22, %c1_23, %c0_24], %29 {strides = array<i32>} : memref<1x2x128xf32, #tpu.memory_space<vmem>>, vector<1x1x128xf32>,
    return
  }
  func.func @transform_0(%arg0: i32) -> (i32, i32) {
    %c0_i32 = arith.constant 0 : i32
    %c0_i32_0 = arith.constant 0 : i32
    return %arg0, %c0_i32 : i32, i32
  }
  func.func @transform_1(%arg0: i32) -> (i32, i32) {
    %c0_i32 = arith.constant 0 : i32
    %c0_i32_0 = arith.constant 0 : i32
    %c0_i32_1 = arith.constant 0 : i32
    return %c0_i32, %c0_i32_0 : i32, i32
  }
  func.func @transform_2(%arg0: i32) -> (i32, i32) {
    %c0_i32 = arith.constant 0 : i32
    %c0_i32_0 = arith.constant 0 : i32
    %c0_i32_1 = arith.constant 0 : i32
    return %c0_i32, %c0_i32_0 : i32, i32
  }
  func.func @transform_3(%arg0: i32) -> (i32, i32) {
    %c0_i32 = arith.constant 0 : i32
    %c0_i32_0 = arith.constant 0 : i32
    return %arg0, %c0_i32 : i32, i32
  }
  func.func @transform_4(%arg0: i32) -> (i32, i32) {
    %c0_i32 = arith.constant 0 : i32
    %c0_i32_0 = arith.constant 0 : i32
    return %arg0, %c0_i32 : i32, i32
  }
  func.func @transform_5(%arg0: i32) -> (i32, i32, i32) {
    %c0_i32 = arith.constant 0 : i32
    %c0_i32_0 = arith.constant 0 : i32
    %c0_i32_1 = arith.constant 0 : i32
    return %arg0, %c0_i32, %c0_i32_0 : i32, i32, i32
  }
  func.func @transform_6(%arg0: i32) -> (i32, i32, i32) {
    %c0_i32 = arith.constant 0 : i32
    %c0_i32_0 = arith.constant 0 : i32
    %c0_i32_1 = arith.constant 0 : i32
    return %arg0, %c0_i32, %c0_i32_0 : i32, i32, i32
  }
}

module attributes {stable_mosaic.version = 11 : i64} {
  func.func @_matmul_stats_kernel(%arg0: i32, %arg1: memref<512x1152xbf16, #tpu.memory_space<vmem>>, %arg2: memref<1152x128xbf16, #tpu.memory_space<vmem>>, %arg3: memref<512x128xf32, #tpu.memory_space<vmem>>, %arg4: memref<1x2x128xf32, #tpu.memory_space<vmem>>) attributes {dimension_semantics = [#tpu.dimension_semantics<parallel>], iteration_bounds = array<i64: 1>, scalar_prefetch = 0 : i64, scratch_operands = 0 : i64, tpu.core_type = #tpu.core_type<tc>, window_params = [{transform_indices = @transform_0, window_bounds = array<i64: 512, 1152>}, {pipeline_mode = #tpu.pipeline_mode<synchronous>, transform_indices = @transform_1, window_bounds = array<i64: 1152, 128>}, {transform_indices = @transform_2, window_bounds = array<i64: 512, 128>}, {transform_indices = @transform_3, window_bounds = array<i64: 1, 2, 128>}]} {
    %c0 = arith.constant 0 : index
    %c0_0 = arith.constant 0 : index
    %0 = vector.load %arg1[%c0, %c0_0] : memref<512x1152xbf16, #tpu.memory_space<vmem>>, vector<512x1152xbf16>
    %c0_1 = arith.constant 0 : index
    %c0_2 = arith.constant 0 : index
    %1 = vector.load %arg2[%c0_1, %c0_2] : memref<1152x128xbf16, #tpu.memory_space<vmem>>, vector<1152x128xbf16>
    %cst = arith.constant dense<0.000000e+00> : vector<512x128xf32>
    %2 = tpu.matmul %0, %1, %cst {dimension_numbers = #tpu.dot_dimension_numbers<[1], [0], [0], [1], [0, 0, 1, 1], [], []>} : vector<512x1152xbf16>, vector<1152x128xbf16>, vector<512x128xf32> -> vector<512x128xf32>
    %c0_3 = arith.constant 0 : index
    %c0_4 = arith.constant 0 : index
    %3 = vector.load %arg3[%c0_3, %c0_4] : memref<512x128xf32, #tpu.memory_space<vmem>>, vector<512x128xf32>
    tpu.vector_store %arg3[%c0_3, %c0_4], %2 {strides = array<i32>} : memref<512x128xf32, #tpu.memory_space<vmem>>, vector<512x128xf32>,
    %cst_5 = arith.constant dense<0.000000e+00> : vector<128xf32>
    %4 = vector.multi_reduction <add>, %2, %cst_5 [0] : vector<512x128xf32> to vector<128xf32>
    %5 = vector.shape_cast %4 : vector<128xf32> to vector<1x128xf32>
    %c0_6 = arith.constant 0 : index
    %c0_7 = arith.constant 0 : index
    %c0_8 = arith.constant 0 : index
    %6 = vector.load %arg4[%c0_6, %c0_7, %c0_8] : memref<1x2x128xf32, #tpu.memory_space<vmem>>, vector<1x1x128xf32>
    %7 = vector.shape_cast %6 : vector<1x1x128xf32> to vector<1x128xf32>
    %8 = vector.shape_cast %5 : vector<1x128xf32> to vector<1x1x128xf32>
    tpu.vector_store %arg4[%c0_6, %c0_7, %c0_8], %8 {strides = array<i32>} : memref<1x2x128xf32, #tpu.memory_space<vmem>>, vector<1x1x128xf32>,
    %9 = arith.mulf %2, %2 : vector<512x128xf32>
    %cst_9 = arith.constant dense<0.000000e+00> : vector<128xf32>
    %10 = vector.multi_reduction <add>, %9, %cst_9 [0] : vector<512x128xf32> to vector<128xf32>
    %11 = vector.shape_cast %10 : vector<128xf32> to vector<1x128xf32>
    %c0_10 = arith.constant 0 : index
    %c1 = arith.constant 1 : index
    %c0_11 = arith.constant 0 : index
    %12 = vector.load %arg4[%c0_10, %c1, %c0_11] : memref<1x2x128xf32, #tpu.memory_space<vmem>>, vector<1x1x128xf32>
    %13 = vector.shape_cast %12 : vector<1x1x128xf32> to vector<1x128xf32>
    %14 = vector.shape_cast %11 : vector<1x128xf32> to vector<1x1x128xf32>
    tpu.vector_store %arg4[%c0_10, %c1, %c0_11], %14 {strides = array<i32>} : memref<1x2x128xf32, #tpu.memory_space<vmem>>, vector<1x1x128xf32>,
    return
  }
  func.func @transform_0(%arg0: i32) -> (i32, i32) {
    %c0_i32 = arith.constant 0 : i32
    %c0_i32_0 = arith.constant 0 : i32
    return %arg0, %c0_i32 : i32, i32
  }
  func.func @transform_1(%arg0: i32) -> (i32, i32) {
    %c0_i32 = arith.constant 0 : i32
    %c0_i32_0 = arith.constant 0 : i32
    %c0_i32_1 = arith.constant 0 : i32
    return %c0_i32, %c0_i32_0 : i32, i32
  }
  func.func @transform_2(%arg0: i32) -> (i32, i32) {
    %c0_i32 = arith.constant 0 : i32
    %c0_i32_0 = arith.constant 0 : i32
    return %arg0, %c0_i32 : i32, i32
  }
  func.func @transform_3(%arg0: i32) -> (i32, i32, i32) {
    %c0_i32 = arith.constant 0 : i32
    %c0_i32_0 = arith.constant 0 : i32
    %c0_i32_1 = arith.constant 0 : i32
    return %arg0, %c0_i32, %c0_i32_0 : i32, i32, i32
  }
}

module attributes {stable_mosaic.version = 11 : i64} {
  func.func @_bn_residual_relu_kernel(%arg0: i32, %arg1: memref<512x128xf32, #tpu.memory_space<vmem>>, %arg2: memref<512x128xf32, #tpu.memory_space<vmem>>, %arg3: memref<1x128xf32, #tpu.memory_space<vmem>>, %arg4: memref<1x128xf32, #tpu.memory_space<vmem>>, %arg5: memref<1x128xf32, #tpu.memory_space<vmem>>, %arg6: memref<1x128xf32, #tpu.memory_space<vmem>>, %arg7: memref<512x128xf32, #tpu.memory_space<vmem>>) attributes {dimension_semantics = [#tpu.dimension_semantics<parallel>], iteration_bounds = array<i64: 1>, scalar_prefetch = 0 : i64, scratch_operands = 0 : i64, tpu.core_type = #tpu.core_type<tc>, window_params = [{transform_indices = @transform_0, window_bounds = array<i64: 512, 128>}, {transform_indices = @transform_1, window_bounds = array<i64: 512, 128>}, {pipeline_mode = #tpu.pipeline_mode<synchronous>, transform_indices = @transform_2, window_bounds = array<i64: 1, 128>}, {pipeline_mode = #tpu.pipeline_mode<synchronous>, transform_indices = @transform_3, window_bounds = array<i64: 1, 128>}, {pipeline_mode = #tpu.pipeline_mode<synchronous>, transform_indices = @transform_4, window_bounds = array<i64: 1, 128>}, {pipeline_mode = #tpu.pipeline_mode<synchronous>, transform_indices = @transform_5, window_bounds = array<i64: 1, 128>}, {transform_indices = @transform_6, window_bounds = array<i64: 512, 128>}]} {
    %c0 = arith.constant 0 : index
    %c0_0 = arith.constant 0 : index
    %0 = vector.load %arg1[%c0, %c0_0] : memref<512x128xf32, #tpu.memory_space<vmem>>, vector<512x128xf32>
    %c0_1 = arith.constant 0 : index
    %c0_2 = arith.constant 0 : index
    %1 = vector.load %arg3[%c0_1, %c0_2] : memref<1x128xf32, #tpu.memory_space<vmem>>, vector<1x128xf32>
    %2 = vector.broadcast %1 : vector<1x128xf32> to vector<512x128xf32>
    %3 = arith.mulf %0, %2 : vector<512x128xf32>
    %c0_3 = arith.constant 0 : index
    %c0_4 = arith.constant 0 : index
    %4 = vector.load %arg4[%c0_3, %c0_4] : memref<1x128xf32, #tpu.memory_space<vmem>>, vector<1x128xf32>
    %5 = vector.broadcast %4 : vector<1x128xf32> to vector<512x128xf32>
    %6 = arith.addf %3, %5 : vector<512x128xf32>
    %c0_5 = arith.constant 0 : index
    %c0_6 = arith.constant 0 : index
    %7 = vector.load %arg2[%c0_5, %c0_6] : memref<512x128xf32, #tpu.memory_space<vmem>>, vector<512x128xf32>
    %c0_7 = arith.constant 0 : index
    %c0_8 = arith.constant 0 : index
    %8 = vector.load %arg5[%c0_7, %c0_8] : memref<1x128xf32, #tpu.memory_space<vmem>>, vector<1x128xf32>
    %9 = vector.broadcast %8 : vector<1x128xf32> to vector<512x128xf32>
    %10 = arith.mulf %7, %9 : vector<512x128xf32>
    %c0_9 = arith.constant 0 : index
    %c0_10 = arith.constant 0 : index
    %11 = vector.load %arg6[%c0_9, %c0_10] : memref<1x128xf32, #tpu.memory_space<vmem>>, vector<1x128xf32>
    %12 = vector.broadcast %11 : vector<1x128xf32> to vector<512x128xf32>
    %13 = arith.addf %10, %12 : vector<512x128xf32>
    %14 = arith.addf %6, %13 : vector<512x128xf32>
    %cst = arith.constant 0.000000e+00 : f32
    %15 = vector.broadcast %cst : f32 to vector<512x128xf32>
    %16 = arith.maximumf %14, %15 : vector<512x128xf32>
    %c0_11 = arith.constant 0 : index
    %c0_12 = arith.constant 0 : index
    %17 = vector.load %arg7[%c0_11, %c0_12] : memref<512x128xf32, #tpu.memory_space<vmem>>, vector<512x128xf32>
    tpu.vector_store %arg7[%c0_11, %c0_12], %16 {strides = array<i32>} : memref<512x128xf32, #tpu.memory_space<vmem>>, vector<512x128xf32>,
    return
  }
  func.func @transform_0(%arg0: i32) -> (i32, i32) {
    %c0_i32 = arith.constant 0 : i32
    %c0_i32_0 = arith.constant 0 : i32
    return %arg0, %c0_i32 : i32, i32
  }
  func.func @transform_1(%arg0: i32) -> (i32, i32) {
    %c0_i32 = arith.constant 0 : i32
    %c0_i32_0 = arith.constant 0 : i32
    return %arg0, %c0_i32 : i32, i32
  }
  func.func @transform_2(%arg0: i32) -> (i32, i32) {
    %c0_i32 = arith.constant 0 : i32
    %c0_i32_0 = arith.constant 0 : i32
    %c0_i32_1 = arith.constant 0 : i32
    return %c0_i32, %c0_i32_0 : i32, i32
  }
  func.func @transform_3(%arg0: i32) -> (i32, i32) {
    %c0_i32 = arith.constant 0 : i32
    %c0_i32_0 = arith.constant 0 : i32
    %c0_i32_1 = arith.constant 0 : i32
    return %c0_i32, %c0_i32_0 : i32, i32
  }
  func.func @transform_4(%arg0: i32) -> (i32, i32) {
    %c0_i32 = arith.constant 0 : i32
    %c0_i32_0 = arith.constant 0 : i32
    %c0_i32_1 = arith.constant 0 : i32
    return %c0_i32, %c0_i32_0 : i32, i32
  }
  func.func @transform_5(%arg0: i32) -> (i32, i32) {
    %c0_i32 = arith.constant 0 : i32
    %c0_i32_0 = arith.constant 0 : i32
    %c0_i32_1 = arith.constant 0 : i32
    return %c0_i32, %c0_i32_0 : i32, i32
  }
  func.func @transform_6(%arg0: i32) -> (i32, i32) {
    %c0_i32 = arith.constant 0 : i32
    %c0_i32_0 = arith.constant 0 : i32
    return %arg0, %c0_i32 : i32, i32
  }
}

</mosaic_0001>

<llo_original>
// kernel: basic_block_forward.5
$region0: #{basic_block_forward.5}
  #allocation0 [shape = 'u32[]', space=smem, size = 0x4, offset = 0x4, fixed_abs, tag = 'smem constant byte address 0x4 - core index']
  #allocation1 [shape = 'u32[144,128]{1,0:T(1,128)}', space=vmem, size = 0x12000, scoped, tag = 'internal scratch']
  %s0 = inlined_call_operand.vmem [shape: f32[512,128], index: 0, kind: input, shape index: {}]
  %s1 = inlined_call_operand.vmem [shape: f32[1,128], index: 1, kind: input, shape index: {}]
  %s2 = inlined_call_operand.vmem [shape: f32[1,128], index: 2, kind: input, shape index: {}]
  %s3 = inlined_call_operand.vmem [shape: bf16[512,128], index: 3, kind: output, shape index: {}]
  %s4 = sld [smem:[#allocation0]]
  $region22: #{basic_block_forward.5} parent=0
    _
  %s6 = ssub.s32 1, %s4
  %s7 = scalar_select 0, %s6, %s4
  // Predicated region
  $region2: #{basic_block_forward.5} parent=0 // pred_check
    _
  $region3: #{basic_block_forward.5} parent=0 // pred_check_branch
    %9 = sbr.rel (0) target = $region5
  $region4: #{basic_block_forward.5} parent=0 // pred_region
    _
  $region5: #{basic_block_forward.5} parent=0 // pred_fallthru
    _
  // Predicated region
  $region6: #{basic_block_forward.5} parent=0 // pred_check
    _
  $region7: #{basic_block_forward.5} parent=0 // pred_check_branch
    %11 = sbr.rel (0) target = $region9
  $region8: #{basic_block_forward.5} parent=0 // pred_region
    _
  $region9: #{basic_block_forward.5} parent=0 // pred_fallthru
    _
  // Predicated region
  $region10: #{basic_block_forward.5} parent=0 // pred_check
    _
  $region11: #{basic_block_forward.5} parent=0 // pred_check_branch
    %13 = sbr.rel (0) target = $region13
  $region12: #{basic_block_forward.5} parent=0 // pred_region
    _
  $region13: #{basic_block_forward.5} parent=0 // pred_fallthru
    _
  %v14 = vld [vmem:[%s0] sm:$0xff]
  %v15 = vld [vmem:[%s0 + $0x8] sm:$0xff]
  %v16 = vld [vmem:[%s0 + $0x10] sm:$0xff]
  %v17 = vld [vmem:[%s0 + $0x18] sm:$0xff]
  %v18 = vld [vmem:[%s0 + $0x20] sm:$0xff]
  %v19 = vld [vmem:[%s0 + $0x28] sm:$0xff]
  %v20 = vld [vmem:[%s0 + $0x30] sm:$0xff]
  %v21 = vld [vmem:[%s0 + $0x38] sm:$0xff]
  %v22 = vld [vmem:[%s0 + $0x40] sm:$0xff]
  %v23 = vld [vmem:[%s0 + $0x48] sm:$0xff]
  %v24 = vld [vmem:[%s0 + $0x50] sm:$0xff]
  %v25 = vld [vmem:[%s0 + $0x58] sm:$0xff]
  %v26 = vld [vmem:[%s0 + $0x60] sm:$0xff]
  %v27 = vld [vmem:[%s0 + $0x68] sm:$0xff]
  %v28 = vld [vmem:[%s0 + $0x70] sm:$0xff]
  %v29 = vld [vmem:[%s0 + $0x78] sm:$0xff]
  %v30 = vld [vmem:[%s0 + $0x80] sm:$0xff]
  %v31 = vld [vmem:[%s0 + $0x88] sm:$0xff]
  %v32 = vld [vmem:[%s0 + $0x90] sm:$0xff]
  %v33 = vld [vmem:[%s0 + $0x98] sm:$0xff]
  %v34 = vld [vmem:[%s0 + $0xa0] sm:$0xff]
  %v35 = vld [vmem:[%s0 + $0xa8] sm:$0xff]
  %v36 = vld [vmem:[%s0 + $0xb0] sm:$0xff]
  %v37 = vld [vmem:[%s0 + $0xb8] sm:$0xff]
  %v38 = vld [vmem:[%s0 + $0xc0] sm:$0xff]
  %v39 = vld [vmem:[%s0 + $0xc8] sm:$0xff]
  %v40 = vld [vmem:[%s0 + $0xd0] sm:$0xff]
  %v41 = vld [vmem:[%s0 + $0xd8] sm:$0xff]
  %v42 = vld [vmem:[%s0 + $0xe0] sm:$0xff]
  %v43 = vld [vmem:[%s0 + $0xe8] sm:$0xff]
  %v44 = vld [vmem:[%s0 + $0xf0] sm:$0xff]
  %v45 = vld [vmem:[%s0 + $0xf8] sm:$0xff]
  %v46 = vld [vmem:[%s0 + $0x100] sm:$0xff]
  %v47 = vld [vmem:[%s0 + $0x108] sm:$0xff]
  %v48 = vld [vmem:[%s0 + $0x110] sm:$0xff]
  %v49 = vld [vmem:[%s0 + $0x118] sm:$0xff]
  %v50 = vld [vmem:[%s0 + $0x120] sm:$0xff]
  %v51 = vld [vmem:[%s0 + $0x128] sm:$0xff]
  %v52 = vld [vmem:[%s0 + $0x130] sm:$0xff]
  %v53 = vld [vmem:[%s0 + $0x138] sm:$0xff]
  %v54 = vld [vmem:[%s0 + $0x140] sm:$0xff]
  %v55 = vld [vmem:[%s0 + $0x148] sm:$0xff]
  %v56 = vld [vmem:[%s0 + $0x150] sm:$0xff]
  %v57 = vld [vmem:[%s0 + $0x158] sm:$0xff]
  %v58 = vld [vmem:[%s0 + $0x160] sm:$0xff]
  %v59 = vld [vmem:[%s0 + $0x168] sm:$0xff]
  %v60 = vld [vmem:[%s0 + $0x170] sm:$0xff]
  %v61 = vld [vmem:[%s0 + $0x178] sm:$0xff]
  %v62 = vld [vmem:[%s0 + $0x180] sm:$0xff]
  %v63 = vld [vmem:[%s0 + $0x188] sm:$0xff]
  %v64 = vld [vmem:[%s0 + $0x190] sm:$0xff]
  %v65 = vld [vmem:[%s0 + $0x198] sm:$0xff]
  %v66 = vld [vmem:[%s0 + $0x1a0] sm:$0xff]
  %v67 = vld [vmem:[%s0 + $0x1a8] sm:$0xff]
  %v68 = vld [vmem:[%s0 + $0x1b0] sm:$0xff]
  %v69 = vld [vmem:[%s0 + $0x1b8] sm:$0xff]
  %v70 = vld [vmem:[%s0 + $0x1c0] sm:$0xff]
  %v71 = vld [vmem:[%s0 + $0x1c8] sm:$0xff]
  %v72 = vld [vmem:[%s0 + $0x1d0] sm:$0xff]
  %v73 = vld [vmem:[%s0 + $0x1d8] sm:$0xff]
  %v74 = vld [vmem:[%s0 + $0x1e0] sm:$0xff]
  %v75 = vld [vmem:[%s0 + $0x1e8] sm:$0xff]
  %v76 = vld [vmem:[%s0 + $0x1f0] sm:$0xff]
  %v77 = vld [vmem:[%s0 + $0x1f8] sm:$0xff]
  %v78 = vld [vmem:[%s1] sm:$0x1]
  %v80 = vlaneseq
  %v81 = vshrl.u32 %v80, 7
  %v82 = vsub.s32 0, %v81
  %v83 = vrot.slane %v78, %v82
  %v85 = vmul.f32 %v14, %v83
  %v86 = vmul.f32 %v15, %v83
  %v87 = vmul.f32 %v16, %v83
  %v88 = vmul.f32 %v17, %v83
  %v89 = vmul.f32 %v18, %v83
  %v90 = vmul.f32 %v19, %v83
  %v91 = vmul.f32 %v20, %v83
  %v92 = vmul.f32 %v21, %v83
  %v93 = vmul.f32 %v22, %v83
  %v94 = vmul.f32 %v23, %v83
  %v95 = vmul.f32 %v24, %v83
  %v96 = vmul.f32 %v25, %v83
  %v97 = vmul.f32 %v26, %v83
  %v98 = vmul.f32 %v27, %v83
  %v99 = vmul.f32 %v28, %v83
  %v100 = vmul.f32 %v29, %v83
  %v101 = vmul.f32 %v30, %v83
  %v102 = vmul.f32 %v31, %v83
  %v103 = vmul.f32 %v32, %v83
  %v104 = vmul.f32 %v33, %v83
  %v105 = vmul.f32 %v34, %v83
  %v106 = vmul.f32 %v35, %v83
  %v107 = vmul.f32 %v36, %v83
  %v108 = vmul.f32 %v37, %v83
  %v109 = vmul.f32 %v38, %v83
  %v110 = vmul.f32 %v39, %v83
  %v111 = vmul.f32 %v40, %v83
  %v112 = vmul.f32 %v41, %v83
  %v113 = vmul.f32 %v42, %v83
  %v114 = vmul.f32 %v43, %v83
  %v115 = vmul.f32 %v44, %v83
  %v116 = vmul.f32 %v45, %v83
  %v117 = vmul.f32 %v46, %v83
  %v118 = vmul.f32 %v47, %v83
  %v119 = vmul.f32 %v48, %v83
  %v120 = vmul.f32 %v49, %v83
  %v121 = vmul.f32 %v50, %v83
  %v122 = vmul.f32 %v51, %v83
  %v123 = vmul.f32 %v52, %v83
  %v124 = vmul.f32 %v53, %v83
  %v125 = vmul.f32 %v54, %v83
  %v126 = vmul.f32 %v55, %v83
  %v127 = vmul.f32 %v56, %v83
  %v128 = vmul.f32 %v57, %v83
  %v129 = vmul.f32 %v58, %v83
  %v130 = vmul.f32 %v59, %v83
  %v131 = vmul.f32 %v60, %v83
  %v132 = vmul.f32 %v61, %v83
  %v133 = vmul.f32 %v62, %v83
  %v134 = vmul.f32 %v63, %v83
  %v135 = vmul.f32 %v64, %v83
  %v136 = vmul.f32 %v65, %v83
  %v137 = vmul.f32 %v66, %v83
  %v138 = vmul.f32 %v67, %v83
  %v139 = vmul.f32 %v68, %v83
  %v140 = vmul.f32 %v69, %v83
  %v141 = vmul.f32 %v70, %v83
  %v142 = vmul.f32 %v71, %v83
  %v143 = vmul.f32 %v72, %v83
  %v144 = vmul.f32 %v73, %v83
  %v145 = vmul.f32 %v74, %v83
  %v146 = vmul.f32 %v75, %v83
  %v147 = vmul.f32 %v76, %v83
  %v148 = vmul.f32 %v77, %v83
  %v149 = vld [vmem:[%s2] sm:$0x1]
  %v151 = vlaneseq
  %v152 = vshrl.u32 %v151, 7
  %v153 = vsub.s32 0, %v152
  %v154 = vrot.slane %v149, %v153
  %v156 = vadd.f32 %v85, %v154
  %v157 = vadd.f32 %v86, %v154
  %v158 = vadd.f32 %v87, %v154
  %v159 = vadd.f32 %v88, %v154
  %v160 = vadd.f32 %v89, %v154
  %v161 = vadd.f32 %v90, %v154
  %v162 = vadd.f32 %v91, %v154
  %v163 = vadd.f32 %v92, %v154
  %v164 = vadd.f32 %v93, %v154
  %v165 = vadd.f32 %v94, %v154
  %v166 = vadd.f32 %v95, %v154
  %v167 = vadd.f32 %v96, %v154
  %v168 = vadd.f32 %v97, %v154
  %v169 = vadd.f32 %v98, %v154
  %v170 = vadd.f32 %v99, %v154
  %v171 = vadd.f32 %v100, %v154
  %v172 = vadd.f32 %v101, %v154
  %v173 = vadd.f32 %v102, %v154
  %v174 = vadd.f32 %v103, %v154
  %v175 = vadd.f32 %v104, %v154
  %v176 = vadd.f32 %v105, %v154
  %v177 = vadd.f32 %v106, %v154
  %v178 = vadd.f32 %v107, %v154
  %v179 = vadd.f32 %v108, %v154
  %v180 = vadd.f32 %v109, %v154
  %v181 = vadd.f32 %v110, %v154
  %v182 = vadd.f32 %v111, %v154
  %v183 = vadd.f32 %v112, %v154
  %v184 = vadd.f32 %v113, %v154
  %v185 = vadd.f32 %v114, %v154
  %v186 = vadd.f32 %v115, %v154
  %v187 = vadd.f32 %v116, %v154
  %v188 = vadd.f32 %v117, %v154
  %v189 = vadd.f32 %v118, %v154
  %v190 = vadd.f32 %v119, %v154
  %v191 = vadd.f32 %v120, %v154
  %v192 = vadd.f32 %v121, %v154
  %v193 = vadd.f32 %v122, %v154
  %v194 = vadd.f32 %v123, %v154
  %v195 = vadd.f32 %v124, %v154
  %v196 = vadd.f32 %v125, %v154
  %v197 = vadd.f32 %v126, %v154
  %v198 = vadd.f32 %v127, %v154
  %v199 = vadd.f32 %v128, %v154
  %v200 = vadd.f32 %v129, %v154
  %v201 = vadd.f32 %v130, %v154
  %v202 = vadd.f32 %v131, %v154
  %v203 = vadd.f32 %v132, %v154
  %v204 = vadd.f32 %v133, %v154
  %v205 = vadd.f32 %v134, %v154
  %v206 = vadd.f32 %v135, %v154
  %v207 = vadd.f32 %v136, %v154
  %v208 = vadd.f32 %v137, %v154
  %v209 = vadd.f32 %v138, %v154
  %v210 = vadd.f32 %v139, %v154
  %v211 = vadd.f32 %v140, %v154
  %v212 = vadd.f32 %v141, %v154
  %v213 = vadd.f32 %v142, %v154
  %v214 = vadd.f32 %v143, %v154
  %v215 = vadd.f32 %v144, %v154
  %v216 = vadd.f32 %v145, %v154
  %v217 = vadd.f32 %v146, %v154
  %v218 = vadd.f32 %v147, %v154
  %v219 = vadd.f32 %v148, %v154
  %v220 = vmax.f32 %v156, 0.0
  %v221 = vmax.f32 %v157, 0.0
  %v222 = vmax.f32 %v158, 0.0
  %v223 = vmax.f32 %v159, 0.0
  %v224 = vmax.f32 %v160, 0.0
  %v225 = vmax.f32 %v161, 0.0
  %v226 = vmax.f32 %v162, 0.0
  %v227 = vmax.f32 %v163, 0.0
  %v228 = vmax.f32 %v164, 0.0
  %v229 = vmax.f32 %v165, 0.0
  %v230 = vmax.f32 %v166, 0.0
  %v231 = vmax.f32 %v167, 0.0
  %v232 = vmax.f32 %v168, 0.0
  %v233 = vmax.f32 %v169, 0.0
  %v234 = vmax.f32 %v170, 0.0
  %v235 = vmax.f32 %v171, 0.0
  %v236 = vmax.f32 %v172, 0.0
  %v237 = vmax.f32 %v173, 0.0
  %v238 = vmax.f32 %v174, 0.0
  %v239 = vmax.f32 %v175, 0.0
  %v240 = vmax.f32 %v176, 0.0
  %v241 = vmax.f32 %v177, 0.0
  %v242 = vmax.f32 %v178, 0.0
  %v243 = vmax.f32 %v179, 0.0
  %v244 = vmax.f32 %v180, 0.0
  %v245 = vmax.f32 %v181, 0.0
  %v246 = vmax.f32 %v182, 0.0
  %v247 = vmax.f32 %v183, 0.0
  %v248 = vmax.f32 %v184, 0.0
  %v249 = vmax.f32 %v185, 0.0
  %v250 = vmax.f32 %v186, 0.0
  %v251 = vmax.f32 %v187, 0.0
  %v252 = vmax.f32 %v188, 0.0
  %v253 = vmax.f32 %v189, 0.0
  %v254 = vmax.f32 %v190, 0.0
  %v255 = vmax.f32 %v191, 0.0
  %v256 = vmax.f32 %v192, 0.0
  %v257 = vmax.f32 %v193, 0.0
  %v258 = vmax.f32 %v194, 0.0
  %v259 = vmax.f32 %v195, 0.0
  %v260 = vmax.f32 %v196, 0.0
  %v261 = vmax.f32 %v197, 0.0
  %v262 = vmax.f32 %v198, 0.0
  %v263 = vmax.f32 %v199, 0.0
  %v264 = vmax.f32 %v200, 0.0
  %v265 = vmax.f32 %v201, 0.0
  %v266 = vmax.f32 %v202, 0.0
  %v267 = vmax.f32 %v203, 0.0
  %v268 = vmax.f32 %v204, 0.0
  %v269 = vmax.f32 %v205, 0.0
  %v270 = vmax.f32 %v206, 0.0
  %v271 = vmax.f32 %v207, 0.0
  %v272 = vmax.f32 %v208, 0.0
  %v273 = vmax.f32 %v209, 0.0
  %v274 = vmax.f32 %v210, 0.0
  %v275 = vmax.f32 %v211, 0.0
  %v276 = vmax.f32 %v212, 0.0
  %v277 = vmax.f32 %v213, 0.0
  %v278 = vmax.f32 %v214, 0.0
  %v279 = vmax.f32 %v215, 0.0
  %v280 = vmax.f32 %v216, 0.0
  %v281 = vmax.f32 %v217, 0.0
  %v282 = vmax.f32 %v218, 0.0
  %v283 = vmax.f32 %v219, 0.0
  %v284 = vpack.c.bf16 %v221, %v220
  %v285 = vpack.c.bf16 %v223, %v222
  %v286 = vpack.c.bf16 %v225, %v224
  %v287 = vpack.c.bf16 %v227, %v226
  %v288 = vpack.c.bf16 %v229, %v228
  %v289 = vpack.c.bf16 %v231, %v230
  %v290 = vpack.c.bf16 %v233, %v232
  %v291 = vpack.c.bf16 %v235, %v234
  %v292 = vpack.c.bf16 %v237, %v236
  %v293 = vpack.c.bf16 %v239, %v238
  %v294 = vpack.c.bf16 %v241, %v240
  %v295 = vpack.c.bf16 %v243, %v242
  %v296 = vpack.c.bf16 %v245, %v244
  %v297 = vpack.c.bf16 %v247, %v246
  %v298 = vpack.c.bf16 %v249, %v248
  %v299 = vpack.c.bf16 %v251, %v250
  %v300 = vpack.c.bf16 %v253, %v252
  %v301 = vpack.c.bf16 %v255, %v254
  %v302 = vpack.c.bf16 %v257, %v256
  %v303 = vpack.c.bf16 %v259, %v258
  %v304 = vpack.c.bf16 %v261, %v260
  %v305 = vpack.c.bf16 %v263, %v262
  %v306 = vpack.c.bf16 %v265, %v264
  %v307 = vpack.c.bf16 %v267, %v266
  %v308 = vpack.c.bf16 %v269, %v268
  %v309 = vpack.c.bf16 %v271, %v270
  %v310 = vpack.c.bf16 %v273, %v272
  %v311 = vpack.c.bf16 %v275, %v274
  %v312 = vpack.c.bf16 %v277, %v276
  %v313 = vpack.c.bf16 %v279, %v278
  %v314 = vpack.c.bf16 %v281, %v280
  %v315 = vpack.c.bf16 %v283, %v282
  %v348 = vunpack.c.l.b16 %v284
  %v349 = vunpack.c.h.b16 %v284
  %v350 = vunpack.c.l.b16 %v285
  %v351 = vunpack.c.h.b16 %v285
  %v352 = vunpack.c.l.b16 %v286
  %v353 = vunpack.c.h.b16 %v286
  %v354 = vunpack.c.l.b16 %v287
  %v355 = vunpack.c.h.b16 %v287
  %v356 = vunpack.c.l.b16 %v288
  %v357 = vunpack.c.h.b16 %v288
  %v358 = vunpack.c.l.b16 %v289
  %v359 = vunpack.c.h.b16 %v289
  %v360 = vunpack.c.l.b16 %v290
  %v361 = vunpack.c.h.b16 %v290
  %v362 = vunpack.c.l.b16 %v291
  %v363 = vunpack.c.h.b16 %v291
  %v364 = vunpack.c.l.b16 %v292
  %v365 = vunpack.c.h.b16 %v292
  %v366 = vunpack.c.l.b16 %v293
  %v367 = vunpack.c.h.b16 %v293
  %v368 = vunpack.c.l.b16 %v294
  %v369 = vunpack.c.h.b16 %v294
  %v370 = vunpack.c.l.b16 %v295
  %v371 = vunpack.c.h.b16 %v295
  %v372 = vunpack.c.l.b16 %v296
  %v373 = vunpack.c.h.b16 %v296
  %v374 = vunpack.c.l.b16 %v297
  %v375 = vunpack.c.h.b16 %v297
  %v376 = vunpack.c.l.b16 %v298
  %v377 = vunpack.c.h.b16 %v298
  %v378 = vunpack.c.l.b16 %v299
  %v379 = vunpack.c.h.b16 %v299
  %v380 = vunpack.c.l.b16 %v300
  %v381 = vunpack.c.h.b16 %v300
  %v382 = vunpack.c.l.b16 %v301
  %v383 = vunpack.c.h.b16 %v301
  %v384 = vunpack.c.l.b16 %v302
  %v385 = vunpack.c.h.b16 %v302
  %v386 = vunpack.c.l.b16 %v303
  %v387 = vunpack.c.h.b16 %v303
  %v388 = vunpack.c.l.b16 %v304
  %v389 = vunpack.c.h.b16 %v304
  %v390 = vunpack.c.l.b16 %v305
  %v391 = vunpack.c.h.b16 %v305
  %v392 = vunpack.c.l.b16 %v306
  %v393 = vunpack.c.h.b16 %v306
  %v394 = vunpack.c.l.b16 %v307
  %v395 = vunpack.c.h.b16 %v307
  %v396 = vunpack.c.l.b16 %v308
  %v397 = vunpack.c.h.b16 %v308
  %v398 = vunpack.c.l.b16 %v309
  %v399 = vunpack.c.h.b16 %v309
  %v400 = vunpack.c.l.b16 %v310
  %v401 = vunpack.c.h.b16 %v310
  %v402 = vunpack.c.l.b16 %v311
  %v403 = vunpack.c.h.b16 %v311
  %v404 = vunpack.c.l.b16 %v312
  %v405 = vunpack.c.h.b16 %v312
  %v406 = vunpack.c.l.b16 %v313
  %v407 = vunpack.c.h.b16 %v313
  %v408 = vunpack.c.l.b16 %v314
  %v409 = vunpack.c.h.b16 %v314
  %v410 = vunpack.c.l.b16 %v315
  %v411 = vunpack.c.h.b16 %v315
  %v412 = vpack.c.b16 %v348, %v348
  %v413 = vpack.c.b16 %v349, %v349
  %v414 = vpack.c.b16 %v350, %v350
  %v415 = vpack.c.b16 %v351, %v351
  %v416 = vpack.c.b16 %v352, %v352
  %v417 = vpack.c.b16 %v353, %v353
  %v418 = vpack.c.b16 %v354, %v354
  %v419 = vpack.c.b16 %v355, %v355
  %v420 = vpack.c.b16 %v356, %v356
  %v421 = vpack.c.b16 %v357, %v357
  %v422 = vpack.c.b16 %v358, %v358
  %v423 = vpack.c.b16 %v359, %v359
  %v424 = vpack.c.b16 %v360, %v360
  %v425 = vpack.c.b16 %v361, %v361
  %v426 = vpack.c.b16 %v362, %v362
  %v427 = vpack.c.b16 %v363, %v363
  %v428 = vpack.c.b16 %v364, %v364
  %v429 = vpack.c.b16 %v365, %v365
  %v430 = vpack.c.b16 %v366, %v366
  %v431 = vpack.c.b16 %v367, %v367
  %v432 = vpack.c.b16 %v368, %v368
  %v433 = vpack.c.b16 %v369, %v369
  %v434 = vpack.c.b16 %v370, %v370
  %v435 = vpack.c.b16 %v371, %v371
  %v436 = vpack.c.b16 %v372, %v372
  %v437 = vpack.c.b16 %v373, %v373
  %v438 = vpack.c.b16 %v374, %v374
  %v439 = vpack.c.b16 %v375, %v375
  %v440 = vpack.c.b16 %v376, %v376
  %v441 = vpack.c.b16 %v377, %v377
  %v442 = vpack.c.b16 %v378, %v378
  %v443 = vpack.c.b16 %v379, %v379
  %v444 = vpack.c.b16 %v380, %v380
  %v445 = vpack.c.b16 %v381, %v381
  %v446 = vpack.c.b16 %v382, %v382
  %v447 = vpack.c.b16 %v383, %v383
  %v448 = vpack.c.b16 %v384, %v384
  %v449 = vpack.c.b16 %v385, %v385
  %v450 = vpack.c.b16 %v386, %v386
  %v451 = vpack.c.b16 %v387, %v387
  %v452 = vpack.c.b16 %v388, %v388
  %v453 = vpack.c.b16 %v389, %v389
  %v454 = vpack.c.b16 %v390, %v390
  %v455 = vpack.c.b16 %v391, %v391
  %v456 = vpack.c.b16 %v392, %v392
  %v457 = vpack.c.b16 %v393, %v393
  %v458 = vpack.c.b16 %v394, %v394
  %v459 = vpack.c.b16 %v395, %v395
  %v460 = vpack.c.b16 %v396, %v396
  %v461 = vpack.c.b16 %v397, %v397
  %v462 = vpack.c.b16 %v398, %v398
  %v463 = vpack.c.b16 %v399, %v399
  %v464 = vpack.c.b16 %v400, %v400
  %v465 = vpack.c.b16 %v401, %v401
  %v466 = vpack.c.b16 %v402, %v402
  %v467 = vpack.c.b16 %v403, %v403
  %v468 = vpack.c.b16 %v404, %v404
  %v469 = vpack.c.b16 %v405, %v405
  %v470 = vpack.c.b16 %v406, %v406
  %v471 = vpack.c.b16 %v407, %v407
  %v472 = vpack.c.b16 %v408, %v408
  %v473 = vpack.c.b16 %v409, %v409
  %v474 = vpack.c.b16 %v410, %v410
  %v475 = vpack.c.b16 %v411, %v411
  %540 = vst [vmem:[%s3] sm:$0xf] %v412
  %541 = vst [vmem:[%s3 + $0x4] sm:$0xf] %v413
  %542 = vst [vmem:[%s3 + $0x8] sm:$0xf] %v414
  %543 = vst [vmem:[%s3 + $0xc] sm:$0xf] %v415
  %544 = vst [vmem:[%s3 + $0x10] sm:$0xf] %v416
  %545 = vst [vmem:[%s3 + $0x14] sm:$0xf] %v417
  %546 = vst [vmem:[%s3 + $0x18] sm:$0xf] %v418
  %547 = vst [vmem:[%s3 + $0x1c] sm:$0xf] %v419
  %548 = vst [vmem:[%s3 + $0x20] sm:$0xf] %v420
  %549 = vst [vmem:[%s3 + $0x24] sm:$0xf] %v421
  %550 = vst [vmem:[%s3 + $0x28] sm:$0xf] %v422
  %551 = vst [vmem:[%s3 + $0x2c] sm:$0xf] %v423
  %552 = vst [vmem:[%s3 + $0x30] sm:$0xf] %v424
  %553 = vst [vmem:[%s3 + $0x34] sm:$0xf] %v425
  %554 = vst [vmem:[%s3 + $0x38] sm:$0xf] %v426
  %555 = vst [vmem:[%s3 + $0x3c] sm:$0xf] %v427
  %556 = vst [vmem:[%s3 + $0x40] sm:$0xf] %v428
  %557 = vst [vmem:[%s3 + $0x44] sm:$0xf] %v429
  %558 = vst [vmem:[%s3 + $0x48] sm:$0xf] %v430
  %559 = vst [vmem:[%s3 + $0x4c] sm:$0xf] %v431
  %560 = vst [vmem:[%s3 + $0x50] sm:$0xf] %v432
  %561 = vst [vmem:[%s3 + $0x54] sm:$0xf] %v433
  %562 = vst [vmem:[%s3 + $0x58] sm:$0xf] %v434
  %563 = vst [vmem:[%s3 + $0x5c] sm:$0xf] %v435
  %564 = vst [vmem:[%s3 + $0x60] sm:$0xf] %v436
  %565 = vst [vmem:[%s3 + $0x64] sm:$0xf] %v437
  %566 = vst [vmem:[%s3 + $0x68] sm:$0xf] %v438
  %567 = vst [vmem:[%s3 + $0x6c] sm:$0xf] %v439
  %568 = vst [vmem:[%s3 + $0x70] sm:$0xf] %v440
  %569 = vst [vmem:[%s3 + $0x74] sm:$0xf] %v441
  %570 = vst [vmem:[%s3 + $0x78] sm:$0xf] %v442
  %571 = vst [vmem:[%s3 + $0x7c] sm:$0xf] %v443
  %572 = vst [vmem:[%s3 + $0x80] sm:$0xf] %v444
  %573 = vst [vmem:[%s3 + $0x84] sm:$0xf] %v445
  %574 = vst [vmem:[%s3 + $0x88] sm:$0xf] %v446
  %575 = vst [vmem:[%s3 + $0x8c] sm:$0xf] %v447
  %576 = vst [vmem:[%s3 + $0x90] sm:$0xf] %v448
  %577 = vst [vmem:[%s3 + $0x94] sm:$0xf] %v449
  %578 = vst [vmem:[%s3 + $0x98] sm:$0xf] %v450
  %579 = vst [vmem:[%s3 + $0x9c] sm:$0xf] %v451
  %580 = vst [vmem:[%s3 + $0xa0] sm:$0xf] %v452
  %581 = vst [vmem:[%s3 + $0xa4] sm:$0xf] %v453
  %582 = vst [vmem:[%s3 + $0xa8] sm:$0xf] %v454
  %583 = vst [vmem:[%s3 + $0xac] sm:$0xf] %v455
  %584 = vst [vmem:[%s3 + $0xb0] sm:$0xf] %v456
  %585 = vst [vmem:[%s3 + $0xb4] sm:$0xf] %v457
  %586 = vst [vmem:[%s3 + $0xb8] sm:$0xf] %v458
  %587 = vst [vmem:[%s3 + $0xbc] sm:$0xf] %v459
  %588 = vst [vmem:[%s3 + $0xc0] sm:$0xf] %v460
  %589 = vst [vmem:[%s3 + $0xc4] sm:$0xf] %v461
  %590 = vst [vmem:[%s3 + $0xc8] sm:$0xf] %v462
  %591 = vst [vmem:[%s3 + $0xcc] sm:$0xf] %v463
  %592 = vst [vmem:[%s3 + $0xd0] sm:$0xf] %v464
  %593 = vst [vmem:[%s3 + $0xd4] sm:$0xf] %v465
  %594 = vst [vmem:[%s3 + $0xd8] sm:$0xf] %v466
  %595 = vst [vmem:[%s3 + $0xdc] sm:$0xf] %v467
  %596 = vst [vmem:[%s3 + $0xe0] sm:$0xf] %v468
  %597 = vst [vmem:[%s3 + $0xe4] sm:$0xf] %v469
  %598 = vst [vmem:[%s3 + $0xe8] sm:$0xf] %v470
  %599 = vst [vmem:[%s3 + $0xec] sm:$0xf] %v471
  %600 = vst [vmem:[%s3 + $0xf0] sm:$0xf] %v472
  %601 = vst [vmem:[%s3 + $0xf4] sm:$0xf] %v473
  %602 = vst [vmem:[%s3 + $0xf8] sm:$0xf] %v474
  %603 = vst [vmem:[%s3 + $0xfc] sm:$0xf] %v475
  // Predicated region
  $region14: #{basic_block_forward.5} parent=0 // pred_check
    _
  $region15: #{basic_block_forward.5} parent=0 // pred_check_branch
    %605 = sbr.rel (0) target = $region17
  $region16: #{basic_block_forward.5} parent=0 // pred_region
    _
  $region17: #{basic_block_forward.5} parent=0 // pred_fallthru
    _
  // Predicated region
  $region18: #{basic_block_forward.5} parent=0 // pred_check
    _
  $region19: #{basic_block_forward.5} parent=0 // pred_check_branch
    %607 = sbr.rel (0) target = $region21
  $region20: #{basic_block_forward.5} parent=0 // pred_region
    _
  $region21: #{basic_block_forward.5} parent=0 // pred_fallthru
    _

// kernel: basic_block_forward.4
$region0: #{basic_block_forward.4}
  #allocation0 [shape = 'u32[]', space=smem, size = 0x4, offset = 0x4, fixed_abs, tag = 'smem constant byte address 0x4 - core index']
  #allocation1 [shape = 'u32[144,128]{1,0:T(1,128)}', space=vmem, size = 0x12000, scoped, tag = 'internal scratch']
  %s0 = inlined_call_operand.vmem [shape: bf16[512,36], index: 0, kind: input, shape index: {}]
  %s1 = inlined_call_operand.vmem [shape: bf16[36,128], index: 1, kind: input, shape index: {}]
  %s2 = inlined_call_operand.vmem [shape: bf16[4,128], index: 2, kind: input, shape index: {}]
  %s3 = inlined_call_operand.vmem [shape: f32[512,128], index: 3, kind: output, shape index: {0}]
  %s4 = inlined_call_operand.vmem [shape: f32[512,128], index: 4, kind: output, shape index: {1}]
  %s5 = inlined_call_operand.vmem [shape: f32[1,2,128], index: 5, kind: output, shape index: {2}]
  %s6 = inlined_call_operand.vmem [shape: f32[1,2,128], index: 6, kind: output, shape index: {3}]
  %7 = xla_tuple %s3, %s4, %s5, %s6
  %s8 = sld [smem:[#allocation0]]
  $region46: #{basic_block_forward.4} parent=0
    _
  %s10 = ssub.s32 1, %s8
  %s11 = scalar_select 0, %s10, %s8
  // Predicated region
  $region2: #{basic_block_forward.4} parent=0 // pred_check
    _
  $region3: #{basic_block_forward.4} parent=0 // pred_check_branch
    %13 = sbr.rel (0) target = $region5
  $region4: #{basic_block_forward.4} parent=0 // pred_region
    _
  $region5: #{basic_block_forward.4} parent=0 // pred_fallthru
    _
  // Predicated region
  $region6: #{basic_block_forward.4} parent=0 // pred_check
    _
  $region7: #{basic_block_forward.4} parent=0 // pred_check_branch
    %15 = sbr.rel (0) target = $region9
  $region8: #{basic_block_forward.4} parent=0 // pred_region
    _
  $region9: #{basic_block_forward.4} parent=0 // pred_fallthru
    _
  // Predicated region
  $region10: #{basic_block_forward.4} parent=0 // pred_check
    _
  $region11: #{basic_block_forward.4} parent=0 // pred_check_branch
    %17 = sbr.rel (0) target = $region13
  $region12: #{basic_block_forward.4} parent=0 // pred_region
    _
  $region13: #{basic_block_forward.4} parent=0 // pred_fallthru
    _
  %v19 = vld [vmem:[%s0] sm:$0xf]
  %v20 = vld [vmem:[%s0 + $0x4] sm:$0xf]
  %v21 = vld [vmem:[%s0 + $0x8] sm:$0xf]
  %v22 = vld [vmem:[%s0 + $0xc] sm:$0xf]
  %v23 = vld [vmem:[%s0 + $0x10] sm:$0xf]
  %v24 = vld [vmem:[%s0 + $0x14] sm:$0xf]
  %v25 = vld [vmem:[%s0 + $0x18] sm:$0xf]
  %v26 = vld [vmem:[%s0 + $0x1c] sm:$0xf]
  %v27 = vld [vmem:[%s0 + $0x20] sm:$0xf]
  %v28 = vld [vmem:[%s0 + $0x24] sm:$0xf]
  %v29 = vld [vmem:[%s0 + $0x28] sm:$0xf]
  %v30 = vld [vmem:[%s0 + $0x2c] sm:$0xf]
  %v31 = vld [vmem:[%s0 + $0x30] sm:$0xf]
  %v32 = vld [vmem:[%s0 + $0x34] sm:$0xf]
  %v33 = vld [vmem:[%s0 + $0x38] sm:$0xf]
  %v34 = vld [vmem:[%s0 + $0x3c] sm:$0xf]
  %v35 = vld [vmem:[%s0 + $0x40] sm:$0xf]
  %v36 = vld [vmem:[%s0 + $0x44] sm:$0xf]
  %v37 = vld [vmem:[%s0 + $0x48] sm:$0xf]
  %v38 = vld [vmem:[%s0 + $0x4c] sm:$0xf]
  %v39 = vld [vmem:[%s0 + $0x50] sm:$0xf]
  %v40 = vld [vmem:[%s0 + $0x54] sm:$0xf]
  %v41 = vld [vmem:[%s0 + $0x58] sm:$0xf]
  %v42 = vld [vmem:[%s0 + $0x5c] sm:$0xf]
  %v43 = vld [vmem:[%s0 + $0x60] sm:$0xf]
  %v44 = vld [vmem:[%s0 + $0x64] sm:$0xf]
  %v45 = vld [vmem:[%s0 + $0x68] sm:$0xf]
  %v46 = vld [vmem:[%s0 + $0x6c] sm:$0xf]
  %v47 = vld [vmem:[%s0 + $0x70] sm:$0xf]
  %v48 = vld [vmem:[%s0 + $0x74] sm:$0xf]
  %v49 = vld [vmem:[%s0 + $0x78] sm:$0xf]
  %v50 = vld [vmem:[%s0 + $0x7c] sm:$0xf]
  %v51 = vld [vmem:[%s0 + $0x80] sm:$0xf]
  %v52 = vld [vmem:[%s0 + $0x84] sm:$0xf]
  %v53 = vld [vmem:[%s0 + $0x88] sm:$0xf]
  %v54 = vld [vmem:[%s0 + $0x8c] sm:$0xf]
  %v55 = vld [vmem:[%s0 + $0x90] sm:$0xf]
  %v56 = vld [vmem:[%s0 + $0x94] sm:$0xf]
  %v57 = vld [vmem:[%s0 + $0x98] sm:$0xf]
  %v58 = vld [vmem:[%s0 + $0x9c] sm:$0xf]
  %v59 = vld [vmem:[%s0 + $0xa0] sm:$0xf]
  %v60 = vld [vmem:[%s0 + $0xa4] sm:$0xf]
  %v61 = vld [vmem:[%s0 + $0xa8] sm:$0xf]
  %v62 = vld [vmem:[%s0 + $0xac] sm:$0xf]
  %v63 = vld [vmem:[%s0 + $0xb0] sm:$0xf]
  %v64 = vld [vmem:[%s0 + $0xb4] sm:$0xf]
  %v65 = vld [vmem:[%s0 + $0xb8] sm:$0xf]
  %v66 = vld [vmem:[%s0 + $0xbc] sm:$0xf]
  %v67 = vld [vmem:[%s0 + $0xc0] sm:$0xf]
  %v68 = vld [vmem:[%s0 + $0xc4] sm:$0xf]
  %v69 = vld [vmem:[%s0 + $0xc8] sm:$0xf]
  %v70 = vld [vmem:[%s0 + $0xcc] sm:$0xf]
  %v71 = vld [vmem:[%s0 + $0xd0] sm:$0xf]
  %v72 = vld [vmem:[%s0 + $0xd4] sm:$0xf]
  %v73 = vld [vmem:[%s0 + $0xd8] sm:$0xf]
  %v74 = vld [vmem:[%s0 + $0xdc] sm:$0xf]
  %v75 = vld [vmem:[%s0 + $0xe0] sm:$0xf]
  %v76 = vld [vmem:[%s0 + $0xe4] sm:$0xf]
  %v77 = vld [vmem:[%s0 + $0xe8] sm:$0xf]
  %v78 = vld [vmem:[%s0 + $0xec] sm:$0xf]
  %v79 = vld [vmem:[%s0 + $0xf0] sm:$0xf]
  %v80 = vld [vmem:[%s0 + $0xf4] sm:$0xf]
  %v81 = vld [vmem:[%s0 + $0xf8] sm:$0xf]
  %v82 = vld [vmem:[%s0 + $0xfc] sm:$0xf]
  %v83 = vld [vmem:[%s1] sm:$0xf]
  %v84 = vld [vmem:[%s1 + $0x4] sm:$0xf]
  %v85 = vld [vmem:[%s1 + $0x8] sm:$0xf]
  %v86 = vld [vmem:[%s1 + $0xc] sm:$0xf]
  %v87 = vld [vmem:[%s1 + $0x10] sm:$0x3]
  %v152 = vunpack.c.l.b16 %v19
  %v153 = vunpack.c.l.b16 %v20
  %v154 = vunpack.c.l.b16 %v21
  %v155 = vunpack.c.l.b16 %v22
  %v156 = vunpack.c.l.b16 %v23
  %v157 = vunpack.c.l.b16 %v24
  %v158 = vunpack.c.l.b16 %v25
  %v159 = vunpack.c.l.b16 %v26
  %v160 = vunpack.c.l.b16 %v27
  %v161 = vunpack.c.l.b16 %v28
  %v162 = vunpack.c.l.b16 %v29
  %v163 = vunpack.c.l.b16 %v30
  %v164 = vunpack.c.l.b16 %v31
  %v165 = vunpack.c.l.b16 %v32
  %v166 = vunpack.c.l.b16 %v33
  %v167 = vunpack.c.l.b16 %v34
  %v168 = vunpack.c.l.b16 %v35
  %v169 = vunpack.c.l.b16 %v36
  %v170 = vunpack.c.l.b16 %v37
  %v171 = vunpack.c.l.b16 %v38
  %v172 = vunpack.c.l.b16 %v39
  %v173 = vunpack.c.l.b16 %v40
  %v174 = vunpack.c.l.b16 %v41
  %v175 = vunpack.c.l.b16 %v42
  %v176 = vunpack.c.l.b16 %v43
  %v177 = vunpack.c.l.b16 %v44
  %v178 = vunpack.c.l.b16 %v45
  %v179 = vunpack.c.l.b16 %v46
  %v180 = vunpack.c.l.b16 %v47
  %v181 = vunpack.c.l.b16 %v48
  %v182 = vunpack.c.l.b16 %v49
  %v183 = vunpack.c.l.b16 %v50
  %v184 = vunpack.c.l.b16 %v51
  %v185 = vunpack.c.l.b16 %v52
  %v186 = vunpack.c.l.b16 %v53
  %v187 = vunpack.c.l.b16 %v54
  %v188 = vunpack.c.l.b16 %v55
  %v189 = vunpack.c.l.b16 %v56
  %v190 = vunpack.c.l.b16 %v57
  %v191 = vunpack.c.l.b16 %v58
  %v192 = vunpack.c.l.b16 %v59
  %v193 = vunpack.c.l.b16 %v60
  %v194 = vunpack.c.l.b16 %v61
  %v195 = vunpack.c.l.b16 %v62
  %v196 = vunpack.c.l.b16 %v63
  %v197 = vunpack.c.l.b16 %v64
  %v198 = vunpack.c.l.b16 %v65
  %v199 = vunpack.c.l.b16 %v66
  %v200 = vunpack.c.l.b16 %v67
  %v201 = vunpack.c.l.b16 %v68
  %v202 = vunpack.c.l.b16 %v69
  %v203 = vunpack.c.l.b16 %v70
  %v204 = vunpack.c.l.b16 %v71
  %v205 = vunpack.c.l.b16 %v72
  %v206 = vunpack.c.l.b16 %v73
  %v207 = vunpack.c.l.b16 %v74
  %v208 = vunpack.c.l.b16 %v75
  %v209 = vunpack.c.l.b16 %v76
  %v210 = vunpack.c.l.b16 %v77
  %v211 = vunpack.c.l.b16 %v78
  %v212 = vunpack.c.l.b16 %v79
  %v213 = vunpack.c.l.b16 %v80
  %v214 = vunpack.c.l.b16 %v81
  %v215 = vunpack.c.l.b16 %v82
  %v216 = vpack.c.b16 %v153, %v152
  %v217 = vpack.c.b16 %v155, %v154
  %v218 = vpack.c.b16 %v157, %v156
  %v219 = vpack.c.b16 %v159, %v158
  %v220 = vpack.c.b16 %v161, %v160
  %v221 = vpack.c.b16 %v163, %v162
  %v222 = vpack.c.b16 %v165, %v164
  %v223 = vpack.c.b16 %v167, %v166
  %v224 = vpack.c.b16 %v169, %v168
  %v225 = vpack.c.b16 %v171, %v170
  %v226 = vpack.c.b16 %v173, %v172
  %v227 = vpack.c.b16 %v175, %v174
  %v228 = vpack.c.b16 %v177, %v176
  %v229 = vpack.c.b16 %v179, %v178
  %v230 = vpack.c.b16 %v181, %v180
  %v231 = vpack.c.b16 %v183, %v182
  %v232 = vpack.c.b16 %v185, %v184
  %v233 = vpack.c.b16 %v187, %v186
  %v234 = vpack.c.b16 %v189, %v188
  %v235 = vpack.c.b16 %v191, %v190
  %v236 = vpack.c.b16 %v193, %v192
  %v237 = vpack.c.b16 %v195, %v194
  %v238 = vpack.c.b16 %v197, %v196
  %v239 = vpack.c.b16 %v199, %v198
  %v240 = vpack.c.b16 %v201, %v200
  %v241 = vpack.c.b16 %v203, %v202
  %v242 = vpack.c.b16 %v205, %v204
  %v243 = vpack.c.b16 %v207, %v206
  %v244 = vpack.c.b16 %v209, %v208
  %v245 = vpack.c.b16 %v211, %v210
  %v246 = vpack.c.b16 %v213, %v212
  %v247 = vpack.c.b16 %v215, %v214
  %v253 = vunpack.c.l.b16 %v83
  %v254 = vunpack.c.l.b16 %v84
  %v255 = vunpack.c.l.b16 %v85
  %v256 = vunpack.c.l.b16 %v86
  %v257 = vunpack.c.l.b16 %v87
  %v258 = vpack.c.b16 %v254, %v253
  %v259 = vpack.c.b16 %v256, %v255
  %v260 = vpack.c.b16 %v257, %v257
  %vm263 = vcmask 293888
  %v265 = vsel %vm263, %v216, 0
  %v268 = vsel %vm263, %v217, 0
  %v271 = vsel %vm263, %v218, 0
  %v274 = vsel %vm263, %v219, 0
  %v277 = vsel %vm263, %v220, 0
  %v280 = vsel %vm263, %v221, 0
  %v283 = vsel %vm263, %v222, 0
  %v286 = vsel %vm263, %v223, 0
  %v289 = vsel %vm263, %v224, 0
  %v292 = vsel %vm263, %v225, 0
  %v295 = vsel %vm263, %v226, 0
  %v298 = vsel %vm263, %v227, 0
  %v301 = vsel %vm263, %v228, 0
  %v304 = vsel %vm263, %v229, 0
  %v307 = vsel %vm263, %v230, 0
  %v310 = vsel %vm263, %v231, 0
  %v313 = vsel %vm263, %v232, 0
  %v316 = vsel %vm263, %v233, 0
  %v319 = vsel %vm263, %v234, 0
  %v322 = vsel %vm263, %v235, 0
  %v325 = vsel %vm263, %v236, 0
  %v328 = vsel %vm263, %v237, 0
  %v331 = vsel %vm263, %v238, 0
  %v334 = vsel %vm263, %v239, 0
  %v337 = vsel %vm263, %v240, 0
  %v340 = vsel %vm263, %v241, 0
  %v343 = vsel %vm263, %v242, 0
  %v346 = vsel %vm263, %v243, 0
  %v349 = vsel %vm263, %v244, 0
  %v352 = vsel %vm263, %v245, 0
  %v355 = vsel %vm263, %v246, 0
  %v358 = vsel %vm263, %v247, 0
  %vm360 = vcmask 1041408
  %v362 = vsel %vm360, %v260, 0
  %364 = vmatprep.subr.bf16.mxu0 0
  %365 = vmatpush1.bf16.msra.mxu0 %v258
  %366 = vmatprep.subr.bf16.mxu0 0
  %367 = vmatpush1.bf16.msra.mxu0 %v259
  %368 = vmatprep.subr.bf16.mxu0 0
  %369 = vmatpush1.bf16.msra.mxu0 %v362
  %370 = vmatprep.subr.bf16.mxu0 0
  %371 = vmatpush1.bf16.msra.mxu0 0
  %372 = vmatprep.subr.bf16.mxu0 0
  %373 = vmatpush1.bf16.msra.mxu0 0
  %374 = vmatprep.subr.bf16.mxu0 0
  %375 = vmatpush1.bf16.msra.mxu0 0
  %376 = vmatprep.subr.bf16.mxu0 0
  %377 = vmatpush1.bf16.msra.mxu0 0
  %378 = vmatprep.subr.bf16.mxu0 0
  %379 = vmatpush1.bf16.msra.mxu0 0
  %380 = vmatprep.subr.bf16.mxu0 0
  %381 = vmatpush1.bf16.msra.mxu0 0
  %382 = vmatprep.subr.bf16.mxu0 0
  %383 = vmatpush1.bf16.msra.mxu0 0
  %384 = vmatprep.subr.bf16.mxu0 0
  %385 = vmatpush1.bf16.msra.mxu0 0
  %386 = vmatprep.subr.bf16.mxu0 0
  %387 = vmatpush1.bf16.msra.mxu0 0
  %388 = vmatprep.subr.bf16.mxu0 0
  %389 = vmatpush1.bf16.msra.mxu0 0
  %390 = vmatprep.subr.bf16.mxu0 0
  %391 = vmatpush1.bf16.msra.mxu0 0
  %392 = vmatprep.subr.bf16.mxu0 0
  %393 = vmatpush1.bf16.msra.mxu0 0
  %394 = vmatprep.subr.bf16.mxu0 0
  %395 = vmatpush1.bf16.msra.mxu0 0
  %396 = vmatprep.mubr.bf16.mxu0 0
  %397 = vmatmul.mubr.bf16.gmra.mrb[0].mxu0 %v265
  %v398 = vpop.f32.mrb[0].mxu0
  %v399 = vadd.f32 0.0, %v398
  %v400 = vpop.f32.mrb[0].mxu0
  %v401 = vpop.f32.mrb[0].mxu0
  %v402 = vadd.f32 0.0, %v401
  %v403 = vpop.f32.mrb[0].mxu0
  %404 = vmatprep.mubr.bf16.mxu0 0
  %405 = vmatmul.mubr.bf16.gmra.mrb[0].mxu0 %v268
  %v406 = vpop.f32.mrb[0].mxu0
  %v407 = vadd.f32 0.0, %v406
  %v408 = vpop.f32.mrb[0].mxu0
  %v409 = vpop.f32.mrb[0].mxu0
  %v410 = vadd.f32 0.0, %v409
  %v411 = vpop.f32.mrb[0].mxu0
  %412 = vmatprep.mubr.bf16.mxu0 0
  %413 = vmatmul.mubr.bf16.gmra.mrb[0].mxu0 %v271
  %v414 = vpop.f32.mrb[0].mxu0
  %v415 = vadd.f32 0.0, %v414
  %v416 = vpop.f32.mrb[0].mxu0
  %v417 = vpop.f32.mrb[0].mxu0
  %v418 = vadd.f32 0.0, %v417
  %v419 = vpop.f32.mrb[0].mxu0
  %420 = vmatprep.mubr.bf16.mxu0 0
  %421 = vmatmul.mubr.bf16.gmra.mrb[0].mxu0 %v274
  %v422 = vpop.f32.mrb[0].mxu0
  %v423 = vadd.f32 0.0, %v422
  %v424 = vpop.f32.mrb[0].mxu0
  %v425 = vpop.f32.mrb[0].mxu0
  %v426 = vadd.f32 0.0, %v425
  %v427 = vpop.f32.mrb[0].mxu0
  %428 = vmatprep.mubr.bf16.mxu0 0
  %429 = vmatmul.mubr.bf16.gmra.mrb[0].mxu0 %v277
  %v430 = vpop.f32.mrb[0].mxu0
  %v431 = vadd.f32 0.0, %v430
  %v432 = vpop.f32.mrb[0].mxu0
  %v433 = vpop.f32.mrb[0].mxu0
  %v434 = vadd.f32 0.0, %v433
  %v435 = vpop.f32.mrb[0].mxu0
  %436 = vmatprep.mubr.bf16.mxu0 0
  %437 = vmatmul.mubr.bf16.gmra.mrb[0].mxu0 %v280
  %v438 = vpop.f32.mrb[0].mxu0
  %v439 = vadd.f32 0.0, %v438
  %v440 = vpop.f32.mrb[0].mxu0
  %v441 = vpop.f32.mrb[0].mxu0
  %v442 = vadd.f32 0.0, %v441
  %v443 = vpop.f32.mrb[0].mxu0
  %444 = vmatprep.mubr.bf16.mxu0 0
  %445 = vmatmul.mubr.bf16.gmra.mrb[0].mxu0 %v283
  %v446 = vpop.f32.mrb[0].mxu0
  %v447 = vadd.f32 0.0, %v446
  %v448 = vpop.f32.mrb[0].mxu0
  %v449 = vpop.f32.mrb[0].mxu0
  %v450 = vadd.f32 0.0, %v449
  %v451 = vpop.f32.mrb[0].mxu0
  %452 = vmatprep.mubr.bf16.mxu0 0
  %453 = vmatmul.mubr.bf16.gmra.mrb[0].mxu0 %v286
  %v454 = vpop.f32.mrb[0].mxu0
  %v455 = vadd.f32 0.0, %v454
  %v456 = vpop.f32.mrb[0].mxu0
  %v457 = vpop.f32.mrb[0].mxu0
  %v458 = vadd.f32 0.0, %v457
  %v459 = vpop.f32.mrb[0].mxu0
  %460 = vmatprep.mubr.bf16.mxu0 0
  %461 = vmatmul.mubr.bf16.gmra.mrb[0].mxu0 %v289
  %v462 = vpop.f32.mrb[0].mxu0
  %v463 = vadd.f32 0.0, %v462
  %v464 = vpop.f32.mrb[0].mxu0
  %v465 = vpop.f32.mrb[0].mxu0
  %v466 = vadd.f32 0.0, %v465
  %v467 = vpop.f32.mrb[0].mxu0
  %468 = vmatprep.mubr.bf16.mxu0 0
  %469 = vmatmul.mubr.bf16.gmra.mrb[0].mxu0 %v292
  %v470 = vpop.f32.mrb[0].mxu0
  %v471 = vadd.f32 0.0, %v470
  %v472 = vpop.f32.mrb[0].mxu0
  %v473 = vpop.f32.mrb[0].mxu0
  %v474 = vadd.f32 0.0, %v473
  %v475 = vpop.f32.mrb[0].mxu0
  %476 = vmatprep.mubr.bf16.mxu0 0
  %477 = vmatmul.mubr.bf16.gmra.mrb[0].mxu0 %v295
  %v478 = vpop.f32.mrb[0].mxu0
  %v479 = vadd.f32 0.0, %v478
  %v480 = vpop.f32.mrb[0].mxu0
  %v481 = vpop.f32.mrb[0].mxu0
  %v482 = vadd.f32 0.0, %v481
  %v483 = vpop.f32.mrb[0].mxu0
  %484 = vmatprep.mubr.bf16.mxu0 0
  %485 = vmatmul.mubr.bf16.gmra.mrb[0].mxu0 %v298
  %v486 = vpop.f32.mrb[0].mxu0
  %v487 = vadd.f32 0.0, %v486
  %v488 = vpop.f32.mrb[0].mxu0
  %v489 = vpop.f32.mrb[0].mxu0
  %v490 = vadd.f32 0.0, %v489
  %v491 = vpop.f32.mrb[0].mxu0
  %492 = vmatprep.mubr.bf16.mxu0 0
  %493 = vmatmul.mubr.bf16.gmra.mrb[0].mxu0 %v301
  %v494 = vpop.f32.mrb[0].mxu0
  %v495 = vadd.f32 0.0, %v494
  %v496 = vpop.f32.mrb[0].mxu0
  %v497 = vpop.f32.mrb[0].mxu0
  %v498 = vadd.f32 0.0, %v497
  %v499 = vpop.f32.mrb[0].mxu0
  %500 = vmatprep.mubr.bf16.mxu0 0
  %501 = vmatmul.mubr.bf16.gmra.mrb[0].mxu0 %v304
  %v502 = vpop.f32.mrb[0].mxu0
  %v503 = vadd.f32 0.0, %v502
  %v504 = vpop.f32.mrb[0].mxu0
  %v505 = vpop.f32.mrb[0].mxu0
  %v506 = vadd.f32 0.0, %v505
  %v507 = vpop.f32.mrb[0].mxu0
  %508 = vmatprep.mubr.bf16.mxu0 0
  %509 = vmatmul.mubr.bf16.gmra.mrb[0].mxu0 %v307
  %v510 = vpop.f32.mrb[0].mxu0
  %v511 = vadd.f32 0.0, %v510
  %v512 = vpop.f32.mrb[0].mxu0
  %v513 = vpop.f32.mrb[0].mxu0
  %v514 = vadd.f32 0.0, %v513
  %v515 = vpop.f32.mrb[0].mxu0
  %516 = vmatprep.mubr.bf16.mxu0 0
  %517 = vmatmul.mubr.bf16.gmra.mrb[0].mxu0 %v310
  %v518 = vpop.f32.mrb[0].mxu0
  %v519 = vadd.f32 0.0, %v518
  %v520 = vpop.f32.mrb[0].mxu0
  %v521 = vpop.f32.mrb[0].mxu0
  %v522 = vadd.f32 0.0, %v521
  %v523 = vpop.f32.mrb[0].mxu0
  %524 = vmatprep.mubr.bf16.mxu0 0
  %525 = vmatmul.mubr.bf16.gmra.mrb[0].mxu0 %v313
  %v526 = vpop.f32.mrb[0].mxu0
  %v527 = vadd.f32 0.0, %v526
  %v528 = vpop.f32.mrb[0].mxu0
  %v529 = vpop.f32.mrb[0].mxu0
  %v530 = vadd.f32 0.0, %v529
  %v531 = vpop.f32.mrb[0].mxu0
  %532 = vmatprep.mubr.bf16.mxu0 0
  %533 = vmatmul.mubr.bf16.gmra.mrb[0].mxu0 %v316
  %v534 = vpop.f32.mrb[0].mxu0
  %v535 = vadd.f32 0.0, %v534
  %v536 = vpop.f32.mrb[0].mxu0
  %v537 = vpop.f32.mrb[0].mxu0
  %v538 = vadd.f32 0.0, %v537
  %v539 = vpop.f32.mrb[0].mxu0
  %540 = vmatprep.mubr.bf16.mxu0 0
  %541 = vmatmul.mubr.bf16.gmra.mrb[0].mxu0 %v319
  %v542 = vpop.f32.mrb[0].mxu0
  %v543 = vadd.f32 0.0, %v542
  %v544 = vpop.f32.mrb[0].mxu0
  %v545 = vpop.f32.mrb[0].mxu0
  %v546 = vadd.f32 0.0, %v545
  %v547 = vpop.f32.mrb[0].mxu0
  %548 = vmatprep.mubr.bf16.mxu0 0
  %549 = vmatmul.mubr.bf16.gmra.mrb[0].mxu0 %v322
  %v550 = vpop.f32.mrb[0].mxu0
  %v551 = vadd.f32 0.0, %v550
  %v552 = vpop.f32.mrb[0].mxu0
  %v553 = vpop.f32.mrb[0].mxu0
  %v554 = vadd.f32 0.0, %v553
  %v555 = vpop.f32.mrb[0].mxu0
  %556 = vmatprep.mubr.bf16.mxu0 0
  %557 = vmatmul.mubr.bf16.gmra.mrb[0].mxu0 %v325
  %v558 = vpop.f32.mrb[0].mxu0
  %v559 = vadd.f32 0.0, %v558
  %v560 = vpop.f32.mrb[0].mxu0
  %v561 = vpop.f32.mrb[0].mxu0
  %v562 = vadd.f32 0.0, %v561
  %v563 = vpop.f32.mrb[0].mxu0
  %564 = vmatprep.mubr.bf16.mxu0 0
  %565 = vmatmul.mubr.bf16.gmra.mrb[0].mxu0 %v328
  %v566 = vpop.f32.mrb[0].mxu0
  %v567 = vadd.f32 0.0, %v566
  %v568 = vpop.f32.mrb[0].mxu0
  %v569 = vpop.f32.mrb[0].mxu0
  %v570 = vadd.f32 0.0, %v569
  %v571 = vpop.f32.mrb[0].mxu0
  %572 = vmatprep.mubr.bf16.mxu0 0
  %573 = vmatmul.mubr.bf16.gmra.mrb[0].mxu0 %v331
  %v574 = vpop.f32.mrb[0].mxu0
  %v575 = vadd.f32 0.0, %v574
  %v576 = vpop.f32.mrb[0].mxu0
  %v577 = vpop.f32.mrb[0].mxu0
  %v578 = vadd.f32 0.0, %v577
  %v579 = vpop.f32.mrb[0].mxu0
  %580 = vmatprep.mubr.bf16.mxu0 0
  %581 = vmatmul.mubr.bf16.gmra.mrb[0].mxu0 %v334
  %v582 = vpop.f32.mrb[0].mxu0
  %v583 = vadd.f32 0.0, %v582
  %v584 = vpop.f32.mrb[0].mxu0
  %v585 = vpop.f32.mrb[0].mxu0
  %v586 = vadd.f32 0.0, %v585
  %v587 = vpop.f32.mrb[0].mxu0
  %588 = vmatprep.mubr.bf16.mxu0 0
  %589 = vmatmul.mubr.bf16.gmra.mrb[0].mxu0 %v337
  %v590 = vpop.f32.mrb[0].mxu0
  %v591 = vadd.f32 0.0, %v590
  %v592 = vpop.f32.mrb[0].mxu0
  %v593 = vpop.f32.mrb[0].mxu0
  %v594 = vadd.f32 0.0, %v593
  %v595 = vpop.f32.mrb[0].mxu0
  %596 = vmatprep.mubr.bf16.mxu0 0
  %597 = vmatmul.mubr.bf16.gmra.mrb[0].mxu0 %v340
  %v598 = vpop.f32.mrb[0].mxu0
  %v599 = vadd.f32 0.0, %v598
  %v600 = vpop.f32.mrb[0].mxu0
  %v601 = vpop.f32.mrb[0].mxu0
  %v602 = vadd.f32 0.0, %v601
  %v603 = vpop.f32.mrb[0].mxu0
  %604 = vmatprep.mubr.bf16.mxu0 0
  %605 = vmatmul.mubr.bf16.gmra.mrb[0].mxu0 %v343
  %v606 = vpop.f32.mrb[0].mxu0
  %v607 = vadd.f32 0.0, %v606
  %v608 = vpop.f32.mrb[0].mxu0
  %v609 = vpop.f32.mrb[0].mxu0
  %v610 = vadd.f32 0.0, %v609
  %v611 = vpop.f32.mrb[0].mxu0
  %612 = vmatprep.mubr.bf16.mxu0 0
  %613 = vmatmul.mubr.bf16.gmra.mrb[0].mxu0 %v346
  %v614 = vpop.f32.mrb[0].mxu0
  %v615 = vadd.f32 0.0, %v614
  %v616 = vpop.f32.mrb[0].mxu0
  %v617 = vpop.f32.mrb[0].mxu0
  %v618 = vadd.f32 0.0, %v617
  %v619 = vpop.f32.mrb[0].mxu0
  %620 = vmatprep.mubr.bf16.mxu0 0
  %621 = vmatmul.mubr.bf16.gmra.mrb[0].mxu0 %v349
  %v622 = vpop.f32.mrb[0].mxu0
  %v623 = vadd.f32 0.0, %v622
  %v624 = vpop.f32.mrb[0].mxu0
  %v625 = vpop.f32.mrb[0].mxu0
  %v626 = vadd.f32 0.0, %v625
  %v627 = vpop.f32.mrb[0].mxu0
  %628 = vmatprep.mubr.bf16.mxu0 0
  %629 = vmatmul.mubr.bf16.gmra.mrb[0].mxu0 %v352
  %v630 = vpop.f32.mrb[0].mxu0
  %v631 = vadd.f32 0.0, %v630
  %v632 = vpop.f32.mrb[0].mxu0
  %v633 = vpop.f32.mrb[0].mxu0
  %v634 = vadd.f32 0.0, %v633
  %v635 = vpop.f32.mrb[0].mxu0
  %636 = vmatprep.mubr.bf16.mxu0 0
  %637 = vmatmul.mubr.bf16.gmra.mrb[0].mxu0 %v355
  %v638 = vpop.f32.mrb[0].mxu0
  %v639 = vadd.f32 0.0, %v638
  %v640 = vpop.f32.mrb[0].mxu0
  %v641 = vpop.f32.mrb[0].mxu0
  %v642 = vadd.f32 0.0, %v641
  %v643 = vpop.f32.mrb[0].mxu0
  %644 = vmatprep.mubr.bf16.mxu0 0
  %645 = vmatmul.mubr.bf16.gmra.mrb[0].mxu0 %v358
  %v646 = vpop.f32.mrb[0].mxu0
  %v647 = vadd.f32 0.0, %v646
  %v648 = vpop.f32.mrb[0].mxu0
  %v649 = vpop.f32.mrb[0].mxu0
  %v650 = vadd.f32 0.0, %v649
  %v651 = vpop.f32.mrb[0].mxu0
  %652 = vdwg.mxu0
  %653 = vst [vmem:[%s3] sm:$0xff] %v399
  %654 = vst [vmem:[%s3 + $0x8] sm:$0xff] %v402
  %655 = vst [vmem:[%s3 + $0x10] sm:$0xff] %v407
  %656 = vst [vmem:[%s3 + $0x18] sm:$0xff] %v410
  %657 = vst [vmem:[%s3 + $0x20] sm:$0xff] %v415
  %658 = vst [vmem:[%s3 + $0x28] sm:$0xff] %v418
  %659 = vst [vmem:[%s3 + $0x30] sm:$0xff] %v423
  %660 = vst [vmem:[%s3 + $0x38] sm:$0xff] %v426
  %661 = vst [vmem:[%s3 + $0x40] sm:$0xff] %v431
  %662 = vst [vmem:[%s3 + $0x48] sm:$0xff] %v434
  %663 = vst [vmem:[%s3 + $0x50] sm:$0xff] %v439
  %664 = vst [vmem:[%s3 + $0x58] sm:$0xff] %v442
  %665 = vst [vmem:[%s3 + $0x60] sm:$0xff] %v447
  %666 = vst [vmem:[%s3 + $0x68] sm:$0xff] %v450
  %667 = vst [vmem:[%s3 + $0x70] sm:$0xff] %v455
  %668 = vst [vmem:[%s3 + $0x78] sm:$0xff] %v458
  %669 = vst [vmem:[%s3 + $0x80] sm:$0xff] %v463
  %670 = vst [vmem:[%s3 + $0x88] sm:$0xff] %v466
  %671 = vst [vmem:[%s3 + $0x90] sm:$0xff] %v471
  %672 = vst [vmem:[%s3 + $0x98] sm:$0xff] %v474
  %673 = vst [vmem:[%s3 + $0xa0] sm:$0xff] %v479
  %674 = vst [vmem:[%s3 + $0xa8] sm:$0xff] %v482
  %675 = vst [vmem:[%s3 + $0xb0] sm:$0xff] %v487
  %676 = vst [vmem:[%s3 + $0xb8] sm:$0xff] %v490
  %677 = vst [vmem:[%s3 + $0xc0] sm:$0xff] %v495
  %678 = vst [vmem:[%s3 + $0xc8] sm:$0xff] %v498
  %679 = vst [vmem:[%s3 + $0xd0] sm:$0xff] %v503
  %680 = vst [vmem:[%s3 + $0xd8] sm:$0xff] %v506
  %681 = vst [vmem:[%s3 + $0xe0] sm:$0xff] %v511
  %682 = vst [vmem:[%s3 + $0xe8] sm:$0xff] %v514
  %683 = vst [vmem:[%s3 + $0xf0] sm:$0xff] %v519
  %684 = vst [vmem:[%s3 + $0xf8] sm:$0xff] %v522
  %685 = vst [vmem:[%s3 + $0x100] sm:$0xff] %v527
  %686 = vst [vmem:[%s3 + $0x108] sm:$0xff] %v530
  %687 = vst [vmem:[%s3 + $0x110] sm:$0xff] %v535
  %688 = vst [vmem:[%s3 + $0x118] sm:$0xff] %v538
  %689 = vst [vmem:[%s3 + $0x120] sm:$0xff] %v543
  %690 = vst [vmem:[%s3 + $0x128] sm:$0xff] %v546
  %691 = vst [vmem:[%s3 + $0x130] sm:$0xff] %v551
  %692 = vst [vmem:[%s3 + $0x138] sm:$0xff] %v554
  %693 = vst [vmem:[%s3 + $0x140] sm:$0xff] %v559
  %694 = vst [vmem:[%s3 + $0x148] sm:$0xff] %v562
  %695 = vst [vmem:[%s3 + $0x150] sm:$0xff] %v567
  %696 = vst [vmem:[%s3 + $0x158] sm:$0xff] %v570
  %697 = vst [vmem:[%s3 + $0x160] sm:$0xff] %v575
  %698 = vst [vmem:[%s3 + $0x168] sm:$0xff] %v578
  %699 = vst [vmem:[%s3 + $0x170] sm:$0xff] %v583
  %700 = vst [vmem:[%s3 + $0x178] sm:$0xff] %v586
  %701 = vst [vmem:[%s3 + $0x180] sm:$0xff] %v591
  %702 = vst [vmem:[%s3 + $0x188] sm:$0xff] %v594
  %703 = vst [vmem:[%s3 + $0x190] sm:$0xff] %v599
  %704 = vst [vmem:[%s3 + $0x198] sm:$0xff] %v602
  %705 = vst [vmem:[%s3 + $0x1a0] sm:$0xff] %v607
  %706 = vst [vmem:[%s3 + $0x1a8] sm:$0xff] %v610
  %707 = vst [vmem:[%s3 + $0x1b0] sm:$0xff] %v615
  %708 = vst [vmem:[%s3 + $0x1b8] sm:$0xff] %v618
  %709 = vst [vmem:[%s3 + $0x1c0] sm:$0xff] %v623
  %710 = vst [vmem:[%s3 + $0x1c8] sm:$0xff] %v626
  %711 = vst [vmem:[%s3 + $0x1d0] sm:$0xff] %v631
  %712 = vst [vmem:[%s3 + $0x1d8] sm:$0xff] %v634
  %713 = vst [vmem:[%s3 + $0x1e0] sm:$0xff] %v639
  %714 = vst [vmem:[%s3 + $0x1e8] sm:$0xff] %v642
  %715 = vst [vmem:[%s3 + $0x1f0] sm:$0xff] %v647
  %716 = vst [vmem:[%s3 + $0x1f8] sm:$0xff] %v650
  %v717 = vadd.f32 %v399, %v402
  %v718 = vadd.f32 %v717, %v407
  %v719 = vadd.f32 %v718, %v410
  %v720 = vadd.f32 %v719, %v415
  %v721 = vadd.f32 %v720, %v418
  %v722 = vadd.f32 %v721, %v423
  %v723 = vadd.f32 %v722, %v426
  %v724 = vadd.f32 %v723, %v431
  %v725 = vadd.f32 %v724, %v434
  %v726 = vadd.f32 %v725, %v439
  %v727 = vadd.f32 %v726, %v442
  %v728 = vadd.f32 %v727, %v447
  %v729 = vadd.f32 %v728, %v450
  %v730 = vadd.f32 %v729, %v455
  %v731 = vadd.f32 %v730, %v458
  %v732 = vadd.f32 %v731, %v463
  %v733 = vadd.f32 %v732, %v466
  %v734 = vadd.f32 %v733, %v471
  %v735 = vadd.f32 %v734, %v474
  %v736 = vadd.f32 %v735, %v479
  %v737 = vadd.f32 %v736, %v482
  %v738 = vadd.f32 %v737, %v487
  %v739 = vadd.f32 %v738, %v490
  %v740 = vadd.f32 %v739, %v495
  %v741 = vadd.f32 %v740, %v498
  %v742 = vadd.f32 %v741, %v503
  %v743 = vadd.f32 %v742, %v506
  %v744 = vadd.f32 %v743, %v511
  %v745 = vadd.f32 %v744, %v514
  %v746 = vadd.f32 %v745, %v519
  %v747 = vadd.f32 %v746, %v522
  %v748 = vadd.f32 %v747, %v527
  %v749 = vadd.f32 %v748, %v530
  %v750 = vadd.f32 %v749, %v535
  %v751 = vadd.f32 %v750, %v538
  %v752 = vadd.f32 %v751, %v543
  %v753 = vadd.f32 %v752, %v546
  %v754 = vadd.f32 %v753, %v551
  %v755 = vadd.f32 %v754, %v554
  %v756 = vadd.f32 %v755, %v559
  %v757 = vadd.f32 %v756, %v562
  %v758 = vadd.f32 %v757, %v567
  %v759 = vadd.f32 %v758, %v570
  %v760 = vadd.f32 %v759, %v575
  %v761 = vadd.f32 %v760, %v578
  %v762 = vadd.f32 %v761, %v583
  %v763 = vadd.f32 %v762, %v586
  %v764 = vadd.f32 %v763, %v591
  %v765 = vadd.f32 %v764, %v594
  %v766 = vadd.f32 %v765, %v599
  %v767 = vadd.f32 %v766, %v602
  %v768 = vadd.f32 %v767, %v607
  %v769 = vadd.f32 %v768, %v610
  %v770 = vadd.f32 %v769, %v615
  %v771 = vadd.f32 %v770, %v618
  %v772 = vadd.f32 %v771, %v623
  %v773 = vadd.f32 %v772, %v626
  %v774 = vadd.f32 %v773, %v631
  %v775 = vadd.f32 %v774, %v634
  %v776 = vadd.f32 %v775, %v639
  %v777 = vadd.f32 %v776, %v642
  %v778 = vadd.f32 %v777, %v647
  %v779 = vadd.f32 %v778, %v650
  %v780 = vrot.slane %v779, 4
  %v781 = vadd.f32 %v779, %v780
  %v782 = vrot.slane %v781, 2
  %v783 = vadd.f32 %v781, %v782
  %v784 = vrot.slane %v783, 1
  %v785 = vadd.f32 %v783, %v784
  %786 = vst [vmem:[%s5] sm:$0x1] %v785
  %v787 = vmul.f32 %v399, %v399
  %v788 = vmul.f32 %v402, %v402
  %v789 = vmul.f32 %v407, %v407
  %v790 = vmul.f32 %v410, %v410
  %v791 = vmul.f32 %v415, %v415
  %v792 = vmul.f32 %v418, %v418
  %v793 = vmul.f32 %v423, %v423
  %v794 = vmul.f32 %v426, %v426
  %v795 = vmul.f32 %v431, %v431
  %v796 = vmul.f32 %v434, %v434
  %v797 = vmul.f32 %v439, %v439
  %v798 = vmul.f32 %v442, %v442
  %v799 = vmul.f32 %v447, %v447
  %v800 = vmul.f32 %v450, %v450
  %v801 = vmul.f32 %v455, %v455
  %v802 = vmul.f32 %v458, %v458
  %v803 = vmul.f32 %v463, %v463
  %v804 = vmul.f32 %v466, %v466
  %v805 = vmul.f32 %v471, %v471
  %v806 = vmul.f32 %v474, %v474
  %v807 = vmul.f32 %v479, %v479
  %v808 = vmul.f32 %v482, %v482
  %v809 = vmul.f32 %v487, %v487
  %v810 = vmul.f32 %v490, %v490
  %v811 = vmul.f32 %v495, %v495
  %v812 = vmul.f32 %v498, %v498
  %v813 = vmul.f32 %v503, %v503
  %v814 = vmul.f32 %v506, %v506
  %v815 = vmul.f32 %v511, %v511
  %v816 = vmul.f32 %v514, %v514
  %v817 = vmul.f32 %v519, %v519
  %v818 = vmul.f32 %v522, %v522
  %v819 = vmul.f32 %v527, %v527
  %v820 = vmul.f32 %v530, %v530
  %v821 = vmul.f32 %v535, %v535
  %v822 = vmul.f32 %v538, %v538
  %v823 = vmul.f32 %v543, %v543
  %v824 = vmul.f32 %v546, %v546
  %v825 = vmul.f32 %v551, %v551
  %v826 = vmul.f32 %v554, %v554
  %v827 = vmul.f32 %v559, %v559
  %v828 = vmul.f32 %v562, %v562
  %v829 = vmul.f32 %v567, %v567
  %v830 = vmul.f32 %v570, %v570
  %v831 = vmul.f32 %v575, %v575
  %v832 = vmul.f32 %v578, %v578
  %v833 = vmul.f32 %v583, %v583
  %v834 = vmul.f32 %v586, %v586
  %v835 = vmul.f32 %v591, %v591
  %v836 = vmul.f32 %v594, %v594
  %v837 = vmul.f32 %v599, %v599
  %v838 = vmul.f32 %v602, %v602
  %v839 = vmul.f32 %v607, %v607
  %v840 = vmul.f32 %v610, %v610
  %v841 = vmul.f32 %v615, %v615
  %v842 = vmul.f32 %v618, %v618
  %v843 = vmul.f32 %v623, %v623
  %v844 = vmul.f32 %v626, %v626
  %v845 = vmul.f32 %v631, %v631
  %v846 = vmul.f32 %v634, %v634
  %v847 = vmul.f32 %v639, %v639
  %v848 = vmul.f32 %v642, %v642
  %v849 = vmul.f32 %v647, %v647
  %v850 = vmul.f32 %v650, %v650
  %v851 = vadd.f32 %v787, %v788
  %v852 = vadd.f32 %v851, %v789
  %v853 = vadd.f32 %v852, %v790
  %v854 = vadd.f32 %v853, %v791
  %v855 = vadd.f32 %v854, %v792
  %v856 = vadd.f32 %v855, %v793
  %v857 = vadd.f32 %v856, %v794
  %v858 = vadd.f32 %v857, %v795
  %v859 = vadd.f32 %v858, %v796
  %v860 = vadd.f32 %v859, %v797
  %v861 = vadd.f32 %v860, %v798
  %v862 = vadd.f32 %v861, %v799
  %v863 = vadd.f32 %v862, %v800
  %v864 = vadd.f32 %v863, %v801
  %v865 = vadd.f32 %v864, %v802
  %v866 = vadd.f32 %v865, %v803
  %v867 = vadd.f32 %v866, %v804
  %v868 = vadd.f32 %v867, %v805
  %v869 = vadd.f32 %v868, %v806
  %v870 = vadd.f32 %v869, %v807
  %v871 = vadd.f32 %v870, %v808
  %v872 = vadd.f32 %v871, %v809
  %v873 = vadd.f32 %v872, %v810
  %v874 = vadd.f32 %v873, %v811
  %v875 = vadd.f32 %v874, %v812
  %v876 = vadd.f32 %v875, %v813
  %v877 = vadd.f32 %v876, %v814
  %v878 = vadd.f32 %v877, %v815
  %v879 = vadd.f32 %v878, %v816
  %v880 = vadd.f32 %v879, %v817
  %v881 = vadd.f32 %v880, %v818
  %v882 = vadd.f32 %v881, %v819
  %v883 = vadd.f32 %v882, %v820
  %v884 = vadd.f32 %v883, %v821
  %v885 = vadd.f32 %v884, %v822
  %v886 = vadd.f32 %v885, %v823
  %v887 = vadd.f32 %v886, %v824
  %v888 = vadd.f32 %v887, %v825
  %v889 = vadd.f32 %v888, %v826
  %v890 = vadd.f32 %v889, %v827
  %v891 = vadd.f32 %v890, %v828
  %v892 = vadd.f32 %v891, %v829
  %v893 = vadd.f32 %v892, %v830
  %v894 = vadd.f32 %v893, %v831
  %v895 = vadd.f32 %v894, %v832
  %v896 = vadd.f32 %v895, %v833
  %v897 = vadd.f32 %v896, %v834
  %v898 = vadd.f32 %v897, %v835
  %v899 = vadd.f32 %v898, %v836
  %v900 = vadd.f32 %v899, %v837
  %v901 = vadd.f32 %v900, %v838
  %v902 = vadd.f32 %v901, %v839
  %v903 = vadd.f32 %v902, %v840
  %v904 = vadd.f32 %v903, %v841
  %v905 = vadd.f32 %v904, %v842
  %v906 = vadd.f32 %v905, %v843
  %v907 = vadd.f32 %v906, %v844
  %v908 = vadd.f32 %v907, %v845
  %v909 = vadd.f32 %v908, %v846
  %v910 = vadd.f32 %v909, %v847
  %v911 = vadd.f32 %v910, %v848
  %v912 = vadd.f32 %v911, %v849
  %v913 = vadd.f32 %v912, %v850
  %v914 = vrot.slane %v913, 4
  %v915 = vadd.f32 %v913, %v914
  %v916 = vrot.slane %v915, 2
  %v917 = vadd.f32 %v915, %v916
  %v918 = vrot.slane %v917, 1
  %v919 = vadd.f32 %v917, %v918
  %920 = vst [vmem:[%s5 + $0x1] sm:$0x1] %v919
  %v921 = vld [vmem:[%s2] sm:$0x3]
  %vm922 = vcmask 31744
  %v923 = vsel %vm922, %v216, 0
  %v925 = vsel %vm922, %v217, 0
  %v927 = vsel %vm922, %v218, 0
  %v929 = vsel %vm922, %v219, 0
  %v931 = vsel %vm922, %v220, 0
  %v933 = vsel %vm922, %v221, 0
  %v935 = vsel %vm922, %v222, 0
  %v937 = vsel %vm922, %v223, 0
  %v939 = vsel %vm922, %v224, 0
  %v941 = vsel %vm922, %v225, 0
  %v943 = vsel %vm922, %v226, 0
  %v945 = vsel %vm922, %v227, 0
  %v947 = vsel %vm922, %v228, 0
  %v949 = vsel %vm922, %v229, 0
  %v951 = vsel %vm922, %v230, 0
  %v953 = vsel %vm922, %v231, 0
  %v955 = vsel %vm922, %v232, 0
  %v957 = vsel %vm922, %v233, 0
  %v959 = vsel %vm922, %v234, 0
  %v961 = vsel %vm922, %v235, 0
  %v963 = vsel %vm922, %v236, 0
  %v965 = vsel %vm922, %v237, 0
  %v967 = vsel %vm922, %v238, 0
  %v969 = vsel %vm922, %v239, 0
  %v971 = vsel %vm922, %v240, 0
  %v973 = vsel %vm922, %v241, 0
  %v975 = vsel %vm922, %v242, 0
  %v977 = vsel %vm922, %v243, 0
  %v979 = vsel %vm922, %v244, 0
  %v981 = vsel %vm922, %v245, 0
  %v983 = vsel %vm922, %v246, 0
  %v985 = vsel %vm922, %v247, 0
  %v988 = vsel %vm360, %v921, 0
  %990 = vmatprep.subr.bf16.mxu0 0
  %991 = vmatpush1.bf16.msra.mxu0 %v988
  %992 = vmatprep.subr.bf16.mxu0 0
  %993 = vmatpush1.bf16.msra.mxu0 0
  %994 = vmatprep.subr.bf16.mxu0 0
  %995 = vmatpush1.bf16.msra.mxu0 0
  %996 = vmatprep.subr.bf16.mxu0 0
  %997 = vmatpush1.bf16.msra.mxu0 0
  %998 = vmatprep.subr.bf16.mxu0 0
  %999 = vmatpush1.bf16.msra.mxu0 0
  %1000 = vmatprep.subr.bf16.mxu0 0
  %1001 = vmatpush1.bf16.msra.mxu0 0
  %1002 = vmatprep.subr.bf16.mxu0 0
  %1003 = vmatpush1.bf16.msra.mxu0 0
  %1004 = vmatprep.subr.bf16.mxu0 0
  %1005 = vmatpush1.bf16.msra.mxu0 0
  %1006 = vmatprep.subr.bf16.mxu0 0
  %1007 = vmatpush1.bf16.msra.mxu0 0
  %1008 = vmatprep.subr.bf16.mxu0 0
  %1009 = vmatpush1.bf16.msra.mxu0 0
  %1010 = vmatprep.subr.bf16.mxu0 0
  %1011 = vmatpush1.bf16.msra.mxu0 0
  %1012 = vmatprep.subr.bf16.mxu0 0
  %1013 = vmatpush1.bf16.msra.mxu0 0
  %1014 = vmatprep.subr.bf16.mxu0 0
  %1015 = vmatpush1.bf16.msra.mxu0 0
  %1016 = vmatprep.subr.bf16.mxu0 0
  %1017 = vmatpush1.bf16.msra.mxu0 0
  %1018 = vmatprep.subr.bf16.mxu0 0
  %1019 = vmatpush1.bf16.msra.mxu0 0
  %1020 = vmatprep.subr.bf16.mxu0 0
  %1021 = vmatpush1.bf16.msra.mxu0 0
  %1022 = vmatprep.mubr.bf16.mxu0 0
  %1023 = vmatmul.mubr.bf16.gmra.mrb[0].mxu0 %v923
  %v1024 = vpop.f32.mrb[0].mxu0
  %v1025 = vadd.f32 0.0, %v1024
  %v1026 = vpop.f32.mrb[0].mxu0
  %v1027 = vpop.f32.mrb[0].mxu0
  %v1028 = vadd.f32 0.0, %v1027
  %v1029 = vpop.f32.mrb[0].mxu0
  %1030 = vmatprep.mubr.bf16.mxu0 0
  %1031 = vmatmul.mubr.bf16.gmra.mrb[0].mxu0 %v925
  %v1032 = vpop.f32.mrb[0].mxu0
  %v1033 = vadd.f32 0.0, %v1032
  %v1034 = vpop.f32.mrb[0].mxu0
  %v1035 = vpop.f32.mrb[0].mxu0
  %v1036 = vadd.f32 0.0, %v1035
  %v1037 = vpop.f32.mrb[0].mxu0
  %1038 = vmatprep.mubr.bf16.mxu0 0
  %1039 = vmatmul.mubr.bf16.gmra.mrb[0].mxu0 %v927
  %v1040 = vpop.f32.mrb[0].mxu0
  %v1041 = vadd.f32 0.0, %v1040
  %v1042 = vpop.f32.mrb[0].mxu0
  %v1043 = vpop.f32.mrb[0].mxu0
  %v1044 = vadd.f32 0.0, %v1043
  %v1045 = vpop.f32.mrb[0].mxu0
  %1046 = vmatprep.mubr.bf16.mxu0 0
  %1047 = vmatmul.mubr.bf16.gmra.mrb[0].mxu0 %v929
  %v1048 = vpop.f32.mrb[0].mxu0
  %v1049 = vadd.f32 0.0, %v1048
  %v1050 = vpop.f32.mrb[0].mxu0
  %v1051 = vpop.f32.mrb[0].mxu0
  %v1052 = vadd.f32 0.0, %v1051
  %v1053 = vpop.f32.mrb[0].mxu0
  %1054 = vmatprep.mubr.bf16.mxu0 0
  %1055 = vmatmul.mubr.bf16.gmra.mrb[0].mxu0 %v931
  %v1056 = vpop.f32.mrb[0].mxu0
  %v1057 = vadd.f32 0.0, %v1056
  %v1058 = vpop.f32.mrb[0].mxu0
  %v1059 = vpop.f32.mrb[0].mxu0
  %v1060 = vadd.f32 0.0, %v1059
  %v1061 = vpop.f32.mrb[0].mxu0
  %1062 = vmatprep.mubr.bf16.mxu0 0
  %1063 = vmatmul.mubr.bf16.gmra.mrb[0].mxu0 %v933
  %v1064 = vpop.f32.mrb[0].mxu0
  %v1065 = vadd.f32 0.0, %v1064
  %v1066 = vpop.f32.mrb[0].mxu0
  %v1067 = vpop.f32.mrb[0].mxu0
  %v1068 = vadd.f32 0.0, %v1067
  %v1069 = vpop.f32.mrb[0].mxu0
  %1070 = vmatprep.mubr.bf16.mxu0 0
  %1071 = vmatmul.mubr.bf16.gmra.mrb[0].mxu0 %v935
  %v1072 = vpop.f32.mrb[0].mxu0
  %v1073 = vadd.f32 0.0, %v1072
  %v1074 = vpop.f32.mrb[0].mxu0
  %v1075 = vpop.f32.mrb[0].mxu0
  %v1076 = vadd.f32 0.0, %v1075
  %v1077 = vpop.f32.mrb[0].mxu0
  %1078 = vmatprep.mubr.bf16.mxu0 0
  %1079 = vmatmul.mubr.bf16.gmra.mrb[0].mxu0 %v937
  %v1080 = vpop.f32.mrb[0].mxu0
  %v1081 = vadd.f32 0.0, %v1080
  %v1082 = vpop.f32.mrb[0].mxu0
  %v1083 = vpop.f32.mrb[0].mxu0
  %v1084 = vadd.f32 0.0, %v1083
  %v1085 = vpop.f32.mrb[0].mxu0
  %1086 = vmatprep.mubr.bf16.mxu0 0
  %1087 = vmatmul.mubr.bf16.gmra.mrb[0].mxu0 %v939
  %v1088 = vpop.f32.mrb[0].mxu0
  %v1089 = vadd.f32 0.0, %v1088
  %v1090 = vpop.f32.mrb[0].mxu0
  %v1091 = vpop.f32.mrb[0].mxu0
  %v1092 = vadd.f32 0.0, %v1091
  %v1093 = vpop.f32.mrb[0].mxu0
  %1094 = vmatprep.mubr.bf16.mxu0 0
  %1095 = vmatmul.mubr.bf16.gmra.mrb[0].mxu0 %v941
  %v1096 = vpop.f32.mrb[0].mxu0
  %v1097 = vadd.f32 0.0, %v1096
  %v1098 = vpop.f32.mrb[0].mxu0
  %v1099 = vpop.f32.mrb[0].mxu0
  %v1100 = vadd.f32 0.0, %v1099
  %v1101 = vpop.f32.mrb[0].mxu0
  %1102 = vmatprep.mubr.bf16.mxu0 0
  %1103 = vmatmul.mubr.bf16.gmra.mrb[0].mxu0 %v943
  %v1104 = vpop.f32.mrb[0].mxu0
  %v1105 = vadd.f32 0.0, %v1104
  %v1106 = vpop.f32.mrb[0].mxu0
  %v1107 = vpop.f32.mrb[0].mxu0
  %v1108 = vadd.f32 0.0, %v1107
  %v1109 = vpop.f32.mrb[0].mxu0
  %1110 = vmatprep.mubr.bf16.mxu0 0
  %1111 = vmatmul.mubr.bf16.gmra.mrb[0].mxu0 %v945
  %v1112 = vpop.f32.mrb[0].mxu0
  %v1113 = vadd.f32 0.0, %v1112
  %v1114 = vpop.f32.mrb[0].mxu0
  %v1115 = vpop.f32.mrb[0].mxu0
  %v1116 = vadd.f32 0.0, %v1115
  %v1117 = vpop.f32.mrb[0].mxu0
  %1118 = vmatprep.mubr.bf16.mxu0 0
  %1119 = vmatmul.mubr.bf16.gmra.mrb[0].mxu0 %v947
  %v1120 = vpop.f32.mrb[0].mxu0
  %v1121 = vadd.f32 0.0, %v1120
  %v1122 = vpop.f32.mrb[0].mxu0
  %v1123 = vpop.f32.mrb[0].mxu0
  %v1124 = vadd.f32 0.0, %v1123
  %v1125 = vpop.f32.mrb[0].mxu0
  %1126 = vmatprep.mubr.bf16.mxu0 0
  %1127 = vmatmul.mubr.bf16.gmra.mrb[0].mxu0 %v949
  %v1128 = vpop.f32.mrb[0].mxu0
  %v1129 = vadd.f32 0.0, %v1128
  %v1130 = vpop.f32.mrb[0].mxu0
  %v1131 = vpop.f32.mrb[0].mxu0
  %v1132 = vadd.f32 0.0, %v1131
  %v1133 = vpop.f32.mrb[0].mxu0
  %1134 = vmatprep.mubr.bf16.mxu0 0
  %1135 = vmatmul.mubr.bf16.gmra.mrb[0].mxu0 %v951
  %v1136 = vpop.f32.mrb[0].mxu0
  %v1137 = vadd.f32 0.0, %v1136
  %v1138 = vpop.f32.mrb[0].mxu0
  %v1139 = vpop.f32.mrb[0].mxu0
  %v1140 = vadd.f32 0.0, %v1139
  %v1141 = vpop.f32.mrb[0].mxu0
  %1142 = vmatprep.mubr.bf16.mxu0 0
  %1143 = vmatmul.mubr.bf16.gmra.mrb[0].mxu0 %v953
  %v1144 = vpop.f32.mrb[0].mxu0
  %v1145 = vadd.f32 0.0, %v1144
  %v1146 = vpop.f32.mrb[0].mxu0
  %v1147 = vpop.f32.mrb[0].mxu0
  %v1148 = vadd.f32 0.0, %v1147
  %v1149 = vpop.f32.mrb[0].mxu0
  %1150 = vmatprep.mubr.bf16.mxu0 0
  %1151 = vmatmul.mubr.bf16.gmra.mrb[0].mxu0 %v955
  %v1152 = vpop.f32.mrb[0].mxu0
  %v1153 = vadd.f32 0.0, %v1152
  %v1154 = vpop.f32.mrb[0].mxu0
  %v1155 = vpop.f32.mrb[0].mxu0
  %v1156 = vadd.f32 0.0, %v1155
  %v1157 = vpop.f32.mrb[0].mxu0
  %1158 = vmatprep.mubr.bf16.mxu0 0
  %1159 = vmatmul.mubr.bf16.gmra.mrb[0].mxu0 %v957
  %v1160 = vpop.f32.mrb[0].mxu0
  %v1161 = vadd.f32 0.0, %v1160
  %v1162 = vpop.f32.mrb[0].mxu0
  %v1163 = vpop.f32.mrb[0].mxu0
  %v1164 = vadd.f32 0.0, %v1163
  %v1165 = vpop.f32.mrb[0].mxu0
  %1166 = vmatprep.mubr.bf16.mxu0 0
  %1167 = vmatmul.mubr.bf16.gmra.mrb[0].mxu0 %v959
  %v1168 = vpop.f32.mrb[0].mxu0
  %v1169 = vadd.f32 0.0, %v1168
  %v1170 = vpop.f32.mrb[0].mxu0
  %v1171 = vpop.f32.mrb[0].mxu0
  %v1172 = vadd.f32 0.0, %v1171
  %v1173 = vpop.f32.mrb[0].mxu0
  %1174 = vmatprep.mubr.bf16.mxu0 0
  %1175 = vmatmul.mubr.bf16.gmra.mrb[0].mxu0 %v961
  %v1176 = vpop.f32.mrb[0].mxu0
  %v1177 = vadd.f32 0.0, %v1176
  %v1178 = vpop.f32.mrb[0].mxu0
  %v1179 = vpop.f32.mrb[0].mxu0
  %v1180 = vadd.f32 0.0, %v1179
  %v1181 = vpop.f32.mrb[0].mxu0
  %1182 = vmatprep.mubr.bf16.mxu0 0
  %1183 = vmatmul.mubr.bf16.gmra.mrb[0].mxu0 %v963
  %v1184 = vpop.f32.mrb[0].mxu0
  %v1185 = vadd.f32 0.0, %v1184
  %v1186 = vpop.f32.mrb[0].mxu0
  %v1187 = vpop.f32.mrb[0].mxu0
  %v1188 = vadd.f32 0.0, %v1187
  %v1189 = vpop.f32.mrb[0].mxu0
  %1190 = vmatprep.mubr.bf16.mxu0 0
  %1191 = vmatmul.mubr.bf16.gmra.mrb[0].mxu0 %v965
  %v1192 = vpop.f32.mrb[0].mxu0
  %v1193 = vadd.f32 0.0, %v1192
  %v1194 = vpop.f32.mrb[0].mxu0
  %v1195 = vpop.f32.mrb[0].mxu0
  %v1196 = vadd.f32 0.0, %v1195
  %v1197 = vpop.f32.mrb[0].mxu0
  %1198 = vmatprep.mubr.bf16.mxu0 0
  %1199 = vmatmul.mubr.bf16.gmra.mrb[0].mxu0 %v967
  %v1200 = vpop.f32.mrb[0].mxu0
  %v1201 = vadd.f32 0.0, %v1200
  %v1202 = vpop.f32.mrb[0].mxu0
  %v1203 = vpop.f32.mrb[0].mxu0
  %v1204 = vadd.f32 0.0, %v1203
  %v1205 = vpop.f32.mrb[0].mxu0
  %1206 = vmatprep.mubr.bf16.mxu0 0
  %1207 = vmatmul.mubr.bf16.gmra.mrb[0].mxu0 %v969
  %v1208 = vpop.f32.mrb[0].mxu0
  %v1209 = vadd.f32 0.0, %v1208
  %v1210 = vpop.f32.mrb[0].mxu0
  %v1211 = vpop.f32.mrb[0].mxu0
  %v1212 = vadd.f32 0.0, %v1211
  %v1213 = vpop.f32.mrb[0].mxu0
  %1214 = vmatprep.mubr.bf16.mxu0 0
  %1215 = vmatmul.mubr.bf16.gmra.mrb[0].mxu0 %v971
  %v1216 = vpop.f32.mrb[0].mxu0
  %v1217 = vadd.f32 0.0, %v1216
  %v1218 = vpop.f32.mrb[0].mxu0
  %v1219 = vpop.f32.mrb[0].mxu0
  %v1220 = vadd.f32 0.0, %v1219
  %v1221 = vpop.f32.mrb[0].mxu0
  %1222 = vmatprep.mubr.bf16.mxu0 0
  %1223 = vmatmul.mubr.bf16.gmra.mrb[0].mxu0 %v973
  %v1224 = vpop.f32.mrb[0].mxu0
  %v1225 = vadd.f32 0.0, %v1224
  %v1226 = vpop.f32.mrb[0].mxu0
  %v1227 = vpop.f32.mrb[0].mxu0
  %v1228 = vadd.f32 0.0, %v1227
  %v1229 = vpop.f32.mrb[0].mxu0
  %1230 = vmatprep.mubr.bf16.mxu0 0
  %1231 = vmatmul.mubr.bf16.gmra.mrb[0].mxu0 %v975
  %v1232 = vpop.f32.mrb[0].mxu0
  %v1233 = vadd.f32 0.0, %v1232
  %v1234 = vpop.f32.mrb[0].mxu0
  %v1235 = vpop.f32.mrb[0].mxu0
  %v1236 = vadd.f32 0.0, %v1235
  %v1237 = vpop.f32.mrb[0].mxu0
  %1238 = vmatprep.mubr.bf16.mxu0 0
  %1239 = vmatmul.mubr.bf16.gmra.mrb[0].mxu0 %v977
  %v1240 = vpop.f32.mrb[0].mxu0
  %v1241 = vadd.f32 0.0, %v1240
  %v1242 = vpop.f32.mrb[0].mxu0
  %v1243 = vpop.f32.mrb[0].mxu0
  %v1244 = vadd.f32 0.0, %v1243
  %v1245 = vpop.f32.mrb[0].mxu0
  %1246 = vmatprep.mubr.bf16.mxu0 0
  %1247 = vmatmul.mubr.bf16.gmra.mrb[0].mxu0 %v979
  %v1248 = vpop.f32.mrb[0].mxu0
  %v1249 = vadd.f32 0.0, %v1248
  %v1250 = vpop.f32.mrb[0].mxu0
  %v1251 = vpop.f32.mrb[0].mxu0
  %v1252 = vadd.f32 0.0, %v1251
  %v1253 = vpop.f32.mrb[0].mxu0
  %1254 = vmatprep.mubr.bf16.mxu0 0
  %1255 = vmatmul.mubr.bf16.gmra.mrb[0].mxu0 %v981
  %v1256 = vpop.f32.mrb[0].mxu0
  %v1257 = vadd.f32 0.0, %v1256
  %v1258 = vpop.f32.mrb[0].mxu0
  %v1259 = vpop.f32.mrb[0].mxu0
  %v1260 = vadd.f32 0.0, %v1259
  %v1261 = vpop.f32.mrb[0].mxu0
  %1262 = vmatprep.mubr.bf16.mxu0 0
  %1263 = vmatmul.mubr.bf16.gmra.mrb[0].mxu0 %v983
  %v1264 = vpop.f32.mrb[0].mxu0
  %v1265 = vadd.f32 0.0, %v1264
  %v1266 = vpop.f32.mrb[0].mxu0
  %v1267 = vpop.f32.mrb[0].mxu0
  %v1268 = vadd.f32 0.0, %v1267
  %v1269 = vpop.f32.mrb[0].mxu0
  %1270 = vmatprep.mubr.bf16.mxu0 0
  %1271 = vmatmul.mubr.bf16.gmra.mrb[0].mxu0 %v985
  %v1272 = vpop.f32.mrb[0].mxu0
  %v1273 = vadd.f32 0.0, %v1272
  %v1274 = vpop.f32.mrb[0].mxu0
  %v1275 = vpop.f32.mrb[0].mxu0
  %v1276 = vadd.f32 0.0, %v1275
  %v1277 = vpop.f32.mrb[0].mxu0
  %1278 = vdwg.mxu0
  %1279 = vst [vmem:[%s4] sm:$0xff] %v1025
  %1280 = vst [vmem:[%s4 + $0x8] sm:$0xff] %v1028
  %1281 = vst [vmem:[%s4 + $0x10] sm:$0xff] %v1033
  %1282 = vst [vmem:[%s4 + $0x18] sm:$0xff] %v1036
  %1283 = vst [vmem:[%s4 + $0x20] sm:$0xff] %v1041
  %1284 = vst [vmem:[%s4 + $0x28] sm:$0xff] %v1044
  %1285 = vst [vmem:[%s4 + $0x30] sm:$0xff] %v1049
  %1286 = vst [vmem:[%s4 + $0x38] sm:$0xff] %v1052
  %1287 = vst [vmem:[%s4 + $0x40] sm:$0xff] %v1057
  %1288 = vst [vmem:[%s4 + $0x48] sm:$0xff] %v1060
  %1289 = vst [vmem:[%s4 + $0x50] sm:$0xff] %v1065
  %1290 = vst [vmem:[%s4 + $0x58] sm:$0xff] %v1068
  %1291 = vst [vmem:[%s4 + $0x60] sm:$0xff] %v1073
  %1292 = vst [vmem:[%s4 + $0x68] sm:$0xff] %v1076
  %1293 = vst [vmem:[%s4 + $0x70] sm:$0xff] %v1081
  %1294 = vst [vmem:[%s4 + $0x78] sm:$0xff] %v1084
  %1295 = vst [vmem:[%s4 + $0x80] sm:$0xff] %v1089
  %1296 = vst [vmem:[%s4 + $0x88] sm:$0xff] %v1092
  %1297 = vst [vmem:[%s4 + $0x90] sm:$0xff] %v1097
  %1298 = vst [vmem:[%s4 + $0x98] sm:$0xff] %v1100
  %1299 = vst [vmem:[%s4 + $0xa0] sm:$0xff] %v1105
  %1300 = vst [vmem:[%s4 + $0xa8] sm:$0xff] %v1108
  %1301 = vst [vmem:[%s4 + $0xb0] sm:$0xff] %v1113
  %1302 = vst [vmem:[%s4 + $0xb8] sm:$0xff] %v1116
  %1303 = vst [vmem:[%s4 + $0xc0] sm:$0xff] %v1121
  %1304 = vst [vmem:[%s4 + $0xc8] sm:$0xff] %v1124
  %1305 = vst [vmem:[%s4 + $0xd0] sm:$0xff] %v1129
  %1306 = vst [vmem:[%s4 + $0xd8] sm:$0xff] %v1132
  %1307 = vst [vmem:[%s4 + $0xe0] sm:$0xff] %v1137
  %1308 = vst [vmem:[%s4 + $0xe8] sm:$0xff] %v1140
  %1309 = vst [vmem:[%s4 + $0xf0] sm:$0xff] %v1145
  %1310 = vst [vmem:[%s4 + $0xf8] sm:$0xff] %v1148
  %1311 = vst [vmem:[%s4 + $0x100] sm:$0xff] %v1153
  %1312 = vst [vmem:[%s4 + $0x108] sm:$0xff] %v1156
  %1313 = vst [vmem:[%s4 + $0x110] sm:$0xff] %v1161
  %1314 = vst [vmem:[%s4 + $0x118] sm:$0xff] %v1164
  %1315 = vst [vmem:[%s4 + $0x120] sm:$0xff] %v1169
  %1316 = vst [vmem:[%s4 + $0x128] sm:$0xff] %v1172
  %1317 = vst [vmem:[%s4 + $0x130] sm:$0xff] %v1177
  %1318 = vst [vmem:[%s4 + $0x138] sm:$0xff] %v1180
  %1319 = vst [vmem:[%s4 + $0x140] sm:$0xff] %v1185
  %1320 = vst [vmem:[%s4 + $0x148] sm:$0xff] %v1188
  %1321 = vst [vmem:[%s4 + $0x150] sm:$0xff] %v1193
  %1322 = vst [vmem:[%s4 + $0x158] sm:$0xff] %v1196
  %1323 = vst [vmem:[%s4 + $0x160] sm:$0xff] %v1201
  %1324 = vst [vmem:[%s4 + $0x168] sm:$0xff] %v1204
  %1325 = vst [vmem:[%s4 + $0x170] sm:$0xff] %v1209
  %1326 = vst [vmem:[%s4 + $0x178] sm:$0xff] %v1212
  %1327 = vst [vmem:[%s4 + $0x180] sm:$0xff] %v1217
  %1328 = vst [vmem:[%s4 + $0x188] sm:$0xff] %v1220
  %1329 = vst [vmem:[%s4 + $0x190] sm:$0xff] %v1225
  %1330 = vst [vmem:[%s4 + $0x198] sm:$0xff] %v1228
  %1331 = vst [vmem:[%s4 + $0x1a0] sm:$0xff] %v1233
  %1332 = vst [vmem:[%s4 + $0x1a8] sm:$0xff] %v1236
  %1333 = vst [vmem:[%s4 + $0x1b0] sm:$0xff] %v1241
  %1334 = vst [vmem:[%s4 + $0x1b8] sm:$0xff] %v1244
  %1335 = vst [vmem:[%s4 + $0x1c0] sm:$0xff] %v1249
  %1336 = vst [vmem:[%s4 + $0x1c8] sm:$0xff] %v1252
  %1337 = vst [vmem:[%s4 + $0x1d0] sm:$0xff] %v1257
  %1338 = vst [vmem:[%s4 + $0x1d8] sm:$0xff] %v1260
  %1339 = vst [vmem:[%s4 + $0x1e0] sm:$0xff] %v1265
  %1340 = vst [vmem:[%s4 + $0x1e8] sm:$0xff] %v1268
  %1341 = vst [vmem:[%s4 + $0x1f0] sm:$0xff] %v1273
  %1342 = vst [vmem:[%s4 + $0x1f8] sm:$0xff] %v1276
  %v1343 = vadd.f32 %v1025, %v1028
  %v1344 = vadd.f32 %v1343, %v1033
  %v1345 = vadd.f32 %v1344, %v1036
  %v1346 = vadd.f32 %v1345, %v1041
  %v1347 = vadd.f32 %v1346, %v1044
  %v1348 = vadd.f32 %v1347, %v1049
  %v1349 = vadd.f32 %v1348, %v1052
  %v1350 = vadd.f32 %v1349, %v1057
  %v1351 = vadd.f32 %v1350, %v1060
  %v1352 = vadd.f32 %v1351, %v1065
  %v1353 = vadd.f32 %v1352, %v1068
  %v1354 = vadd.f32 %v1353, %v1073
  %v1355 = vadd.f32 %v1354, %v1076
  %v1356 = vadd.f32 %v1355, %v1081
  %v1357 = vadd.f32 %v1356, %v1084
  %v1358 = vadd.f32 %v1357, %v1089
  %v1359 = vadd.f32 %v1358, %v1092
  %v1360 = vadd.f32 %v1359, %v1097
  %v1361 = vadd.f32 %v1360, %v1100
  %v1362 = vadd.f32 %v1361, %v1105
  %v1363 = vadd.f32 %v1362, %v1108
  %v1364 = vadd.f32 %v1363, %v1113
  %v1365 = vadd.f32 %v1364, %v1116
  %v1366 = vadd.f32 %v1365, %v1121
  %v1367 = vadd.f32 %v1366, %v1124
  %v1368 = vadd.f32 %v1367, %v1129
  %v1369 = vadd.f32 %v1368, %v1132
  %v1370 = vadd.f32 %v1369, %v1137
  %v1371 = vadd.f32 %v1370, %v1140
  %v1372 = vadd.f32 %v1371, %v1145
  %v1373 = vadd.f32 %v1372, %v1148
  %v1374 = vadd.f32 %v1373, %v1153
  %v1375 = vadd.f32 %v1374, %v1156
  %v1376 = vadd.f32 %v1375, %v1161
  %v1377 = vadd.f32 %v1376, %v1164
  %v1378 = vadd.f32 %v1377, %v1169
  %v1379 = vadd.f32 %v1378, %v1172
  %v1380 = vadd.f32 %v1379, %v1177
  %v1381 = vadd.f32 %v1380, %v1180
  %v1382 = vadd.f32 %v1381, %v1185
  %v1383 = vadd.f32 %v1382, %v1188
  %v1384 = vadd.f32 %v1383, %v1193
  %v1385 = vadd.f32 %v1384, %v1196
  %v1386 = vadd.f32 %v1385, %v1201
  %v1387 = vadd.f32 %v1386, %v1204
  %v1388 = vadd.f32 %v1387, %v1209
  %v1389 = vadd.f32 %v1388, %v1212
  %v1390 = vadd.f32 %v1389, %v1217
  %v1391 = vadd.f32 %v1390, %v1220
  %v1392 = vadd.f32 %v1391, %v1225
  %v1393 = vadd.f32 %v1392, %v1228
  %v1394 = vadd.f32 %v1393, %v1233
  %v1395 = vadd.f32 %v1394, %v1236
  %v1396 = vadd.f32 %v1395, %v1241
  %v1397 = vadd.f32 %v1396, %v1244
  %v1398 = vadd.f32 %v1397, %v1249
  %v1399 = vadd.f32 %v1398, %v1252
  %v1400 = vadd.f32 %v1399, %v1257
  %v1401 = vadd.f32 %v1400, %v1260
  %v1402 = vadd.f32 %v1401, %v1265
  %v1403 = vadd.f32 %v1402, %v1268
  %v1404 = vadd.f32 %v1403, %v1273
  %v1405 = vadd.f32 %v1404, %v1276
  %v1406 = vrot.slane %v1405, 4
  %v1407 = vadd.f32 %v1405, %v1406
  %v1408 = vrot.slane %v1407, 2
  %v1409 = vadd.f32 %v1407, %v1408
  %v1410 = vrot.slane %v1409, 1
  %v1411 = vadd.f32 %v1409, %v1410
  %1412 = vst [vmem:[%s6] sm:$0x1] %v1411
  %v1413 = vmul.f32 %v1025, %v1025
  %v1414 = vmul.f32 %v1028, %v1028
  %v1415 = vmul.f32 %v1033, %v1033
  %v1416 = vmul.f32 %v1036, %v1036
  %v1417 = vmul.f32 %v1041, %v1041
  %v1418 = vmul.f32 %v1044, %v1044
  %v1419 = vmul.f32 %v1049, %v1049
  %v1420 = vmul.f32 %v1052, %v1052
  %v1421 = vmul.f32 %v1057, %v1057
  %v1422 = vmul.f32 %v1060, %v1060
  %v1423 = vmul.f32 %v1065, %v1065
  %v1424 = vmul.f32 %v1068, %v1068
  %v1425 = vmul.f32 %v1073, %v1073
  %v1426 = vmul.f32 %v1076, %v1076
  %v1427 = vmul.f32 %v1081, %v1081
  %v1428 = vmul.f32 %v1084, %v1084
  %v1429 = vmul.f32 %v1089, %v1089
  %v1430 = vmul.f32 %v1092, %v1092
  %v1431 = vmul.f32 %v1097, %v1097
  %v1432 = vmul.f32 %v1100, %v1100
  %v1433 = vmul.f32 %v1105, %v1105
  %v1434 = vmul.f32 %v1108, %v1108
  %v1435 = vmul.f32 %v1113, %v1113
  %v1436 = vmul.f32 %v1116, %v1116
  %v1437 = vmul.f32 %v1121, %v1121
  %v1438 = vmul.f32 %v1124, %v1124
  %v1439 = vmul.f32 %v1129, %v1129
  %v1440 = vmul.f32 %v1132, %v1132
  %v1441 = vmul.f32 %v1137, %v1137
  %v1442 = vmul.f32 %v1140, %v1140
  %v1443 = vmul.f32 %v1145, %v1145
  %v1444 = vmul.f32 %v1148, %v1148
  %v1445 = vmul.f32 %v1153, %v1153
  %v1446 = vmul.f32 %v1156, %v1156
  %v1447 = vmul.f32 %v1161, %v1161
  %v1448 = vmul.f32 %v1164, %v1164
  %v1449 = vmul.f32 %v1169, %v1169
  %v1450 = vmul.f32 %v1172, %v1172
  %v1451 = vmul.f32 %v1177, %v1177
  %v1452 = vmul.f32 %v1180, %v1180
  %v1453 = vmul.f32 %v1185, %v1185
  %v1454 = vmul.f32 %v1188, %v1188
  %v1455 = vmul.f32 %v1193, %v1193
  %v1456 = vmul.f32 %v1196, %v1196
  %v1457 = vmul.f32 %v1201, %v1201
  %v1458 = vmul.f32 %v1204, %v1204
  %v1459 = vmul.f32 %v1209, %v1209
  %v1460 = vmul.f32 %v1212, %v1212
  %v1461 = vmul.f32 %v1217, %v1217
  %v1462 = vmul.f32 %v1220, %v1220
  %v1463 = vmul.f32 %v1225, %v1225
  %v1464 = vmul.f32 %v1228, %v1228
  %v1465 = vmul.f32 %v1233, %v1233
  %v1466 = vmul.f32 %v1236, %v1236
  %v1467 = vmul.f32 %v1241, %v1241
  %v1468 = vmul.f32 %v1244, %v1244
  %v1469 = vmul.f32 %v1249, %v1249
  %v1470 = vmul.f32 %v1252, %v1252
  %v1471 = vmul.f32 %v1257, %v1257
  %v1472 = vmul.f32 %v1260, %v1260
  %v1473 = vmul.f32 %v1265, %v1265
  %v1474 = vmul.f32 %v1268, %v1268
  %v1475 = vmul.f32 %v1273, %v1273
  %v1476 = vmul.f32 %v1276, %v1276
  %v1477 = vadd.f32 %v1413, %v1414
  %v1478 = vadd.f32 %v1477, %v1415
  %v1479 = vadd.f32 %v1478, %v1416
  %v1480 = vadd.f32 %v1479, %v1417
  %v1481 = vadd.f32 %v1480, %v1418
  %v1482 = vadd.f32 %v1481, %v1419
  %v1483 = vadd.f32 %v1482, %v1420
  %v1484 = vadd.f32 %v1483, %v1421
  %v1485 = vadd.f32 %v1484, %v1422
  %v1486 = vadd.f32 %v1485, %v1423
  %v1487 = vadd.f32 %v1486, %v1424
  %v1488 = vadd.f32 %v1487, %v1425
  %v1489 = vadd.f32 %v1488, %v1426
  %v1490 = vadd.f32 %v1489, %v1427
  %v1491 = vadd.f32 %v1490, %v1428
  %v1492 = vadd.f32 %v1491, %v1429
  %v1493 = vadd.f32 %v1492, %v1430
  %v1494 = vadd.f32 %v1493, %v1431
  %v1495 = vadd.f32 %v1494, %v1432
  %v1496 = vadd.f32 %v1495, %v1433
  %v1497 = vadd.f32 %v1496, %v1434
  %v1498 = vadd.f32 %v1497, %v1435
  %v1499 = vadd.f32 %v1498, %v1436
  %v1500 = vadd.f32 %v1499, %v1437
  %v1501 = vadd.f32 %v1500, %v1438
  %v1502 = vadd.f32 %v1501, %v1439
  %v1503 = vadd.f32 %v1502, %v1440
  %v1504 = vadd.f32 %v1503, %v1441
  %v1505 = vadd.f32 %v1504, %v1442
  %v1506 = vadd.f32 %v1505, %v1443
  %v1507 = vadd.f32 %v1506, %v1444
  %v1508 = vadd.f32 %v1507, %v1445
  %v1509 = vadd.f32 %v1508, %v1446
  %v1510 = vadd.f32 %v1509, %v1447
  %v1511 = vadd.f32 %v1510, %v1448
  %v1512 = vadd.f32 %v1511, %v1449
  %v1513 = vadd.f32 %v1512, %v1450
  %v1514 = vadd.f32 %v1513, %v1451
  %v1515 = vadd.f32 %v1514, %v1452
  %v1516 = vadd.f32 %v1515, %v1453
  %v1517 = vadd.f32 %v1516, %v1454
  %v1518 = vadd.f32 %v1517, %v1455
  %v1519 = vadd.f32 %v1518, %v1456
  %v1520 = vadd.f32 %v1519, %v1457
  %v1521 = vadd.f32 %v1520, %v1458
  %v1522 = vadd.f32 %v1521, %v1459
  %v1523 = vadd.f32 %v1522, %v1460
  %v1524 = vadd.f32 %v1523, %v1461
  %v1525 = vadd.f32 %v1524, %v1462
  %v1526 = vadd.f32 %v1525, %v1463
  %v1527 = vadd.f32 %v1526, %v1464
  %v1528 = vadd.f32 %v1527, %v1465
  %v1529 = vadd.f32 %v1528, %v1466
  %v1530 = vadd.f32 %v1529, %v1467
  %v1531 = vadd.f32 %v1530, %v1468
  %v1532 = vadd.f32 %v1531, %v1469
  %v1533 = vadd.f32 %v1532, %v1470
  %v1534 = vadd.f32 %v1533, %v1471
  %v1535 = vadd.f32 %v1534, %v1472
  %v1536 = vadd.f32 %v1535, %v1473
  %v1537 = vadd.f32 %v1536, %v1474
  %v1538 = vadd.f32 %v1537, %v1475
  %v1539 = vadd.f32 %v1538, %v1476
  %v1540 = vrot.slane %v1539, 4
  %v1541 = vadd.f32 %v1539, %v1540
  %v1542 = vrot.slane %v1541, 2
  %v1543 = vadd.f32 %v1541, %v1542
  %v1544 = vrot.slane %v1543, 1
  %v1545 = vadd.f32 %v1543, %v1544
  %1546 = vst [vmem:[%s6 + $0x1] sm:$0x1] %v1545
  // Predicated region
  $region14: #{basic_block_forward.4} parent=0 // pred_check
    _
  $region15: #{basic_block_forward.4} parent=0 // pred_check_branch
    %1548 = sbr.rel (0) target = $region17
  $region16: #{basic_block_forward.4} parent=0 // pred_region
    _
  $region17: #{basic_block_forward.4} parent=0 // pred_fallthru
    _
  // Predicated region
  $region18: #{basic_block_forward.4} parent=0 // pred_check
    _
  $region19: #{basic_block_forward.4} parent=0 // pred_check_branch
    %1550 = sbr.rel (0) target = $region21
  $region20: #{basic_block_forward.4} parent=0 // pred_region
    _
  $region21: #{basic_block_forward.4} parent=0 // pred_fallthru
    _
  // Predicated region
  $region22: #{basic_block_forward.4} parent=0 // pred_check
    _
  $region23: #{basic_block_forward.4} parent=0 // pred_check_branch
    %1552 = sbr.rel (0) target = $region25
  $region24: #{basic_block_forward.4} parent=0 // pred_region
    _
  $region25: #{basic_block_forward.4} parent=0 // pred_fallthru
    _
  // Predicated region
  $region26: #{basic_block_forward.4} parent=0 // pred_check
    _
  $region27: #{basic_block_forward.4} parent=0 // pred_check_branch
    %1554 = sbr.rel (0) target = $region29
  $region28: #{basic_block_forward.4} parent=0 // pred_region
    _
  $region29: #{basic_block_forward.4} parent=0 // pred_fallthru
    _
  // Predicated region
  $region30: #{basic_block_forward.4} parent=0 // pred_check
    _
  $region31: #{basic_block_forward.4} parent=0 // pred_check_branch
    %1556 = sbr.rel (0) target = $region33
  $region32: #{basic_block_forward.4} parent=0 // pred_region
    _
  $region33: #{basic_block_forward.4} parent=0 // pred_fallthru
    _
  // Predicated region
  $region34: #{basic_block_forward.4} parent=0 // pred_check
    _
  $region35: #{basic_block_forward.4} parent=0 // pred_check_branch
    %1558 = sbr.rel (0) target = $region37
  $region36: #{basic_block_forward.4} parent=0 // pred_region
    _
  $region37: #{basic_block_forward.4} parent=0 // pred_fallthru
    _
  // Predicated region
  $region38: #{basic_block_forward.4} parent=0 // pred_check
    _
  $region39: #{basic_block_forward.4} parent=0 // pred_check_branch
    %1560 = sbr.rel (0) target = $region41
  $region40: #{basic_block_forward.4} parent=0 // pred_region
    _
  $region41: #{basic_block_forward.4} parent=0 // pred_fallthru
    _
  // Predicated region
  $region42: #{basic_block_forward.4} parent=0 // pred_check
    _
  $region43: #{basic_block_forward.4} parent=0 // pred_check_branch
    %1562 = sbr.rel (0) target = $region45
  $region44: #{basic_block_forward.4} parent=0 // pred_region
    _
  $region45: #{basic_block_forward.4} parent=0 // pred_fallthru
    _

// kernel: basic_block_forward.7
$region0: #{basic_block_forward.7}
  #allocation0 [shape = 'u32[]', space=smem, size = 0x4, offset = 0x4, fixed_abs, tag = 'smem constant byte address 0x4 - core index']
  #allocation1 [shape = 'u32[144,128]{1,0:T(1,128)}', space=vmem, size = 0x12000, scoped, tag = 'internal scratch']
  %s0 = inlined_call_operand.vmem [shape: f32[512,128], index: 0, kind: input, shape index: {}]
  %s1 = inlined_call_operand.vmem [shape: f32[512,128], index: 1, kind: input, shape index: {}]
  %s2 = inlined_call_operand.vmem [shape: f32[1,128], index: 2, kind: input, shape index: {}]
  %s3 = inlined_call_operand.vmem [shape: f32[1,128], index: 3, kind: input, shape index: {}]
  %s4 = inlined_call_operand.vmem [shape: f32[1,128], index: 4, kind: input, shape index: {}]
  %s5 = inlined_call_operand.vmem [shape: f32[1,128], index: 5, kind: input, shape index: {}]
  %s6 = inlined_call_operand.vmem [shape: f32[512,128], index: 6, kind: output, shape index: {}]
  %s7 = sld [smem:[#allocation0]]
  $region34: #{basic_block_forward.7} parent=0
    _
  %s9 = ssub.s32 1, %s7
  %s10 = scalar_select 0, %s9, %s7
  // Predicated region
  $region2: #{basic_block_forward.7} parent=0 // pred_check
    _
  $region3: #{basic_block_forward.7} parent=0 // pred_check_branch
    %12 = sbr.rel (0) target = $region5
  $region4: #{basic_block_forward.7} parent=0 // pred_region
    _
  $region5: #{basic_block_forward.7} parent=0 // pred_fallthru
    _
  // Predicated region
  $region6: #{basic_block_forward.7} parent=0 // pred_check
    _
  $region7: #{basic_block_forward.7} parent=0 // pred_check_branch
    %14 = sbr.rel (0) target = $region9
  $region8: #{basic_block_forward.7} parent=0 // pred_region
    _
  $region9: #{basic_block_forward.7} parent=0 // pred_fallthru
    _
  // Predicated region
  $region10: #{basic_block_forward.7} parent=0 // pred_check
    _
  $region11: #{basic_block_forward.7} parent=0 // pred_check_branch
    %16 = sbr.rel (0) target = $region13
  $region12: #{basic_block_forward.7} parent=0 // pred_region
    _
  $region13: #{basic_block_forward.7} parent=0 // pred_fallthru
    _
  // Predicated region
  $region14: #{basic_block_forward.7} parent=0 // pred_check
    _
  $region15: #{basic_block_forward.7} parent=0 // pred_check_branch
    %18 = sbr.rel (0) target = $region17
  $region16: #{basic_block_forward.7} parent=0 // pred_region
    _
  $region17: #{basic_block_forward.7} parent=0 // pred_fallthru
    _
  // Predicated region
  $region18: #{basic_block_forward.7} parent=0 // pred_check
    _
  $region19: #{basic_block_forward.7} parent=0 // pred_check_branch
    %20 = sbr.rel (0) target = $region21
  $region20: #{basic_block_forward.7} parent=0 // pred_region
    _
  $region21: #{basic_block_forward.7} parent=0 // pred_fallthru
    _
  // Predicated region
  $region22: #{basic_block_forward.7} parent=0 // pred_check
    _
  $region23: #{basic_block_forward.7} parent=0 // pred_check_branch
    %22 = sbr.rel (0) target = $region25
  $region24: #{basic_block_forward.7} parent=0 // pred_region
    _
  $region25: #{basic_block_forward.7} parent=0 // pred_fallthru
    _
  %v23 = vld [vmem:[%s0] sm:$0xff]
  %v24 = vld [vmem:[%s0 + $0x8] sm:$0xff]
  %v25 = vld [vmem:[%s0 + $0x10] sm:$0xff]
  %v26 = vld [vmem:[%s0 + $0x18] sm:$0xff]
  %v27 = vld [vmem:[%s0 + $0x20] sm:$0xff]
  %v28 = vld [vmem:[%s0 + $0x28] sm:$0xff]
  %v29 = vld [vmem:[%s0 + $0x30] sm:$0xff]
  %v30 = vld [vmem:[%s0 + $0x38] sm:$0xff]
  %v31 = vld [vmem:[%s0 + $0x40] sm:$0xff]
  %v32 = vld [vmem:[%s0 + $0x48] sm:$0xff]
  %v33 = vld [vmem:[%s0 + $0x50] sm:$0xff]
  %v34 = vld [vmem:[%s0 + $0x58] sm:$0xff]
  %v35 = vld [vmem:[%s0 + $0x60] sm:$0xff]
  %v36 = vld [vmem:[%s0 + $0x68] sm:$0xff]
  %v37 = vld [vmem:[%s0 + $0x70] sm:$0xff]
  %v38 = vld [vmem:[%s0 + $0x78] sm:$0xff]
  %v39 = vld [vmem:[%s0 + $0x80] sm:$0xff]
  %v40 = vld [vmem:[%s0 + $0x88] sm:$0xff]
  %v41 = vld [vmem:[%s0 + $0x90] sm:$0xff]
  %v42 = vld [vmem:[%s0 + $0x98] sm:$0xff]
  %v43 = vld [vmem:[%s0 + $0xa0] sm:$0xff]
  %v44 = vld [vmem:[%s0 + $0xa8] sm:$0xff]
  %v45 = vld [vmem:[%s0 + $0xb0] sm:$0xff]
  %v46 = vld [vmem:[%s0 + $0xb8] sm:$0xff]
  %v47 = vld [vmem:[%s0 + $0xc0] sm:$0xff]
  %v48 = vld [vmem:[%s0 + $0xc8] sm:$0xff]
  %v49 = vld [vmem:[%s0 + $0xd0] sm:$0xff]
  %v50 = vld [vmem:[%s0 + $0xd8] sm:$0xff]
  %v51 = vld [vmem:[%s0 + $0xe0] sm:$0xff]
  %v52 = vld [vmem:[%s0 + $0xe8] sm:$0xff]
  %v53 = vld [vmem:[%s0 + $0xf0] sm:$0xff]
  %v54 = vld [vmem:[%s0 + $0xf8] sm:$0xff]
  %v55 = vld [vmem:[%s0 + $0x100] sm:$0xff]
  %v56 = vld [vmem:[%s0 + $0x108] sm:$0xff]
  %v57 = vld [vmem:[%s0 + $0x110] sm:$0xff]
  %v58 = vld [vmem:[%s0 + $0x118] sm:$0xff]
  %v59 = vld [vmem:[%s0 + $0x120] sm:$0xff]
  %v60 = vld [vmem:[%s0 + $0x128] sm:$0xff]
  %v61 = vld [vmem:[%s0 + $0x130] sm:$0xff]
  %v62 = vld [vmem:[%s0 + $0x138] sm:$0xff]
  %v63 = vld [vmem:[%s0 + $0x140] sm:$0xff]
  %v64 = vld [vmem:[%s0 + $0x148] sm:$0xff]
  %v65 = vld [vmem:[%s0 + $0x150] sm:$0xff]
  %v66 = vld [vmem:[%s0 + $0x158] sm:$0xff]
  %v67 = vld [vmem:[%s0 + $0x160] sm:$0xff]
  %v68 = vld [vmem:[%s0 + $0x168] sm:$0xff]
  %v69 = vld [vmem:[%s0 + $0x170] sm:$0xff]
  %v70 = vld [vmem:[%s0 + $0x178] sm:$0xff]
  %v71 = vld [vmem:[%s0 + $0x180] sm:$0xff]
  %v72 = vld [vmem:[%s0 + $0x188] sm:$0xff]
  %v73 = vld [vmem:[%s0 + $0x190] sm:$0xff]
  %v74 = vld [vmem:[%s0 + $0x198] sm:$0xff]
  %v75 = vld [vmem:[%s0 + $0x1a0] sm:$0xff]
  %v76 = vld [vmem:[%s0 + $0x1a8] sm:$0xff]
  %v77 = vld [vmem:[%s0 + $0x1b0] sm:$0xff]
  %v78 = vld [vmem:[%s0 + $0x1b8] sm:$0xff]
  %v79 = vld [vmem:[%s0 + $0x1c0] sm:$0xff]
  %v80 = vld [vmem:[%s0 + $0x1c8] sm:$0xff]
  %v81 = vld [vmem:[%s0 + $0x1d0] sm:$0xff]
  %v82 = vld [vmem:[%s0 + $0x1d8] sm:$0xff]
  %v83 = vld [vmem:[%s0 + $0x1e0] sm:$0xff]
  %v84 = vld [vmem:[%s0 + $0x1e8] sm:$0xff]
  %v85 = vld [vmem:[%s0 + $0x1f0] sm:$0xff]
  %v86 = vld [vmem:[%s0 + $0x1f8] sm:$0xff]
  %v87 = vld [vmem:[%s2] sm:$0x1]
  %v89 = vlaneseq
  %v90 = vshrl.u32 %v89, 7
  %v91 = vsub.s32 0, %v90
  %v92 = vrot.slane %v87, %v91
  %v94 = vmul.f32 %v23, %v92
  %v95 = vmul.f32 %v24, %v92
  %v96 = vmul.f32 %v25, %v92
  %v97 = vmul.f32 %v26, %v92
  %v98 = vmul.f32 %v27, %v92
  %v99 = vmul.f32 %v28, %v92
  %v100 = vmul.f32 %v29, %v92
  %v101 = vmul.f32 %v30, %v92
  %v102 = vmul.f32 %v31, %v92
  %v103 = vmul.f32 %v32, %v92
  %v104 = vmul.f32 %v33, %v92
  %v105 = vmul.f32 %v34, %v92
  %v106 = vmul.f32 %v35, %v92
  %v107 = vmul.f32 %v36, %v92
  %v108 = vmul.f32 %v37, %v92
  %v109 = vmul.f32 %v38, %v92
  %v110 = vmul.f32 %v39, %v92
  %v111 = vmul.f32 %v40, %v92
  %v112 = vmul.f32 %v41, %v92
  %v113 = vmul.f32 %v42, %v92
  %v114 = vmul.f32 %v43, %v92
  %v115 = vmul.f32 %v44, %v92
  %v116 = vmul.f32 %v45, %v92
  %v117 = vmul.f32 %v46, %v92
  %v118 = vmul.f32 %v47, %v92
  %v119 = vmul.f32 %v48, %v92
  %v120 = vmul.f32 %v49, %v92
  %v121 = vmul.f32 %v50, %v92
  %v122 = vmul.f32 %v51, %v92
  %v123 = vmul.f32 %v52, %v92
  %v124 = vmul.f32 %v53, %v92
  %v125 = vmul.f32 %v54, %v92
  %v126 = vmul.f32 %v55, %v92
  %v127 = vmul.f32 %v56, %v92
  %v128 = vmul.f32 %v57, %v92
  %v129 = vmul.f32 %v58, %v92
  %v130 = vmul.f32 %v59, %v92
  %v131 = vmul.f32 %v60, %v92
  %v132 = vmul.f32 %v61, %v92
  %v133 = vmul.f32 %v62, %v92
  %v134 = vmul.f32 %v63, %v92
  %v135 = vmul.f32 %v64, %v92
  %v136 = vmul.f32 %v65, %v92
  %v137 = vmul.f32 %v66, %v92
  %v138 = vmul.f32 %v67, %v92
  %v139 = vmul.f32 %v68, %v92
  %v140 = vmul.f32 %v69, %v92
  %v141 = vmul.f32 %v70, %v92
  %v142 = vmul.f32 %v71, %v92
  %v143 = vmul.f32 %v72, %v92
  %v144 = vmul.f32 %v73, %v92
  %v145 = vmul.f32 %v74, %v92
  %v146 = vmul.f32 %v75, %v92
  %v147 = vmul.f32 %v76, %v92
  %v148 = vmul.f32 %v77, %v92
  %v149 = vmul.f32 %v78, %v92
  %v150 = vmul.f32 %v79, %v92
  %v151 = vmul.f32 %v80, %v92
  %v152 = vmul.f32 %v81, %v92
  %v153 = vmul.f32 %v82, %v92
  %v154 = vmul.f32 %v83, %v92
  %v155 = vmul.f32 %v84, %v92
  %v156 = vmul.f32 %v85, %v92
  %v157 = vmul.f32 %v86, %v92
  %v158 = vld [vmem:[%s3] sm:$0x1]
  %v160 = vlaneseq
  %v161 = vshrl.u32 %v160, 7
  %v162 = vsub.s32 0, %v161
  %v163 = vrot.slane %v158, %v162
  %v165 = vadd.f32 %v94, %v163
  %v166 = vadd.f32 %v95, %v163
  %v167 = vadd.f32 %v96, %v163
  %v168 = vadd.f32 %v97, %v163
  %v169 = vadd.f32 %v98, %v163
  %v170 = vadd.f32 %v99, %v163
  %v171 = vadd.f32 %v100, %v163
  %v172 = vadd.f32 %v101, %v163
  %v173 = vadd.f32 %v102, %v163
  %v174 = vadd.f32 %v103, %v163
  %v175 = vadd.f32 %v104, %v163
  %v176 = vadd.f32 %v105, %v163
  %v177 = vadd.f32 %v106, %v163
  %v178 = vadd.f32 %v107, %v163
  %v179 = vadd.f32 %v108, %v163
  %v180 = vadd.f32 %v109, %v163
  %v181 = vadd.f32 %v110, %v163
  %v182 = vadd.f32 %v111, %v163
  %v183 = vadd.f32 %v112, %v163
  %v184 = vadd.f32 %v113, %v163
  %v185 = vadd.f32 %v114, %v163
  %v186 = vadd.f32 %v115, %v163
  %v187 = vadd.f32 %v116, %v163
  %v188 = vadd.f32 %v117, %v163
  %v189 = vadd.f32 %v118, %v163
  %v190 = vadd.f32 %v119, %v163
  %v191 = vadd.f32 %v120, %v163
  %v192 = vadd.f32 %v121, %v163
  %v193 = vadd.f32 %v122, %v163
  %v194 = vadd.f32 %v123, %v163
  %v195 = vadd.f32 %v124, %v163
  %v196 = vadd.f32 %v125, %v163
  %v197 = vadd.f32 %v126, %v163
  %v198 = vadd.f32 %v127, %v163
  %v199 = vadd.f32 %v128, %v163
  %v200 = vadd.f32 %v129, %v163
  %v201 = vadd.f32 %v130, %v163
  %v202 = vadd.f32 %v131, %v163
  %v203 = vadd.f32 %v132, %v163
  %v204 = vadd.f32 %v133, %v163
  %v205 = vadd.f32 %v134, %v163
  %v206 = vadd.f32 %v135, %v163
  %v207 = vadd.f32 %v136, %v163
  %v208 = vadd.f32 %v137, %v163
  %v209 = vadd.f32 %v138, %v163
  %v210 = vadd.f32 %v139, %v163
  %v211 = vadd.f32 %v140, %v163
  %v212 = vadd.f32 %v141, %v163
  %v213 = vadd.f32 %v142, %v163
  %v214 = vadd.f32 %v143, %v163
  %v215 = vadd.f32 %v144, %v163
  %v216 = vadd.f32 %v145, %v163
  %v217 = vadd.f32 %v146, %v163
  %v218 = vadd.f32 %v147, %v163
  %v219 = vadd.f32 %v148, %v163
  %v220 = vadd.f32 %v149, %v163
  %v221 = vadd.f32 %v150, %v163
  %v222 = vadd.f32 %v151, %v163
  %v223 = vadd.f32 %v152, %v163
  %v224 = vadd.f32 %v153, %v163
  %v225 = vadd.f32 %v154, %v163
  %v226 = vadd.f32 %v155, %v163
  %v227 = vadd.f32 %v156, %v163
  %v228 = vadd.f32 %v157, %v163
  %v229 = vld [vmem:[%s1] sm:$0xff]
  %v230 = vld [vmem:[%s1 + $0x8] sm:$0xff]
  %v231 = vld [vmem:[%s1 + $0x10] sm:$0xff]
  %v232 = vld [vmem:[%s1 + $0x18] sm:$0xff]
  %v233 = vld [vmem:[%s1 + $0x20] sm:$0xff]
  %v234 = vld [vmem:[%s1 + $0x28] sm:$0xff]
  %v235 = vld [vmem:[%s1 + $0x30] sm:$0xff]
  %v236 = vld [vmem:[%s1 + $0x38] sm:$0xff]
  %v237 = vld [vmem:[%s1 + $0x40] sm:$0xff]
  %v238 = vld [vmem:[%s1 + $0x48] sm:$0xff]
  %v239 = vld [vmem:[%s1 + $0x50] sm:$0xff]
  %v240 = vld [vmem:[%s1 + $0x58] sm:$0xff]
  %v241 = vld [vmem:[%s1 + $0x60] sm:$0xff]
  %v242 = vld [vmem:[%s1 + $0x68] sm:$0xff]
  %v243 = vld [vmem:[%s1 + $0x70] sm:$0xff]
  %v244 = vld [vmem:[%s1 + $0x78] sm:$0xff]
  %v245 = vld [vmem:[%s1 + $0x80] sm:$0xff]
  %v246 = vld [vmem:[%s1 + $0x88] sm:$0xff]
  %v247 = vld [vmem:[%s1 + $0x90] sm:$0xff]
  %v248 = vld [vmem:[%s1 + $0x98] sm:$0xff]
  %v249 = vld [vmem:[%s1 + $0xa0] sm:$0xff]
  %v250 = vld [vmem:[%s1 + $0xa8] sm:$0xff]
  %v251 = vld [vmem:[%s1 + $0xb0] sm:$0xff]
  %v252 = vld [vmem:[%s1 + $0xb8] sm:$0xff]
  %v253 = vld [vmem:[%s1 + $0xc0] sm:$0xff]
  %v254 = vld [vmem:[%s1 + $0xc8] sm:$0xff]
  %v255 = vld [vmem:[%s1 + $0xd0] sm:$0xff]
  %v256 = vld [vmem:[%s1 + $0xd8] sm:$0xff]
  %v257 = vld [vmem:[%s1 + $0xe0] sm:$0xff]
  %v258 = vld [vmem:[%s1 + $0xe8] sm:$0xff]
  %v259 = vld [vmem:[%s1 + $0xf0] sm:$0xff]
  %v260 = vld [vmem:[%s1 + $0xf8] sm:$0xff]
  %v261 = vld [vmem:[%s1 + $0x100] sm:$0xff]
  %v262 = vld [vmem:[%s1 + $0x108] sm:$0xff]
  %v263 = vld [vmem:[%s1 + $0x110] sm:$0xff]
  %v264 = vld [vmem:[%s1 + $0x118] sm:$0xff]
  %v265 = vld [vmem:[%s1 + $0x120] sm:$0xff]
  %v266 = vld [vmem:[%s1 + $0x128] sm:$0xff]
  %v267 = vld [vmem:[%s1 + $0x130] sm:$0xff]
  %v268 = vld [vmem:[%s1 + $0x138] sm:$0xff]
  %v269 = vld [vmem:[%s1 + $0x140] sm:$0xff]
  %v270 = vld [vmem:[%s1 + $0x148] sm:$0xff]
  %v271 = vld [vmem:[%s1 + $0x150] sm:$0xff]
  %v272 = vld [vmem:[%s1 + $0x158] sm:$0xff]
  %v273 = vld [vmem:[%s1 + $0x160] sm:$0xff]
  %v274 = vld [vmem:[%s1 + $0x168] sm:$0xff]
  %v275 = vld [vmem:[%s1 + $0x170] sm:$0xff]
  %v276 = vld [vmem:[%s1 + $0x178] sm:$0xff]
  %v277 = vld [vmem:[%s1 + $0x180] sm:$0xff]
  %v278 = vld [vmem:[%s1 + $0x188] sm:$0xff]
  %v279 = vld [vmem:[%s1 + $0x190] sm:$0xff]
  %v280 = vld [vmem:[%s1 + $0x198] sm:$0xff]
  %v281 = vld [vmem:[%s1 + $0x1a0] sm:$0xff]
  %v282 = vld [vmem:[%s1 + $0x1a8] sm:$0xff]
  %v283 = vld [vmem:[%s1 + $0x1b0] sm:$0xff]
  %v284 = vld [vmem:[%s1 + $0x1b8] sm:$0xff]
  %v285 = vld [vmem:[%s1 + $0x1c0] sm:$0xff]
  %v286 = vld [vmem:[%s1 + $0x1c8] sm:$0xff]
  %v287 = vld [vmem:[%s1 + $0x1d0] sm:$0xff]
  %v288 = vld [vmem:[%s1 + $0x1d8] sm:$0xff]
  %v289 = vld [vmem:[%s1 + $0x1e0] sm:$0xff]
  %v290 = vld [vmem:[%s1 + $0x1e8] sm:$0xff]
  %v291 = vld [vmem:[%s1 + $0x1f0] sm:$0xff]
  %v292 = vld [vmem:[%s1 + $0x1f8] sm:$0xff]
  %v293 = vld [vmem:[%s4] sm:$0x1]
  %v295 = vlaneseq
  %v296 = vshrl.u32 %v295, 7
  %v297 = vsub.s32 0, %v296
  %v298 = vrot.slane %v293, %v297
  %v300 = vmul.f32 %v229, %v298
  %v301 = vmul.f32 %v230, %v298
  %v302 = vmul.f32 %v231, %v298
  %v303 = vmul.f32 %v232, %v298
  %v304 = vmul.f32 %v233, %v298
  %v305 = vmul.f32 %v234, %v298
  %v306 = vmul.f32 %v235, %v298
  %v307 = vmul.f32 %v236, %v298
  %v308 = vmul.f32 %v237, %v298
  %v309 = vmul.f32 %v238, %v298
  %v310 = vmul.f32 %v239, %v298
  %v311 = vmul.f32 %v240, %v298
  %v312 = vmul.f32 %v241, %v298
  %v313 = vmul.f32 %v242, %v298
  %v314 = vmul.f32 %v243, %v298
  %v315 = vmul.f32 %v244, %v298
  %v316 = vmul.f32 %v245, %v298
  %v317 = vmul.f32 %v246, %v298
  %v318 = vmul.f32 %v247, %v298
  %v319 = vmul.f32 %v248, %v298
  %v320 = vmul.f32 %v249, %v298
  %v321 = vmul.f32 %v250, %v298
  %v322 = vmul.f32 %v251, %v298
  %v323 = vmul.f32 %v252, %v298
  %v324 = vmul.f32 %v253, %v298
  %v325 = vmul.f32 %v254, %v298
  %v326 = vmul.f32 %v255, %v298
  %v327 = vmul.f32 %v256, %v298
  %v328 = vmul.f32 %v257, %v298
  %v329 = vmul.f32 %v258, %v298
  %v330 = vmul.f32 %v259, %v298
  %v331 = vmul.f32 %v260, %v298
  %v332 = vmul.f32 %v261, %v298
  %v333 = vmul.f32 %v262, %v298
  %v334 = vmul.f32 %v263, %v298
  %v335 = vmul.f32 %v264, %v298
  %v336 = vmul.f32 %v265, %v298
  %v337 = vmul.f32 %v266, %v298
  %v338 = vmul.f32 %v267, %v298
  %v339 = vmul.f32 %v268, %v298
  %v340 = vmul.f32 %v269, %v298
  %v341 = vmul.f32 %v270, %v298
  %v342 = vmul.f32 %v271, %v298
  %v343 = vmul.f32 %v272, %v298
  %v344 = vmul.f32 %v273, %v298
  %v345 = vmul.f32 %v274, %v298
  %v346 = vmul.f32 %v275, %v298
  %v347 = vmul.f32 %v276, %v298
  %v348 = vmul.f32 %v277, %v298
  %v349 = vmul.f32 %v278, %v298
  %v350 = vmul.f32 %v279, %v298
  %v351 = vmul.f32 %v280, %v298
  %v352 = vmul.f32 %v281, %v298
  %v353 = vmul.f32 %v282, %v298
  %v354 = vmul.f32 %v283, %v298
  %v355 = vmul.f32 %v284, %v298
  %v356 = vmul.f32 %v285, %v298
  %v357 = vmul.f32 %v286, %v298
  %v358 = vmul.f32 %v287, %v298
  %v359 = vmul.f32 %v288, %v298
  %v360 = vmul.f32 %v289, %v298
  %v361 = vmul.f32 %v290, %v298
  %v362 = vmul.f32 %v291, %v298
  %v363 = vmul.f32 %v292, %v298
  %v364 = vld [vmem:[%s5] sm:$0x1]
  %v366 = vlaneseq
  %v367 = vshrl.u32 %v366, 7
  %v368 = vsub.s32 0, %v367
  %v369 = vrot.slane %v364, %v368
  %v371 = vadd.f32 %v300, %v369
  %v372 = vadd.f32 %v301, %v369
  %v373 = vadd.f32 %v302, %v369
  %v374 = vadd.f32 %v303, %v369
  %v375 = vadd.f32 %v304, %v369
  %v376 = vadd.f32 %v305, %v369
  %v377 = vadd.f32 %v306, %v369
  %v378 = vadd.f32 %v307, %v369
  %v379 = vadd.f32 %v308, %v369
  %v380 = vadd.f32 %v309, %v369
  %v381 = vadd.f32 %v310, %v369
  %v382 = vadd.f32 %v311, %v369
  %v383 = vadd.f32 %v312, %v369
  %v384 = vadd.f32 %v313, %v369
  %v385 = vadd.f32 %v314, %v369
  %v386 = vadd.f32 %v315, %v369
  %v387 = vadd.f32 %v316, %v369
  %v388 = vadd.f32 %v317, %v369
  %v389 = vadd.f32 %v318, %v369
  %v390 = vadd.f32 %v319, %v369
  %v391 = vadd.f32 %v320, %v369
  %v392 = vadd.f32 %v321, %v369
  %v393 = vadd.f32 %v322, %v369
  %v394 = vadd.f32 %v323, %v369
  %v395 = vadd.f32 %v324, %v369
  %v396 = vadd.f32 %v325, %v369
  %v397 = vadd.f32 %v326, %v369
  %v398 = vadd.f32 %v327, %v369
  %v399 = vadd.f32 %v328, %v369
  %v400 = vadd.f32 %v329, %v369
  %v401 = vadd.f32 %v330, %v369
  %v402 = vadd.f32 %v331, %v369
  %v403 = vadd.f32 %v332, %v369
  %v404 = vadd.f32 %v333, %v369
  %v405 = vadd.f32 %v334, %v369
  %v406 = vadd.f32 %v335, %v369
  %v407 = vadd.f32 %v336, %v369
  %v408 = vadd.f32 %v337, %v369
  %v409 = vadd.f32 %v338, %v369
  %v410 = vadd.f32 %v339, %v369
  %v411 = vadd.f32 %v340, %v369
  %v412 = vadd.f32 %v341, %v369
  %v413 = vadd.f32 %v342, %v369
  %v414 = vadd.f32 %v343, %v369
  %v415 = vadd.f32 %v344, %v369
  %v416 = vadd.f32 %v345, %v369
  %v417 = vadd.f32 %v346, %v369
  %v418 = vadd.f32 %v347, %v369
  %v419 = vadd.f32 %v348, %v369
  %v420 = vadd.f32 %v349, %v369
  %v421 = vadd.f32 %v350, %v369
  %v422 = vadd.f32 %v351, %v369
  %v423 = vadd.f32 %v352, %v369
  %v424 = vadd.f32 %v353, %v369
  %v425 = vadd.f32 %v354, %v369
  %v426 = vadd.f32 %v355, %v369
  %v427 = vadd.f32 %v356, %v369
  %v428 = vadd.f32 %v357, %v369
  %v429 = vadd.f32 %v358, %v369
  %v430 = vadd.f32 %v359, %v369
  %v431 = vadd.f32 %v360, %v369
  %v432 = vadd.f32 %v361, %v369
  %v433 = vadd.f32 %v362, %v369
  %v434 = vadd.f32 %v363, %v369
  %v435 = vadd.f32 %v165, %v371
  %v436 = vadd.f32 %v166, %v372
  %v437 = vadd.f32 %v167, %v373
  %v438 = vadd.f32 %v168, %v374
  %v439 = vadd.f32 %v169, %v375
  %v440 = vadd.f32 %v170, %v376
  %v441 = vadd.f32 %v171, %v377
  %v442 = vadd.f32 %v172, %v378
  %v443 = vadd.f32 %v173, %v379
  %v444 = vadd.f32 %v174, %v380
  %v445 = vadd.f32 %v175, %v381
  %v446 = vadd.f32 %v176, %v382
  %v447 = vadd.f32 %v177, %v383
  %v448 = vadd.f32 %v178, %v384
  %v449 = vadd.f32 %v179, %v385
  %v450 = vadd.f32 %v180, %v386
  %v451 = vadd.f32 %v181, %v387
  %v452 = vadd.f32 %v182, %v388
  %v453 = vadd.f32 %v183, %v389
  %v454 = vadd.f32 %v184, %v390
  %v455 = vadd.f32 %v185, %v391
  %v456 = vadd.f32 %v186, %v392
  %v457 = vadd.f32 %v187, %v393
  %v458 = vadd.f32 %v188, %v394
  %v459 = vadd.f32 %v189, %v395
  %v460 = vadd.f32 %v190, %v396
  %v461 = vadd.f32 %v191, %v397
  %v462 = vadd.f32 %v192, %v398
  %v463 = vadd.f32 %v193, %v399
  %v464 = vadd.f32 %v194, %v400
  %v465 = vadd.f32 %v195, %v401
  %v466 = vadd.f32 %v196, %v402
  %v467 = vadd.f32 %v197, %v403
  %v468 = vadd.f32 %v198, %v404
  %v469 = vadd.f32 %v199, %v405
  %v470 = vadd.f32 %v200, %v406
  %v471 = vadd.f32 %v201, %v407
  %v472 = vadd.f32 %v202, %v408
  %v473 = vadd.f32 %v203, %v409
  %v474 = vadd.f32 %v204, %v410
  %v475 = vadd.f32 %v205, %v411
  %v476 = vadd.f32 %v206, %v412
  %v477 = vadd.f32 %v207, %v413
  %v478 = vadd.f32 %v208, %v414
  %v479 = vadd.f32 %v209, %v415
  %v480 = vadd.f32 %v210, %v416
  %v481 = vadd.f32 %v211, %v417
  %v482 = vadd.f32 %v212, %v418
  %v483 = vadd.f32 %v213, %v419
  %v484 = vadd.f32 %v214, %v420
  %v485 = vadd.f32 %v215, %v421
  %v486 = vadd.f32 %v216, %v422
  %v487 = vadd.f32 %v217, %v423
  %v488 = vadd.f32 %v218, %v424
  %v489 = vadd.f32 %v219, %v425
  %v490 = vadd.f32 %v220, %v426
  %v491 = vadd.f32 %v221, %v427
  %v492 = vadd.f32 %v222, %v428
  %v493 = vadd.f32 %v223, %v429
  %v494 = vadd.f32 %v224, %v430
  %v495 = vadd.f32 %v225, %v431
  %v496 = vadd.f32 %v226, %v432
  %v497 = vadd.f32 %v227, %v433
  %v498 = vadd.f32 %v228, %v434
  %v499 = vmax.f32 %v435, 0.0
  %v500 = vmax.f32 %v436, 0.0
  %v501 = vmax.f32 %v437, 0.0
  %v502 = vmax.f32 %v438, 0.0
  %v503 = vmax.f32 %v439, 0.0
  %v504 = vmax.f32 %v440, 0.0
  %v505 = vmax.f32 %v441, 0.0
  %v506 = vmax.f32 %v442, 0.0
  %v507 = vmax.f32 %v443, 0.0
  %v508 = vmax.f32 %v444, 0.0
  %v509 = vmax.f32 %v445, 0.0
  %v510 = vmax.f32 %v446, 0.0
  %v511 = vmax.f32 %v447, 0.0
  %v512 = vmax.f32 %v448, 0.0
  %v513 = vmax.f32 %v449, 0.0
  %v514 = vmax.f32 %v450, 0.0
  %v515 = vmax.f32 %v451, 0.0
  %v516 = vmax.f32 %v452, 0.0
  %v517 = vmax.f32 %v453, 0.0
  %v518 = vmax.f32 %v454, 0.0
  %v519 = vmax.f32 %v455, 0.0
  %v520 = vmax.f32 %v456, 0.0
  %v521 = vmax.f32 %v457, 0.0
  %v522 = vmax.f32 %v458, 0.0
  %v523 = vmax.f32 %v459, 0.0
  %v524 = vmax.f32 %v460, 0.0
  %v525 = vmax.f32 %v461, 0.0
  %v526 = vmax.f32 %v462, 0.0
  %v527 = vmax.f32 %v463, 0.0
  %v528 = vmax.f32 %v464, 0.0
  %v529 = vmax.f32 %v465, 0.0
  %v530 = vmax.f32 %v466, 0.0
  %v531 = vmax.f32 %v467, 0.0
  %v532 = vmax.f32 %v468, 0.0
  %v533 = vmax.f32 %v469, 0.0
  %v534 = vmax.f32 %v470, 0.0
  %v535 = vmax.f32 %v471, 0.0
  %v536 = vmax.f32 %v472, 0.0
  %v537 = vmax.f32 %v473, 0.0
  %v538 = vmax.f32 %v474, 0.0
  %v539 = vmax.f32 %v475, 0.0
  %v540 = vmax.f32 %v476, 0.0
  %v541 = vmax.f32 %v477, 0.0
  %v542 = vmax.f32 %v478, 0.0
  %v543 = vmax.f32 %v479, 0.0
  %v544 = vmax.f32 %v480, 0.0
  %v545 = vmax.f32 %v481, 0.0
  %v546 = vmax.f32 %v482, 0.0
  %v547 = vmax.f32 %v483, 0.0
  %v548 = vmax.f32 %v484, 0.0
  %v549 = vmax.f32 %v485, 0.0
  %v550 = vmax.f32 %v486, 0.0
  %v551 = vmax.f32 %v487, 0.0
  %v552 = vmax.f32 %v488, 0.0
  %v553 = vmax.f32 %v489, 0.0
  %v554 = vmax.f32 %v490, 0.0
  %v555 = vmax.f32 %v491, 0.0
  %v556 = vmax.f32 %v492, 0.0
  %v557 = vmax.f32 %v493, 0.0
  %v558 = vmax.f32 %v494, 0.0
  %v559 = vmax.f32 %v495, 0.0
  %v560 = vmax.f32 %v496, 0.0
  %v561 = vmax.f32 %v497, 0.0
  %v562 = vmax.f32 %v498, 0.0
  %563 = vst [vmem:[%s6] sm:$0xff] %v499
  %564 = vst [vmem:[%s6 + $0x8] sm:$0xff] %v500
  %565 = vst [vmem:[%s6 + $0x10] sm:$0xff] %v501
  %566 = vst [vmem:[%s6 + $0x18] sm:$0xff] %v502
  %567 = vst [vmem:[%s6 + $0x20] sm:$0xff] %v503
  %568 = vst [vmem:[%s6 + $0x28] sm:$0xff] %v504
  %569 = vst [vmem:[%s6 + $0x30] sm:$0xff] %v505
  %570 = vst [vmem:[%s6 + $0x38] sm:$0xff] %v506
  %571 = vst [vmem:[%s6 + $0x40] sm:$0xff] %v507
  %572 = vst [vmem:[%s6 + $0x48] sm:$0xff] %v508
  %573 = vst [vmem:[%s6 + $0x50] sm:$0xff] %v509
  %574 = vst [vmem:[%s6 + $0x58] sm:$0xff] %v510
  %575 = vst [vmem:[%s6 + $0x60] sm:$0xff] %v511
  %576 = vst [vmem:[%s6 + $0x68] sm:$0xff] %v512
  %577 = vst [vmem:[%s6 + $0x70] sm:$0xff] %v513
  %578 = vst [vmem:[%s6 + $0x78] sm:$0xff] %v514
  %579 = vst [vmem:[%s6 + $0x80] sm:$0xff] %v515
  %580 = vst [vmem:[%s6 + $0x88] sm:$0xff] %v516
  %581 = vst [vmem:[%s6 + $0x90] sm:$0xff] %v517
  %582 = vst [vmem:[%s6 + $0x98] sm:$0xff] %v518
  %583 = vst [vmem:[%s6 + $0xa0] sm:$0xff] %v519
  %584 = vst [vmem:[%s6 + $0xa8] sm:$0xff] %v520
  %585 = vst [vmem:[%s6 + $0xb0] sm:$0xff] %v521
  %586 = vst [vmem:[%s6 + $0xb8] sm:$0xff] %v522
  %587 = vst [vmem:[%s6 + $0xc0] sm:$0xff] %v523
  %588 = vst [vmem:[%s6 + $0xc8] sm:$0xff] %v524
  %589 = vst [vmem:[%s6 + $0xd0] sm:$0xff] %v525
  %590 = vst [vmem:[%s6 + $0xd8] sm:$0xff] %v526
  %591 = vst [vmem:[%s6 + $0xe0] sm:$0xff] %v527
  %592 = vst [vmem:[%s6 + $0xe8] sm:$0xff] %v528
  %593 = vst [vmem:[%s6 + $0xf0] sm:$0xff] %v529
  %594 = vst [vmem:[%s6 + $0xf8] sm:$0xff] %v530
  %595 = vst [vmem:[%s6 + $0x100] sm:$0xff] %v531
  %596 = vst [vmem:[%s6 + $0x108] sm:$0xff] %v532
  %597 = vst [vmem:[%s6 + $0x110] sm:$0xff] %v533
  %598 = vst [vmem:[%s6 + $0x118] sm:$0xff] %v534
  %599 = vst [vmem:[%s6 + $0x120] sm:$0xff] %v535
  %600 = vst [vmem:[%s6 + $0x128] sm:$0xff] %v536
  %601 = vst [vmem:[%s6 + $0x130] sm:$0xff] %v537
  %602 = vst [vmem:[%s6 + $0x138] sm:$0xff] %v538
  %603 = vst [vmem:[%s6 + $0x140] sm:$0xff] %v539
  %604 = vst [vmem:[%s6 + $0x148] sm:$0xff] %v540
  %605 = vst [vmem:[%s6 + $0x150] sm:$0xff] %v541
  %606 = vst [vmem:[%s6 + $0x158] sm:$0xff] %v542
  %607 = vst [vmem:[%s6 + $0x160] sm:$0xff] %v543
  %608 = vst [vmem:[%s6 + $0x168] sm:$0xff] %v544
  %609 = vst [vmem:[%s6 + $0x170] sm:$0xff] %v545
  %610 = vst [vmem:[%s6 + $0x178] sm:$0xff] %v546
  %611 = vst [vmem:[%s6 + $0x180] sm:$0xff] %v547
  %612 = vst [vmem:[%s6 + $0x188] sm:$0xff] %v548
  %613 = vst [vmem:[%s6 + $0x190] sm:$0xff] %v549
  %614 = vst [vmem:[%s6 + $0x198] sm:$0xff] %v550
  %615 = vst [vmem:[%s6 + $0x1a0] sm:$0xff] %v551
  %616 = vst [vmem:[%s6 + $0x1a8] sm:$0xff] %v552
  %617 = vst [vmem:[%s6 + $0x1b0] sm:$0xff] %v553
  %618 = vst [vmem:[%s6 + $0x1b8] sm:$0xff] %v554
  %619 = vst [vmem:[%s6 + $0x1c0] sm:$0xff] %v555
  %620 = vst [vmem:[%s6 + $0x1c8] sm:$0xff] %v556
  %621 = vst [vmem:[%s6 + $0x1d0] sm:$0xff] %v557
  %622 = vst [vmem:[%s6 + $0x1d8] sm:$0xff] %v558
  %623 = vst [vmem:[%s6 + $0x1e0] sm:$0xff] %v559
  %624 = vst [vmem:[%s6 + $0x1e8] sm:$0xff] %v560
  %625 = vst [vmem:[%s6 + $0x1f0] sm:$0xff] %v561
  %626 = vst [vmem:[%s6 + $0x1f8] sm:$0xff] %v562
  // Predicated region
  $region26: #{basic_block_forward.7} parent=0 // pred_check
    _
  $region27: #{basic_block_forward.7} parent=0 // pred_check_branch
    %628 = sbr.rel (0) target = $region29
  $region28: #{basic_block_forward.7} parent=0 // pred_region
    _
  $region29: #{basic_block_forward.7} parent=0 // pred_fallthru
    _
  // Predicated region
  $region30: #{basic_block_forward.7} parent=0 // pred_check
    _
  $region31: #{basic_block_forward.7} parent=0 // pred_check_branch
    %630 = sbr.rel (0) target = $region33
  $region32: #{basic_block_forward.7} parent=0 // pred_region
    _
  $region33: #{basic_block_forward.7} parent=0 // pred_fallthru
    _

// kernel: basic_block_forward.6
$region0: #{basic_block_forward.6}
  #allocation0 [shape = 'u32[]', space=smem, size = 0x4, offset = 0x4, fixed_abs, tag = 'smem constant byte address 0x4 - core index']
  #allocation1 [shape = 'u32[144,128]{1,0:T(1,128)}', space=vmem, size = 0x12000, scoped, tag = 'internal scratch']
  %s0 = inlined_call_operand.vmem [shape: bf16[512,1152], index: 0, kind: input, shape index: {}]
  %s1 = inlined_call_operand.vmem [shape: bf16[1152,128], index: 1, kind: input, shape index: {}]
  %s2 = inlined_call_operand.vmem [shape: f32[512,128], index: 2, kind: output, shape index: {0}]
  %s3 = inlined_call_operand.vmem [shape: f32[1,2,128], index: 3, kind: output, shape index: {1}]
  %4 = xla_tuple %s2, %s3
  %s5 = sld [smem:[#allocation0]]
  $region26: #{basic_block_forward.6} parent=0
    _
  %s7 = ssub.s32 1, %s5
  %s8 = scalar_select 0, %s7, %s5
  // Predicated region
  $region2: #{basic_block_forward.6} parent=0 // pred_check
    _
  $region3: #{basic_block_forward.6} parent=0 // pred_check_branch
    %10 = sbr.rel (0) target = $region5
  $region4: #{basic_block_forward.6} parent=0 // pred_region
    _
  $region5: #{basic_block_forward.6} parent=0 // pred_fallthru
    _
  // Predicated region
  $region6: #{basic_block_forward.6} parent=0 // pred_check
    _
  $region7: #{basic_block_forward.6} parent=0 // pred_check_branch
    %12 = sbr.rel (0) target = $region9
  $region8: #{basic_block_forward.6} parent=0 // pred_region
    _
  $region9: #{basic_block_forward.6} parent=0 // pred_fallthru
    _
  %v14 = vld [vmem:[%s0] sm:$0xff]
  %v15 = vld [vmem:[%s0 + $0x8] sm:$0xff]
  %v16 = vld [vmem:[%s0 + $0x10] sm:$0xff]
  %v17 = vld [vmem:[%s0 + $0x18] sm:$0xff]
  %v18 = vld [vmem:[%s0 + $0x20] sm:$0xf]
  %v19 = vld [vmem:[%s0 + $0x24] sm:$0xff]
  %v20 = vld [vmem:[%s0 + $0x2c] sm:$0xff]
  %v21 = vld [vmem:[%s0 + $0x34] sm:$0xff]
  %v22 = vld [vmem:[%s0 + $0x3c] sm:$0xff]
  %v23 = vld [vmem:[%s0 + $0x44] sm:$0xf]
  %v24 = vld [vmem:[%s0 + $0x48] sm:$0xff]
  %v25 = vld [vmem:[%s0 + $0x50] sm:$0xff]
  %v26 = vld [vmem:[%s0 + $0x58] sm:$0xff]
  %v27 = vld [vmem:[%s0 + $0x60] sm:$0xff]
  %v28 = vld [vmem:[%s0 + $0x68] sm:$0xf]
  %v29 = vld [vmem:[%s0 + $0x6c] sm:$0xff]
  %v30 = vld [vmem:[%s0 + $0x74] sm:$0xff]
  %v31 = vld [vmem:[%s0 + $0x7c] sm:$0xff]
  %v32 = vld [vmem:[%s0 + $0x84] sm:$0xff]
  %v33 = vld [vmem:[%s0 + $0x8c] sm:$0xf]
  %v34 = vld [vmem:[%s0 + $0x90] sm:$0xff]
  %v35 = vld [vmem:[%s0 + $0x98] sm:$0xff]
  %v36 = vld [vmem:[%s0 + $0xa0] sm:$0xff]
  %v37 = vld [vmem:[%s0 + $0xa8] sm:$0xff]
  %v38 = vld [vmem:[%s0 + $0xb0] sm:$0xf]
  %v39 = vld [vmem:[%s0 + $0xb4] sm:$0xff]
  %v40 = vld [vmem:[%s0 + $0xbc] sm:$0xff]
  %v41 = vld [vmem:[%s0 + $0xc4] sm:$0xff]
  %v42 = vld [vmem:[%s0 + $0xcc] sm:$0xff]
  %v43 = vld [vmem:[%s0 + $0xd4] sm:$0xf]
  %v44 = vld [vmem:[%s0 + $0xd8] sm:$0xff]
  %v45 = vld [vmem:[%s0 + $0xe0] sm:$0xff]
  %v46 = vld [vmem:[%s0 + $0xe8] sm:$0xff]
  %v47 = vld [vmem:[%s0 + $0xf0] sm:$0xff]
  %v48 = vld [vmem:[%s0 + $0xf8] sm:$0xf]
  %v49 = vld [vmem:[%s0 + $0xfc] sm:$0xff]
  %v50 = vld [vmem:[%s0 + $0x104] sm:$0xff]
  %v51 = vld [vmem:[%s0 + $0x10c] sm:$0xff]
  %v52 = vld [vmem:[%s0 + $0x114] sm:$0xff]
  %v53 = vld [vmem:[%s0 + $0x11c] sm:$0xf]
  %v54 = vld [vmem:[%s0 + $0x120] sm:$0xff]
  %v55 = vld [vmem:[%s0 + $0x128] sm:$0xff]
  %v56 = vld [vmem:[%s0 + $0x130] sm:$0xff]
  %v57 = vld [vmem:[%s0 + $0x138] sm:$0xff]
  %v58 = vld [vmem:[%s0 + $0x140] sm:$0xf]
  %v59 = vld [vmem:[%s0 + $0x144] sm:$0xff]
  %v60 = vld [vmem:[%s0 + $0x14c] sm:$0xff]
  %v61 = vld [vmem:[%s0 + $0x154] sm:$0xff]
  %v62 = vld [vmem:[%s0 + $0x15c] sm:$0xff]
  %v63 = vld [vmem:[%s0 + $0x164] sm:$0xf]
  %v64 = vld [vmem:[%s0 + $0x168] sm:$0xff]
  %v65 = vld [vmem:[%s0 + $0x170] sm:$0xff]
  %v66 = vld [vmem:[%s0 + $0x178] sm:$0xff]
  %v67 = vld [vmem:[%s0 + $0x180] sm:$0xff]
  %v68 = vld [vmem:[%s0 + $0x188] sm:$0xf]
  %v69 = vld [vmem:[%s0 + $0x18c] sm:$0xff]
  %v70 = vld [vmem:[%s0 + $0x194] sm:$0xff]
  %v71 = vld [vmem:[%s0 + $0x19c] sm:$0xff]
  %v72 = vld [vmem:[%s0 + $0x1a4] sm:$0xff]
  %v73 = vld [vmem:[%s0 + $0x1ac] sm:$0xf]
  %v74 = vld [vmem:[%s0 + $0x1b0] sm:$0xff]
  %v75 = vld [vmem:[%s0 + $0x1b8] sm:$0xff]
  %v76 = vld [vmem:[%s0 + $0x1c0] sm:$0xff]
  %v77 = vld [vmem:[%s0 + $0x1c8] sm:$0xff]
  %v78 = vld [vmem:[%s0 + $0x1d0] sm:$0xf]
  %v79 = vld [vmem:[%s0 + $0x1d4] sm:$0xff]
  %v80 = vld [vmem:[%s0 + $0x1dc] sm:$0xff]
  %v81 = vld [vmem:[%s0 + $0x1e4] sm:$0xff]
  %v82 = vld [vmem:[%s0 + $0x1ec] sm:$0xff]
  %v83 = vld [vmem:[%s0 + $0x1f4] sm:$0xf]
  %v84 = vld [vmem:[%s0 + $0x1f8] sm:$0xff]
  %v85 = vld [vmem:[%s0 + $0x200] sm:$0xff]
  %v86 = vld [vmem:[%s0 + $0x208] sm:$0xff]
  %v87 = vld [vmem:[%s0 + $0x210] sm:$0xff]
  %v88 = vld [vmem:[%s0 + $0x218] sm:$0xf]
  %v89 = vld [vmem:[%s0 + $0x21c] sm:$0xff]
  %v90 = vld [vmem:[%s0 + $0x224] sm:$0xff]
  %v91 = vld [vmem:[%s0 + $0x22c] sm:$0xff]
  %v92 = vld [vmem:[%s0 + $0x234] sm:$0xff]
  %v93 = vld [vmem:[%s0 + $0x23c] sm:$0xf]
  %v94 = vld [vmem:[%s0 + $0x240] sm:$0xff]
  %v95 = vld [vmem:[%s0 + $0x248] sm:$0xff]
  %v96 = vld [vmem:[%s0 + $0x250] sm:$0xff]
  %v97 = vld [vmem:[%s0 + $0x258] sm:$0xff]
  %v98 = vld [vmem:[%s0 + $0x260] sm:$0xf]
  %v99 = vld [vmem:[%s0 + $0x264] sm:$0xff]
  %v100 = vld [vmem:[%s0 + $0x26c] sm:$0xff]
  %v101 = vld [vmem:[%s0 + $0x274] sm:$0xff]
  %v102 = vld [vmem:[%s0 + $0x27c] sm:$0xff]
  %v103 = vld [vmem:[%s0 + $0x284] sm:$0xf]
  %v104 = vld [vmem:[%s0 + $0x288] sm:$0xff]
  %v105 = vld [vmem:[%s0 + $0x290] sm:$0xff]
  %v106 = vld [vmem:[%s0 + $0x298] sm:$0xff]
  %v107 = vld [vmem:[%s0 + $0x2a0] sm:$0xff]
  %v108 = vld [vmem:[%s0 + $0x2a8] sm:$0xf]
  %v109 = vld [vmem:[%s0 + $0x2ac] sm:$0xff]
  %v110 = vld [vmem:[%s0 + $0x2b4] sm:$0xff]
  %v111 = vld [vmem:[%s0 + $0x2bc] sm:$0xff]
  %v112 = vld [vmem:[%s0 + $0x2c4] sm:$0xff]
  %v113 = vld [vmem:[%s0 + $0x2cc] sm:$0xf]
  %v114 = vld [vmem:[%s0 + $0x2d0] sm:$0xff]
  %v115 = vld [vmem:[%s0 + $0x2d8] sm:$0xff]
  %v116 = vld [vmem:[%s0 + $0x2e0] sm:$0xff]
  %v117 = vld [vmem:[%s0 + $0x2e8] sm:$0xff]
  %v118 = vld [vmem:[%s0 + $0x2f0] sm:$0xf]
  %v119 = vld [vmem:[%s0 + $0x2f4] sm:$0xff]
  %v120 = vld [vmem:[%s0 + $0x2fc] sm:$0xff]
  %v121 = vld [vmem:[%s0 + $0x304] sm:$0xff]
  %v122 = vld [vmem:[%s0 + $0x30c] sm:$0xff]
  %v123 = vld [vmem:[%s0 + $0x314] sm:$0xf]
  %v124 = vld [vmem:[%s0 + $0x318] sm:$0xff]
  %v125 = vld [vmem:[%s0 + $0x320] sm:$0xff]
  %v126 = vld [vmem:[%s0 + $0x328] sm:$0xff]
  %v127 = vld [vmem:[%s0 + $0x330] sm:$0xff]
  %v128 = vld [vmem:[%s0 + $0x338] sm:$0xf]
  %v129 = vld [vmem:[%s0 + $0x33c] sm:$0xff]
  %v130 = vld [vmem:[%s0 + $0x344] sm:$0xff]
  %v131 = vld [vmem:[%s0 + $0x34c] sm:$0xff]
  %v132 = vld [vmem:[%s0 + $0x354] sm:$0xff]
  %v133 = vld [vmem:[%s0 + $0x35c] sm:$0xf]
  %v134 = vld [vmem:[%s0 + $0x360] sm:$0xff]
  %v135 = vld [vmem:[%s0 + $0x368] sm:$0xff]
  %v136 = vld [vmem:[%s0 + $0x370] sm:$0xff]
  %v137 = vld [vmem:[%s0 + $0x378] sm:$0xff]
  %v138 = vld [vmem:[%s0 + $0x380] sm:$0xf]
  %v139 = vld [vmem:[%s0 + $0x384] sm:$0xff]
  %v140 = vld [vmem:[%s0 + $0x38c] sm:$0xff]
  %v141 = vld [vmem:[%s0 + $0x394] sm:$0xff]
  %v142 = vld [vmem:[%s0 + $0x39c] sm:$0xff]
  %v143 = vld [vmem:[%s0 + $0x3a4] sm:$0xf]
  %v144 = vld [vmem:[%s0 + $0x3a8] sm:$0xff]
  %v145 = vld [vmem:[%s0 + $0x3b0] sm:$0xff]
  %v146 = vld [vmem:[%s0 + $0x3b8] sm:$0xff]
  %v147 = vld [vmem:[%s0 + $0x3c0] sm:$0xff]
  %v148 = vld [vmem:[%s0 + $0x3c8] sm:$0xf]
  %v149 = vld [vmem:[%s0 + $0x3cc] sm:$0xff]
  %v150 = vld [vmem:[%s0 + $0x3d4] sm:$0xff]
  %v151 = vld [vmem:[%s0 + $0x3dc] sm:$0xff]
  %v152 = vld [vmem:[%s0 + $0x3e4] sm:$0xff]
  %v153 = vld [vmem:[%s0 + $0x3ec] sm:$0xf]
  %v154 = vld [vmem:[%s0 + $0x3f0] sm:$0xff]
  %v155 = vld [vmem:[%s0 + $0x3f8] sm:$0xff]
  %v156 = vld [vmem:[%s0 + $0x400] sm:$0xff]
  %v157 = vld [vmem:[%s0 + $0x408] sm:$0xff]
  %v158 = vld [vmem:[%s0 + $0x410] sm:$0xf]
  %v159 = vld [vmem:[%s0 + $0x414] sm:$0xff]
  %v160 = vld [vmem:[%s0 + $0x41c] sm:$0xff]
  %v161 = vld [vmem:[%s0 + $0x424] sm:$0xff]
  %v162 = vld [vmem:[%s0 + $0x42c] sm:$0xff]
  %v163 = vld [vmem:[%s0 + $0x434] sm:$0xf]
  %v164 = vld [vmem:[%s0 + $0x438] sm:$0xff]
  %v165 = vld [vmem:[%s0 + $0x440] sm:$0xff]
  %v166 = vld [vmem:[%s0 + $0x448] sm:$0xff]
  %v167 = vld [vmem:[%s0 + $0x450] sm:$0xff]
  %v168 = vld [vmem:[%s0 + $0x458] sm:$0xf]
  %v169 = vld [vmem:[%s0 + $0x45c] sm:$0xff]
  %v170 = vld [vmem:[%s0 + $0x464] sm:$0xff]
  %v171 = vld [vmem:[%s0 + $0x46c] sm:$0xff]
  %v172 = vld [vmem:[%s0 + $0x474] sm:$0xff]
  %v173 = vld [vmem:[%s0 + $0x47c] sm:$0xf]
  %v174 = vld [vmem:[%s0 + $0x480] sm:$0xff]
  %v175 = vld [vmem:[%s0 + $0x488] sm:$0xff]
  %v176 = vld [vmem:[%s0 + $0x490] sm:$0xff]
  %v177 = vld [vmem:[%s0 + $0x498] sm:$0xff]
  %v178 = vld [vmem:[%s0 + $0x4a0] sm:$0xf]
  %v179 = vld [vmem:[%s0 + $0x4a4] sm:$0xff]
  %v180 = vld [vmem:[%s0 + $0x4ac] sm:$0xff]
  %v181 = vld [vmem:[%s0 + $0x4b4] sm:$0xff]
  %v182 = vld [vmem:[%s0 + $0x4bc] sm:$0xff]
  %v183 = vld [vmem:[%s0 + $0x4c4] sm:$0xf]
  %v184 = vld [vmem:[%s0 + $0x4c8] sm:$0xff]
  %v185 = vld [vmem:[%s0 + $0x4d0] sm:$0xff]
  %v186 = vld [vmem:[%s0 + $0x4d8] sm:$0xff]
  %v187 = vld [vmem:[%s0 + $0x4e0] sm:$0xff]
  %v188 = vld [vmem:[%s0 + $0x4e8] sm:$0xf]
  %v189 = vld [vmem:[%s0 + $0x4ec] sm:$0xff]
  %v190 = vld [vmem:[%s0 + $0x4f4] sm:$0xff]
  %v191 = vld [vmem:[%s0 + $0x4fc] sm:$0xff]
  %v192 = vld [vmem:[%s0 + $0x504] sm:$0xff]
  %v193 = vld [vmem:[%s0 + $0x50c] sm:$0xf]
  %v194 = vld [vmem:[%s0 + $0x510] sm:$0xff]
  %v195 = vld [vmem:[%s0 + $0x518] sm:$0xff]
  %v196 = vld [vmem:[%s0 + $0x520] sm:$0xff]
  %v197 = vld [vmem:[%s0 + $0x528] sm:$0xff]
  %v198 = vld [vmem:[%s0 + $0x530] sm:$0xf]
  %v199 = vld [vmem:[%s0 + $0x534] sm:$0xff]
  %v200 = vld [vmem:[%s0 + $0x53c] sm:$0xff]
  %v201 = vld [vmem:[%s0 + $0x544] sm:$0xff]
  %v202 = vld [vmem:[%s0 + $0x54c] sm:$0xff]
  %v203 = vld [vmem:[%s0 + $0x554] sm:$0xf]
  %v204 = vld [vmem:[%s0 + $0x558] sm:$0xff]
  %v205 = vld [vmem:[%s0 + $0x560] sm:$0xff]
  %v206 = vld [vmem:[%s0 + $0x568] sm:$0xff]
  %v207 = vld [vmem:[%s0 + $0x570] sm:$0xff]
  %v208 = vld [vmem:[%s0 + $0x578] sm:$0xf]
  %v209 = vld [vmem:[%s0 + $0x57c] sm:$0xff]
  %v210 = vld [vmem:[%s0 + $0x584] sm:$0xff]
  %v211 = vld [vmem:[%s0 + $0x58c] sm:$0xff]
  %v212 = vld [vmem:[%s0 + $0x594] sm:$0xff]
  %v213 = vld [vmem:[%s0 + $0x59c] sm:$0xf]
  %v214 = vld [vmem:[%s0 + $0x5a0] sm:$0xff]
  %v215 = vld [vmem:[%s0 + $0x5a8] sm:$0xff]
  %v216 = vld [vmem:[%s0 + $0x5b0] sm:$0xff]
  %v217 = vld [vmem:[%s0 + $0x5b8] sm:$0xff]
  %v218 = vld [vmem:[%s0 + $0x5c0] sm:$0xf]
  %v219 = vld [vmem:[%s0 + $0x5c4] sm:$0xff]
  %v220 = vld [vmem:[%s0 + $0x5cc] sm:$0xff]
  %v221 = vld [vmem:[%s0 + $0x5d4] sm:$0xff]
  %v222 = vld [vmem:[%s0 + $0x5dc] sm:$0xff]
  %v223 = vld [vmem:[%s0 + $0x5e4] sm:$0xf]
  %v224 = vld [vmem:[%s0 + $0x5e8] sm:$0xff]
  %v225 = vld [vmem:[%s0 + $0x5f0] sm:$0xff]
  %v226 = vld [vmem:[%s0 + $0x5f8] sm:$0xff]
  %v227 = vld [vmem:[%s0 + $0x600] sm:$0xff]
  %v228 = vld [vmem:[%s0 + $0x608] sm:$0xf]
  %v229 = vld [vmem:[%s0 + $0x60c] sm:$0xff]
  %v230 = vld [vmem:[%s0 + $0x614] sm:$0xff]
  %v231 = vld [vmem:[%s0 + $0x61c] sm:$0xff]
  %v232 = vld [vmem:[%s0 + $0x624] sm:$0xff]
  %v233 = vld [vmem:[%s0 + $0x62c] sm:$0xf]
  %v234 = vld [vmem:[%s0 + $0x630] sm:$0xff]
  %v235 = vld [vmem:[%s0 + $0x638] sm:$0xff]
  %v236 = vld [vmem:[%s0 + $0x640] sm:$0xff]
  %v237 = vld [vmem:[%s0 + $0x648] sm:$0xff]
  %v238 = vld [vmem:[%s0 + $0x650] sm:$0xf]
  %v239 = vld [vmem:[%s0 + $0x654] sm:$0xff]
  %v240 = vld [vmem:[%s0 + $0x65c] sm:$0xff]
  %v241 = vld [vmem:[%s0 + $0x664] sm:$0xff]
  %v242 = vld [vmem:[%s0 + $0x66c] sm:$0xff]
  %v243 = vld [vmem:[%s0 + $0x674] sm:$0xf]
  %v244 = vld [vmem:[%s0 + $0x678] sm:$0xff]
  %v245 = vld [vmem:[%s0 + $0x680] sm:$0xff]
  %v246 = vld [vmem:[%s0 + $0x688] sm:$0xff]
  %v247 = vld [vmem:[%s0 + $0x690] sm:$0xff]
  %v248 = vld [vmem:[%s0 + $0x698] sm:$0xf]
  %v249 = vld [vmem:[%s0 + $0x69c] sm:$0xff]
  %v250 = vld [vmem:[%s0 + $0x6a4] sm:$0xff]
  %v251 = vld [vmem:[%s0 + $0x6ac] sm:$0xff]
  %v252 = vld [vmem:[%s0 + $0x6b4] sm:$0xff]
  %v253 = vld [vmem:[%s0 + $0x6bc] sm:$0xf]
  %v254 = vld [vmem:[%s0 + $0x6c0] sm:$0xff]
  %v255 = vld [vmem:[%s0 + $0x6c8] sm:$0xff]
  %v256 = vld [vmem:[%s0 + $0x6d0] sm:$0xff]
  %v257 = vld [vmem:[%s0 + $0x6d8] sm:$0xff]
  %v258 = vld [vmem:[%s0 + $0x6e0] sm:$0xf]
  %v259 = vld [vmem:[%s0 + $0x6e4] sm:$0xff]
  %v260 = vld [vmem:[%s0 + $0x6ec] sm:$0xff]
  %v261 = vld [vmem:[%s0 + $0x6f4] sm:$0xff]
  %v262 = vld [vmem:[%s0 + $0x6fc] sm:$0xff]
  %v263 = vld [vmem:[%s0 + $0x704] sm:$0xf]
  %v264 = vld [vmem:[%s0 + $0x708] sm:$0xff]
  %v265 = vld [vmem:[%s0 + $0x710] sm:$0xff]
  %v266 = vld [vmem:[%s0 + $0x718] sm:$0xff]
  %v267 = vld [vmem:[%s0 + $0x720] sm:$0xff]
  %v268 = vld [vmem:[%s0 + $0x728] sm:$0xf]
  %v269 = vld [vmem:[%s0 + $0x72c] sm:$0xff]
  %v270 = vld [vmem:[%s0 + $0x734] sm:$0xff]
  %v271 = vld [vmem:[%s0 + $0x73c] sm:$0xff]
  %v272 = vld [vmem:[%s0 + $0x744] sm:$0xff]
  %v273 = vld [vmem:[%s0 + $0x74c] sm:$0xf]
  %v274 = vld [vmem:[%s0 + $0x750] sm:$0xff]
  %v275 = vld [vmem:[%s0 + $0x758] sm:$0xff]
  %v276 = vld [vmem:[%s0 + $0x760] sm:$0xff]
  %v277 = vld [vmem:[%s0 + $0x768] sm:$0xff]
  %v278 = vld [vmem:[%s0 + $0x770] sm:$0xf]
  %v279 = vld [vmem:[%s0 + $0x774] sm:$0xff]
  %v280 = vld [vmem:[%s0 + $0x77c] sm:$0xff]
  %v281 = vld [vmem:[%s0 + $0x784] sm:$0xff]
  %v282 = vld [vmem:[%s0 + $0x78c] sm:$0xff]
  %v283 = vld [vmem:[%s0 + $0x794] sm:$0xf]
  %v284 = vld [vmem:[%s0 + $0x798] sm:$0xff]
  %v285 = vld [vmem:[%s0 + $0x7a0] sm:$0xff]
  %v286 = vld [vmem:[%s0 + $0x7a8] sm:$0xff]
  %v287 = vld [vmem:[%s0 + $0x7b0] sm:$0xff]
  %v288 = vld [vmem:[%s0 + $0x7b8] sm:$0xf]
  %v289 = vld [vmem:[%s0 + $0x7bc] sm:$0xff]
  %v290 = vld [vmem:[%s0 + $0x7c4] sm:$0xff]
  %v291 = vld [vmem:[%s0 + $0x7cc] sm:$0xff]
  %v292 = vld [vmem:[%s0 + $0x7d4] sm:$0xff]
  %v293 = vld [vmem:[%s0 + $0x7dc] sm:$0xf]
  %v294 = vld [vmem:[%s0 + $0x7e0] sm:$0xff]
  %v295 = vld [vmem:[%s0 + $0x7e8] sm:$0xff]
  %v296 = vld [vmem:[%s0 + $0x7f0] sm:$0xff]
  %v297 = vld [vmem:[%s0 + $0x7f8] sm:$0xff]
  %v298 = vld [vmem:[%s0 + $0x800] sm:$0xf]
  %v299 = vld [vmem:[%s0 + $0x804] sm:$0xff]
  %v300 = vld [vmem:[%s0 + $0x80c] sm:$0xff]
  %v301 = vld [vmem:[%s0 + $0x814] sm:$0xff]
  %v302 = vld [vmem:[%s0 + $0x81c] sm:$0xff]
  %v303 = vld [vmem:[%s0 + $0x824] sm:$0xf]
  %v304 = vld [vmem:[%s0 + $0x828] sm:$0xff]
  %v305 = vld [vmem:[%s0 + $0x830] sm:$0xff]
  %v306 = vld [vmem:[%s0 + $0x838] sm:$0xff]
  %v307 = vld [vmem:[%s0 + $0x840] sm:$0xff]
  %v308 = vld [vmem:[%s0 + $0x848] sm:$0xf]
  %v309 = vld [vmem:[%s0 + $0x84c] sm:$0xff]
  %v310 = vld [vmem:[%s0 + $0x854] sm:$0xff]
  %v311 = vld [vmem:[%s0 + $0x85c] sm:$0xff]
  %v312 = vld [vmem:[%s0 + $0x864] sm:$0xff]
  %v313 = vld [vmem:[%s0 + $0x86c] sm:$0xf]
  %v314 = vld [vmem:[%s0 + $0x870] sm:$0xff]
  %v315 = vld [vmem:[%s0 + $0x878] sm:$0xff]
  %v316 = vld [vmem:[%s0 + $0x880] sm:$0xff]
  %v317 = vld [vmem:[%s0 + $0x888] sm:$0xff]
  %v318 = vld [vmem:[%s0 + $0x890] sm:$0xf]
  %v319 = vld [vmem:[%s0 + $0x894] sm:$0xff]
  %v320 = vld [vmem:[%s0 + $0x89c] sm:$0xff]
  %v321 = vld [vmem:[%s0 + $0x8a4] sm:$0xff]
  %v322 = vld [vmem:[%s0 + $0x8ac] sm:$0xff]
  %v323 = vld [vmem:[%s0 + $0x8b4] sm:$0xf]
  %v324 = vld [vmem:[%s0 + $0x8b8] sm:$0xff]
  %v325 = vld [vmem:[%s0 + $0x8c0] sm:$0xff]
  %v326 = vld [vmem:[%s0 + $0x8c8] sm:$0xff]
  %v327 = vld [vmem:[%s0 + $0x8d0] sm:$0xff]
  %v328 = vld [vmem:[%s0 + $0x8d8] sm:$0xf]
  %v329 = vld [vmem:[%s0 + $0x8dc] sm:$0xff]
  %v330 = vld [vmem:[%s0 + $0x8e4] sm:$0xff]
  %v331 = vld [vmem:[%s0 + $0x8ec] sm:$0xff]
  %v332 = vld [vmem:[%s0 + $0x8f4] sm:$0xff]
  %v333 = vld [vmem:[%s0 + $0x8fc] sm:$0xf]
  %v334 = vld [vmem:[%s1] sm:$0xf]
  %v335 = vld [vmem:[%s1 + $0x4] sm:$0xf]
  %v336 = vld [vmem:[%s1 + $0x8] sm:$0xf]
  %v337 = vld [vmem:[%s1 + $0xc] sm:$0xf]
  %v338 = vld [vmem:[%s1 + $0x10] sm:$0xf]
  %v339 = vld [vmem:[%s1 + $0x14] sm:$0xf]
  %v340 = vld [vmem:[%s1 + $0x18] sm:$0xf]
  %v341 = vld [vmem:[%s1 + $0x1c] sm:$0xf]
  %v342 = vld [vmem:[%s1 + $0x20] sm:$0xf]
  %v343 = vld [vmem:[%s1 + $0x24] sm:$0xf]
  %v344 = vld [vmem:[%s1 + $0x28] sm:$0xf]
  %v345 = vld [vmem:[%s1 + $0x2c] sm:$0xf]
  %v346 = vld [vmem:[%s1 + $0x30] sm:$0xf]
  %v347 = vld [vmem:[%s1 + $0x34] sm:$0xf]
  %v348 = vld [vmem:[%s1 + $0x38] sm:$0xf]
  %v349 = vld [vmem:[%s1 + $0x3c] sm:$0xf]
  %v350 = vld [vmem:[%s1 + $0x40] sm:$0xf]
  %v351 = vld [vmem:[%s1 + $0x44] sm:$0xf]
  %v352 = vld [vmem:[%s1 + $0x48] sm:$0xf]
  %v353 = vld [vmem:[%s1 + $0x4c] sm:$0xf]
  %v354 = vld [vmem:[%s1 + $0x50] sm:$0xf]
  %v355 = vld [vmem:[%s1 + $0x54] sm:$0xf]
  %v356 = vld [vmem:[%s1 + $0x58] sm:$0xf]
  %v357 = vld [vmem:[%s1 + $0x5c] sm:$0xf]
  %v358 = vld [vmem:[%s1 + $0x60] sm:$0xf]
  %v359 = vld [vmem:[%s1 + $0x64] sm:$0xf]
  %v360 = vld [vmem:[%s1 + $0x68] sm:$0xf]
  %v361 = vld [vmem:[%s1 + $0x6c] sm:$0xf]
  %v362 = vld [vmem:[%s1 + $0x70] sm:$0xf]
  %v363 = vld [vmem:[%s1 + $0x74] sm:$0xf]
  %v364 = vld [vmem:[%s1 + $0x78] sm:$0xf]
  %v365 = vld [vmem:[%s1 + $0x7c] sm:$0xf]
  %v366 = vld [vmem:[%s1 + $0x80] sm:$0xf]
  %v367 = vld [vmem:[%s1 + $0x84] sm:$0xf]
  %v368 = vld [vmem:[%s1 + $0x88] sm:$0xf]
  %v369 = vld [vmem:[%s1 + $0x8c] sm:$0xf]
  %v370 = vld [vmem:[%s1 + $0x90] sm:$0xf]
  %v371 = vld [vmem:[%s1 + $0x94] sm:$0xf]
  %v372 = vld [vmem:[%s1 + $0x98] sm:$0xf]
  %v373 = vld [vmem:[%s1 + $0x9c] sm:$0xf]
  %v374 = vld [vmem:[%s1 + $0xa0] sm:$0xf]
  %v375 = vld [vmem:[%s1 + $0xa4] sm:$0xf]
  %v376 = vld [vmem:[%s1 + $0xa8] sm:$0xf]
  %v377 = vld [vmem:[%s1 + $0xac] sm:$0xf]
  %v378 = vld [vmem:[%s1 + $0xb0] sm:$0xf]
  %v379 = vld [vmem:[%s1 + $0xb4] sm:$0xf]
  %v380 = vld [vmem:[%s1 + $0xb8] sm:$0xf]
  %v381 = vld [vmem:[%s1 + $0xbc] sm:$0xf]
  %v382 = vld [vmem:[%s1 + $0xc0] sm:$0xf]
  %v383 = vld [vmem:[%s1 + $0xc4] sm:$0xf]
  %v384 = vld [vmem:[%s1 + $0xc8] sm:$0xf]
  %v385 = vld [vmem:[%s1 + $0xcc] sm:$0xf]
  %v386 = vld [vmem:[%s1 + $0xd0] sm:$0xf]
  %v387 = vld [vmem:[%s1 + $0xd4] sm:$0xf]
  %v388 = vld [vmem:[%s1 + $0xd8] sm:$0xf]
  %v389 = vld [vmem:[%s1 + $0xdc] sm:$0xf]
  %v390 = vld [vmem:[%s1 + $0xe0] sm:$0xf]
  %v391 = vld [vmem:[%s1 + $0xe4] sm:$0xf]
  %v392 = vld [vmem:[%s1 + $0xe8] sm:$0xf]
  %v393 = vld [vmem:[%s1 + $0xec] sm:$0xf]
  %v394 = vld [vmem:[%s1 + $0xf0] sm:$0xf]
  %v395 = vld [vmem:[%s1 + $0xf4] sm:$0xf]
  %v396 = vld [vmem:[%s1 + $0xf8] sm:$0xf]
  %v397 = vld [vmem:[%s1 + $0xfc] sm:$0xf]
  %v398 = vld [vmem:[%s1 + $0x100] sm:$0xf]
  %v399 = vld [vmem:[%s1 + $0x104] sm:$0xf]
  %v400 = vld [vmem:[%s1 + $0x108] sm:$0xf]
  %v401 = vld [vmem:[%s1 + $0x10c] sm:$0xf]
  %v402 = vld [vmem:[%s1 + $0x110] sm:$0xf]
  %v403 = vld [vmem:[%s1 + $0x114] sm:$0xf]
  %v404 = vld [vmem:[%s1 + $0x118] sm:$0xf]
  %v405 = vld [vmem:[%s1 + $0x11c] sm:$0xf]
  %v406 = vld [vmem:[%s1 + $0x120] sm:$0xf]
  %v407 = vld [vmem:[%s1 + $0x124] sm:$0xf]
  %v408 = vld [vmem:[%s1 + $0x128] sm:$0xf]
  %v409 = vld [vmem:[%s1 + $0x12c] sm:$0xf]
  %v410 = vld [vmem:[%s1 + $0x130] sm:$0xf]
  %v411 = vld [vmem:[%s1 + $0x134] sm:$0xf]
  %v412 = vld [vmem:[%s1 + $0x138] sm:$0xf]
  %v413 = vld [vmem:[%s1 + $0x13c] sm:$0xf]
  %v414 = vld [vmem:[%s1 + $0x140] sm:$0xf]
  %v415 = vld [vmem:[%s1 + $0x144] sm:$0xf]
  %v416 = vld [vmem:[%s1 + $0x148] sm:$0xf]
  %v417 = vld [vmem:[%s1 + $0x14c] sm:$0xf]
  %v418 = vld [vmem:[%s1 + $0x150] sm:$0xf]
  %v419 = vld [vmem:[%s1 + $0x154] sm:$0xf]
  %v420 = vld [vmem:[%s1 + $0x158] sm:$0xf]
  %v421 = vld [vmem:[%s1 + $0x15c] sm:$0xf]
  %v422 = vld [vmem:[%s1 + $0x160] sm:$0xf]
  %v423 = vld [vmem:[%s1 + $0x164] sm:$0xf]
  %v424 = vld [vmem:[%s1 + $0x168] sm:$0xf]
  %v425 = vld [vmem:[%s1 + $0x16c] sm:$0xf]
  %v426 = vld [vmem:[%s1 + $0x170] sm:$0xf]
  %v427 = vld [vmem:[%s1 + $0x174] sm:$0xf]
  %v428 = vld [vmem:[%s1 + $0x178] sm:$0xf]
  %v429 = vld [vmem:[%s1 + $0x17c] sm:$0xf]
  %v430 = vld [vmem:[%s1 + $0x180] sm:$0xf]
  %v431 = vld [vmem:[%s1 + $0x184] sm:$0xf]
  %v432 = vld [vmem:[%s1 + $0x188] sm:$0xf]
  %v433 = vld [vmem:[%s1 + $0x18c] sm:$0xf]
  %v434 = vld [vmem:[%s1 + $0x190] sm:$0xf]
  %v435 = vld [vmem:[%s1 + $0x194] sm:$0xf]
  %v436 = vld [vmem:[%s1 + $0x198] sm:$0xf]
  %v437 = vld [vmem:[%s1 + $0x19c] sm:$0xf]
  %v438 = vld [vmem:[%s1 + $0x1a0] sm:$0xf]
  %v439 = vld [vmem:[%s1 + $0x1a4] sm:$0xf]
  %v440 = vld [vmem:[%s1 + $0x1a8] sm:$0xf]
  %v441 = vld [vmem:[%s1 + $0x1ac] sm:$0xf]
  %v442 = vld [vmem:[%s1 + $0x1b0] sm:$0xf]
  %v443 = vld [vmem:[%s1 + $0x1b4] sm:$0xf]
  %v444 = vld [vmem:[%s1 + $0x1b8] sm:$0xf]
  %v445 = vld [vmem:[%s1 + $0x1bc] sm:$0xf]
  %v446 = vld [vmem:[%s1 + $0x1c0] sm:$0xf]
  %v447 = vld [vmem:[%s1 + $0x1c4] sm:$0xf]
  %v448 = vld [vmem:[%s1 + $0x1c8] sm:$0xf]
  %v449 = vld [vmem:[%s1 + $0x1cc] sm:$0xf]
  %v450 = vld [vmem:[%s1 + $0x1d0] sm:$0xf]
  %v451 = vld [vmem:[%s1 + $0x1d4] sm:$0xf]
  %v452 = vld [vmem:[%s1 + $0x1d8] sm:$0xf]
  %v453 = vld [vmem:[%s1 + $0x1dc] sm:$0xf]
  %v454 = vld [vmem:[%s1 + $0x1e0] sm:$0xf]
  %v455 = vld [vmem:[%s1 + $0x1e4] sm:$0xf]
  %v456 = vld [vmem:[%s1 + $0x1e8] sm:$0xf]
  %v457 = vld [vmem:[%s1 + $0x1ec] sm:$0xf]
  %v458 = vld [vmem:[%s1 + $0x1f0] sm:$0xf]
  %v459 = vld [vmem:[%s1 + $0x1f4] sm:$0xf]
  %v460 = vld [vmem:[%s1 + $0x1f8] sm:$0xf]
  %v461 = vld [vmem:[%s1 + $0x1fc] sm:$0xf]
  %v462 = vld [vmem:[%s1 + $0x200] sm:$0xf]
  %v463 = vld [vmem:[%s1 + $0x204] sm:$0xf]
  %v464 = vld [vmem:[%s1 + $0x208] sm:$0xf]
  %v465 = vld [vmem:[%s1 + $0x20c] sm:$0xf]
  %v466 = vld [vmem:[%s1 + $0x210] sm:$0xf]
  %v467 = vld [vmem:[%s1 + $0x214] sm:$0xf]
  %v468 = vld [vmem:[%s1 + $0x218] sm:$0xf]
  %v469 = vld [vmem:[%s1 + $0x21c] sm:$0xf]
  %v470 = vld [vmem:[%s1 + $0x220] sm:$0xf]
  %v471 = vld [vmem:[%s1 + $0x224] sm:$0xf]
  %v472 = vld [vmem:[%s1 + $0x228] sm:$0xf]
  %v473 = vld [vmem:[%s1 + $0x22c] sm:$0xf]
  %v474 = vld [vmem:[%s1 + $0x230] sm:$0xf]
  %v475 = vld [vmem:[%s1 + $0x234] sm:$0xf]
  %v476 = vld [vmem:[%s1 + $0x238] sm:$0xf]
  %v477 = vld [vmem:[%s1 + $0x23c] sm:$0xf]
  %v798 = vunpack.c.l.b16 %v14
  %v799 = vunpack.c.h.b16 %v14
  %v800 = vunpack.c.l.b16 %v15
  %v801 = vunpack.c.h.b16 %v15
  %v802 = vunpack.c.l.b16 %v16
  %v803 = vunpack.c.h.b16 %v16
  %v804 = vunpack.c.l.b16 %v17
  %v805 = vunpack.c.h.b16 %v17
  %v806 = vunpack.c.l.b16 %v18
  %v807 = vunpack.c.l.b16 %v19
  %v808 = vunpack.c.h.b16 %v19
  %v809 = vunpack.c.l.b16 %v20
  %v810 = vunpack.c.h.b16 %v20
  %v811 = vunpack.c.l.b16 %v21
  %v812 = vunpack.c.h.b16 %v21
  %v813 = vunpack.c.l.b16 %v22
  %v814 = vunpack.c.h.b16 %v22
  %v815 = vunpack.c.l.b16 %v23
  %v816 = vunpack.c.l.b16 %v24
  %v817 = vunpack.c.h.b16 %v24
  %v818 = vunpack.c.l.b16 %v25
  %v819 = vunpack.c.h.b16 %v25
  %v820 = vunpack.c.l.b16 %v26
  %v821 = vunpack.c.h.b16 %v26
  %v822 = vunpack.c.l.b16 %v27
  %v823 = vunpack.c.h.b16 %v27
  %v824 = vunpack.c.l.b16 %v28
  %v825 = vunpack.c.l.b16 %v29
  %v826 = vunpack.c.h.b16 %v29
  %v827 = vunpack.c.l.b16 %v30
  %v828 = vunpack.c.h.b16 %v30
  %v829 = vunpack.c.l.b16 %v31
  %v830 = vunpack.c.h.b16 %v31
  %v831 = vunpack.c.l.b16 %v32
  %v832 = vunpack.c.h.b16 %v32
  %v833 = vunpack.c.l.b16 %v33
  %v834 = vunpack.c.l.b16 %v34
  %v835 = vunpack.c.h.b16 %v34
  %v836 = vunpack.c.l.b16 %v35
  %v837 = vunpack.c.h.b16 %v35
  %v838 = vunpack.c.l.b16 %v36
  %v839 = vunpack.c.h.b16 %v36
  %v840 = vunpack.c.l.b16 %v37
  %v841 = vunpack.c.h.b16 %v37
  %v842 = vunpack.c.l.b16 %v38
  %v843 = vunpack.c.l.b16 %v39
  %v844 = vunpack.c.h.b16 %v39
  %v845 = vunpack.c.l.b16 %v40
  %v846 = vunpack.c.h.b16 %v40
  %v847 = vunpack.c.l.b16 %v41
  %v848 = vunpack.c.h.b16 %v41
  %v849 = vunpack.c.l.b16 %v42
  %v850 = vunpack.c.h.b16 %v42
  %v851 = vunpack.c.l.b16 %v43
  %v852 = vunpack.c.l.b16 %v44
  %v853 = vunpack.c.h.b16 %v44
  %v854 = vunpack.c.l.b16 %v45
  %v855 = vunpack.c.h.b16 %v45
  %v856 = vunpack.c.l.b16 %v46
  %v857 = vunpack.c.h.b16 %v46
  %v858 = vunpack.c.l.b16 %v47
  %v859 = vunpack.c.h.b16 %v47
  %v860 = vunpack.c.l.b16 %v48
  %v861 = vunpack.c.l.b16 %v49
  %v862 = vunpack.c.h.b16 %v49
  %v863 = vunpack.c.l.b16 %v50
  %v864 = vunpack.c.h.b16 %v50
  %v865 = vunpack.c.l.b16 %v51
  %v866 = vunpack.c.h.b16 %v51
  %v867 = vunpack.c.l.b16 %v52
  %v868 = vunpack.c.h.b16 %v52
  %v869 = vunpack.c.l.b16 %v53
  %v870 = vunpack.c.l.b16 %v54
  %v871 = vunpack.c.h.b16 %v54
  %v872 = vunpack.c.l.b16 %v55
  %v873 = vunpack.c.h.b16 %v55
  %v874 = vunpack.c.l.b16 %v56
  %v875 = vunpack.c.h.b16 %v56
  %v876 = vunpack.c.l.b16 %v57
  %v877 = vunpack.c.h.b16 %v57
  %v878 = vunpack.c.l.b16 %v58
  %v879 = vunpack.c.l.b16 %v59
  %v880 = vunpack.c.h.b16 %v59
  %v881 = vunpack.c.l.b16 %v60
  %v882 = vunpack.c.h.b16 %v60
  %v883 = vunpack.c.l.b16 %v61
  %v884 = vunpack.c.h.b16 %v61
  %v885 = vunpack.c.l.b16 %v62
  %v886 = vunpack.c.h.b16 %v62
  %v887 = vunpack.c.l.b16 %v63
  %v888 = vunpack.c.l.b16 %v64
  %v889 = vunpack.c.h.b16 %v64
  %v890 = vunpack.c.l.b16 %v65
  %v891 = vunpack.c.h.b16 %v65
  %v892 = vunpack.c.l.b16 %v66
  %v893 = vunpack.c.h.b16 %v66
  %v894 = vunpack.c.l.b16 %v67
  %v895 = vunpack.c.h.b16 %v67
  %v896 = vunpack.c.l.b16 %v68
  %v897 = vunpack.c.l.b16 %v69
  %v898 = vunpack.c.h.b16 %v69
  %v899 = vunpack.c.l.b16 %v70
  %v900 = vunpack.c.h.b16 %v70
  %v901 = vunpack.c.l.b16 %v71
  %v902 = vunpack.c.h.b16 %v71
  %v903 = vunpack.c.l.b16 %v72
  %v904 = vunpack.c.h.b16 %v72
  %v905 = vunpack.c.l.b16 %v73
  %v906 = vunpack.c.l.b16 %v74
  %v907 = vunpack.c.h.b16 %v74
  %v908 = vunpack.c.l.b16 %v75
  %v909 = vunpack.c.h.b16 %v75
  %v910 = vunpack.c.l.b16 %v76
  %v911 = vunpack.c.h.b16 %v76
  %v912 = vunpack.c.l.b16 %v77
  %v913 = vunpack.c.h.b16 %v77
  %v914 = vunpack.c.l.b16 %v78
  %v915 = vunpack.c.l.b16 %v79
  %v916 = vunpack.c.h.b16 %v79
  %v917 = vunpack.c.l.b16 %v80
  %v918 = vunpack.c.h.b16 %v80
  %v919 = vunpack.c.l.b16 %v81
  %v920 = vunpack.c.h.b16 %v81
  %v921 = vunpack.c.l.b16 %v82
  %v922 = vunpack.c.h.b16 %v82
  %v923 = vunpack.c.l.b16 %v83
  %v924 = vunpack.c.l.b16 %v84
  %v925 = vunpack.c.h.b16 %v84
  %v926 = vunpack.c.l.b16 %v85
  %v927 = vunpack.c.h.b16 %v85
  %v928 = vunpack.c.l.b16 %v86
  %v929 = vunpack.c.h.b16 %v86
  %v930 = vunpack.c.l.b16 %v87
  %v931 = vunpack.c.h.b16 %v87
  %v932 = vunpack.c.l.b16 %v88
  %v933 = vunpack.c.l.b16 %v89
  %v934 = vunpack.c.h.b16 %v89
  %v935 = vunpack.c.l.b16 %v90
  %v936 = vunpack.c.h.b16 %v90
  %v937 = vunpack.c.l.b16 %v91
  %v938 = vunpack.c.h.b16 %v91
  %v939 = vunpack.c.l.b16 %v92
  %v940 = vunpack.c.h.b16 %v92
  %v941 = vunpack.c.l.b16 %v93
  %v942 = vunpack.c.l.b16 %v94
  %v943 = vunpack.c.h.b16 %v94
  %v944 = vunpack.c.l.b16 %v95
  %v945 = vunpack.c.h.b16 %v95
  %v946 = vunpack.c.l.b16 %v96
  %v947 = vunpack.c.h.b16 %v96
  %v948 = vunpack.c.l.b16 %v97
  %v949 = vunpack.c.h.b16 %v97
  %v950 = vunpack.c.l.b16 %v98
  %v951 = vunpack.c.l.b16 %v99
  %v952 = vunpack.c.h.b16 %v99
  %v953 = vunpack.c.l.b16 %v100
  %v954 = vunpack.c.h.b16 %v100
  %v955 = vunpack.c.l.b16 %v101
  %v956 = vunpack.c.h.b16 %v101
  %v957 = vunpack.c.l.b16 %v102
  %v958 = vunpack.c.h.b16 %v102
  %v959 = vunpack.c.l.b16 %v103
  %v960 = vunpack.c.l.b16 %v104
  %v961 = vunpack.c.h.b16 %v104
  %v962 = vunpack.c.l.b16 %v105
  %v963 = vunpack.c.h.b16 %v105
  %v964 = vunpack.c.l.b16 %v106
  %v965 = vunpack.c.h.b16 %v106
  %v966 = vunpack.c.l.b16 %v107
  %v967 = vunpack.c.h.b16 %v107
  %v968 = vunpack.c.l.b16 %v108
  %v969 = vunpack.c.l.b16 %v109
  %v970 = vunpack.c.h.b16 %v109
  %v971 = vunpack.c.l.b16 %v110
  %v972 = vunpack.c.h.b16 %v110
  %v973 = vunpack.c.l.b16 %v111
  %v974 = vunpack.c.h.b16 %v111
  %v975 = vunpack.c.l.b16 %v112
  %v976 = vunpack.c.h.b16 %v112
  %v977 = vunpack.c.l.b16 %v113
  %v978 = vunpack.c.l.b16 %v114
  %v979 = vunpack.c.h.b16 %v114
  %v980 = vunpack.c.l.b16 %v115
  %v981 = vunpack.c.h.b16 %v115
  %v982 = vunpack.c.l.b16 %v116
  %v983 = vunpack.c.h.b16 %v116
  %v984 = vunpack.c.l.b16 %v117
  %v985 = vunpack.c.h.b16 %v117
  %v986 = vunpack.c.l.b16 %v118
  %v987 = vunpack.c.l.b16 %v119
  %v988 = vunpack.c.h.b16 %v119
  %v989 = vunpack.c.l.b16 %v120
  %v990 = vunpack.c.h.b16 %v120
  %v991 = vunpack.c.l.b16 %v121
  %v992 = vunpack.c.h.b16 %v121
  %v993 = vunpack.c.l.b16 %v122
  %v994 = vunpack.c.h.b16 %v122
  %v995 = vunpack.c.l.b16 %v123
  %v996 = vunpack.c.l.b16 %v124
  %v997 = vunpack.c.h.b16 %v124
  %v998 = vunpack.c.l.b16 %v125
  %v999 = vunpack.c.h.b16 %v125
  %v1000 = vunpack.c.l.b16 %v126
  %v1001 = vunpack.c.h.b16 %v126
  %v1002 = vunpack.c.l.b16 %v127
  %v1003 = vunpack.c.h.b16 %v127
  %v1004 = vunpack.c.l.b16 %v128
  %v1005 = vunpack.c.l.b16 %v129
  %v1006 = vunpack.c.h.b16 %v129
  %v1007 = vunpack.c.l.b16 %v130
  %v1008 = vunpack.c.h.b16 %v130
  %v1009 = vunpack.c.l.b16 %v131
  %v1010 = vunpack.c.h.b16 %v131
  %v1011 = vunpack.c.l.b16 %v132
  %v1012 = vunpack.c.h.b16 %v132
  %v1013 = vunpack.c.l.b16 %v133
  %v1014 = vunpack.c.l.b16 %v134
  %v1015 = vunpack.c.h.b16 %v134
  %v1016 = vunpack.c.l.b16 %v135
  %v1017 = vunpack.c.h.b16 %v135
  %v1018 = vunpack.c.l.b16 %v136
  %v1019 = vunpack.c.h.b16 %v136
  %v1020 = vunpack.c.l.b16 %v137
  %v1021 = vunpack.c.h.b16 %v137
  %v1022 = vunpack.c.l.b16 %v138
  %v1023 = vunpack.c.l.b16 %v139
  %v1024 = vunpack.c.h.b16 %v139
  %v1025 = vunpack.c.l.b16 %v140
  %v1026 = vunpack.c.h.b16 %v140
  %v1027 = vunpack.c.l.b16 %v141
  %v1028 = vunpack.c.h.b16 %v141
  %v1029 = vunpack.c.l.b16 %v142
  %v1030 = vunpack.c.h.b16 %v142
  %v1031 = vunpack.c.l.b16 %v143
  %v1032 = vunpack.c.l.b16 %v144
  %v1033 = vunpack.c.h.b16 %v144
  %v1034 = vunpack.c.l.b16 %v145
  %v1035 = vunpack.c.h.b16 %v145
  %v1036 = vunpack.c.l.b16 %v146
  %v1037 = vunpack.c.h.b16 %v146
  %v1038 = vunpack.c.l.b16 %v147
  %v1039 = vunpack.c.h.b16 %v147
  %v1040 = vunpack.c.l.b16 %v148
  %v1041 = vunpack.c.l.b16 %v149
  %v1042 = vunpack.c.h.b16 %v149
  %v1043 = vunpack.c.l.b16 %v150
  %v1044 = vunpack.c.h.b16 %v150
  %v1045 = vunpack.c.l.b16 %v151
  %v1046 = vunpack.c.h.b16 %v151
  %v1047 = vunpack.c.l.b16 %v152
  %v1048 = vunpack.c.h.b16 %v152
  %v1049 = vunpack.c.l.b16 %v153
  %v1050 = vunpack.c.l.b16 %v154
  %v1051 = vunpack.c.h.b16 %v154
  %v1052 = vunpack.c.l.b16 %v155
  %v1053 = vunpack.c.h.b16 %v155
  %v1054 = vunpack.c.l.b16 %v156
  %v1055 = vunpack.c.h.b16 %v156
  %v1056 = vunpack.c.l.b16 %v157
  %v1057 = vunpack.c.h.b16 %v157
  %v1058 = vunpack.c.l.b16 %v158
  %v1059 = vunpack.c.l.b16 %v159
  %v1060 = vunpack.c.h.b16 %v159
  %v1061 = vunpack.c.l.b16 %v160
  %v1062 = vunpack.c.h.b16 %v160
  %v1063 = vunpack.c.l.b16 %v161
  %v1064 = vunpack.c.h.b16 %v161
  %v1065 = vunpack.c.l.b16 %v162
  %v1066 = vunpack.c.h.b16 %v162
  %v1067 = vunpack.c.l.b16 %v163
  %v1068 = vunpack.c.l.b16 %v164
  %v1069 = vunpack.c.h.b16 %v164
  %v1070 = vunpack.c.l.b16 %v165
  %v1071 = vunpack.c.h.b16 %v165
  %v1072 = vunpack.c.l.b16 %v166
  %v1073 = vunpack.c.h.b16 %v166
  %v1074 = vunpack.c.l.b16 %v167
  %v1075 = vunpack.c.h.b16 %v167
  %v1076 = vunpack.c.l.b16 %v168
  %v1077 = vunpack.c.l.b16 %v169
  %v1078 = vunpack.c.h.b16 %v169
  %v1079 = vunpack.c.l.b16 %v170
  %v1080 = vunpack.c.h.b16 %v170
  %v1081 = vunpack.c.l.b16 %v171
  %v1082 = vunpack.c.h.b16 %v171
  %v1083 = vunpack.c.l.b16 %v172
  %v1084 = vunpack.c.h.b16 %v172
  %v1085 = vunpack.c.l.b16 %v173
  %v1086 = vunpack.c.l.b16 %v174
  %v1087 = vunpack.c.h.b16 %v174
  %v1088 = vunpack.c.l.b16 %v175
  %v1089 = vunpack.c.h.b16 %v175
  %v1090 = vunpack.c.l.b16 %v176
  %v1091 = vunpack.c.h.b16 %v176
  %v1092 = vunpack.c.l.b16 %v177
  %v1093 = vunpack.c.h.b16 %v177
  %v1094 = vunpack.c.l.b16 %v178
  %v1095 = vunpack.c.l.b16 %v179
  %v1096 = vunpack.c.h.b16 %v179
  %v1097 = vunpack.c.l.b16 %v180
  %v1098 = vunpack.c.h.b16 %v180
  %v1099 = vunpack.c.l.b16 %v181
  %v1100 = vunpack.c.h.b16 %v181
  %v1101 = vunpack.c.l.b16 %v182
  %v1102 = vunpack.c.h.b16 %v182
  %v1103 = vunpack.c.l.b16 %v183
  %v1104 = vunpack.c.l.b16 %v184
  %v1105 = vunpack.c.h.b16 %v184
  %v1106 = vunpack.c.l.b16 %v185
  %v1107 = vunpack.c.h.b16 %v185
  %v1108 = vunpack.c.l.b16 %v186
  %v1109 = vunpack.c.h.b16 %v186
  %v1110 = vunpack.c.l.b16 %v187
  %v1111 = vunpack.c.h.b16 %v187
  %v1112 = vunpack.c.l.b16 %v188
  %v1113 = vunpack.c.l.b16 %v189
  %v1114 = vunpack.c.h.b16 %v189
  %v1115 = vunpack.c.l.b16 %v190
  %v1116 = vunpack.c.h.b16 %v190
  %v1117 = vunpack.c.l.b16 %v191
  %v1118 = vunpack.c.h.b16 %v191
  %v1119 = vunpack.c.l.b16 %v192
  %v1120 = vunpack.c.h.b16 %v192
  %v1121 = vunpack.c.l.b16 %v193
  %v1122 = vunpack.c.l.b16 %v194
  %v1123 = vunpack.c.h.b16 %v194
  %v1124 = vunpack.c.l.b16 %v195
  %v1125 = vunpack.c.h.b16 %v195
  %v1126 = vunpack.c.l.b16 %v196
  %v1127 = vunpack.c.h.b16 %v196
  %v1128 = vunpack.c.l.b16 %v197
  %v1129 = vunpack.c.h.b16 %v197
  %v1130 = vunpack.c.l.b16 %v198
  %v1131 = vunpack.c.l.b16 %v199
  %v1132 = vunpack.c.h.b16 %v199
  %v1133 = vunpack.c.l.b16 %v200
  %v1134 = vunpack.c.h.b16 %v200
  %v1135 = vunpack.c.l.b16 %v201
  %v1136 = vunpack.c.h.b16 %v201
  %v1137 = vunpack.c.l.b16 %v202
  %v1138 = vunpack.c.h.b16 %v202
  %v1139 = vunpack.c.l.b16 %v203
  %v1140 = vunpack.c.l.b16 %v204
  %v1141 = vunpack.c.h.b16 %v204
  %v1142 = vunpack.c.l.b16 %v205
  %v1143 = vunpack.c.h.b16 %v205
  %v1144 = vunpack.c.l.b16 %v206
  %v1145 = vunpack.c.h.b16 %v206
  %v1146 = vunpack.c.l.b16 %v207
  %v1147 = vunpack.c.h.b16 %v207
  %v1148 = vunpack.c.l.b16 %v208
  %v1149 = vunpack.c.l.b16 %v209
  %v1150 = vunpack.c.h.b16 %v209
  %v1151 = vunpack.c.l.b16 %v210
  %v1152 = vunpack.c.h.b16 %v210
  %v1153 = vunpack.c.l.b16 %v211
  %v1154 = vunpack.c.h.b16 %v211
  %v1155 = vunpack.c.l.b16 %v212
  %v1156 = vunpack.c.h.b16 %v212
  %v1157 = vunpack.c.l.b16 %v213
  %v1158 = vunpack.c.l.b16 %v214
  %v1159 = vunpack.c.h.b16 %v214
  %v1160 = vunpack.c.l.b16 %v215
  %v1161 = vunpack.c.h.b16 %v215
  %v1162 = vunpack.c.l.b16 %v216
  %v1163 = vunpack.c.h.b16 %v216
  %v1164 = vunpack.c.l.b16 %v217
  %v1165 = vunpack.c.h.b16 %v217
  %v1166 = vunpack.c.l.b16 %v218
  %v1167 = vunpack.c.l.b16 %v219
  %v1168 = vunpack.c.h.b16 %v219
  %v1169 = vunpack.c.l.b16 %v220
  %v1170 = vunpack.c.h.b16 %v220
  %v1171 = vunpack.c.l.b16 %v221
  %v1172 = vunpack.c.h.b16 %v221
  %v1173 = vunpack.c.l.b16 %v222
  %v1174 = vunpack.c.h.b16 %v222
  %v1175 = vunpack.c.l.b16 %v223
  %v1176 = vunpack.c.l.b16 %v224
  %v1177 = vunpack.c.h.b16 %v224
  %v1178 = vunpack.c.l.b16 %v225
  %v1179 = vunpack.c.h.b16 %v225
  %v1180 = vunpack.c.l.b16 %v226
  %v1181 = vunpack.c.h.b16 %v226
  %v1182 = vunpack.c.l.b16 %v227
  %v1183 = vunpack.c.h.b16 %v227
  %v1184 = vunpack.c.l.b16 %v228
  %v1185 = vunpack.c.l.b16 %v229
  %v1186 = vunpack.c.h.b16 %v229
  %v1187 = vunpack.c.l.b16 %v230
  %v1188 = vunpack.c.h.b16 %v230
  %v1189 = vunpack.c.l.b16 %v231
  %v1190 = vunpack.c.h.b16 %v231
  %v1191 = vunpack.c.l.b16 %v232
  %v1192 = vunpack.c.h.b16 %v232
  %v1193 = vunpack.c.l.b16 %v233
  %v1194 = vunpack.c.l.b16 %v234
  %v1195 = vunpack.c.h.b16 %v234
  %v1196 = vunpack.c.l.b16 %v235
  %v1197 = vunpack.c.h.b16 %v235
  %v1198 = vunpack.c.l.b16 %v236
  %v1199 = vunpack.c.h.b16 %v236
  %v1200 = vunpack.c.l.b16 %v237
  %v1201 = vunpack.c.h.b16 %v237
  %v1202 = vunpack.c.l.b16 %v238
  %v1203 = vunpack.c.l.b16 %v239
  %v1204 = vunpack.c.h.b16 %v239
  %v1205 = vunpack.c.l.b16 %v240
  %v1206 = vunpack.c.h.b16 %v240
  %v1207 = vunpack.c.l.b16 %v241
  %v1208 = vunpack.c.h.b16 %v241
  %v1209 = vunpack.c.l.b16 %v242
  %v1210 = vunpack.c.h.b16 %v242
  %v1211 = vunpack.c.l.b16 %v243
  %v1212 = vunpack.c.l.b16 %v244
  %v1213 = vunpack.c.h.b16 %v244
  %v1214 = vunpack.c.l.b16 %v245
  %v1215 = vunpack.c.h.b16 %v245
  %v1216 = vunpack.c.l.b16 %v246
  %v1217 = vunpack.c.h.b16 %v246
  %v1218 = vunpack.c.l.b16 %v247
  %v1219 = vunpack.c.h.b16 %v247
  %v1220 = vunpack.c.l.b16 %v248
  %v1221 = vunpack.c.l.b16 %v249
  %v1222 = vunpack.c.h.b16 %v249
  %v1223 = vunpack.c.l.b16 %v250
  %v1224 = vunpack.c.h.b16 %v250
  %v1225 = vunpack.c.l.b16 %v251
  %v1226 = vunpack.c.h.b16 %v251
  %v1227 = vunpack.c.l.b16 %v252
  %v1228 = vunpack.c.h.b16 %v252
  %v1229 = vunpack.c.l.b16 %v253
  %v1230 = vunpack.c.l.b16 %v254
  %v1231 = vunpack.c.h.b16 %v254
  %v1232 = vunpack.c.l.b16 %v255
  %v1233 = vunpack.c.h.b16 %v255
  %v1234 = vunpack.c.l.b16 %v256
  %v1235 = vunpack.c.h.b16 %v256
  %v1236 = vunpack.c.l.b16 %v257
  %v1237 = vunpack.c.h.b16 %v257
  %v1238 = vunpack.c.l.b16 %v258
  %v1239 = vunpack.c.l.b16 %v259
  %v1240 = vunpack.c.h.b16 %v259
  %v1241 = vunpack.c.l.b16 %v260
  %v1242 = vunpack.c.h.b16 %v260
  %v1243 = vunpack.c.l.b16 %v261
  %v1244 = vunpack.c.h.b16 %v261
  %v1245 = vunpack.c.l.b16 %v262
  %v1246 = vunpack.c.h.b16 %v262
  %v1247 = vunpack.c.l.b16 %v263
  %v1248 = vunpack.c.l.b16 %v264
  %v1249 = vunpack.c.h.b16 %v264
  %v1250 = vunpack.c.l.b16 %v265
  %v1251 = vunpack.c.h.b16 %v265
  %v1252 = vunpack.c.l.b16 %v266
  %v1253 = vunpack.c.h.b16 %v266
  %v1254 = vunpack.c.l.b16 %v267
  %v1255 = vunpack.c.h.b16 %v267
  %v1256 = vunpack.c.l.b16 %v268
  %v1257 = vunpack.c.l.b16 %v269
  %v1258 = vunpack.c.h.b16 %v269
  %v1259 = vunpack.c.l.b16 %v270
  %v1260 = vunpack.c.h.b16 %v270
  %v1261 = vunpack.c.l.b16 %v271
  %v1262 = vunpack.c.h.b16 %v271
  %v1263 = vunpack.c.l.b16 %v272
  %v1264 = vunpack.c.h.b16 %v272
  %v1265 = vunpack.c.l.b16 %v273
  %v1266 = vunpack.c.l.b16 %v274
  %v1267 = vunpack.c.h.b16 %v274
  %v1268 = vunpack.c.l.b16 %v275
  %v1269 = vunpack.c.h.b16 %v275
  %v1270 = vunpack.c.l.b16 %v276
  %v1271 = vunpack.c.h.b16 %v276
  %v1272 = vunpack.c.l.b16 %v277
  %v1273 = vunpack.c.h.b16 %v277
  %v1274 = vunpack.c.l.b16 %v278
  %v1275 = vunpack.c.l.b16 %v279
  %v1276 = vunpack.c.h.b16 %v279
  %v1277 = vunpack.c.l.b16 %v280
  %v1278 = vunpack.c.h.b16 %v280
  %v1279 = vunpack.c.l.b16 %v281
  %v1280 = vunpack.c.h.b16 %v281
  %v1281 = vunpack.c.l.b16 %v282
  %v1282 = vunpack.c.h.b16 %v282
  %v1283 = vunpack.c.l.b16 %v283
  %v1284 = vunpack.c.l.b16 %v284
  %v1285 = vunpack.c.h.b16 %v284
  %v1286 = vunpack.c.l.b16 %v285
  %v1287 = vunpack.c.h.b16 %v285
  %v1288 = vunpack.c.l.b16 %v286
  %v1289 = vunpack.c.h.b16 %v286
  %v1290 = vunpack.c.l.b16 %v287
  %v1291 = vunpack.c.h.b16 %v287
  %v1292 = vunpack.c.l.b16 %v288
  %v1293 = vunpack.c.l.b16 %v289
  %v1294 = vunpack.c.h.b16 %v289
  %v1295 = vunpack.c.l.b16 %v290
  %v1296 = vunpack.c.h.b16 %v290
  %v1297 = vunpack.c.l.b16 %v291
  %v1298 = vunpack.c.h.b16 %v291
  %v1299 = vunpack.c.l.b16 %v292
  %v1300 = vunpack.c.h.b16 %v292
  %v1301 = vunpack.c.l.b16 %v293
  %v1302 = vunpack.c.l.b16 %v294
  %v1303 = vunpack.c.h.b16 %v294
  %v1304 = vunpack.c.l.b16 %v295
  %v1305 = vunpack.c.h.b16 %v295
  %v1306 = vunpack.c.l.b16 %v296
  %v1307 = vunpack.c.h.b16 %v296
  %v1308 = vunpack.c.l.b16 %v297
  %v1309 = vunpack.c.h.b16 %v297
  %v1310 = vunpack.c.l.b16 %v298
  %v1311 = vunpack.c.l.b16 %v299
  %v1312 = vunpack.c.h.b16 %v299
  %v1313 = vunpack.c.l.b16 %v300
  %v1314 = vunpack.c.h.b16 %v300
  %v1315 = vunpack.c.l.b16 %v301
  %v1316 = vunpack.c.h.b16 %v301
  %v1317 = vunpack.c.l.b16 %v302
  %v1318 = vunpack.c.h.b16 %v302
  %v1319 = vunpack.c.l.b16 %v303
  %v1320 = vunpack.c.l.b16 %v304
  %v1321 = vunpack.c.h.b16 %v304
  %v1322 = vunpack.c.l.b16 %v305
  %v1323 = vunpack.c.h.b16 %v305
  %v1324 = vunpack.c.l.b16 %v306
  %v1325 = vunpack.c.h.b16 %v306
  %v1326 = vunpack.c.l.b16 %v307
  %v1327 = vunpack.c.h.b16 %v307
  %v1328 = vunpack.c.l.b16 %v308
  %v1329 = vunpack.c.l.b16 %v309
  %v1330 = vunpack.c.h.b16 %v309
  %v1331 = vunpack.c.l.b16 %v310
  %v1332 = vunpack.c.h.b16 %v310
  %v1333 = vunpack.c.l.b16 %v311
  %v1334 = vunpack.c.h.b16 %v311
  %v1335 = vunpack.c.l.b16 %v312
  %v1336 = vunpack.c.h.b16 %v312
  %v1337 = vunpack.c.l.b16 %v313
  %v1338 = vunpack.c.l.b16 %v314
  %v1339 = vunpack.c.h.b16 %v314
  %v1340 = vunpack.c.l.b16 %v315
  %v1341 = vunpack.c.h.b16 %v315
  %v1342 = vunpack.c.l.b16 %v316
  %v1343 = vunpack.c.h.b16 %v316
  %v1344 = vunpack.c.l.b16 %v317
  %v1345 = vunpack.c.h.b16 %v317
  %v1346 = vunpack.c.l.b16 %v318
  %v1347 = vunpack.c.l.b16 %v319
  %v1348 = vunpack.c.h.b16 %v319
  %v1349 = vunpack.c.l.b16 %v320
  %v1350 = vunpack.c.h.b16 %v320
  %v1351 = vunpack.c.l.b16 %v321
  %v1352 = vunpack.c.h.b16 %v321
  %v1353 = vunpack.c.l.b16 %v322
  %v1354 = vunpack.c.h.b16 %v322
  %v1355 = vunpack.c.l.b16 %v323
  %v1356 = vunpack.c.l.b16 %v324
  %v1357 = vunpack.c.h.b16 %v324
  %v1358 = vunpack.c.l.b16 %v325
  %v1359 = vunpack.c.h.b16 %v325
  %v1360 = vunpack.c.l.b16 %v326
  %v1361 = vunpack.c.h.b16 %v326
  %v1362 = vunpack.c.l.b16 %v327
  %v1363 = vunpack.c.h.b16 %v327
  %v1364 = vunpack.c.l.b16 %v328
  %v1365 = vunpack.c.l.b16 %v329
  %v1366 = vunpack.c.h.b16 %v329
  %v1367 = vunpack.c.l.b16 %v330
  %v1368 = vunpack.c.h.b16 %v330
  %v1369 = vunpack.c.l.b16 %v331
  %v1370 = vunpack.c.h.b16 %v331
  %v1371 = vunpack.c.l.b16 %v332
  %v1372 = vunpack.c.h.b16 %v332
  %v1373 = vunpack.c.l.b16 %v333
  %v1374 = vpack.c.b16 %v807, %v798
  %v1375 = vpack.c.b16 %v808, %v799
  %v1376 = vpack.c.b16 %v809, %v800
  %v1377 = vpack.c.b16 %v810, %v801
  %v1378 = vpack.c.b16 %v811, %v802
  %v1379 = vpack.c.b16 %v812, %v803
  %v1380 = vpack.c.b16 %v813, %v804
  %v1381 = vpack.c.b16 %v814, %v805
  %v1382 = vpack.c.b16 %v815, %v806
  %v1383 = vpack.c.b16 %v825, %v816
  %v1384 = vpack.c.b16 %v826, %v817
  %v1385 = vpack.c.b16 %v827, %v818
  %v1386 = vpack.c.b16 %v828, %v819
  %v1387 = vpack.c.b16 %v829, %v820
  %v1388 = vpack.c.b16 %v830, %v821
  %v1389 = vpack.c.b16 %v831, %v822
  %v1390 = vpack.c.b16 %v832, %v823
  %v1391 = vpack.c.b16 %v833, %v824
  %v1392 = vpack.c.b16 %v843, %v834
  %v1393 = vpack.c.b16 %v844, %v835
  %v1394 = vpack.c.b16 %v845, %v836
  %v1395 = vpack.c.b16 %v846, %v837
  %v1396 = vpack.c.b16 %v847, %v838
  %v1397 = vpack.c.b16 %v848, %v839
  %v1398 = vpack.c.b16 %v849, %v840
  %v1399 = vpack.c.b16 %v850, %v841
  %v1400 = vpack.c.b16 %v851, %v842
  %v1401 = vpack.c.b16 %v861, %v852
  %v1402 = vpack.c.b16 %v862, %v853
  %v1403 = vpack.c.b16 %v863, %v854
  %v1404 = vpack.c.b16 %v864, %v855
  %v1405 = vpack.c.b16 %v865, %v856
  %v1406 = vpack.c.b16 %v866, %v857
  %v1407 = vpack.c.b16 %v867, %v858
  %v1408 = vpack.c.b16 %v868, %v859
  %v1409 = vpack.c.b16 %v869, %v860
  %v1410 = vpack.c.b16 %v879, %v870
  %v1411 = vpack.c.b16 %v880, %v871
  %v1412 = vpack.c.b16 %v881, %v872
  %v1413 = vpack.c.b16 %v882, %v873
  %v1414 = vpack.c.b16 %v883, %v874
  %v1415 = vpack.c.b16 %v884, %v875
  %v1416 = vpack.c.b16 %v885, %v876
  %v1417 = vpack.c.b16 %v886, %v877
  %v1418 = vpack.c.b16 %v887, %v878
  %v1419 = vpack.c.b16 %v897, %v888
  %v1420 = vpack.c.b16 %v898, %v889
  %v1421 = vpack.c.b16 %v899, %v890
  %v1422 = vpack.c.b16 %v900, %v891
  %v1423 = vpack.c.b16 %v901, %v892
  %v1424 = vpack.c.b16 %v902, %v893
  %v1425 = vpack.c.b16 %v903, %v894
  %v1426 = vpack.c.b16 %v904, %v895
  %v1427 = vpack.c.b16 %v905, %v896
  %v1428 = vpack.c.b16 %v915, %v906
  %v1429 = vpack.c.b16 %v916, %v907
  %v1430 = vpack.c.b16 %v917, %v908
  %v1431 = vpack.c.b16 %v918, %v909
  %v1432 = vpack.c.b16 %v919, %v910
  %v1433 = vpack.c.b16 %v920, %v911
  %v1434 = vpack.c.b16 %v921, %v912
  %v1435 = vpack.c.b16 %v922, %v913
  %v1436 = vpack.c.b16 %v923, %v914
  %v1437 = vpack.c.b16 %v933, %v924
  %v1438 = vpack.c.b16 %v934, %v925
  %v1439 = vpack.c.b16 %v935, %v926
  %v1440 = vpack.c.b16 %v936, %v927
  %v1441 = vpack.c.b16 %v937, %v928
  %v1442 = vpack.c.b16 %v938, %v929
  %v1443 = vpack.c.b16 %v939, %v930
  %v1444 = vpack.c.b16 %v940, %v931
  %v1445 = vpack.c.b16 %v941, %v932
  %v1446 = vpack.c.b16 %v951, %v942
  %v1447 = vpack.c.b16 %v952, %v943
  %v1448 = vpack.c.b16 %v953, %v944
  %v1449 = vpack.c.b16 %v954, %v945
  %v1450 = vpack.c.b16 %v955, %v946
  %v1451 = vpack.c.b16 %v956, %v947
  %v1452 = vpack.c.b16 %v957, %v948
  %v1453 = vpack.c.b16 %v958, %v949
  %v1454 = vpack.c.b16 %v959, %v950
  %v1455 = vpack.c.b16 %v969, %v960
  %v1456 = vpack.c.b16 %v970, %v961
  %v1457 = vpack.c.b16 %v971, %v962
  %v1458 = vpack.c.b16 %v972, %v963
  %v1459 = vpack.c.b16 %v973, %v964
  %v1460 = vpack.c.b16 %v974, %v965
  %v1461 = vpack.c.b16 %v975, %v966
  %v1462 = vpack.c.b16 %v976, %v967
  %v1463 = vpack.c.b16 %v977, %v968
  %v1464 = vpack.c.b16 %v987, %v978
  %v1465 = vpack.c.b16 %v988, %v979
  %v1466 = vpack.c.b16 %v989, %v980
  %v1467 = vpack.c.b16 %v990, %v981
  %v1468 = vpack.c.b16 %v991, %v982
  %v1469 = vpack.c.b16 %v992, %v983
  %v1470 = vpack.c.b16 %v993, %v984
  %v1471 = vpack.c.b16 %v994, %v985
  %v1472 = vpack.c.b16 %v995, %v986
  %v1473 = vpack.c.b16 %v1005, %v996
  %v1474 = vpack.c.b16 %v1006, %v997
  %v1475 = vpack.c.b16 %v1007, %v998
  %v1476 = vpack.c.b16 %v1008, %v999
  %v1477 = vpack.c.b16 %v1009, %v1000
  %v1478 = vpack.c.b16 %v1010, %v1001
  %v1479 = vpack.c.b16 %v1011, %v1002
  %v1480 = vpack.c.b16 %v1012, %v1003
  %v1481 = vpack.c.b16 %v1013, %v1004
  %v1482 = vpack.c.b16 %v1023, %v1014
  %v1483 = vpack.c.b16 %v1024, %v1015
  %v1484 = vpack.c.b16 %v1025, %v1016
  %v1485 = vpack.c.b16 %v1026, %v1017
  %v1486 = vpack.c.b16 %v1027, %v1018
  %v1487 = vpack.c.b16 %v1028, %v1019
  %v1488 = vpack.c.b16 %v1029, %v1020
  %v1489 = vpack.c.b16 %v1030, %v1021
  %v1490 = vpack.c.b16 %v1031, %v1022
  %v1491 = vpack.c.b16 %v1041, %v1032
  %v1492 = vpack.c.b16 %v1042, %v1033
  %v1493 = vpack.c.b16 %v1043, %v1034
  %v1494 = vpack.c.b16 %v1044, %v1035
  %v1495 = vpack.c.b16 %v1045, %v1036
  %v1496 = vpack.c.b16 %v1046, %v1037
  %v1497 = vpack.c.b16 %v1047, %v1038
  %v1498 = vpack.c.b16 %v1048, %v1039
  %v1499 = vpack.c.b16 %v1049, %v1040
  %v1500 = vpack.c.b16 %v1059, %v1050
  %v1501 = vpack.c.b16 %v1060, %v1051
  %v1502 = vpack.c.b16 %v1061, %v1052
  %v1503 = vpack.c.b16 %v1062, %v1053
  %v1504 = vpack.c.b16 %v1063, %v1054
  %v1505 = vpack.c.b16 %v1064, %v1055
  %v1506 = vpack.c.b16 %v1065, %v1056
  %v1507 = vpack.c.b16 %v1066, %v1057
  %v1508 = vpack.c.b16 %v1067, %v1058
  %v1509 = vpack.c.b16 %v1077, %v1068
  %v1510 = vpack.c.b16 %v1078, %v1069
  %v1511 = vpack.c.b16 %v1079, %v1070
  %v1512 = vpack.c.b16 %v1080, %v1071
  %v1513 = vpack.c.b16 %v1081, %v1072
  %v1514 = vpack.c.b16 %v1082, %v1073
  %v1515 = vpack.c.b16 %v1083, %v1074
  %v1516 = vpack.c.b16 %v1084, %v1075
  %v1517 = vpack.c.b16 %v1085, %v1076
  %v1518 = vpack.c.b16 %v1095, %v1086
  %v1519 = vpack.c.b16 %v1096, %v1087
  %v1520 = vpack.c.b16 %v1097, %v1088
  %v1521 = vpack.c.b16 %v1098, %v1089
  %v1522 = vpack.c.b16 %v1099, %v1090
  %v1523 = vpack.c.b16 %v1100, %v1091
  %v1524 = vpack.c.b16 %v1101, %v1092
  %v1525 = vpack.c.b16 %v1102, %v1093
  %v1526 = vpack.c.b16 %v1103, %v1094
  %v1527 = vpack.c.b16 %v1113, %v1104
  %v1528 = vpack.c.b16 %v1114, %v1105
  %v1529 = vpack.c.b16 %v1115, %v1106
  %v1530 = vpack.c.b16 %v1116, %v1107
  %v1531 = vpack.c.b16 %v1117, %v1108
  %v1532 = vpack.c.b16 %v1118, %v1109
  %v1533 = vpack.c.b16 %v1119, %v1110
  %v1534 = vpack.c.b16 %v1120, %v1111
  %v1535 = vpack.c.b16 %v1121, %v1112
  %v1536 = vpack.c.b16 %v1131, %v1122
  %v1537 = vpack.c.b16 %v1132, %v1123
  %v1538 = vpack.c.b16 %v1133, %v1124
  %v1539 = vpack.c.b16 %v1134, %v1125
  %v1540 = vpack.c.b16 %v1135, %v1126
  %v1541 = vpack.c.b16 %v1136, %v1127
  %v1542 = vpack.c.b16 %v1137, %v1128
  %v1543 = vpack.c.b16 %v1138, %v1129
  %v1544 = vpack.c.b16 %v1139, %v1130
  %v1545 = vpack.c.b16 %v1149, %v1140
  %v1546 = vpack.c.b16 %v1150, %v1141
  %v1547 = vpack.c.b16 %v1151, %v1142
  %v1548 = vpack.c.b16 %v1152, %v1143
  %v1549 = vpack.c.b16 %v1153, %v1144
  %v1550 = vpack.c.b16 %v1154, %v1145
  %v1551 = vpack.c.b16 %v1155, %v1146
  %v1552 = vpack.c.b16 %v1156, %v1147
  %v1553 = vpack.c.b16 %v1157, %v1148
  %v1554 = vpack.c.b16 %v1167, %v1158
  %v1555 = vpack.c.b16 %v1168, %v1159
  %v1556 = vpack.c.b16 %v1169, %v1160
  %v1557 = vpack.c.b16 %v1170, %v1161
  %v1558 = vpack.c.b16 %v1171, %v1162
  %v1559 = vpack.c.b16 %v1172, %v1163
  %v1560 = vpack.c.b16 %v1173, %v1164
  %v1561 = vpack.c.b16 %v1174, %v1165
  %v1562 = vpack.c.b16 %v1175, %v1166
  %v1563 = vpack.c.b16 %v1185, %v1176
  %v1564 = vpack.c.b16 %v1186, %v1177
  %v1565 = vpack.c.b16 %v1187, %v1178
  %v1566 = vpack.c.b16 %v1188, %v1179
  %v1567 = vpack.c.b16 %v1189, %v1180
  %v1568 = vpack.c.b16 %v1190, %v1181
  %v1569 = vpack.c.b16 %v1191, %v1182
  %v1570 = vpack.c.b16 %v1192, %v1183
  %v1571 = vpack.c.b16 %v1193, %v1184
  %v1572 = vpack.c.b16 %v1203, %v1194
  %v1573 = vpack.c.b16 %v1204, %v1195
  %v1574 = vpack.c.b16 %v1205, %v1196
  %v1575 = vpack.c.b16 %v1206, %v1197
  %v1576 = vpack.c.b16 %v1207, %v1198
  %v1577 = vpack.c.b16 %v1208, %v1199
  %v1578 = vpack.c.b16 %v1209, %v1200
  %v1579 = vpack.c.b16 %v1210, %v1201
  %v1580 = vpack.c.b16 %v1211, %v1202
  %v1581 = vpack.c.b16 %v1221, %v1212
  %v1582 = vpack.c.b16 %v1222, %v1213
  %v1583 = vpack.c.b16 %v1223, %v1214
  %v1584 = vpack.c.b16 %v1224, %v1215
  %v1585 = vpack.c.b16 %v1225, %v1216
  %v1586 = vpack.c.b16 %v1226, %v1217
  %v1587 = vpack.c.b16 %v1227, %v1218
  %v1588 = vpack.c.b16 %v1228, %v1219
  %v1589 = vpack.c.b16 %v1229, %v1220
  %v1590 = vpack.c.b16 %v1239, %v1230
  %v1591 = vpack.c.b16 %v1240, %v1231
  %v1592 = vpack.c.b16 %v1241, %v1232
  %v1593 = vpack.c.b16 %v1242, %v1233
  %v1594 = vpack.c.b16 %v1243, %v1234
  %v1595 = vpack.c.b16 %v1244, %v1235
  %v1596 = vpack.c.b16 %v1245, %v1236
  %v1597 = vpack.c.b16 %v1246, %v1237
  %v1598 = vpack.c.b16 %v1247, %v1238
  %v1599 = vpack.c.b16 %v1257, %v1248
  %v1600 = vpack.c.b16 %v1258, %v1249
  %v1601 = vpack.c.b16 %v1259, %v1250
  %v1602 = vpack.c.b16 %v1260, %v1251
  %v1603 = vpack.c.b16 %v1261, %v1252
  %v1604 = vpack.c.b16 %v1262, %v1253
  %v1605 = vpack.c.b16 %v1263, %v1254
  %v1606 = vpack.c.b16 %v1264, %v1255
  %v1607 = vpack.c.b16 %v1265, %v1256
  %v1608 = vpack.c.b16 %v1275, %v1266
  %v1609 = vpack.c.b16 %v1276, %v1267
  %v1610 = vpack.c.b16 %v1277, %v1268
  %v1611 = vpack.c.b16 %v1278, %v1269
  %v1612 = vpack.c.b16 %v1279, %v1270
  %v1613 = vpack.c.b16 %v1280, %v1271
  %v1614 = vpack.c.b16 %v1281, %v1272
  %v1615 = vpack.c.b16 %v1282, %v1273
  %v1616 = vpack.c.b16 %v1283, %v1274
  %v1617 = vpack.c.b16 %v1293, %v1284
  %v1618 = vpack.c.b16 %v1294, %v1285
  %v1619 = vpack.c.b16 %v1295, %v1286
  %v1620 = vpack.c.b16 %v1296, %v1287
  %v1621 = vpack.c.b16 %v1297, %v1288
  %v1622 = vpack.c.b16 %v1298, %v1289
  %v1623 = vpack.c.b16 %v1299, %v1290
  %v1624 = vpack.c.b16 %v1300, %v1291
  %v1625 = vpack.c.b16 %v1301, %v1292
  %v1626 = vpack.c.b16 %v1311, %v1302
  %v1627 = vpack.c.b16 %v1312, %v1303
  %v1628 = vpack.c.b16 %v1313, %v1304
  %v1629 = vpack.c.b16 %v1314, %v1305
  %v1630 = vpack.c.b16 %v1315, %v1306
  %v1631 = vpack.c.b16 %v1316, %v1307
  %v1632 = vpack.c.b16 %v1317, %v1308
  %v1633 = vpack.c.b16 %v1318, %v1309
  %v1634 = vpack.c.b16 %v1319, %v1310
  %v1635 = vpack.c.b16 %v1329, %v1320
  %v1636 = vpack.c.b16 %v1330, %v1321
  %v1637 = vpack.c.b16 %v1331, %v1322
  %v1638 = vpack.c.b16 %v1332, %v1323
  %v1639 = vpack.c.b16 %v1333, %v1324
  %v1640 = vpack.c.b16 %v1334, %v1325
  %v1641 = vpack.c.b16 %v1335, %v1326
  %v1642 = vpack.c.b16 %v1336, %v1327
  %v1643 = vpack.c.b16 %v1337, %v1328
  %v1644 = vpack.c.b16 %v1347, %v1338
  %v1645 = vpack.c.b16 %v1348, %v1339
  %v1646 = vpack.c.b16 %v1349, %v1340
  %v1647 = vpack.c.b16 %v1350, %v1341
  %v1648 = vpack.c.b16 %v1351, %v1342
  %v1649 = vpack.c.b16 %v1352, %v1343
  %v1650 = vpack.c.b16 %v1353, %v1344
  %v1651 = vpack.c.b16 %v1354, %v1345
  %v1652 = vpack.c.b16 %v1355, %v1346
  %v1653 = vpack.c.b16 %v1365, %v1356
  %v1654 = vpack.c.b16 %v1366, %v1357
  %v1655 = vpack.c.b16 %v1367, %v1358
  %v1656 = vpack.c.b16 %v1368, %v1359
  %v1657 = vpack.c.b16 %v1369, %v1360
  %v1658 = vpack.c.b16 %v1370, %v1361
  %v1659 = vpack.c.b16 %v1371, %v1362
  %v1660 = vpack.c.b16 %v1372, %v1363
  %v1661 = vpack.c.b16 %v1373, %v1364
  %v2094 = vunpack.c.l.b16 %v334
  %v2095 = vunpack.c.l.b16 %v335
  %v2096 = vunpack.c.l.b16 %v336
  %v2097 = vunpack.c.l.b16 %v337
  %v2098 = vunpack.c.l.b16 %v338
  %v2099 = vunpack.c.l.b16 %v339
  %v2100 = vunpack.c.l.b16 %v340
  %v2101 = vunpack.c.l.b16 %v341
  %v2102 = vunpack.c.l.b16 %v342
  %v2103 = vunpack.c.l.b16 %v343
  %v2104 = vunpack.c.l.b16 %v344
  %v2105 = vunpack.c.l.b16 %v345
  %v2106 = vunpack.c.l.b16 %v346
  %v2107 = vunpack.c.l.b16 %v347
  %v2108 = vunpack.c.l.b16 %v348
  %v2109 = vunpack.c.l.b16 %v349
  %v2110 = vunpack.c.l.b16 %v350
  %v2111 = vunpack.c.l.b16 %v351
  %v2112 = vunpack.c.l.b16 %v352
  %v2113 = vunpack.c.l.b16 %v353
  %v2114 = vunpack.c.l.b16 %v354
  %v2115 = vunpack.c.l.b16 %v355
  %v2116 = vunpack.c.l.b16 %v356
  %v2117 = vunpack.c.l.b16 %v357
  %v2118 = vunpack.c.l.b16 %v358
  %v2119 = vunpack.c.l.b16 %v359
  %v2120 = vunpack.c.l.b16 %v360
  %v2121 = vunpack.c.l.b16 %v361
  %v2122 = vunpack.c.l.b16 %v362
  %v2123 = vunpack.c.l.b16 %v363
  %v2124 = vunpack.c.l.b16 %v364
  %v2125 = vunpack.c.l.b16 %v365
  %v2126 = vunpack.c.l.b16 %v366
  %v2127 = vunpack.c.l.b16 %v367
  %v2128 = vunpack.c.l.b16 %v368
  %v2129 = vunpack.c.l.b16 %v369
  %v2130 = vunpack.c.l.b16 %v370
  %v2131 = vunpack.c.l.b16 %v371
  %v2132 = vunpack.c.l.b16 %v372
  %v2133 = vunpack.c.l.b16 %v373
  %v2134 = vunpack.c.l.b16 %v374
  %v2135 = vunpack.c.l.b16 %v375
  %v2136 = vunpack.c.l.b16 %v376
  %v2137 = vunpack.c.l.b16 %v377
  %v2138 = vunpack.c.l.b16 %v378
  %v2139 = vunpack.c.l.b16 %v379
  %v2140 = vunpack.c.l.b16 %v380
  %v2141 = vunpack.c.l.b16 %v381
  %v2142 = vunpack.c.l.b16 %v382
  %v2143 = vunpack.c.l.b16 %v383
  %v2144 = vunpack.c.l.b16 %v384
  %v2145 = vunpack.c.l.b16 %v385
  %v2146 = vunpack.c.l.b16 %v386
  %v2147 = vunpack.c.l.b16 %v387
  %v2148 = vunpack.c.l.b16 %v388
  %v2149 = vunpack.c.l.b16 %v389
  %v2150 = vunpack.c.l.b16 %v390
  %v2151 = vunpack.c.l.b16 %v391
  %v2152 = vunpack.c.l.b16 %v392
  %v2153 = vunpack.c.l.b16 %v393
  %v2154 = vunpack.c.l.b16 %v394
  %v2155 = vunpack.c.l.b16 %v395
  %v2156 = vunpack.c.l.b16 %v396
  %v2157 = vunpack.c.l.b16 %v397
  %v2158 = vunpack.c.l.b16 %v398
  %v2159 = vunpack.c.l.b16 %v399
  %v2160 = vunpack.c.l.b16 %v400
  %v2161 = vunpack.c.l.b16 %v401
  %v2162 = vunpack.c.l.b16 %v402
  %v2163 = vunpack.c.l.b16 %v403
  %v2164 = vunpack.c.l.b16 %v404
  %v2165 = vunpack.c.l.b16 %v405
  %v2166 = vunpack.c.l.b16 %v406
  %v2167 = vunpack.c.l.b16 %v407
  %v2168 = vunpack.c.l.b16 %v408
  %v2169 = vunpack.c.l.b16 %v409
  %v2170 = vunpack.c.l.b16 %v410
  %v2171 = vunpack.c.l.b16 %v411
  %v2172 = vunpack.c.l.b16 %v412
  %v2173 = vunpack.c.l.b16 %v413
  %v2174 = vunpack.c.l.b16 %v414
  %v2175 = vunpack.c.l.b16 %v415
  %v2176 = vunpack.c.l.b16 %v416
  %v2177 = vunpack.c.l.b16 %v417
  %v2178 = vunpack.c.l.b16 %v418
  %v2179 = vunpack.c.l.b16 %v419
  %v2180 = vunpack.c.l.b16 %v420
  %v2181 = vunpack.c.l.b16 %v421
  %v2182 = vunpack.c.l.b16 %v422
  %v2183 = vunpack.c.l.b16 %v423
  %v2184 = vunpack.c.l.b16 %v424
  %v2185 = vunpack.c.l.b16 %v425
  %v2186 = vunpack.c.l.b16 %v426
  %v2187 = vunpack.c.l.b16 %v427
  %v2188 = vunpack.c.l.b16 %v428
  %v2189 = vunpack.c.l.b16 %v429
  %v2190 = vunpack.c.l.b16 %v430
  %v2191 = vunpack.c.l.b16 %v431
  %v2192 = vunpack.c.l.b16 %v432
  %v2193 = vunpack.c.l.b16 %v433
  %v2194 = vunpack.c.l.b16 %v434
  %v2195 = vunpack.c.l.b16 %v435
  %v2196 = vunpack.c.l.b16 %v436
  %v2197 = vunpack.c.l.b16 %v437
  %v2198 = vunpack.c.l.b16 %v438
  %v2199 = vunpack.c.l.b16 %v439
  %v2200 = vunpack.c.l.b16 %v440
  %v2201 = vunpack.c.l.b16 %v441
  %v2202 = vunpack.c.l.b16 %v442
  %v2203 = vunpack.c.l.b16 %v443
  %v2204 = vunpack.c.l.b16 %v444
  %v2205 = vunpack.c.l.b16 %v445
  %v2206 = vunpack.c.l.b16 %v446
  %v2207 = vunpack.c.l.b16 %v447
  %v2208 = vunpack.c.l.b16 %v448
  %v2209 = vunpack.c.l.b16 %v449
  %v2210 = vunpack.c.l.b16 %v450
  %v2211 = vunpack.c.l.b16 %v451
  %v2212 = vunpack.c.l.b16 %v452
  %v2213 = vunpack.c.l.b16 %v453
  %v2214 = vunpack.c.l.b16 %v454
  %v2215 = vunpack.c.l.b16 %v455
  %v2216 = vunpack.c.l.b16 %v456
  %v2217 = vunpack.c.l.b16 %v457
  %v2218 = vunpack.c.l.b16 %v458
  %v2219 = vunpack.c.l.b16 %v459
  %v2220 = vunpack.c.l.b16 %v460
  %v2221 = vunpack.c.l.b16 %v461
  %v2222 = vunpack.c.l.b16 %v462
  %v2223 = vunpack.c.l.b16 %v463
  %v2224 = vunpack.c.l.b16 %v464
  %v2225 = vunpack.c.l.b16 %v465
  %v2226 = vunpack.c.l.b16 %v466
  %v2227 = vunpack.c.l.b16 %v467
  %v2228 = vunpack.c.l.b16 %v468
  %v2229 = vunpack.c.l.b16 %v469
  %v2230 = vunpack.c.l.b16 %v470
  %v2231 = vunpack.c.l.b16 %v471
  %v2232 = vunpack.c.l.b16 %v472
  %v2233 = vunpack.c.l.b16 %v473
  %v2234 = vunpack.c.l.b16 %v474
  %v2235 = vunpack.c.l.b16 %v475
  %v2236 = vunpack.c.l.b16 %v476
  %v2237 = vunpack.c.l.b16 %v477
  %v2238 = vpack.c.b16 %v2095, %v2094
  %v2239 = vpack.c.b16 %v2097, %v2096
  %v2240 = vpack.c.b16 %v2099, %v2098
  %v2241 = vpack.c.b16 %v2101, %v2100
  %v2242 = vpack.c.b16 %v2103, %v2102
  %v2243 = vpack.c.b16 %v2105, %v2104
  %v2244 = vpack.c.b16 %v2107, %v2106
  %v2245 = vpack.c.b16 %v2109, %v2108
  %v2246 = vpack.c.b16 %v2111, %v2110
  %v2247 = vpack.c.b16 %v2113, %v2112
  %v2248 = vpack.c.b16 %v2115, %v2114
  %v2249 = vpack.c.b16 %v2117, %v2116
  %v2250 = vpack.c.b16 %v2119, %v2118
  %v2251 = vpack.c.b16 %v2121, %v2120
  %v2252 = vpack.c.b16 %v2123, %v2122
  %v2253 = vpack.c.b16 %v2125, %v2124
  %v2254 = vpack.c.b16 %v2127, %v2126
  %v2255 = vpack.c.b16 %v2129, %v2128
  %v2256 = vpack.c.b16 %v2131, %v2130
  %v2257 = vpack.c.b16 %v2133, %v2132
  %v2258 = vpack.c.b16 %v2135, %v2134
  %v2259 = vpack.c.b16 %v2137, %v2136
  %v2260 = vpack.c.b16 %v2139, %v2138
  %v2261 = vpack.c.b16 %v2141, %v2140
  %v2262 = vpack.c.b16 %v2143, %v2142
  %v2263 = vpack.c.b16 %v2145, %v2144
  %v2264 = vpack.c.b16 %v2147, %v2146
  %v2265 = vpack.c.b16 %v2149, %v2148
  %v2266 = vpack.c.b16 %v2151, %v2150
  %v2267 = vpack.c.b16 %v2153, %v2152
  %v2268 = vpack.c.b16 %v2155, %v2154
  %v2269 = vpack.c.b16 %v2157, %v2156
  %v2270 = vpack.c.b16 %v2159, %v2158
  %v2271 = vpack.c.b16 %v2161, %v2160
  %v2272 = vpack.c.b16 %v2163, %v2162
  %v2273 = vpack.c.b16 %v2165, %v2164
  %v2274 = vpack.c.b16 %v2167, %v2166
  %v2275 = vpack.c.b16 %v2169, %v2168
  %v2276 = vpack.c.b16 %v2171, %v2170
  %v2277 = vpack.c.b16 %v2173, %v2172
  %v2278 = vpack.c.b16 %v2175, %v2174
  %v2279 = vpack.c.b16 %v2177, %v2176
  %v2280 = vpack.c.b16 %v2179, %v2178
  %v2281 = vpack.c.b16 %v2181, %v2180
  %v2282 = vpack.c.b16 %v2183, %v2182
  %v2283 = vpack.c.b16 %v2185, %v2184
  %v2284 = vpack.c.b16 %v2187, %v2186
  %v2285 = vpack.c.b16 %v2189, %v2188
  %v2286 = vpack.c.b16 %v2191, %v2190
  %v2287 = vpack.c.b16 %v2193, %v2192
  %v2288 = vpack.c.b16 %v2195, %v2194
  %v2289 = vpack.c.b16 %v2197, %v2196
  %v2290 = vpack.c.b16 %v2199, %v2198
  %v2291 = vpack.c.b16 %v2201, %v2200
  %v2292 = vpack.c.b16 %v2203, %v2202
  %v2293 = vpack.c.b16 %v2205, %v2204
  %v2294 = vpack.c.b16 %v2207, %v2206
  %v2295 = vpack.c.b16 %v2209, %v2208
  %v2296 = vpack.c.b16 %v2211, %v2210
  %v2297 = vpack.c.b16 %v2213, %v2212
  %v2298 = vpack.c.b16 %v2215, %v2214
  %v2299 = vpack.c.b16 %v2217, %v2216
  %v2300 = vpack.c.b16 %v2219, %v2218
  %v2301 = vpack.c.b16 %v2221, %v2220
  %v2302 = vpack.c.b16 %v2223, %v2222
  %v2303 = vpack.c.b16 %v2225, %v2224
  %v2304 = vpack.c.b16 %v2227, %v2226
  %v2305 = vpack.c.b16 %v2229, %v2228
  %v2306 = vpack.c.b16 %v2231, %v2230
  %v2307 = vpack.c.b16 %v2233, %v2232
  %v2308 = vpack.c.b16 %v2235, %v2234
  %v2309 = vpack.c.b16 %v2237, %v2236
  %2382 = vmatprep.subr.bf16.mxu0 0
  %2383 = vmatpush1.bf16.msra.mxu0 %v2238
  %2384 = vmatprep.subr.bf16.mxu0 0
  %2385 = vmatpush1.bf16.msra.mxu0 %v2239
  %2386 = vmatprep.subr.bf16.mxu0 0
  %2387 = vmatpush1.bf16.msra.mxu0 %v2240
  %2388 = vmatprep.subr.bf16.mxu0 0
  %2389 = vmatpush1.bf16.msra.mxu0 %v2241
  %2390 = vmatprep.subr.bf16.mxu0 0
  %2391 = vmatpush1.bf16.msra.mxu0 %v2242
  %2392 = vmatprep.subr.bf16.mxu0 0
  %2393 = vmatpush1.bf16.msra.mxu0 %v2243
  %2394 = vmatprep.subr.bf16.mxu0 0
  %2395 = vmatpush1.bf16.msra.mxu0 %v2244
  %2396 = vmatprep.subr.bf16.mxu0 0
  %2397 = vmatpush1.bf16.msra.mxu0 %v2245
  %2398 = vmatprep.subr.bf16.mxu0 0
  %2399 = vmatpush1.bf16.msra.mxu0 %v2246
  %2400 = vmatprep.subr.bf16.mxu0 0
  %2401 = vmatpush1.bf16.msra.mxu0 %v2247
  %2402 = vmatprep.subr.bf16.mxu0 0
  %2403 = vmatpush1.bf16.msra.mxu0 %v2248
  %2404 = vmatprep.subr.bf16.mxu0 0
  %2405 = vmatpush1.bf16.msra.mxu0 %v2249
  %2406 = vmatprep.subr.bf16.mxu0 0
  %2407 = vmatpush1.bf16.msra.mxu0 %v2250
  %2408 = vmatprep.subr.bf16.mxu0 0
  %2409 = vmatpush1.bf16.msra.mxu0 %v2251
  %2410 = vmatprep.subr.bf16.mxu0 0
  %2411 = vmatpush1.bf16.msra.mxu0 %v2252
  %2412 = vmatprep.subr.bf16.mxu0 0
  %2413 = vmatpush1.bf16.msra.mxu0 %v2253
  %2414 = vmatprep.mubr.bf16.mxu0 %v1375
  %2415 = vmatmul.mubr.bf16.gmra.mrb[0].mxu0 %v1374
  %v2416 = vpop.f32.mrb[0].mxu0
  %v2417 = vadd.f32 0.0, %v2416
  %v2418 = vpop.f32.mrb[0].mxu0
  %v2419 = vpop.f32.mrb[0].mxu0
  %v2420 = vadd.f32 0.0, %v2419
  %v2421 = vpop.f32.mrb[0].mxu0
  %2422 = vmatprep.mubr.bf16.mxu0 %v1384
  %2423 = vmatmul.mubr.bf16.gmra.mrb[0].mxu0 %v1383
  %v2424 = vpop.f32.mrb[0].mxu0
  %v2425 = vadd.f32 0.0, %v2424
  %v2426 = vpop.f32.mrb[0].mxu0
  %v2427 = vpop.f32.mrb[0].mxu0
  %v2428 = vadd.f32 0.0, %v2427
  %v2429 = vpop.f32.mrb[0].mxu0
  %2430 = vmatprep.mubr.bf16.mxu0 %v1393
  %2431 = vmatmul.mubr.bf16.gmra.mrb[0].mxu0 %v1392
  %v2432 = vpop.f32.mrb[0].mxu0
  %v2433 = vadd.f32 0.0, %v2432
  %v2434 = vpop.f32.mrb[0].mxu0
  %v2435 = vpop.f32.mrb[0].mxu0
  %v2436 = vadd.f32 0.0, %v2435
  %v2437 = vpop.f32.mrb[0].mxu0
  %2438 = vmatprep.mubr.bf16.mxu0 %v1402
  %2439 = vmatmul.mubr.bf16.gmra.mrb[0].mxu0 %v1401
  %v2440 = vpop.f32.mrb[0].mxu0
  %v2441 = vadd.f32 0.0, %v2440
  %v2442 = vpop.f32.mrb[0].mxu0
  %v2443 = vpop.f32.mrb[0].mxu0
  %v2444 = vadd.f32 0.0, %v2443
  %v2445 = vpop.f32.mrb[0].mxu0
  %2446 = vmatprep.mubr.bf16.mxu0 %v1411
  %2447 = vmatmul.mubr.bf16.gmra.mrb[0].mxu0 %v1410
  %v2448 = vpop.f32.mrb[0].mxu0
  %v2449 = vadd.f32 0.0, %v2448
  %v2450 = vpop.f32.mrb[0].mxu0
  %v2451 = vpop.f32.mrb[0].mxu0
  %v2452 = vadd.f32 0.0, %v2451
  %v2453 = vpop.f32.mrb[0].mxu0
  %2454 = vmatprep.mubr.bf16.mxu0 %v1420
  %2455 = vmatmul.mubr.bf16.gmra.mrb[0].mxu0 %v1419
  %v2456 = vpop.f32.mrb[0].mxu0
  %v2457 = vadd.f32 0.0, %v2456
  %v2458 = vpop.f32.mrb[0].mxu0
  %v2459 = vpop.f32.mrb[0].mxu0
  %v2460 = vadd.f32 0.0, %v2459
  %v2461 = vpop.f32.mrb[0].mxu0
  %2462 = vmatprep.mubr.bf16.mxu0 %v1429
  %2463 = vmatmul.mubr.bf16.gmra.mrb[0].mxu0 %v1428
  %v2464 = vpop.f32.mrb[0].mxu0
  %v2465 = vadd.f32 0.0, %v2464
  %v2466 = vpop.f32.mrb[0].mxu0
  %v2467 = vpop.f32.mrb[0].mxu0
  %v2468 = vadd.f32 0.0, %v2467
  %v2469 = vpop.f32.mrb[0].mxu0
  %2470 = vmatprep.mubr.bf16.mxu0 %v1438
  %2471 = vmatmul.mubr.bf16.gmra.mrb[0].mxu0 %v1437
  %v2472 = vpop.f32.mrb[0].mxu0
  %v2473 = vadd.f32 0.0, %v2472
  %v2474 = vpop.f32.mrb[0].mxu0
  %v2475 = vpop.f32.mrb[0].mxu0
  %v2476 = vadd.f32 0.0, %v2475
  %v2477 = vpop.f32.mrb[0].mxu0
  %2478 = vmatprep.mubr.bf16.mxu0 %v1447
  %2479 = vmatmul.mubr.bf16.gmra.mrb[0].mxu0 %v1446
  %v2480 = vpop.f32.mrb[0].mxu0
  %v2481 = vadd.f32 0.0, %v2480
  %v2482 = vpop.f32.mrb[0].mxu0
  %v2483 = vpop.f32.mrb[0].mxu0
  %v2484 = vadd.f32 0.0, %v2483
  %v2485 = vpop.f32.mrb[0].mxu0
  %2486 = vmatprep.mubr.bf16.mxu0 %v1456
  %2487 = vmatmul.mubr.bf16.gmra.mrb[0].mxu0 %v1455
  %v2488 = vpop.f32.mrb[0].mxu0
  %v2489 = vadd.f32 0.0, %v2488
  %v2490 = vpop.f32.mrb[0].mxu0
  %v2491 = vpop.f32.mrb[0].mxu0
  %v2492 = vadd.f32 0.0, %v2491
  %v2493 = vpop.f32.mrb[0].mxu0
  %2494 = vmatprep.mubr.bf16.mxu0 %v1465
  %2495 = vmatmul.mubr.bf16.gmra.mrb[0].mxu0 %v1464
  %v2496 = vpop.f32.mrb[0].mxu0
  %v2497 = vadd.f32 0.0, %v2496
  %v2498 = vpop.f32.mrb[0].mxu0
  %v2499 = vpop.f32.mrb[0].mxu0
  %v2500 = vadd.f32 0.0, %v2499
  %v2501 = vpop.f32.mrb[0].mxu0
  %2502 = vmatprep.mubr.bf16.mxu0 %v1474
  %2503 = vmatmul.mubr.bf16.gmra.mrb[0].mxu0 %v1473
  %v2504 = vpop.f32.mrb[0].mxu0
  %v2505 = vadd.f32 0.0, %v2504
  %v2506 = vpop.f32.mrb[0].mxu0
  %v2507 = vpop.f32.mrb[0].mxu0
  %v2508 = vadd.f32 0.0, %v2507
  %v2509 = vpop.f32.mrb[0].mxu0
  %2510 = vmatprep.mubr.bf16.mxu0 %v1483
  %2511 = vmatmul.mubr.bf16.gmra.mrb[0].mxu0 %v1482
  %v2512 = vpop.f32.mrb[0].mxu0
  %v2513 = vadd.f32 0.0, %v2512
  %v2514 = vpop.f32.mrb[0].mxu0
  %v2515 = vpop.f32.mrb[0].mxu0
  %v2516 = vadd.f32 0.0, %v2515
  %v2517 = vpop.f32.mrb[0].mxu0
  %2518 = vmatprep.mubr.bf16.mxu0 %v1492
  %2519 = vmatmul.mubr.bf16.gmra.mrb[0].mxu0 %v1491
  %v2520 = vpop.f32.mrb[0].mxu0
  %v2521 = vadd.f32 0.0, %v2520
  %v2522 = vpop.f32.mrb[0].mxu0
  %v2523 = vpop.f32.mrb[0].mxu0
  %v2524 = vadd.f32 0.0, %v2523
  %v2525 = vpop.f32.mrb[0].mxu0
  %2526 = vmatprep.mubr.bf16.mxu0 %v1501
  %2527 = vmatmul.mubr.bf16.gmra.mrb[0].mxu0 %v1500
  %v2528 = vpop.f32.mrb[0].mxu0
  %v2529 = vadd.f32 0.0, %v2528
  %v2530 = vpop.f32.mrb[0].mxu0
  %v2531 = vpop.f32.mrb[0].mxu0
  %v2532 = vadd.f32 0.0, %v2531
  %v2533 = vpop.f32.mrb[0].mxu0
  %2534 = vmatprep.mubr.bf16.mxu0 %v1510
  %2535 = vmatmul.mubr.bf16.gmra.mrb[0].mxu0 %v1509
  %v2536 = vpop.f32.mrb[0].mxu0
  %v2537 = vadd.f32 0.0, %v2536
  %v2538 = vpop.f32.mrb[0].mxu0
  %v2539 = vpop.f32.mrb[0].mxu0
  %v2540 = vadd.f32 0.0, %v2539
  %v2541 = vpop.f32.mrb[0].mxu0
  %2542 = vmatprep.mubr.bf16.mxu0 %v1519
  %2543 = vmatmul.mubr.bf16.gmra.mrb[0].mxu0 %v1518
  %v2544 = vpop.f32.mrb[0].mxu0
  %v2545 = vadd.f32 0.0, %v2544
  %v2546 = vpop.f32.mrb[0].mxu0
  %v2547 = vpop.f32.mrb[0].mxu0
  %v2548 = vadd.f32 0.0, %v2547
  %v2549 = vpop.f32.mrb[0].mxu0
  %2550 = vmatprep.mubr.bf16.mxu0 %v1528
  %2551 = vmatmul.mubr.bf16.gmra.mrb[0].mxu0 %v1527
  %v2552 = vpop.f32.mrb[0].mxu0
  %v2553 = vadd.f32 0.0, %v2552
  %v2554 = vpop.f32.mrb[0].mxu0
  %v2555 = vpop.f32.mrb[0].mxu0
  %v2556 = vadd.f32 0.0, %v2555
  %v2557 = vpop.f32.mrb[0].mxu0
  %2558 = vmatprep.mubr.bf16.mxu0 %v1537
  %2559 = vmatmul.mubr.bf16.gmra.mrb[0].mxu0 %v1536
  %v2560 = vpop.f32.mrb[0].mxu0
  %v2561 = vadd.f32 0.0, %v2560
  %v2562 = vpop.f32.mrb[0].mxu0
  %v2563 = vpop.f32.mrb[0].mxu0
  %v2564 = vadd.f32 0.0, %v2563
  %v2565 = vpop.f32.mrb[0].mxu0
  %2566 = vmatprep.mubr.bf16.mxu0 %v1546
  %2567 = vmatmul.mubr.bf16.gmra.mrb[0].mxu0 %v1545
  %v2568 = vpop.f32.mrb[0].mxu0
  %v2569 = vadd.f32 0.0, %v2568
  %v2570 = vpop.f32.mrb[0].mxu0
  %v2571 = vpop.f32.mrb[0].mxu0
  %v2572 = vadd.f32 0.0, %v2571
  %v2573 = vpop.f32.mrb[0].mxu0
  %2574 = vmatprep.mubr.bf16.mxu0 %v1555
  %2575 = vmatmul.mubr.bf16.gmra.mrb[0].mxu0 %v1554
  %v2576 = vpop.f32.mrb[0].mxu0
  %v2577 = vadd.f32 0.0, %v2576
  %v2578 = vpop.f32.mrb[0].mxu0
  %v2579 = vpop.f32.mrb[0].mxu0
  %v2580 = vadd.f32 0.0, %v2579
  %v2581 = vpop.f32.mrb[0].mxu0
  %2582 = vmatprep.mubr.bf16.mxu0 %v1564
  %2583 = vmatmul.mubr.bf16.gmra.mrb[0].mxu0 %v1563
  %v2584 = vpop.f32.mrb[0].mxu0
  %v2585 = vadd.f32 0.0, %v2584
  %v2586 = vpop.f32.mrb[0].mxu0
  %v2587 = vpop.f32.mrb[0].mxu0
  %v2588 = vadd.f32 0.0, %v2587
  %v2589 = vpop.f32.mrb[0].mxu0
  %2590 = vmatprep.mubr.bf16.mxu0 %v1573
  %2591 = vmatmul.mubr.bf16.gmra.mrb[0].mxu0 %v1572
  %v2592 = vpop.f32.mrb[0].mxu0
  %v2593 = vadd.f32 0.0, %v2592
  %v2594 = vpop.f32.mrb[0].mxu0
  %v2595 = vpop.f32.mrb[0].mxu0
  %v2596 = vadd.f32 0.0, %v2595
  %v2597 = vpop.f32.mrb[0].mxu0
  %2598 = vmatprep.mubr.bf16.mxu0 %v1582
  %2599 = vmatmul.mubr.bf16.gmra.mrb[0].mxu0 %v1581
  %v2600 = vpop.f32.mrb[0].mxu0
  %v2601 = vadd.f32 0.0, %v2600
  %v2602 = vpop.f32.mrb[0].mxu0
  %v2603 = vpop.f32.mrb[0].mxu0
  %v2604 = vadd.f32 0.0, %v2603
  %v2605 = vpop.f32.mrb[0].mxu0
  %2606 = vmatprep.mubr.bf16.mxu0 %v1591
  %2607 = vmatmul.mubr.bf16.gmra.mrb[0].mxu0 %v1590
  %v2608 = vpop.f32.mrb[0].mxu0
  %v2609 = vadd.f32 0.0, %v2608
  %v2610 = vpop.f32.mrb[0].mxu0
  %v2611 = vpop.f32.mrb[0].mxu0
  %v2612 = vadd.f32 0.0, %v2611
  %v2613 = vpop.f32.mrb[0].mxu0
  %2614 = vmatprep.mubr.bf16.mxu0 %v1600
  %2615 = vmatmul.mubr.bf16.gmra.mrb[0].mxu0 %v1599
  %v2616 = vpop.f32.mrb[0].mxu0
  %v2617 = vadd.f32 0.0, %v2616
  %v2618 = vpop.f32.mrb[0].mxu0
  %v2619 = vpop.f32.mrb[0].mxu0
  %v2620 = vadd.f32 0.0, %v2619
  %v2621 = vpop.f32.mrb[0].mxu0
  %2622 = vmatprep.mubr.bf16.mxu0 %v1609
  %2623 = vmatmul.mubr.bf16.gmra.mrb[0].mxu0 %v1608
  %v2624 = vpop.f32.mrb[0].mxu0
  %v2625 = vadd.f32 0.0, %v2624
  %v2626 = vpop.f32.mrb[0].mxu0
  %v2627 = vpop.f32.mrb[0].mxu0
  %v2628 = vadd.f32 0.0, %v2627
  %v2629 = vpop.f32.mrb[0].mxu0
  %2630 = vmatprep.mubr.bf16.mxu0 %v1618
  %2631 = vmatmul.mubr.bf16.gmra.mrb[0].mxu0 %v1617
  %v2632 = vpop.f32.mrb[0].mxu0
  %v2633 = vadd.f32 0.0, %v2632
  %v2634 = vpop.f32.mrb[0].mxu0
  %v2635 = vpop.f32.mrb[0].mxu0
  %v2636 = vadd.f32 0.0, %v2635
  %v2637 = vpop.f32.mrb[0].mxu0
  %2638 = vmatprep.mubr.bf16.mxu0 %v1627
  %2639 = vmatmul.mubr.bf16.gmra.mrb[0].mxu0 %v1626
  %v2640 = vpop.f32.mrb[0].mxu0
  %v2641 = vadd.f32 0.0, %v2640
  %v2642 = vpop.f32.mrb[0].mxu0
  %v2643 = vpop.f32.mrb[0].mxu0
  %v2644 = vadd.f32 0.0, %v2643
  %v2645 = vpop.f32.mrb[0].mxu0
  %2646 = vmatprep.mubr.bf16.mxu0 %v1636
  %2647 = vmatmul.mubr.bf16.gmra.mrb[0].mxu0 %v1635
  %v2648 = vpop.f32.mrb[0].mxu0
  %v2649 = vadd.f32 0.0, %v2648
  %v2650 = vpop.f32.mrb[0].mxu0
  %v2651 = vpop.f32.mrb[0].mxu0
  %v2652 = vadd.f32 0.0, %v2651
  %v2653 = vpop.f32.mrb[0].mxu0
  %2654 = vmatprep.mubr.bf16.mxu0 %v1645
  %2655 = vmatmul.mubr.bf16.gmra.mrb[0].mxu0 %v1644
  %v2656 = vpop.f32.mrb[0].mxu0
  %v2657 = vadd.f32 0.0, %v2656
  %v2658 = vpop.f32.mrb[0].mxu0
  %v2659 = vpop.f32.mrb[0].mxu0
  %v2660 = vadd.f32 0.0, %v2659
  %v2661 = vpop.f32.mrb[0].mxu0
  %2662 = vmatprep.mubr.bf16.mxu0 %v1654
  %2663 = vmatmul.mubr.bf16.gmra.mrb[0].mxu0 %v1653
  %v2664 = vpop.f32.mrb[0].mxu0
  %v2665 = vadd.f32 0.0, %v2664
  %v2666 = vpop.f32.mrb[0].mxu0
  %v2667 = vpop.f32.mrb[0].mxu0
  %v2668 = vadd.f32 0.0, %v2667
  %v2669 = vpop.f32.mrb[0].mxu0
  %2670 = vdwg.mxu0
  %2671 = vmatprep.subr.bf16.mxu0 0
  %2672 = vmatpush1.bf16.msra.mxu0 %v2254
  %2673 = vmatprep.subr.bf16.mxu0 0
  %2674 = vmatpush1.bf16.msra.mxu0 %v2255
  %2675 = vmatprep.subr.bf16.mxu0 0
  %2676 = vmatpush1.bf16.msra.mxu0 %v2256
  %2677 = vmatprep.subr.bf16.mxu0 0
  %2678 = vmatpush1.bf16.msra.mxu0 %v2257
  %2679 = vmatprep.subr.bf16.mxu0 0
  %2680 = vmatpush1.bf16.msra.mxu0 %v2258
  %2681 = vmatprep.subr.bf16.mxu0 0
  %2682 = vmatpush1.bf16.msra.mxu0 %v2259
  %2683 = vmatprep.subr.bf16.mxu0 0
  %2684 = vmatpush1.bf16.msra.mxu0 %v2260
  %2685 = vmatprep.subr.bf16.mxu0 0
  %2686 = vmatpush1.bf16.msra.mxu0 %v2261
  %2687 = vmatprep.subr.bf16.mxu0 0
  %2688 = vmatpush1.bf16.msra.mxu0 %v2262
  %2689 = vmatprep.subr.bf16.mxu0 0
  %2690 = vmatpush1.bf16.msra.mxu0 %v2263
  %2691 = vmatprep.subr.bf16.mxu0 0
  %2692 = vmatpush1.bf16.msra.mxu0 %v2264
  %2693 = vmatprep.subr.bf16.mxu0 0
  %2694 = vmatpush1.bf16.msra.mxu0 %v2265
  %2695 = vmatprep.subr.bf16.mxu0 0
  %2696 = vmatpush1.bf16.msra.mxu0 %v2266
  %2697 = vmatprep.subr.bf16.mxu0 0
  %2698 = vmatpush1.bf16.msra.mxu0 %v2267
  %2699 = vmatprep.subr.bf16.mxu0 0
  %2700 = vmatpush1.bf16.msra.mxu0 %v2268
  %2701 = vmatprep.subr.bf16.mxu0 0
  %2702 = vmatpush1.bf16.msra.mxu0 %v2269
  %2703 = vmatprep.mubr.bf16.mxu0 %v1377
  %2704 = vmatmul.mubr.bf16.gmra.mrb[0].mxu0 %v1376
  %v2705 = vpop.f32.mrb[0].mxu0
  %v2706 = vadd.f32 %v2417, %v2705
  %v2707 = vpop.f32.mrb[0].mxu0
  %v2708 = vpop.f32.mrb[0].mxu0
  %v2709 = vadd.f32 %v2420, %v2708
  %v2710 = vpop.f32.mrb[0].mxu0
  %2711 = vmatprep.mubr.bf16.mxu0 %v1386
  %2712 = vmatmul.mubr.bf16.gmra.mrb[0].mxu0 %v1385
  %v2713 = vpop.f32.mrb[0].mxu0
  %v2714 = vadd.f32 %v2425, %v2713
  %v2715 = vpop.f32.mrb[0].mxu0
  %v2716 = vpop.f32.mrb[0].mxu0
  %v2717 = vadd.f32 %v2428, %v2716
  %v2718 = vpop.f32.mrb[0].mxu0
  %2719 = vmatprep.mubr.bf16.mxu0 %v1395
  %2720 = vmatmul.mubr.bf16.gmra.mrb[0].mxu0 %v1394
  %v2721 = vpop.f32.mrb[0].mxu0
  %v2722 = vadd.f32 %v2433, %v2721
  %v2723 = vpop.f32.mrb[0].mxu0
  %v2724 = vpop.f32.mrb[0].mxu0
  %v2725 = vadd.f32 %v2436, %v2724
  %v2726 = vpop.f32.mrb[0].mxu0
  %2727 = vmatprep.mubr.bf16.mxu0 %v1404
  %2728 = vmatmul.mubr.bf16.gmra.mrb[0].mxu0 %v1403
  %v2729 = vpop.f32.mrb[0].mxu0
  %v2730 = vadd.f32 %v2441, %v2729
  %v2731 = vpop.f32.mrb[0].mxu0
  %v2732 = vpop.f32.mrb[0].mxu0
  %v2733 = vadd.f32 %v2444, %v2732
  %v2734 = vpop.f32.mrb[0].mxu0
  %2735 = vmatprep.mubr.bf16.mxu0 %v1413
  %2736 = vmatmul.mubr.bf16.gmra.mrb[0].mxu0 %v1412
  %v2737 = vpop.f32.mrb[0].mxu0
  %v2738 = vadd.f32 %v2449, %v2737
  %v2739 = vpop.f32.mrb[0].mxu0
  %v2740 = vpop.f32.mrb[0].mxu0
  %v2741 = vadd.f32 %v2452, %v2740
  %v2742 = vpop.f32.mrb[0].mxu0
  %2743 = vmatprep.mubr.bf16.mxu0 %v1422
  %2744 = vmatmul.mubr.bf16.gmra.mrb[0].mxu0 %v1421
  %v2745 = vpop.f32.mrb[0].mxu0
  %v2746 = vadd.f32 %v2457, %v2745
  %v2747 = vpop.f32.mrb[0].mxu0
  %v2748 = vpop.f32.mrb[0].mxu0
  %v2749 = vadd.f32 %v2460, %v2748
  %v2750 = vpop.f32.mrb[0].mxu0
  %2751 = vmatprep.mubr.bf16.mxu0 %v1431
  %2752 = vmatmul.mubr.bf16.gmra.mrb[0].mxu0 %v1430
  %v2753 = vpop.f32.mrb[0].mxu0
  %v2754 = vadd.f32 %v2465, %v2753
  %v2755 = vpop.f32.mrb[0].mxu0
  %v2756 = vpop.f32.mrb[0].mxu0
  %v2757 = vadd.f32 %v2468, %v2756
  %v2758 = vpop.f32.mrb[0].mxu0
  %2759 = vmatprep.mubr.bf16.mxu0 %v1440
  %2760 = vmatmul.mubr.bf16.gmra.mrb[0].mxu0 %v1439
  %v2761 = vpop.f32.mrb[0].mxu0
  %v2762 = vadd.f32 %v2473, %v2761
  %v2763 = vpop.f32.mrb[0].mxu0
  %v2764 = vpop.f32.mrb[0].mxu0
  %v2765 = vadd.f32 %v2476, %v2764
  %v2766 = vpop.f32.mrb[0].mxu0
  %2767 = vmatprep.mubr.bf16.mxu0 %v1449
  %2768 = vmatmul.mubr.bf16.gmra.mrb[0].mxu0 %v1448
  %v2769 = vpop.f32.mrb[0].mxu0
  %v2770 = vadd.f32 %v2481, %v2769
  %v2771 = vpop.f32.mrb[0].mxu0
  %v2772 = vpop.f32.mrb[0].mxu0
  %v2773 = vadd.f32 %v2484, %v2772
  %v2774 = vpop.f32.mrb[0].mxu0
  %2775 = vmatprep.mubr.bf16.mxu0 %v1458
  %2776 = vmatmul.mubr.bf16.gmra.mrb[0].mxu0 %v1457
  %v2777 = vpop.f32.mrb[0].mxu0
  %v2778 = vadd.f32 %v2489, %v2777
  %v2779 = vpop.f32.mrb[0].mxu0
  %v2780 = vpop.f32.mrb[0].mxu0
  %v2781 = vadd.f32 %v2492, %v2780
  %v2782 = vpop.f32.mrb[0].mxu0
  %2783 = vmatprep.mubr.bf16.mxu0 %v1467
  %2784 = vmatmul.mubr.bf16.gmra.mrb[0].mxu0 %v1466
  %v2785 = vpop.f32.mrb[0].mxu0
  %v2786 = vadd.f32 %v2497, %v2785
  %v2787 = vpop.f32.mrb[0].mxu0
  %v2788 = vpop.f32.mrb[0].mxu0
  %v2789 = vadd.f32 %v2500, %v2788
  %v2790 = vpop.f32.mrb[0].mxu0
  %2791 = vmatprep.mubr.bf16.mxu0 %v1476
  %2792 = vmatmul.mubr.bf16.gmra.mrb[0].mxu0 %v1475
  %v2793 = vpop.f32.mrb[0].mxu0
  %v2794 = vadd.f32 %v2505, %v2793
  %v2795 = vpop.f32.mrb[0].mxu0
  %v2796 = vpop.f32.mrb[0].mxu0
  %v2797 = vadd.f32 %v2508, %v2796
  %v2798 = vpop.f32.mrb[0].mxu0
  %2799 = vmatprep.mubr.bf16.mxu0 %v1485
  %2800 = vmatmul.mubr.bf16.gmra.mrb[0].mxu0 %v1484
  %v2801 = vpop.f32.mrb[0].mxu0
  %v2802 = vadd.f32 %v2513, %v2801
  %v2803 = vpop.f32.mrb[0].mxu0
  %v2804 = vpop.f32.mrb[0].mxu0
  %v2805 = vadd.f32 %v2516, %v2804
  %v2806 = vpop.f32.mrb[0].mxu0
  %2807 = vmatprep.mubr.bf16.mxu0 %v1494
  %2808 = vmatmul.mubr.bf16.gmra.mrb[0].mxu0 %v1493
  %v2809 = vpop.f32.mrb[0].mxu0
  %v2810 = vadd.f32 %v2521, %v2809
  %v2811 = vpop.f32.mrb[0].mxu0
  %v2812 = vpop.f32.mrb[0].mxu0
  %v2813 = vadd.f32 %v2524, %v2812
  %v2814 = vpop.f32.mrb[0].mxu0
  %2815 = vmatprep.mubr.bf16.mxu0 %v1503
  %2816 = vmatmul.mubr.bf16.gmra.mrb[0].mxu0 %v1502
  %v2817 = vpop.f32.mrb[0].mxu0
  %v2818 = vadd.f32 %v2529, %v2817
  %v2819 = vpop.f32.mrb[0].mxu0
  %v2820 = vpop.f32.mrb[0].mxu0
  %v2821 = vadd.f32 %v2532, %v2820
  %v2822 = vpop.f32.mrb[0].mxu0
  %2823 = vmatprep.mubr.bf16.mxu0 %v1512
  %2824 = vmatmul.mubr.bf16.gmra.mrb[0].mxu0 %v1511
  %v2825 = vpop.f32.mrb[0].mxu0
  %v2826 = vadd.f32 %v2537, %v2825
  %v2827 = vpop.f32.mrb[0].mxu0
  %v2828 = vpop.f32.mrb[0].mxu0
  %v2829 = vadd.f32 %v2540, %v2828
  %v2830 = vpop.f32.mrb[0].mxu0
  %2831 = vmatprep.mubr.bf16.mxu0 %v1521
  %2832 = vmatmul.mubr.bf16.gmra.mrb[0].mxu0 %v1520
  %v2833 = vpop.f32.mrb[0].mxu0
  %v2834 = vadd.f32 %v2545, %v2833
  %v2835 = vpop.f32.mrb[0].mxu0
  %v2836 = vpop.f32.mrb[0].mxu0
  %v2837 = vadd.f32 %v2548, %v2836
  %v2838 = vpop.f32.mrb[0].mxu0
  %2839 = vmatprep.mubr.bf16.mxu0 %v1530
  %2840 = vmatmul.mubr.bf16.gmra.mrb[0].mxu0 %v1529
  %v2841 = vpop.f32.mrb[0].mxu0
  %v2842 = vadd.f32 %v2553, %v2841
  %v2843 = vpop.f32.mrb[0].mxu0
  %v2844 = vpop.f32.mrb[0].mxu0
  %v2845 = vadd.f32 %v2556, %v2844
  %v2846 = vpop.f32.mrb[0].mxu0
  %2847 = vmatprep.mubr.bf16.mxu0 %v1539
  %2848 = vmatmul.mubr.bf16.gmra.mrb[0].mxu0 %v1538
  %v2849 = vpop.f32.mrb[0].mxu0
  %v2850 = vadd.f32 %v2561, %v2849
  %v2851 = vpop.f32.mrb[0].mxu0
  %v2852 = vpop.f32.mrb[0].mxu0
  %v2853 = vadd.f32 %v2564, %v2852
  %v2854 = vpop.f32.mrb[0].mxu0
  %2855 = vmatprep.mubr.bf16.mxu0 %v1548
  %2856 = vmatmul.mubr.bf16.gmra.mrb[0].mxu0 %v1547
  %v2857 = vpop.f32.mrb[0].mxu0
  %v2858 = vadd.f32 %v2569, %v2857
  %v2859 = vpop.f32.mrb[0].mxu0
  %v2860 = vpop.f32.mrb[0].mxu0
  %v2861 = vadd.f32 %v2572, %v2860
  %v2862 = vpop.f32.mrb[0].mxu0
  %2863 = vmatprep.mubr.bf16.mxu0 %v1557
  %2864 = vmatmul.mubr.bf16.gmra.mrb[0].mxu0 %v1556
  %v2865 = vpop.f32.mrb[0].mxu0
  %v2866 = vadd.f32 %v2577, %v2865
  %v2867 = vpop.f32.mrb[0].mxu0
  %v2868 = vpop.f32.mrb[0].mxu0
  %v2869 = vadd.f32 %v2580, %v2868
  %v2870 = vpop.f32.mrb[0].mxu0
  %2871 = vmatprep.mubr.bf16.mxu0 %v1566
  %2872 = vmatmul.mubr.bf16.gmra.mrb[0].mxu0 %v1565
  %v2873 = vpop.f32.mrb[0].mxu0
  %v2874 = vadd.f32 %v2585, %v2873
  %v2875 = vpop.f32.mrb[0].mxu0
  %v2876 = vpop.f32.mrb[0].mxu0
  %v2877 = vadd.f32 %v2588, %v2876
  %v2878 = vpop.f32.mrb[0].mxu0
  %2879 = vmatprep.mubr.bf16.mxu0 %v1575
  %2880 = vmatmul.mubr.bf16.gmra.mrb[0].mxu0 %v1574
  %v2881 = vpop.f32.mrb[0].mxu0
  %v2882 = vadd.f32 %v2593, %v2881
  %v2883 = vpop.f32.mrb[0].mxu0
  %v2884 = vpop.f32.mrb[0].mxu0
  %v2885 = vadd.f32 %v2596, %v2884
  %v2886 = vpop.f32.mrb[0].mxu0
  %2887 = vmatprep.mubr.bf16.mxu0 %v1584
  %2888 = vmatmul.mubr.bf16.gmra.mrb[0].mxu0 %v1583
  %v2889 = vpop.f32.mrb[0].mxu0
  %v2890 = vadd.f32 %v2601, %v2889
  %v2891 = vpop.f32.mrb[0].mxu0
  %v2892 = vpop.f32.mrb[0].mxu0
  %v2893 = vadd.f32 %v2604, %v2892
  %v2894 = vpop.f32.mrb[0].mxu0
  %2895 = vmatprep.mubr.bf16.mxu0 %v1593
  %2896 = vmatmul.mubr.bf16.gmra.mrb[0].mxu0 %v1592
  %v2897 = vpop.f32.mrb[0].mxu0
  %v2898 = vadd.f32 %v2609, %v2897
  %v2899 = vpop.f32.mrb[0].mxu0
  %v2900 = vpop.f32.mrb[0].mxu0
  %v2901 = vadd.f32 %v2612, %v2900
  %v2902 = vpop.f32.mrb[0].mxu0
  %2903 = vmatprep.mubr.bf16.mxu0 %v1602
  %2904 = vmatmul.mubr.bf16.gmra.mrb[0].mxu0 %v1601
  %v2905 = vpop.f32.mrb[0].mxu0
  %v2906 = vadd.f32 %v2617, %v2905
  %v2907 = vpop.f32.mrb[0].mxu0
  %v2908 = vpop.f32.mrb[0].mxu0
  %v2909 = vadd.f32 %v2620, %v2908
  %v2910 = vpop.f32.mrb[0].mxu0
  %2911 = vmatprep.mubr.bf16.mxu0 %v1611
  %2912 = vmatmul.mubr.bf16.gmra.mrb[0].mxu0 %v1610
  %v2913 = vpop.f32.mrb[0].mxu0
  %v2914 = vadd.f32 %v2625, %v2913
  %v2915 = vpop.f32.mrb[0].mxu0
  %v2916 = vpop.f32.mrb[0].mxu0
  %v2917 = vadd.f32 %v2628, %v2916
  %v2918 = vpop.f32.mrb[0].mxu0
  %2919 = vmatprep.mubr.bf16.mxu0 %v1620
  %2920 = vmatmul.mubr.bf16.gmra.mrb[0].mxu0 %v1619
  %v2921 = vpop.f32.mrb[0].mxu0
  %v2922 = vadd.f32 %v2633, %v2921
  %v2923 = vpop.f32.mrb[0].mxu0
  %v2924 = vpop.f32.mrb[0].mxu0
  %v2925 = vadd.f32 %v2636, %v2924
  %v2926 = vpop.f32.mrb[0].mxu0
  %2927 = vmatprep.mubr.bf16.mxu0 %v1629
  %2928 = vmatmul.mubr.bf16.gmra.mrb[0].mxu0 %v1628
  %v2929 = vpop.f32.mrb[0].mxu0
  %v2930 = vadd.f32 %v2641, %v2929
  %v2931 = vpop.f32.mrb[0].mxu0
  %v2932 = vpop.f32.mrb[0].mxu0
  %v2933 = vadd.f32 %v2644, %v2932
  %v2934 = vpop.f32.mrb[0].mxu0
  %2935 = vmatprep.mubr.bf16.mxu0 %v1638
  %2936 = vmatmul.mubr.bf16.gmra.mrb[0].mxu0 %v1637
  %v2937 = vpop.f32.mrb[0].mxu0
  %v2938 = vadd.f32 %v2649, %v2937
  %v2939 = vpop.f32.mrb[0].mxu0
  %v2940 = vpop.f32.mrb[0].mxu0
  %v2941 = vadd.f32 %v2652, %v2940
  %v2942 = vpop.f32.mrb[0].mxu0
  %2943 = vmatprep.mubr.bf16.mxu0 %v1647
  %2944 = vmatmul.mubr.bf16.gmra.mrb[0].mxu0 %v1646
  %v2945 = vpop.f32.mrb[0].mxu0
  %v2946 = vadd.f32 %v2657, %v2945
  %v2947 = vpop.f32.mrb[0].mxu0
  %v2948 = vpop.f32.mrb[0].mxu0
  %v2949 = vadd.f32 %v2660, %v2948
  %v2950 = vpop.f32.mrb[0].mxu0
  %2951 = vmatprep.mubr.bf16.mxu0 %v1656
  %2952 = vmatmul.mubr.bf16.gmra.mrb[0].mxu0 %v1655
  %v2953 = vpop.f32.mrb[0].mxu0
  %v2954 = vadd.f32 %v2665, %v2953
  %v2955 = vpop.f32.mrb[0].mxu0
  %v2956 = vpop.f32.mrb[0].mxu0
  %v2957 = vadd.f32 %v2668, %v2956
  %v2958 = vpop.f32.mrb[0].mxu0
  %2959 = vdwg.mxu0
  %2960 = vmatprep.subr.bf16.mxu0 0
  %2961 = vmatpush1.bf16.msra.mxu0 %v2270
  %2962 = vmatprep.subr.bf16.mxu0 0
  %2963 = vmatpush1.bf16.msra.mxu0 %v2271
  %2964 = vmatprep.subr.bf16.mxu0 0
  %2965 = vmatpush1.bf16.msra.mxu0 %v2272
  %2966 = vmatprep.subr.bf16.mxu0 0
  %2967 = vmatpush1.bf16.msra.mxu0 %v2273
  %2968 = vmatprep.subr.bf16.mxu0 0
  %2969 = vmatpush1.bf16.msra.mxu0 %v2274
  %2970 = vmatprep.subr.bf16.mxu0 0
  %2971 = vmatpush1.bf16.msra.mxu0 %v2275
  %2972 = vmatprep.subr.bf16.mxu0 0
  %2973 = vmatpush1.bf16.msra.mxu0 %v2276
  %2974 = vmatprep.subr.bf16.mxu0 0
  %2975 = vmatpush1.bf16.msra.mxu0 %v2277
  %2976 = vmatprep.subr.bf16.mxu0 0
  %2977 = vmatpush1.bf16.msra.mxu0 %v2278
  %2978 = vmatprep.subr.bf16.mxu0 0
  %2979 = vmatpush1.bf16.msra.mxu0 %v2279
  %2980 = vmatprep.subr.bf16.mxu0 0
  %2981 = vmatpush1.bf16.msra.mxu0 %v2280
  %2982 = vmatprep.subr.bf16.mxu0 0
  %2983 = vmatpush1.bf16.msra.mxu0 %v2281
  %2984 = vmatprep.subr.bf16.mxu0 0
  %2985 = vmatpush1.bf16.msra.mxu0 %v2282
  %2986 = vmatprep.subr.bf16.mxu0 0
  %2987 = vmatpush1.bf16.msra.mxu0 %v2283
  %2988 = vmatprep.subr.bf16.mxu0 0
  %2989 = vmatpush1.bf16.msra.mxu0 %v2284
  %2990 = vmatprep.subr.bf16.mxu0 0
  %2991 = vmatpush1.bf16.msra.mxu0 %v2285
  %2992 = vmatprep.mubr.bf16.mxu0 %v1379
  %2993 = vmatmul.mubr.bf16.gmra.mrb[0].mxu0 %v1378
  %v2994 = vpop.f32.mrb[0].mxu0
  %v2995 = vadd.f32 %v2706, %v2994
  %v2996 = vpop.f32.mrb[0].mxu0
  %v2997 = vpop.f32.mrb[0].mxu0
  %v2998 = vadd.f32 %v2709, %v2997
  %v2999 = vpop.f32.mrb[0].mxu0
  %3000 = vmatprep.mubr.bf16.mxu0 %v1388
  %3001 = vmatmul.mubr.bf16.gmra.mrb[0].mxu0 %v1387
  %v3002 = vpop.f32.mrb[0].mxu0
  %v3003 = vadd.f32 %v2714, %v3002
  %v3004 = vpop.f32.mrb[0].mxu0
  %v3005 = vpop.f32.mrb[0].mxu0
  %v3006 = vadd.f32 %v2717, %v3005
  %v3007 = vpop.f32.mrb[0].mxu0
  %3008 = vmatprep.mubr.bf16.mxu0 %v1397
  %3009 = vmatmul.mubr.bf16.gmra.mrb[0].mxu0 %v1396
  %v3010 = vpop.f32.mrb[0].mxu0
  %v3011 = vadd.f32 %v2722, %v3010
  %v3012 = vpop.f32.mrb[0].mxu0
  %v3013 = vpop.f32.mrb[0].mxu0
  %v3014 = vadd.f32 %v2725, %v3013
  %v3015 = vpop.f32.mrb[0].mxu0
  %3016 = vmatprep.mubr.bf16.mxu0 %v1406
  %3017 = vmatmul.mubr.bf16.gmra.mrb[0].mxu0 %v1405
  %v3018 = vpop.f32.mrb[0].mxu0
  %v3019 = vadd.f32 %v2730, %v3018
  %v3020 = vpop.f32.mrb[0].mxu0
  %v3021 = vpop.f32.mrb[0].mxu0
  %v3022 = vadd.f32 %v2733, %v3021
  %v3023 = vpop.f32.mrb[0].mxu0
  %3024 = vmatprep.mubr.bf16.mxu0 %v1415
  %3025 = vmatmul.mubr.bf16.gmra.mrb[0].mxu0 %v1414
  %v3026 = vpop.f32.mrb[0].mxu0
  %v3027 = vadd.f32 %v2738, %v3026
  %v3028 = vpop.f32.mrb[0].mxu0
  %v3029 = vpop.f32.mrb[0].mxu0
  %v3030 = vadd.f32 %v2741, %v3029
  %v3031 = vpop.f32.mrb[0].mxu0
  %3032 = vmatprep.mubr.bf16.mxu0 %v1424
  %3033 = vmatmul.mubr.bf16.gmra.mrb[0].mxu0 %v1423
  %v3034 = vpop.f32.mrb[0].mxu0
  %v3035 = vadd.f32 %v2746, %v3034
  %v3036 = vpop.f32.mrb[0].mxu0
  %v3037 = vpop.f32.mrb[0].mxu0
  %v3038 = vadd.f32 %v2749, %v3037
  %v3039 = vpop.f32.mrb[0].mxu0
  %3040 = vmatprep.mubr.bf16.mxu0 %v1433
  %3041 = vmatmul.mubr.bf16.gmra.mrb[0].mxu0 %v1432
  %v3042 = vpop.f32.mrb[0].mxu0
  %v3043 = vadd.f32 %v2754, %v3042
  %v3044 = vpop.f32.mrb[0].mxu0
  %v3045 = vpop.f32.mrb[0].mxu0
  %v3046 = vadd.f32 %v2757, %v3045
  %v3047 = vpop.f32.mrb[0].mxu0
  %3048 = vmatprep.mubr.bf16.mxu0 %v1442
  %3049 = vmatmul.mubr.bf16.gmra.mrb[0].mxu0 %v1441
  %v3050 = vpop.f32.mrb[0].mxu0
  %v3051 = vadd.f32 %v2762, %v3050
  %v3052 = vpop.f32.mrb[0].mxu0
  %v3053 = vpop.f32.mrb[0].mxu0
  %v3054 = vadd.f32 %v2765, %v3053
  %v3055 = vpop.f32.mrb[0].mxu0
  %3056 = vmatprep.mubr.bf16.mxu0 %v1451
  %3057 = vmatmul.mubr.bf16.gmra.mrb[0].mxu0 %v1450
  %v3058 = vpop.f32.mrb[0].mxu0
  %v3059 = vadd.f32 %v2770, %v3058
  %v3060 = vpop.f32.mrb[0].mxu0
  %v3061 = vpop.f32.mrb[0].mxu0
  %v3062 = vadd.f32 %v2773, %v3061
  %v3063 = vpop.f32.mrb[0].mxu0
  %3064 = vmatprep.mubr.bf16.mxu0 %v1460
  %3065 = vmatmul.mubr.bf16.gmra.mrb[0].mxu0 %v1459
  %v3066 = vpop.f32.mrb[0].mxu0
  %v3067 = vadd.f32 %v2778, %v3066
  %v3068 = vpop.f32.mrb[0].mxu0
  %v3069 = vpop.f32.mrb[0].mxu0
  %v3070 = vadd.f32 %v2781, %v3069
  %v3071 = vpop.f32.mrb[0].mxu0
  %3072 = vmatprep.mubr.bf16.mxu0 %v1469
  %3073 = vmatmul.mubr.bf16.gmra.mrb[0].mxu0 %v1468
  %v3074 = vpop.f32.mrb[0].mxu0
  %v3075 = vadd.f32 %v2786, %v3074
  %v3076 = vpop.f32.mrb[0].mxu0
  %v3077 = vpop.f32.mrb[0].mxu0
  %v3078 = vadd.f32 %v2789, %v3077
  %v3079 = vpop.f32.mrb[0].mxu0
  %3080 = vmatprep.mubr.bf16.mxu0 %v1478
  %3081 = vmatmul.mubr.bf16.gmra.mrb[0].mxu0 %v1477
  %v3082 = vpop.f32.mrb[0].mxu0
  %v3083 = vadd.f32 %v2794, %v3082
  %v3084 = vpop.f32.mrb[0].mxu0
  %v3085 = vpop.f32.mrb[0].mxu0
  %v3086 = vadd.f32 %v2797, %v3085
  %v3087 = vpop.f32.mrb[0].mxu0
  %3088 = vmatprep.mubr.bf16.mxu0 %v1487
  %3089 = vmatmul.mubr.bf16.gmra.mrb[0].mxu0 %v1486
  %v3090 = vpop.f32.mrb[0].mxu0
  %v3091 = vadd.f32 %v2802, %v3090
  %v3092 = vpop.f32.mrb[0].mxu0
  %v3093 = vpop.f32.mrb[0].mxu0
  %v3094 = vadd.f32 %v2805, %v3093
  %v3095 = vpop.f32.mrb[0].mxu0
  %3096 = vmatprep.mubr.bf16.mxu0 %v1496
  %3097 = vmatmul.mubr.bf16.gmra.mrb[0].mxu0 %v1495
  %v3098 = vpop.f32.mrb[0].mxu0
  %v3099 = vadd.f32 %v2810, %v3098
  %v3100 = vpop.f32.mrb[0].mxu0
  %v3101 = vpop.f32.mrb[0].mxu0
  %v3102 = vadd.f32 %v2813, %v3101
  %v3103 = vpop.f32.mrb[0].mxu0
  %3104 = vmatprep.mubr.bf16.mxu0 %v1505
  %3105 = vmatmul.mubr.bf16.gmra.mrb[0].mxu0 %v1504
  %v3106 = vpop.f32.mrb[0].mxu0
  %v3107 = vadd.f32 %v2818, %v3106
  %v3108 = vpop.f32.mrb[0].mxu0
  %v3109 = vpop.f32.mrb[0].mxu0
  %v3110 = vadd.f32 %v2821, %v3109
  %v3111 = vpop.f32.mrb[0].mxu0
  %3112 = vmatprep.mubr.bf16.mxu0 %v1514
  %3113 = vmatmul.mubr.bf16.gmra.mrb[0].mxu0 %v1513
  %v3114 = vpop.f32.mrb[0].mxu0
  %v3115 = vadd.f32 %v2826, %v3114
  %v3116 = vpop.f32.mrb[0].mxu0
  %v3117 = vpop.f32.mrb[0].mxu0
  %v3118 = vadd.f32 %v2829, %v3117
  %v3119 = vpop.f32.mrb[0].mxu0
  %3120 = vmatprep.mubr.bf16.mxu0 %v1523
  %3121 = vmatmul.mubr.bf16.gmra.mrb[0].mxu0 %v1522
  %v3122 = vpop.f32.mrb[0].mxu0
  %v3123 = vadd.f32 %v2834, %v3122
  %v3124 = vpop.f32.mrb[0].mxu0
  %v3125 = vpop.f32.mrb[0].mxu0
  %v3126 = vadd.f32 %v2837, %v3125
  %v3127 = vpop.f32.mrb[0].mxu0
  %3128 = vmatprep.mubr.bf16.mxu0 %v1532
  %3129 = vmatmul.mubr.bf16.gmra.mrb[0].mxu0 %v1531
  %v3130 = vpop.f32.mrb[0].mxu0
  %v3131 = vadd.f32 %v2842, %v3130
  %v3132 = vpop.f32.mrb[0].mxu0
  %v3133 = vpop.f32.mrb[0].mxu0
  %v3134 = vadd.f32 %v2845, %v3133
  %v3135 = vpop.f32.mrb[0].mxu0
  %3136 = vmatprep.mubr.bf16.mxu0 %v1541
  %3137 = vmatmul.mubr.bf16.gmra.mrb[0].mxu0 %v1540
  %v3138 = vpop.f32.mrb[0].mxu0
  %v3139 = vadd.f32 %v2850, %v3138
  %v3140 = vpop.f32.mrb[0].mxu0
  %v3141 = vpop.f32.mrb[0].mxu0
  %v3142 = vadd.f32 %v2853, %v3141
  %v3143 = vpop.f32.mrb[0].mxu0
  %3144 = vmatprep.mubr.bf16.mxu0 %v1550
  %3145 = vmatmul.mubr.bf16.gmra.mrb[0].mxu0 %v1549
  %v3146 = vpop.f32.mrb[0].mxu0
  %v3147 = vadd.f32 %v2858, %v3146
  %v3148 = vpop.f32.mrb[0].mxu0
  %v3149 = vpop.f32.mrb[0].mxu0
  %v3150 = vadd.f32 %v2861, %v3149
  %v3151 = vpop.f32.mrb[0].mxu0
  %3152 = vmatprep.mubr.bf16.mxu0 %v1559
  %3153 = vmatmul.mubr.bf16.gmra.mrb[0].mxu0 %v1558
  %v3154 = vpop.f32.mrb[0].mxu0
  %v3155 = vadd.f32 %v2866, %v3154
  %v3156 = vpop.f32.mrb[0].mxu0
  %v3157 = vpop.f32.mrb[0].mxu0
  %v3158 = vadd.f32 %v2869, %v3157
  %v3159 = vpop.f32.mrb[0].mxu0
  %3160 = vmatprep.mubr.bf16.mxu0 %v1568
  %3161 = vmatmul.mubr.bf16.gmra.mrb[0].mxu0 %v1567
  %v3162 = vpop.f32.mrb[0].mxu0
  %v3163 = vadd.f32 %v2874, %v3162
  %v3164 = vpop.f32.mrb[0].mxu0
  %v3165 = vpop.f32.mrb[0].mxu0
  %v3166 = vadd.f32 %v2877, %v3165
  %v3167 = vpop.f32.mrb[0].mxu0
  %3168 = vmatprep.mubr.bf16.mxu0 %v1577
  %3169 = vmatmul.mubr.bf16.gmra.mrb[0].mxu0 %v1576
  %v3170 = vpop.f32.mrb[0].mxu0
  %v3171 = vadd.f32 %v2882, %v3170
  %v3172 = vpop.f32.mrb[0].mxu0
  %v3173 = vpop.f32.mrb[0].mxu0
  %v3174 = vadd.f32 %v2885, %v3173
  %v3175 = vpop.f32.mrb[0].mxu0
  %3176 = vmatprep.mubr.bf16.mxu0 %v1586
  %3177 = vmatmul.mubr.bf16.gmra.mrb[0].mxu0 %v1585
  %v3178 = vpop.f32.mrb[0].mxu0
  %v3179 = vadd.f32 %v2890, %v3178
  %v3180 = vpop.f32.mrb[0].mxu0
  %v3181 = vpop.f32.mrb[0].mxu0
  %v3182 = vadd.f32 %v2893, %v3181
  %v3183 = vpop.f32.mrb[0].mxu0
  %3184 = vmatprep.mubr.bf16.mxu0 %v1595
  %3185 = vmatmul.mubr.bf16.gmra.mrb[0].mxu0 %v1594
  %v3186 = vpop.f32.mrb[0].mxu0
  %v3187 = vadd.f32 %v2898, %v3186
  %v3188 = vpop.f32.mrb[0].mxu0
  %v3189 = vpop.f32.mrb[0].mxu0
  %v3190 = vadd.f32 %v2901, %v3189
  %v3191 = vpop.f32.mrb[0].mxu0
  %3192 = vmatprep.mubr.bf16.mxu0 %v1604
  %3193 = vmatmul.mubr.bf16.gmra.mrb[0].mxu0 %v1603
  %v3194 = vpop.f32.mrb[0].mxu0
  %v3195 = vadd.f32 %v2906, %v3194
  %v3196 = vpop.f32.mrb[0].mxu0
  %v3197 = vpop.f32.mrb[0].mxu0
  %v3198 = vadd.f32 %v2909, %v3197
  %v3199 = vpop.f32.mrb[0].mxu0
  %3200 = vmatprep.mubr.bf16.mxu0 %v1613
  %3201 = vmatmul.mubr.bf16.gmra.mrb[0].mxu0 %v1612
  %v3202 = vpop.f32.mrb[0].mxu0
  %v3203 = vadd.f32 %v2914, %v3202
  %v3204 = vpop.f32.mrb[0].mxu0
  %v3205 = vpop.f32.mrb[0].mxu0
  %v3206 = vadd.f32 %v2917, %v3205
  %v3207 = vpop.f32.mrb[0].mxu0
  %3208 = vmatprep.mubr.bf16.mxu0 %v1622
  %3209 = vmatmul.mubr.bf16.gmra.mrb[0].mxu0 %v1621
  %v3210 = vpop.f32.mrb[0].mxu0
  %v3211 = vadd.f32 %v2922, %v3210
  %v3212 = vpop.f32.mrb[0].mxu0
  %v3213 = vpop.f32.mrb[0].mxu0
  %v3214 = vadd.f32 %v2925, %v3213
  %v3215 = vpop.f32.mrb[0].mxu0
  %3216 = vmatprep.mubr.bf16.mxu0 %v1631
  %3217 = vmatmul.mubr.bf16.gmra.mrb[0].mxu0 %v1630
  %v3218 = vpop.f32.mrb[0].mxu0
  %v3219 = vadd.f32 %v2930, %v3218
  %v3220 = vpop.f32.mrb[0].mxu0
  %v3221 = vpop.f32.mrb[0].mxu0
  %v3222 = vadd.f32 %v2933, %v3221
  %v3223 = vpop.f32.mrb[0].mxu0
  %3224 = vmatprep.mubr.bf16.mxu0 %v1640
  %3225 = vmatmul.mubr.bf16.gmra.mrb[0].mxu0 %v1639
  %v3226 = vpop.f32.mrb[0].mxu0
  %v3227 = vadd.f32 %v2938, %v3226
  %v3228 = vpop.f32.mrb[0].mxu0
  %v3229 = vpop.f32.mrb[0].mxu0
  %v3230 = vadd.f32 %v2941, %v3229
  %v3231 = vpop.f32.mrb[0].mxu0
  %3232 = vmatprep.mubr.bf16.mxu0 %v1649
  %3233 = vmatmul.mubr.bf16.gmra.mrb[0].mxu0 %v1648
  %v3234 = vpop.f32.mrb[0].mxu0
  %v3235 = vadd.f32 %v2946, %v3234
  %v3236 = vpop.f32.mrb[0].mxu0
  %v3237 = vpop.f32.mrb[0].mxu0
  %v3238 = vadd.f32 %v2949, %v3237
  %v3239 = vpop.f32.mrb[0].mxu0
  %3240 = vmatprep.mubr.bf16.mxu0 %v1658
  %3241 = vmatmul.mubr.bf16.gmra.mrb[0].mxu0 %v1657
  %v3242 = vpop.f32.mrb[0].mxu0
  %v3243 = vadd.f32 %v2954, %v3242
  %v3244 = vpop.f32.mrb[0].mxu0
  %v3245 = vpop.f32.mrb[0].mxu0
  %v3246 = vadd.f32 %v2957, %v3245
  %v3247 = vpop.f32.mrb[0].mxu0
  %3248 = vdwg.mxu0
  %3249 = vmatprep.subr.bf16.mxu0 0
  %3250 = vmatpush1.bf16.msra.mxu0 %v2286
  %3251 = vmatprep.subr.bf16.mxu0 0
  %3252 = vmatpush1.bf16.msra.mxu0 %v2287
  %3253 = vmatprep.subr.bf16.mxu0 0
  %3254 = vmatpush1.bf16.msra.mxu0 %v2288
  %3255 = vmatprep.subr.bf16.mxu0 0
  %3256 = vmatpush1.bf16.msra.mxu0 %v2289
  %3257 = vmatprep.subr.bf16.mxu0 0
  %3258 = vmatpush1.bf16.msra.mxu0 %v2290
  %3259 = vmatprep.subr.bf16.mxu0 0
  %3260 = vmatpush1.bf16.msra.mxu0 %v2291
  %3261 = vmatprep.subr.bf16.mxu0 0
  %3262 = vmatpush1.bf16.msra.mxu0 %v2292
  %3263 = vmatprep.subr.bf16.mxu0 0
  %3264 = vmatpush1.bf16.msra.mxu0 %v2293
  %3265 = vmatprep.subr.bf16.mxu0 0
  %3266 = vmatpush1.bf16.msra.mxu0 %v2294
  %3267 = vmatprep.subr.bf16.mxu0 0
  %3268 = vmatpush1.bf16.msra.mxu0 %v2295
  %3269 = vmatprep.subr.bf16.mxu0 0
  %3270 = vmatpush1.bf16.msra.mxu0 %v2296
  %3271 = vmatprep.subr.bf16.mxu0 0
  %3272 = vmatpush1.bf16.msra.mxu0 %v2297
  %3273 = vmatprep.subr.bf16.mxu0 0
  %3274 = vmatpush1.bf16.msra.mxu0 %v2298
  %3275 = vmatprep.subr.bf16.mxu0 0
  %3276 = vmatpush1.bf16.msra.mxu0 %v2299
  %3277 = vmatprep.subr.bf16.mxu0 0
  %3278 = vmatpush1.bf16.msra.mxu0 %v2300
  %3279 = vmatprep.subr.bf16.mxu0 0
  %3280 = vmatpush1.bf16.msra.mxu0 %v2301
  %3281 = vmatprep.mubr.bf16.mxu0 %v1381
  %3282 = vmatmul.mubr.bf16.gmra.mrb[0].mxu0 %v1380
  %v3283 = vpop.f32.mrb[0].mxu0
  %v3284 = vadd.f32 %v2995, %v3283
  %v3285 = vpop.f32.mrb[0].mxu0
  %v3286 = vpop.f32.mrb[0].mxu0
  %v3287 = vadd.f32 %v2998, %v3286
  %v3288 = vpop.f32.mrb[0].mxu0
  %3289 = vmatprep.mubr.bf16.mxu0 %v1390
  %3290 = vmatmul.mubr.bf16.gmra.mrb[0].mxu0 %v1389
  %v3291 = vpop.f32.mrb[0].mxu0
  %v3292 = vadd.f32 %v3003, %v3291
  %v3293 = vpop.f32.mrb[0].mxu0
  %v3294 = vpop.f32.mrb[0].mxu0
  %v3295 = vadd.f32 %v3006, %v3294
  %v3296 = vpop.f32.mrb[0].mxu0
  %3297 = vmatprep.mubr.bf16.mxu0 %v1399
  %3298 = vmatmul.mubr.bf16.gmra.mrb[0].mxu0 %v1398
  %v3299 = vpop.f32.mrb[0].mxu0
  %v3300 = vadd.f32 %v3011, %v3299
  %v3301 = vpop.f32.mrb[0].mxu0
  %v3302 = vpop.f32.mrb[0].mxu0
  %v3303 = vadd.f32 %v3014, %v3302
  %v3304 = vpop.f32.mrb[0].mxu0
  %3305 = vmatprep.mubr.bf16.mxu0 %v1408
  %3306 = vmatmul.mubr.bf16.gmra.mrb[0].mxu0 %v1407
  %v3307 = vpop.f32.mrb[0].mxu0
  %v3308 = vadd.f32 %v3019, %v3307
  %v3309 = vpop.f32.mrb[0].mxu0
  %v3310 = vpop.f32.mrb[0].mxu0
  %v3311 = vadd.f32 %v3022, %v3310
  %v3312 = vpop.f32.mrb[0].mxu0
  %3313 = vmatprep.mubr.bf16.mxu0 %v1417
  %3314 = vmatmul.mubr.bf16.gmra.mrb[0].mxu0 %v1416
  %v3315 = vpop.f32.mrb[0].mxu0
  %v3316 = vadd.f32 %v3027, %v3315
  %v3317 = vpop.f32.mrb[0].mxu0
  %v3318 = vpop.f32.mrb[0].mxu0
  %v3319 = vadd.f32 %v3030, %v3318
  %v3320 = vpop.f32.mrb[0].mxu0
  %3321 = vmatprep.mubr.bf16.mxu0 %v1426
  %3322 = vmatmul.mubr.bf16.gmra.mrb[0].mxu0 %v1425
  %v3323 = vpop.f32.mrb[0].mxu0
  %v3324 = vadd.f32 %v3035, %v3323
  %v3325 = vpop.f32.mrb[0].mxu0
  %v3326 = vpop.f32.mrb[0].mxu0
  %v3327 = vadd.f32 %v3038, %v3326
  %v3328 = vpop.f32.mrb[0].mxu0
  %3329 = vmatprep.mubr.bf16.mxu0 %v1435
  %3330 = vmatmul.mubr.bf16.gmra.mrb[0].mxu0 %v1434
  %v3331 = vpop.f32.mrb[0].mxu0
  %v3332 = vadd.f32 %v3043, %v3331
  %v3333 = vpop.f32.mrb[0].mxu0
  %v3334 = vpop.f32.mrb[0].mxu0
  %v3335 = vadd.f32 %v3046, %v3334
  %v3336 = vpop.f32.mrb[0].mxu0
  %3337 = vmatprep.mubr.bf16.mxu0 %v1444
  %3338 = vmatmul.mubr.bf16.gmra.mrb[0].mxu0 %v1443
  %v3339 = vpop.f32.mrb[0].mxu0
  %v3340 = vadd.f32 %v3051, %v3339
  %v3341 = vpop.f32.mrb[0].mxu0
  %v3342 = vpop.f32.mrb[0].mxu0
  %v3343 = vadd.f32 %v3054, %v3342
  %v3344 = vpop.f32.mrb[0].mxu0
  %3345 = vmatprep.mubr.bf16.mxu0 %v1453
  %3346 = vmatmul.mubr.bf16.gmra.mrb[0].mxu0 %v1452
  %v3347 = vpop.f32.mrb[0].mxu0
  %v3348 = vadd.f32 %v3059, %v3347
  %v3349 = vpop.f32.mrb[0].mxu0
  %v3350 = vpop.f32.mrb[0].mxu0
  %v3351 = vadd.f32 %v3062, %v3350
  %v3352 = vpop.f32.mrb[0].mxu0
  %3353 = vmatprep.mubr.bf16.mxu0 %v1462
  %3354 = vmatmul.mubr.bf16.gmra.mrb[0].mxu0 %v1461
  %v3355 = vpop.f32.mrb[0].mxu0
  %v3356 = vadd.f32 %v3067, %v3355
  %v3357 = vpop.f32.mrb[0].mxu0
  %v3358 = vpop.f32.mrb[0].mxu0
  %v3359 = vadd.f32 %v3070, %v3358
  %v3360 = vpop.f32.mrb[0].mxu0
  %3361 = vmatprep.mubr.bf16.mxu0 %v1471
  %3362 = vmatmul.mubr.bf16.gmra.mrb[0].mxu0 %v1470
  %v3363 = vpop.f32.mrb[0].mxu0
  %v3364 = vadd.f32 %v3075, %v3363
  %v3365 = vpop.f32.mrb[0].mxu0
  %v3366 = vpop.f32.mrb[0].mxu0
  %v3367 = vadd.f32 %v3078, %v3366
  %v3368 = vpop.f32.mrb[0].mxu0
  %3369 = vmatprep.mubr.bf16.mxu0 %v1480
  %3370 = vmatmul.mubr.bf16.gmra.mrb[0].mxu0 %v1479
  %v3371 = vpop.f32.mrb[0].mxu0
  %v3372 = vadd.f32 %v3083, %v3371
  %v3373 = vpop.f32.mrb[0].mxu0
  %v3374 = vpop.f32.mrb[0].mxu0
  %v3375 = vadd.f32 %v3086, %v3374
  %v3376 = vpop.f32.mrb[0].mxu0
  %3377 = vmatprep.mubr.bf16.mxu0 %v1489
  %3378 = vmatmul.mubr.bf16.gmra.mrb[0].mxu0 %v1488
  %v3379 = vpop.f32.mrb[0].mxu0
  %v3380 = vadd.f32 %v3091, %v3379
  %v3381 = vpop.f32.mrb[0].mxu0
  %v3382 = vpop.f32.mrb[0].mxu0
  %v3383 = vadd.f32 %v3094, %v3382
  %v3384 = vpop.f32.mrb[0].mxu0
  %3385 = vmatprep.mubr.bf16.mxu0 %v1498
  %3386 = vmatmul.mubr.bf16.gmra.mrb[0].mxu0 %v1497
  %v3387 = vpop.f32.mrb[0].mxu0
  %v3388 = vadd.f32 %v3099, %v3387
  %v3389 = vpop.f32.mrb[0].mxu0
  %v3390 = vpop.f32.mrb[0].mxu0
  %v3391 = vadd.f32 %v3102, %v3390
  %v3392 = vpop.f32.mrb[0].mxu0
  %3393 = vmatprep.mubr.bf16.mxu0 %v1507
  %3394 = vmatmul.mubr.bf16.gmra.mrb[0].mxu0 %v1506
  %v3395 = vpop.f32.mrb[0].mxu0
  %v3396 = vadd.f32 %v3107, %v3395
  %v3397 = vpop.f32.mrb[0].mxu0
  %v3398 = vpop.f32.mrb[0].mxu0
  %v3399 = vadd.f32 %v3110, %v3398
  %v3400 = vpop.f32.mrb[0].mxu0
  %3401 = vmatprep.mubr.bf16.mxu0 %v1516
  %3402 = vmatmul.mubr.bf16.gmra.mrb[0].mxu0 %v1515
  %v3403 = vpop.f32.mrb[0].mxu0
  %v3404 = vadd.f32 %v3115, %v3403
  %v3405 = vpop.f32.mrb[0].mxu0
  %v3406 = vpop.f32.mrb[0].mxu0
  %v3407 = vadd.f32 %v3118, %v3406
  %v3408 = vpop.f32.mrb[0].mxu0
  %3409 = vmatprep.mubr.bf16.mxu0 %v1525
  %3410 = vmatmul.mubr.bf16.gmra.mrb[0].mxu0 %v1524
  %v3411 = vpop.f32.mrb[0].mxu0
  %v3412 = vadd.f32 %v3123, %v3411
  %v3413 = vpop.f32.mrb[0].mxu0
  %v3414 = vpop.f32.mrb[0].mxu0
  %v3415 = vadd.f32 %v3126, %v3414
  %v3416 = vpop.f32.mrb[0].mxu0
  %3417 = vmatprep.mubr.bf16.mxu0 %v1534
  %3418 = vmatmul.mubr.bf16.gmra.mrb[0].mxu0 %v1533
  %v3419 = vpop.f32.mrb[0].mxu0
  %v3420 = vadd.f32 %v3131, %v3419
  %v3421 = vpop.f32.mrb[0].mxu0
  %v3422 = vpop.f32.mrb[0].mxu0
  %v3423 = vadd.f32 %v3134, %v3422
  %v3424 = vpop.f32.mrb[0].mxu0
  %3425 = vmatprep.mubr.bf16.mxu0 %v1543
  %3426 = vmatmul.mubr.bf16.gmra.mrb[0].mxu0 %v1542
  %v3427 = vpop.f32.mrb[0].mxu0
  %v3428 = vadd.f32 %v3139, %v3427
  %v3429 = vpop.f32.mrb[0].mxu0
  %v3430 = vpop.f32.mrb[0].mxu0
  %v3431 = vadd.f32 %v3142, %v3430
  %v3432 = vpop.f32.mrb[0].mxu0
  %3433 = vmatprep.mubr.bf16.mxu0 %v1552
  %3434 = vmatmul.mubr.bf16.gmra.mrb[0].mxu0 %v1551
  %v3435 = vpop.f32.mrb[0].mxu0
  %v3436 = vadd.f32 %v3147, %v3435
  %v3437 = vpop.f32.mrb[0].mxu0
  %v3438 = vpop.f32.mrb[0].mxu0
  %v3439 = vadd.f32 %v3150, %v3438
  %v3440 = vpop.f32.mrb[0].mxu0
  %3441 = vmatprep.mubr.bf16.mxu0 %v1561
  %3442 = vmatmul.mubr.bf16.gmra.mrb[0].mxu0 %v1560
  %v3443 = vpop.f32.mrb[0].mxu0
  %v3444 = vadd.f32 %v3155, %v3443
  %v3445 = vpop.f32.mrb[0].mxu0
  %v3446 = vpop.f32.mrb[0].mxu0
  %v3447 = vadd.f32 %v3158, %v3446
  %v3448 = vpop.f32.mrb[0].mxu0
  %3449 = vmatprep.mubr.bf16.mxu0 %v1570
  %3450 = vmatmul.mubr.bf16.gmra.mrb[0].mxu0 %v1569
  %v3451 = vpop.f32.mrb[0].mxu0
  %v3452 = vadd.f32 %v3163, %v3451
  %v3453 = vpop.f32.mrb[0].mxu0
  %v3454 = vpop.f32.mrb[0].mxu0
  %v3455 = vadd.f32 %v3166, %v3454
  %v3456 = vpop.f32.mrb[0].mxu0
  %3457 = vmatprep.mubr.bf16.mxu0 %v1579
  %3458 = vmatmul.mubr.bf16.gmra.mrb[0].mxu0 %v1578
  %v3459 = vpop.f32.mrb[0].mxu0
  %v3460 = vadd.f32 %v3171, %v3459
  %v3461 = vpop.f32.mrb[0].mxu0
  %v3462 = vpop.f32.mrb[0].mxu0
  %v3463 = vadd.f32 %v3174, %v3462
  %v3464 = vpop.f32.mrb[0].mxu0
  %3465 = vmatprep.mubr.bf16.mxu0 %v1588
  %3466 = vmatmul.mubr.bf16.gmra.mrb[0].mxu0 %v1587
  %v3467 = vpop.f32.mrb[0].mxu0
  %v3468 = vadd.f32 %v3179, %v3467
  %v3469 = vpop.f32.mrb[0].mxu0
  %v3470 = vpop.f32.mrb[0].mxu0
  %v3471 = vadd.f32 %v3182, %v3470
  %v3472 = vpop.f32.mrb[0].mxu0
  %3473 = vmatprep.mubr.bf16.mxu0 %v1597
  %3474 = vmatmul.mubr.bf16.gmra.mrb[0].mxu0 %v1596
  %v3475 = vpop.f32.mrb[0].mxu0
  %v3476 = vadd.f32 %v3187, %v3475
  %v3477 = vpop.f32.mrb[0].mxu0
  %v3478 = vpop.f32.mrb[0].mxu0
  %v3479 = vadd.f32 %v3190, %v3478
  %v3480 = vpop.f32.mrb[0].mxu0
  %3481 = vmatprep.mubr.bf16.mxu0 %v1606
  %3482 = vmatmul.mubr.bf16.gmra.mrb[0].mxu0 %v1605
  %v3483 = vpop.f32.mrb[0].mxu0
  %v3484 = vadd.f32 %v3195, %v3483
  %v3485 = vpop.f32.mrb[0].mxu0
  %v3486 = vpop.f32.mrb[0].mxu0
  %v3487 = vadd.f32 %v3198, %v3486
  %v3488 = vpop.f32.mrb[0].mxu0
  %3489 = vmatprep.mubr.bf16.mxu0 %v1615
  %3490 = vmatmul.mubr.bf16.gmra.mrb[0].mxu0 %v1614
  %v3491 = vpop.f32.mrb[0].mxu0
  %v3492 = vadd.f32 %v3203, %v3491
  %v3493 = vpop.f32.mrb[0].mxu0
  %v3494 = vpop.f32.mrb[0].mxu0
  %v3495 = vadd.f32 %v3206, %v3494
  %v3496 = vpop.f32.mrb[0].mxu0
  %3497 = vmatprep.mubr.bf16.mxu0 %v1624
  %3498 = vmatmul.mubr.bf16.gmra.mrb[0].mxu0 %v1623
  %v3499 = vpop.f32.mrb[0].mxu0
  %v3500 = vadd.f32 %v3211, %v3499
  %v3501 = vpop.f32.mrb[0].mxu0
  %v3502 = vpop.f32.mrb[0].mxu0
  %v3503 = vadd.f32 %v3214, %v3502
  %v3504 = vpop.f32.mrb[0].mxu0
  %3505 = vmatprep.mubr.bf16.mxu0 %v1633
  %3506 = vmatmul.mubr.bf16.gmra.mrb[0].mxu0 %v1632
  %v3507 = vpop.f32.mrb[0].mxu0
  %v3508 = vadd.f32 %v3219, %v3507
  %v3509 = vpop.f32.mrb[0].mxu0
  %v3510 = vpop.f32.mrb[0].mxu0
  %v3511 = vadd.f32 %v3222, %v3510
  %v3512 = vpop.f32.mrb[0].mxu0
  %3513 = vmatprep.mubr.bf16.mxu0 %v1642
  %3514 = vmatmul.mubr.bf16.gmra.mrb[0].mxu0 %v1641
  %v3515 = vpop.f32.mrb[0].mxu0
  %v3516 = vadd.f32 %v3227, %v3515
  %v3517 = vpop.f32.mrb[0].mxu0
  %v3518 = vpop.f32.mrb[0].mxu0
  %v3519 = vadd.f32 %v3230, %v3518
  %v3520 = vpop.f32.mrb[0].mxu0
  %3521 = vmatprep.mubr.bf16.mxu0 %v1651
  %3522 = vmatmul.mubr.bf16.gmra.mrb[0].mxu0 %v1650
  %v3523 = vpop.f32.mrb[0].mxu0
  %v3524 = vadd.f32 %v3235, %v3523
  %v3525 = vpop.f32.mrb[0].mxu0
  %v3526 = vpop.f32.mrb[0].mxu0
  %v3527 = vadd.f32 %v3238, %v3526
  %v3528 = vpop.f32.mrb[0].mxu0
  %3529 = vmatprep.mubr.bf16.mxu0 %v1660
  %3530 = vmatmul.mubr.bf16.gmra.mrb[0].mxu0 %v1659
  %v3531 = vpop.f32.mrb[0].mxu0
  %v3532 = vadd.f32 %v3243, %v3531
  %v3533 = vpop.f32.mrb[0].mxu0
  %v3534 = vpop.f32.mrb[0].mxu0
  %v3535 = vadd.f32 %v3246, %v3534
  %v3536 = vpop.f32.mrb[0].mxu0
  %3537 = vdwg.mxu0
  %3538 = vmatprep.subr.bf16.mxu0 0
  %3539 = vmatpush1.bf16.msra.mxu0 %v2302
  %3540 = vmatprep.subr.bf16.mxu0 0
  %3541 = vmatpush1.bf16.msra.mxu0 %v2303
  %3542 = vmatprep.subr.bf16.mxu0 0
  %3543 = vmatpush1.bf16.msra.mxu0 %v2304
  %3544 = vmatprep.subr.bf16.mxu0 0
  %3545 = vmatpush1.bf16.msra.mxu0 %v2305
  %3546 = vmatprep.subr.bf16.mxu0 0
  %3547 = vmatpush1.bf16.msra.mxu0 %v2306
  %3548 = vmatprep.subr.bf16.mxu0 0
  %3549 = vmatpush1.bf16.msra.mxu0 %v2307
  %3550 = vmatprep.subr.bf16.mxu0 0
  %3551 = vmatpush1.bf16.msra.mxu0 %v2308
  %3552 = vmatprep.subr.bf16.mxu0 0
  %3553 = vmatpush1.bf16.msra.mxu0 %v2309
  %3554 = vmatprep.subr.bf16.mxu0 0
  %3555 = vmatpush1.bf16.msra.mxu0 0
  %3556 = vmatprep.subr.bf16.mxu0 0
  %3557 = vmatpush1.bf16.msra.mxu0 0
  %3558 = vmatprep.subr.bf16.mxu0 0
  %3559 = vmatpush1.bf16.msra.mxu0 0
  %3560 = vmatprep.subr.bf16.mxu0 0
  %3561 = vmatpush1.bf16.msra.mxu0 0
  %3562 = vmatprep.subr.bf16.mxu0 0
  %3563 = vmatpush1.bf16.msra.mxu0 0
  %3564 = vmatprep.subr.bf16.mxu0 0
  %3565 = vmatpush1.bf16.msra.mxu0 0
  %3566 = vmatprep.subr.bf16.mxu0 0
  %3567 = vmatpush1.bf16.msra.mxu0 0
  %3568 = vmatprep.subr.bf16.mxu0 0
  %3569 = vmatpush1.bf16.msra.mxu0 0
  %3570 = vmatprep.mubr.bf16.mxu0 0
  %3571 = vmatmul.mubr.bf16.gmra.mrb[0].mxu0 %v1382
  %v3572 = vpop.f32.mrb[0].mxu0
  %v3573 = vadd.f32 %v3284, %v3572
  %v3574 = vpop.f32.mrb[0].mxu0
  %v3575 = vpop.f32.mrb[0].mxu0
  %v3576 = vadd.f32 %v3287, %v3575
  %v3577 = vpop.f32.mrb[0].mxu0
  %3578 = vmatprep.mubr.bf16.mxu0 0
  %3579 = vmatmul.mubr.bf16.gmra.mrb[0].mxu0 %v1391
  %v3580 = vpop.f32.mrb[0].mxu0
  %v3581 = vadd.f32 %v3292, %v3580
  %v3582 = vpop.f32.mrb[0].mxu0
  %v3583 = vpop.f32.mrb[0].mxu0
  %v3584 = vadd.f32 %v3295, %v3583
  %v3585 = vpop.f32.mrb[0].mxu0
  %3586 = vmatprep.mubr.bf16.mxu0 0
  %3587 = vmatmul.mubr.bf16.gmra.mrb[0].mxu0 %v1400
  %v3588 = vpop.f32.mrb[0].mxu0
  %v3589 = vadd.f32 %v3300, %v3588
  %v3590 = vpop.f32.mrb[0].mxu0
  %v3591 = vpop.f32.mrb[0].mxu0
  %v3592 = vadd.f32 %v3303, %v3591
  %v3593 = vpop.f32.mrb[0].mxu0
  %3594 = vmatprep.mubr.bf16.mxu0 0
  %3595 = vmatmul.mubr.bf16.gmra.mrb[0].mxu0 %v1409
  %v3596 = vpop.f32.mrb[0].mxu0
  %v3597 = vadd.f32 %v3308, %v3596
  %v3598 = vpop.f32.mrb[0].mxu0
  %v3599 = vpop.f32.mrb[0].mxu0
  %v3600 = vadd.f32 %v3311, %v3599
  %v3601 = vpop.f32.mrb[0].mxu0
  %3602 = vmatprep.mubr.bf16.mxu0 0
  %3603 = vmatmul.mubr.bf16.gmra.mrb[0].mxu0 %v1418
  %v3604 = vpop.f32.mrb[0].mxu0
  %v3605 = vadd.f32 %v3316, %v3604
  %v3606 = vpop.f32.mrb[0].mxu0
  %v3607 = vpop.f32.mrb[0].mxu0
  %v3608 = vadd.f32 %v3319, %v3607
  %v3609 = vpop.f32.mrb[0].mxu0
  %3610 = vmatprep.mubr.bf16.mxu0 0
  %3611 = vmatmul.mubr.bf16.gmra.mrb[0].mxu0 %v1427
  %v3612 = vpop.f32.mrb[0].mxu0
  %v3613 = vadd.f32 %v3324, %v3612
  %v3614 = vpop.f32.mrb[0].mxu0
  %v3615 = vpop.f32.mrb[0].mxu0
  %v3616 = vadd.f32 %v3327, %v3615
  %v3617 = vpop.f32.mrb[0].mxu0
  %3618 = vmatprep.mubr.bf16.mxu0 0
  %3619 = vmatmul.mubr.bf16.gmra.mrb[0].mxu0 %v1436
  %v3620 = vpop.f32.mrb[0].mxu0
  %v3621 = vadd.f32 %v3332, %v3620
  %v3622 = vpop.f32.mrb[0].mxu0
  %v3623 = vpop.f32.mrb[0].mxu0
  %v3624 = vadd.f32 %v3335, %v3623
  %v3625 = vpop.f32.mrb[0].mxu0
  %3626 = vmatprep.mubr.bf16.mxu0 0
  %3627 = vmatmul.mubr.bf16.gmra.mrb[0].mxu0 %v1445
  %v3628 = vpop.f32.mrb[0].mxu0
  %v3629 = vadd.f32 %v3340, %v3628
  %v3630 = vpop.f32.mrb[0].mxu0
  %v3631 = vpop.f32.mrb[0].mxu0
  %v3632 = vadd.f32 %v3343, %v3631
  %v3633 = vpop.f32.mrb[0].mxu0
  %3634 = vmatprep.mubr.bf16.mxu0 0
  %3635 = vmatmul.mubr.bf16.gmra.mrb[0].mxu0 %v1454
  %v3636 = vpop.f32.mrb[0].mxu0
  %v3637 = vadd.f32 %v3348, %v3636
  %v3638 = vpop.f32.mrb[0].mxu0
  %v3639 = vpop.f32.mrb[0].mxu0
  %v3640 = vadd.f32 %v3351, %v3639
  %v3641 = vpop.f32.mrb[0].mxu0
  %3642 = vmatprep.mubr.bf16.mxu0 0
  %3643 = vmatmul.mubr.bf16.gmra.mrb[0].mxu0 %v1463
  %v3644 = vpop.f32.mrb[0].mxu0
  %v3645 = vadd.f32 %v3356, %v3644
  %v3646 = vpop.f32.mrb[0].mxu0
  %v3647 = vpop.f32.mrb[0].mxu0
  %v3648 = vadd.f32 %v3359, %v3647
  %v3649 = vpop.f32.mrb[0].mxu0
  %3650 = vmatprep.mubr.bf16.mxu0 0
  %3651 = vmatmul.mubr.bf16.gmra.mrb[0].mxu0 %v1472
  %v3652 = vpop.f32.mrb[0].mxu0
  %v3653 = vadd.f32 %v3364, %v3652
  %v3654 = vpop.f32.mrb[0].mxu0
  %v3655 = vpop.f32.mrb[0].mxu0
  %v3656 = vadd.f32 %v3367, %v3655
  %v3657 = vpop.f32.mrb[0].mxu0
  %3658 = vmatprep.mubr.bf16.mxu0 0
  %3659 = vmatmul.mubr.bf16.gmra.mrb[0].mxu0 %v1481
  %v3660 = vpop.f32.mrb[0].mxu0
  %v3661 = vadd.f32 %v3372, %v3660
  %v3662 = vpop.f32.mrb[0].mxu0
  %v3663 = vpop.f32.mrb[0].mxu0
  %v3664 = vadd.f32 %v3375, %v3663
  %v3665 = vpop.f32.mrb[0].mxu0
  %3666 = vmatprep.mubr.bf16.mxu0 0
  %3667 = vmatmul.mubr.bf16.gmra.mrb[0].mxu0 %v1490
  %v3668 = vpop.f32.mrb[0].mxu0
  %v3669 = vadd.f32 %v3380, %v3668
  %v3670 = vpop.f32.mrb[0].mxu0
  %v3671 = vpop.f32.mrb[0].mxu0
  %v3672 = vadd.f32 %v3383, %v3671
  %v3673 = vpop.f32.mrb[0].mxu0
  %3674 = vmatprep.mubr.bf16.mxu0 0
  %3675 = vmatmul.mubr.bf16.gmra.mrb[0].mxu0 %v1499
  %v3676 = vpop.f32.mrb[0].mxu0
  %v3677 = vadd.f32 %v3388, %v3676
  %v3678 = vpop.f32.mrb[0].mxu0
  %v3679 = vpop.f32.mrb[0].mxu0
  %v3680 = vadd.f32 %v3391, %v3679
  %v3681 = vpop.f32.mrb[0].mxu0
  %3682 = vmatprep.mubr.bf16.mxu0 0
  %3683 = vmatmul.mubr.bf16.gmra.mrb[0].mxu0 %v1508
  %v3684 = vpop.f32.mrb[0].mxu0
  %v3685 = vadd.f32 %v3396, %v3684
  %v3686 = vpop.f32.mrb[0].mxu0
  %v3687 = vpop.f32.mrb[0].mxu0
  %v3688 = vadd.f32 %v3399, %v3687
  %v3689 = vpop.f32.mrb[0].mxu0
  %3690 = vmatprep.mubr.bf16.mxu0 0
  %3691 = vmatmul.mubr.bf16.gmra.mrb[0].mxu0 %v1517
  %v3692 = vpop.f32.mrb[0].mxu0
  %v3693 = vadd.f32 %v3404, %v3692
  %v3694 = vpop.f32.mrb[0].mxu0
  %v3695 = vpop.f32.mrb[0].mxu0
  %v3696 = vadd.f32 %v3407, %v3695
  %v3697 = vpop.f32.mrb[0].mxu0
  %3698 = vmatprep.mubr.bf16.mxu0 0
  %3699 = vmatmul.mubr.bf16.gmra.mrb[0].mxu0 %v1526
  %v3700 = vpop.f32.mrb[0].mxu0
  %v3701 = vadd.f32 %v3412, %v3700
  %v3702 = vpop.f32.mrb[0].mxu0
  %v3703 = vpop.f32.mrb[0].mxu0
  %v3704 = vadd.f32 %v3415, %v3703
  %v3705 = vpop.f32.mrb[0].mxu0
  %3706 = vmatprep.mubr.bf16.mxu0 0
  %3707 = vmatmul.mubr.bf16.gmra.mrb[0].mxu0 %v1535
  %v3708 = vpop.f32.mrb[0].mxu0
  %v3709 = vadd.f32 %v3420, %v3708
  %v3710 = vpop.f32.mrb[0].mxu0
  %v3711 = vpop.f32.mrb[0].mxu0
  %v3712 = vadd.f32 %v3423, %v3711
  %v3713 = vpop.f32.mrb[0].mxu0
  %3714 = vmatprep.mubr.bf16.mxu0 0
  %3715 = vmatmul.mubr.bf16.gmra.mrb[0].mxu0 %v1544
  %v3716 = vpop.f32.mrb[0].mxu0
  %v3717 = vadd.f32 %v3428, %v3716
  %v3718 = vpop.f32.mrb[0].mxu0
  %v3719 = vpop.f32.mrb[0].mxu0
  %v3720 = vadd.f32 %v3431, %v3719
  %v3721 = vpop.f32.mrb[0].mxu0
  %3722 = vmatprep.mubr.bf16.mxu0 0
  %3723 = vmatmul.mubr.bf16.gmra.mrb[0].mxu0 %v1553
  %v3724 = vpop.f32.mrb[0].mxu0
  %v3725 = vadd.f32 %v3436, %v3724
  %v3726 = vpop.f32.mrb[0].mxu0
  %v3727 = vpop.f32.mrb[0].mxu0
  %v3728 = vadd.f32 %v3439, %v3727
  %v3729 = vpop.f32.mrb[0].mxu0
  %3730 = vmatprep.mubr.bf16.mxu0 0
  %3731 = vmatmul.mubr.bf16.gmra.mrb[0].mxu0 %v1562
  %v3732 = vpop.f32.mrb[0].mxu0
  %v3733 = vadd.f32 %v3444, %v3732
  %v3734 = vpop.f32.mrb[0].mxu0
  %v3735 = vpop.f32.mrb[0].mxu0
  %v3736 = vadd.f32 %v3447, %v3735
  %v3737 = vpop.f32.mrb[0].mxu0
  %3738 = vmatprep.mubr.bf16.mxu0 0
  %3739 = vmatmul.mubr.bf16.gmra.mrb[0].mxu0 %v1571
  %v3740 = vpop.f32.mrb[0].mxu0
  %v3741 = vadd.f32 %v3452, %v3740
  %v3742 = vpop.f32.mrb[0].mxu0
  %v3743 = vpop.f32.mrb[0].mxu0
  %v3744 = vadd.f32 %v3455, %v3743
  %v3745 = vpop.f32.mrb[0].mxu0
  %3746 = vmatprep.mubr.bf16.mxu0 0
  %3747 = vmatmul.mubr.bf16.gmra.mrb[0].mxu0 %v1580
  %v3748 = vpop.f32.mrb[0].mxu0
  %v3749 = vadd.f32 %v3460, %v3748
  %v3750 = vpop.f32.mrb[0].mxu0
  %v3751 = vpop.f32.mrb[0].mxu0
  %v3752 = vadd.f32 %v3463, %v3751
  %v3753 = vpop.f32.mrb[0].mxu0
  %3754 = vmatprep.mubr.bf16.mxu0 0
  %3755 = vmatmul.mubr.bf16.gmra.mrb[0].mxu0 %v1589
  %v3756 = vpop.f32.mrb[0].mxu0
  %v3757 = vadd.f32 %v3468, %v3756
  %v3758 = vpop.f32.mrb[0].mxu0
  %v3759 = vpop.f32.mrb[0].mxu0
  %v3760 = vadd.f32 %v3471, %v3759
  %v3761 = vpop.f32.mrb[0].mxu0
  %3762 = vmatprep.mubr.bf16.mxu0 0
  %3763 = vmatmul.mubr.bf16.gmra.mrb[0].mxu0 %v1598
  %v3764 = vpop.f32.mrb[0].mxu0
  %v3765 = vadd.f32 %v3476, %v3764
  %v3766 = vpop.f32.mrb[0].mxu0
  %v3767 = vpop.f32.mrb[0].mxu0
  %v3768 = vadd.f32 %v3479, %v3767
  %v3769 = vpop.f32.mrb[0].mxu0
  %3770 = vmatprep.mubr.bf16.mxu0 0
  %3771 = vmatmul.mubr.bf16.gmra.mrb[0].mxu0 %v1607
  %v3772 = vpop.f32.mrb[0].mxu0
  %v3773 = vadd.f32 %v3484, %v3772
  %v3774 = vpop.f32.mrb[0].mxu0
  %v3775 = vpop.f32.mrb[0].mxu0
  %v3776 = vadd.f32 %v3487, %v3775
  %v3777 = vpop.f32.mrb[0].mxu0
  %3778 = vmatprep.mubr.bf16.mxu0 0
  %3779 = vmatmul.mubr.bf16.gmra.mrb[0].mxu0 %v1616
  %v3780 = vpop.f32.mrb[0].mxu0
  %v3781 = vadd.f32 %v3492, %v3780
  %v3782 = vpop.f32.mrb[0].mxu0
  %v3783 = vpop.f32.mrb[0].mxu0
  %v3784 = vadd.f32 %v3495, %v3783
  %v3785 = vpop.f32.mrb[0].mxu0
  %3786 = vmatprep.mubr.bf16.mxu0 0
  %3787 = vmatmul.mubr.bf16.gmra.mrb[0].mxu0 %v1625
  %v3788 = vpop.f32.mrb[0].mxu0
  %v3789 = vadd.f32 %v3500, %v3788
  %v3790 = vpop.f32.mrb[0].mxu0
  %v3791 = vpop.f32.mrb[0].mxu0
  %v3792 = vadd.f32 %v3503, %v3791
  %v3793 = vpop.f32.mrb[0].mxu0
  %3794 = vmatprep.mubr.bf16.mxu0 0
  %3795 = vmatmul.mubr.bf16.gmra.mrb[0].mxu0 %v1634
  %v3796 = vpop.f32.mrb[0].mxu0
  %v3797 = vadd.f32 %v3508, %v3796
  %v3798 = vpop.f32.mrb[0].mxu0
  %v3799 = vpop.f32.mrb[0].mxu0
  %v3800 = vadd.f32 %v3511, %v3799
  %v3801 = vpop.f32.mrb[0].mxu0
  %3802 = vmatprep.mubr.bf16.mxu0 0
  %3803 = vmatmul.mubr.bf16.gmra.mrb[0].mxu0 %v1643
  %v3804 = vpop.f32.mrb[0].mxu0
  %v3805 = vadd.f32 %v3516, %v3804
  %v3806 = vpop.f32.mrb[0].mxu0
  %v3807 = vpop.f32.mrb[0].mxu0
  %v3808 = vadd.f32 %v3519, %v3807
  %v3809 = vpop.f32.mrb[0].mxu0
  %3810 = vmatprep.mubr.bf16.mxu0 0
  %3811 = vmatmul.mubr.bf16.gmra.mrb[0].mxu0 %v1652
  %v3812 = vpop.f32.mrb[0].mxu0
  %v3813 = vadd.f32 %v3524, %v3812
  %v3814 = vpop.f32.mrb[0].mxu0
  %v3815 = vpop.f32.mrb[0].mxu0
  %v3816 = vadd.f32 %v3527, %v3815
  %v3817 = vpop.f32.mrb[0].mxu0
  %3818 = vmatprep.mubr.bf16.mxu0 0
  %3819 = vmatmul.mubr.bf16.gmra.mrb[0].mxu0 %v1661
  %v3820 = vpop.f32.mrb[0].mxu0
  %v3821 = vadd.f32 %v3532, %v3820
  %v3822 = vpop.f32.mrb[0].mxu0
  %v3823 = vpop.f32.mrb[0].mxu0
  %v3824 = vadd.f32 %v3535, %v3823
  %v3825 = vpop.f32.mrb[0].mxu0
  %3826 = vdwg.mxu0
  %3827 = vst [vmem:[%s2] sm:$0xff] %v3573
  %3828 = vst [vmem:[%s2 + $0x8] sm:$0xff] %v3576
  %3829 = vst [vmem:[%s2 + $0x10] sm:$0xff] %v3581
  %3830 = vst [vmem:[%s2 + $0x18] sm:$0xff] %v3584
  %3831 = vst [vmem:[%s2 + $0x20] sm:$0xff] %v3589
  %3832 = vst [vmem:[%s2 + $0x28] sm:$0xff] %v3592
  %3833 = vst [vmem:[%s2 + $0x30] sm:$0xff] %v3597
  %3834 = vst [vmem:[%s2 + $0x38] sm:$0xff] %v3600
  %3835 = vst [vmem:[%s2 + $0x40] sm:$0xff] %v3605
  %3836 = vst [vmem:[%s2 + $0x48] sm:$0xff] %v3608
  %3837 = vst [vmem:[%s2 + $0x50] sm:$0xff] %v3613
  %3838 = vst [vmem:[%s2 + $0x58] sm:$0xff] %v3616
  %3839 = vst [vmem:[%s2 + $0x60] sm:$0xff] %v3621
  %3840 = vst [vmem:[%s2 + $0x68] sm:$0xff] %v3624
  %3841 = vst [vmem:[%s2 + $0x70] sm:$0xff] %v3629
  %3842 = vst [vmem:[%s2 + $0x78] sm:$0xff] %v3632
  %3843 = vst [vmem:[%s2 + $0x80] sm:$0xff] %v3637
  %3844 = vst [vmem:[%s2 + $0x88] sm:$0xff] %v3640
  %3845 = vst [vmem:[%s2 + $0x90] sm:$0xff] %v3645
  %3846 = vst [vmem:[%s2 + $0x98] sm:$0xff] %v3648
  %3847 = vst [vmem:[%s2 + $0xa0] sm:$0xff] %v3653
  %3848 = vst [vmem:[%s2 + $0xa8] sm:$0xff] %v3656
  %3849 = vst [vmem:[%s2 + $0xb0] sm:$0xff] %v3661
  %3850 = vst [vmem:[%s2 + $0xb8] sm:$0xff] %v3664
  %3851 = vst [vmem:[%s2 + $0xc0] sm:$0xff] %v3669
  %3852 = vst [vmem:[%s2 + $0xc8] sm:$0xff] %v3672
  %3853 = vst [vmem:[%s2 + $0xd0] sm:$0xff] %v3677
  %3854 = vst [vmem:[%s2 + $0xd8] sm:$0xff] %v3680
  %3855 = vst [vmem:[%s2 + $0xe0] sm:$0xff] %v3685
  %3856 = vst [vmem:[%s2 + $0xe8] sm:$0xff] %v3688
  %3857 = vst [vmem:[%s2 + $0xf0] sm:$0xff] %v3693
  %3858 = vst [vmem:[%s2 + $0xf8] sm:$0xff] %v3696
  %3859 = vst [vmem:[%s2 + $0x100] sm:$0xff] %v3701
  %3860 = vst [vmem:[%s2 + $0x108] sm:$0xff] %v3704
  %3861 = vst [vmem:[%s2 + $0x110] sm:$0xff] %v3709
  %3862 = vst [vmem:[%s2 + $0x118] sm:$0xff] %v3712
  %3863 = vst [vmem:[%s2 + $0x120] sm:$0xff] %v3717
  %3864 = vst [vmem:[%s2 + $0x128] sm:$0xff] %v3720
  %3865 = vst [vmem:[%s2 + $0x130] sm:$0xff] %v3725
  %3866 = vst [vmem:[%s2 + $0x138] sm:$0xff] %v3728
  %3867 = vst [vmem:[%s2 + $0x140] sm:$0xff] %v3733
  %3868 = vst [vmem:[%s2 + $0x148] sm:$0xff] %v3736
  %3869 = vst [vmem:[%s2 + $0x150] sm:$0xff] %v3741
  %3870 = vst [vmem:[%s2 + $0x158] sm:$0xff] %v3744
  %3871 = vst [vmem:[%s2 + $0x160] sm:$0xff] %v3749
  %3872 = vst [vmem:[%s2 + $0x168] sm:$0xff] %v3752
  %3873 = vst [vmem:[%s2 + $0x170] sm:$0xff] %v3757
  %3874 = vst [vmem:[%s2 + $0x178] sm:$0xff] %v3760
  %3875 = vst [vmem:[%s2 + $0x180] sm:$0xff] %v3765
  %3876 = vst [vmem:[%s2 + $0x188] sm:$0xff] %v3768
  %3877 = vst [vmem:[%s2 + $0x190] sm:$0xff] %v3773
  %3878 = vst [vmem:[%s2 + $0x198] sm:$0xff] %v3776
  %3879 = vst [vmem:[%s2 + $0x1a0] sm:$0xff] %v3781
  %3880 = vst [vmem:[%s2 + $0x1a8] sm:$0xff] %v3784
  %3881 = vst [vmem:[%s2 + $0x1b0] sm:$0xff] %v3789
  %3882 = vst [vmem:[%s2 + $0x1b8] sm:$0xff] %v3792
  %3883 = vst [vmem:[%s2 + $0x1c0] sm:$0xff] %v3797
  %3884 = vst [vmem:[%s2 + $0x1c8] sm:$0xff] %v3800
  %3885 = vst [vmem:[%s2 + $0x1d0] sm:$0xff] %v3805
  %3886 = vst [vmem:[%s2 + $0x1d8] sm:$0xff] %v3808
  %3887 = vst [vmem:[%s2 + $0x1e0] sm:$0xff] %v3813
  %3888 = vst [vmem:[%s2 + $0x1e8] sm:$0xff] %v3816
  %3889 = vst [vmem:[%s2 + $0x1f0] sm:$0xff] %v3821
  %3890 = vst [vmem:[%s2 + $0x1f8] sm:$0xff] %v3824
  %v3891 = vadd.f32 %v3573, %v3576
  %v3892 = vadd.f32 %v3891, %v3581
  %v3893 = vadd.f32 %v3892, %v3584
  %v3894 = vadd.f32 %v3893, %v3589
  %v3895 = vadd.f32 %v3894, %v3592
  %v3896 = vadd.f32 %v3895, %v3597
  %v3897 = vadd.f32 %v3896, %v3600
  %v3898 = vadd.f32 %v3897, %v3605
  %v3899 = vadd.f32 %v3898, %v3608
  %v3900 = vadd.f32 %v3899, %v3613
  %v3901 = vadd.f32 %v3900, %v3616
  %v3902 = vadd.f32 %v3901, %v3621
  %v3903 = vadd.f32 %v3902, %v3624
  %v3904 = vadd.f32 %v3903, %v3629
  %v3905 = vadd.f32 %v3904, %v3632
  %v3906 = vadd.f32 %v3905, %v3637
  %v3907 = vadd.f32 %v3906, %v3640
  %v3908 = vadd.f32 %v3907, %v3645
  %v3909 = vadd.f32 %v3908, %v3648
  %v3910 = vadd.f32 %v3909, %v3653
  %v3911 = vadd.f32 %v3910, %v3656
  %v3912 = vadd.f32 %v3911, %v3661
  %v3913 = vadd.f32 %v3912, %v3664
  %v3914 = vadd.f32 %v3913, %v3669
  %v3915 = vadd.f32 %v3914, %v3672
  %v3916 = vadd.f32 %v3915, %v3677
  %v3917 = vadd.f32 %v3916, %v3680
  %v3918 = vadd.f32 %v3917, %v3685
  %v3919 = vadd.f32 %v3918, %v3688
  %v3920 = vadd.f32 %v3919, %v3693
  %v3921 = vadd.f32 %v3920, %v3696
  %v3922 = vadd.f32 %v3921, %v3701
  %v3923 = vadd.f32 %v3922, %v3704
  %v3924 = vadd.f32 %v3923, %v3709
  %v3925 = vadd.f32 %v3924, %v3712
  %v3926 = vadd.f32 %v3925, %v3717
  %v3927 = vadd.f32 %v3926, %v3720
  %v3928 = vadd.f32 %v3927, %v3725
  %v3929 = vadd.f32 %v3928, %v3728
  %v3930 = vadd.f32 %v3929, %v3733
  %v3931 = vadd.f32 %v3930, %v3736
  %v3932 = vadd.f32 %v3931, %v3741
  %v3933 = vadd.f32 %v3932, %v3744
  %v3934 = vadd.f32 %v3933, %v3749
  %v3935 = vadd.f32 %v3934, %v3752
  %v3936 = vadd.f32 %v3935, %v3757
  %v3937 = vadd.f32 %v3936, %v3760
  %v3938 = vadd.f32 %v3937, %v3765
  %v3939 = vadd.f32 %v3938, %v3768
  %v3940 = vadd.f32 %v3939, %v3773
  %v3941 = vadd.f32 %v3940, %v3776
  %v3942 = vadd.f32 %v3941, %v3781
  %v3943 = vadd.f32 %v3942, %v3784
  %v3944 = vadd.f32 %v3943, %v3789
  %v3945 = vadd.f32 %v3944, %v3792
  %v3946 = vadd.f32 %v3945, %v3797
  %v3947 = vadd.f32 %v3946, %v3800
  %v3948 = vadd.f32 %v3947, %v3805
  %v3949 = vadd.f32 %v3948, %v3808
  %v3950 = vadd.f32 %v3949, %v3813
  %v3951 = vadd.f32 %v3950, %v3816
  %v3952 = vadd.f32 %v3951, %v3821
  %v3953 = vadd.f32 %v3952, %v3824
  %v3954 = vrot.slane %v3953, 4
  %v3955 = vadd.f32 %v3953, %v3954
  %v3956 = vrot.slane %v3955, 2
  %v3957 = vadd.f32 %v3955, %v3956
  %v3958 = vrot.slane %v3957, 1
  %v3959 = vadd.f32 %v3957, %v3958
  %3960 = vst [vmem:[%s3] sm:$0x1] %v3959
  %v3961 = vmul.f32 %v3573, %v3573
  %v3962 = vmul.f32 %v3576, %v3576
  %v3963 = vmul.f32 %v3581, %v3581
  %v3964 = vmul.f32 %v3584, %v3584
  %v3965 = vmul.f32 %v3589, %v3589
  %v3966 = vmul.f32 %v3592, %v3592
  %v3967 = vmul.f32 %v3597, %v3597
  %v3968 = vmul.f32 %v3600, %v3600
  %v3969 = vmul.f32 %v3605, %v3605
  %v3970 = vmul.f32 %v3608, %v3608
  %v3971 = vmul.f32 %v3613, %v3613
  %v3972 = vmul.f32 %v3616, %v3616
  %v3973 = vmul.f32 %v3621, %v3621
  %v3974 = vmul.f32 %v3624, %v3624
  %v3975 = vmul.f32 %v3629, %v3629
  %v3976 = vmul.f32 %v3632, %v3632
  %v3977 = vmul.f32 %v3637, %v3637
  %v3978 = vmul.f32 %v3640, %v3640
  %v3979 = vmul.f32 %v3645, %v3645
  %v3980 = vmul.f32 %v3648, %v3648
  %v3981 = vmul.f32 %v3653, %v3653
  %v3982 = vmul.f32 %v3656, %v3656
  %v3983 = vmul.f32 %v3661, %v3661
  %v3984 = vmul.f32 %v3664, %v3664
  %v3985 = vmul.f32 %v3669, %v3669
  %v3986 = vmul.f32 %v3672, %v3672
  %v3987 = vmul.f32 %v3677, %v3677
  %v3988 = vmul.f32 %v3680, %v3680
  %v3989 = vmul.f32 %v3685, %v3685
  %v3990 = vmul.f32 %v3688, %v3688
  %v3991 = vmul.f32 %v3693, %v3693
  %v3992 = vmul.f32 %v3696, %v3696
  %v3993 = vmul.f32 %v3701, %v3701
  %v3994 = vmul.f32 %v3704, %v3704
  %v3995 = vmul.f32 %v3709, %v3709
  %v3996 = vmul.f32 %v3712, %v3712
  %v3997 = vmul.f32 %v3717, %v3717
  %v3998 = vmul.f32 %v3720, %v3720
  %v3999 = vmul.f32 %v3725, %v3725
  %v4000 = vmul.f32 %v3728, %v3728
  %v4001 = vmul.f32 %v3733, %v3733
  %v4002 = vmul.f32 %v3736, %v3736
  %v4003 = vmul.f32 %v3741, %v3741
  %v4004 = vmul.f32 %v3744, %v3744
  %v4005 = vmul.f32 %v3749, %v3749
  %v4006 = vmul.f32 %v3752, %v3752
  %v4007 = vmul.f32 %v3757, %v3757
  %v4008 = vmul.f32 %v3760, %v3760
  %v4009 = vmul.f32 %v3765, %v3765
  %v4010 = vmul.f32 %v3768, %v3768
  %v4011 = vmul.f32 %v3773, %v3773
  %v4012 = vmul.f32 %v3776, %v3776
  %v4013 = vmul.f32 %v3781, %v3781
  %v4014 = vmul.f32 %v3784, %v3784
  %v4015 = vmul.f32 %v3789, %v3789
  %v4016 = vmul.f32 %v3792, %v3792
  %v4017 = vmul.f32 %v3797, %v3797
  %v4018 = vmul.f32 %v3800, %v3800
  %v4019 = vmul.f32 %v3805, %v3805
  %v4020 = vmul.f32 %v3808, %v3808
  %v4021 = vmul.f32 %v3813, %v3813
  %v4022 = vmul.f32 %v3816, %v3816
  %v4023 = vmul.f32 %v3821, %v3821
  %v4024 = vmul.f32 %v3824, %v3824
  %v4025 = vadd.f32 %v3961, %v3962
  %v4026 = vadd.f32 %v4025, %v3963
  %v4027 = vadd.f32 %v4026, %v3964
  %v4028 = vadd.f32 %v4027, %v3965
  %v4029 = vadd.f32 %v4028, %v3966
  %v4030 = vadd.f32 %v4029, %v3967
  %v4031 = vadd.f32 %v4030, %v3968
  %v4032 = vadd.f32 %v4031, %v3969
  %v4033 = vadd.f32 %v4032, %v3970
  %v4034 = vadd.f32 %v4033, %v3971
  %v4035 = vadd.f32 %v4034, %v3972
  %v4036 = vadd.f32 %v4035, %v3973
  %v4037 = vadd.f32 %v4036, %v3974
  %v4038 = vadd.f32 %v4037, %v3975
  %v4039 = vadd.f32 %v4038, %v3976
  %v4040 = vadd.f32 %v4039, %v3977
  %v4041 = vadd.f32 %v4040, %v3978
  %v4042 = vadd.f32 %v4041, %v3979
  %v4043 = vadd.f32 %v4042, %v3980
  %v4044 = vadd.f32 %v4043, %v3981
  %v4045 = vadd.f32 %v4044, %v3982
  %v4046 = vadd.f32 %v4045, %v3983
  %v4047 = vadd.f32 %v4046, %v3984
  %v4048 = vadd.f32 %v4047, %v3985
  %v4049 = vadd.f32 %v4048, %v3986
  %v4050 = vadd.f32 %v4049, %v3987
  %v4051 = vadd.f32 %v4050, %v3988
  %v4052 = vadd.f32 %v4051, %v3989
  %v4053 = vadd.f32 %v4052, %v3990
  %v4054 = vadd.f32 %v4053, %v3991
  %v4055 = vadd.f32 %v4054, %v3992
  %v4056 = vadd.f32 %v4055, %v3993
  %v4057 = vadd.f32 %v4056, %v3994
  %v4058 = vadd.f32 %v4057, %v3995
  %v4059 = vadd.f32 %v4058, %v3996
  %v4060 = vadd.f32 %v4059, %v3997
  %v4061 = vadd.f32 %v4060, %v3998
  %v4062 = vadd.f32 %v4061, %v3999
  %v4063 = vadd.f32 %v4062, %v4000
  %v4064 = vadd.f32 %v4063, %v4001
  %v4065 = vadd.f32 %v4064, %v4002
  %v4066 = vadd.f32 %v4065, %v4003
  %v4067 = vadd.f32 %v4066, %v4004
  %v4068 = vadd.f32 %v4067, %v4005
  %v4069 = vadd.f32 %v4068, %v4006
  %v4070 = vadd.f32 %v4069, %v4007
  %v4071 = vadd.f32 %v4070, %v4008
  %v4072 = vadd.f32 %v4071, %v4009
  %v4073 = vadd.f32 %v4072, %v4010
  %v4074 = vadd.f32 %v4073, %v4011
  %v4075 = vadd.f32 %v4074, %v4012
  %v4076 = vadd.f32 %v4075, %v4013
  %v4077 = vadd.f32 %v4076, %v4014
  %v4078 = vadd.f32 %v4077, %v4015
  %v4079 = vadd.f32 %v4078, %v4016
  %v4080 = vadd.f32 %v4079, %v4017
  %v4081 = vadd.f32 %v4080, %v4018
  %v4082 = vadd.f32 %v4081, %v4019
  %v4083 = vadd.f32 %v4082, %v4020
  %v4084 = vadd.f32 %v4083, %v4021
  %v4085 = vadd.f32 %v4084, %v4022
  %v4086 = vadd.f32 %v4085, %v4023
  %v4087 = vadd.f32 %v4086, %v4024
  %v4088 = vrot.slane %v4087, 4
  %v4089 = vadd.f32 %v4087, %v4088
  %v4090 = vrot.slane %v4089, 2
  %v4091 = vadd.f32 %v4089, %v4090
  %v4092 = vrot.slane %v4091, 1
  %v4093 = vadd.f32 %v4091, %v4092
  %4094 = vst [vmem:[%s3 + $0x1] sm:$0x1] %v4093
  // Predicated region
  $region10: #{basic_block_forward.6} parent=0 // pred_check
    _
  $region11: #{basic_block_forward.6} parent=0 // pred_check_branch
    %4096 = sbr.rel (0) target = $region13
  $region12: #{basic_block_forward.6} parent=0 // pred_region
    _
  $region13: #{basic_block_forward.6} parent=0 // pred_fallthru
    _
  // Predicated region
  $region14: #{basic_block_forward.6} parent=0 // pred_check
    _
  $region15: #{basic_block_forward.6} parent=0 // pred_check_branch
    %4098 = sbr.rel (0) target = $region17
  $region16: #{basic_block_forward.6} parent=0 // pred_region
    _
  $region17: #{basic_block_forward.6} parent=0 // pred_fallthru
    _
  // Predicated region
  $region18: #{basic_block_forward.6} parent=0 // pred_check
    _
  $region19: #{basic_block_forward.6} parent=0 // pred_check_branch
    %4100 = sbr.rel (0) target = $region21
  $region20: #{basic_block_forward.6} parent=0 // pred_region
    _
  $region21: #{basic_block_forward.6} parent=0 // pred_fallthru
    _
  // Predicated region
  $region22: #{basic_block_forward.6} parent=0 // pred_check
    _
  $region23: #{basic_block_forward.6} parent=0 // pred_check_branch
    %4102 = sbr.rel (0) target = $region25
  $region24: #{basic_block_forward.6} parent=0 // pred_region
    _
  $region25: #{basic_block_forward.6} parent=0 // pred_fallthru
    _

</llo_original>
